<compile_context>
chip_gen: v6e
topology: v6e:2x2x1
jax: 0.10.0
libtpu: 0.0.40
codegen_flags: <defaults>
</compile_context>

<pallas_src>
import functools

import jax
import jax.numpy as jnp
import numpy as np
from jax.experimental import pallas as pl
from jax.experimental.pallas import tpu as pltpu

PAD = 8                                          # in-kernel halo >= max conv pad
UNIQUE_OFFSETS = (0, 2, 4, 6, 7, 8, 9, 10, 12)   # unique padded tap offsets
N_OFF = len(UNIQUE_OFFSETS)

# (kernel_size, dilation, left_pad) for the 6 conv ops, SearchEdge order:
#   std_cnn_3, dil_cnn_3, cau_cnn_3, std_cnn_5, dil_cnn_5, cau_cnn_5
# TODO(synk): DilConv1D / CausalDilConv1D helper classes were not provided in
#             the spec; they are implemented as full dilated convs (not
#             depthwise-separable).
CONV_CFG = [(3, 1, 1), (3, 2, 2), (3, 2, 4), (5, 1, 2), (5, 2, 4), (5, 2, 8)]


# ---------------------------------------------------------------------------
# Pallas kernel
# ---------------------------------------------------------------------------
def _search_node_kernel(alpha_ref, x_ref, w_ref, b_ref, o_ref, xp_ref, *,
                        precision):
    """One batch-tile grid step; all E edges are unrolled inside.

    alpha_ref : SMEM (E, 10) f32        -- only ops 6..8 are read here
    x_ref     : VMEM (E, TB, L, C)      -- raw (un-padded) inputs, all edges
    w_ref     : VMEM (E, 9, C, C)       -- alpha-folded per-tap conv weights
    b_ref     : VMEM (E, 1, C)          -- alpha-folded conv biases
    o_ref     : VMEM (TB, L, C)         -- written once per grid step
    xp_ref    : VMEM (TB, L+2*PAD, C)   -- persistent padded-input scratch
    """
    E, TB, L, C = x_ref.shape

    # Zero only the halo rows (cheap; done every step so it stays correct even
    # if the "parallel" batch axis is split across TensorCores).
    zhalo = jnp.zeros((TB, PAD, C), jnp.float32)
    xp_ref[:, 0:PAD, :] = zhalo
    xp_ref[:, PAD + L:PAD + L + PAD, :] = zhalo

    acc = jnp.zeros((TB, L, C), jnp.float32)
    for e in range(E):                              # static unroll over edges
        x = jnp.maximum(x_ref[e], 0.0)              # ReLU, (TB, L, C)
        xp_ref[:, PAD:PAD + L, :] = x               # interior of padded buffer

        # --- all 6 conv ops: 9 accumulating matmuls (one per tap offset) ----
        conv = jnp.zeros((TB * L, C), jnp.float32)
        for t, off in enumerate(UNIQUE_OFFSETS):
            xs = xp_ref[:, off:off + L, :].reshape(TB * L, C)
            conv = conv + jax.lax.dot_general(
                xs, w_ref[e, t], (((1,), (0,)), ((), ())),
                precision=precision,
                preferred_element_type=jnp.float32)
        acc = acc + conv.reshape(TB, L, C) + b_ref[e]   # + sum_op alpha*bias

        # --- pooling / skip / none (k=3, stride 1, pad 1), on ReLU(x) -------
        xl = xp_ref[:, PAD - 1:PAD - 1 + L, :]
        xr = xp_ref[:, PAD + 1:PAD + 1 + L, :]
        a_max = alpha_ref[e, 6]
        a_avg = alpha_ref[e, 7]
        a_res = alpha_ref[e, 8]
        acc = acc + a_max * jnp.maximum(jnp.maximum(xl, x), xr)  # 0-halo==-inf post-ReLU
        acc = acc + (a_avg * (1.0 / 3.0)) * (xl + x + xr)        # count_include_pad
        acc = acc + a_res * x                                    # skip connect
        # op 9 (NoneConnect) contributes zero.

    o_ref[...] = acc


# ---------------------------------------------------------------------------
# Wrapper
# ---------------------------------------------------------------------------
def _pick_tb(B, L, target_rows=1024):
    """Largest divisor of B giving <= ~target_rows matmul rows per tile,
    preferring >=2 batch tiles (v7x megacore) when that still leaves >=256
    rows per tile."""
    divs = [d for d in range(1, B + 1) if B % d == 0]
    fit = [d for d in divs if d * L <= target_rows] or [1]
    tb = max(fit)
    pref = [d for d in fit if d < tb and B // d >= 2 and d * L >= 256]
    if B // tb < 2 and pref:
        tb = max(pref)
    return tb


def _default_vmem_limit():
    # ~75% of physical VMEM, capped at 100 MiB: ~96 MiB on v5e/v6e (128 MiB),
    # ~48 MiB on v7x (64 MiB).
    try:
        cap = pltpu.get_tpu_info().vmem_capacity_bytes
    except Exception:
        cap = 64 * 1024 * 1024
    return int(min(100 * 1024 * 1024, cap * 3 // 4))


def search_node_forward(inputs_blc, alpha, w_fold, bias_fold, *, tb=None,
                        vmem_limit_bytes=None):
    """inputs_blc: (E, B, L, C); alpha: (E, 10);
       w_fold: (E, 9, C, C); bias_fold: (E, 1, C).  Returns (B, L, C)."""
    E, B, L, C = inputs_blc.shape
    if tb is None:
        tb = _pick_tb(B, L)
    assert B % tb == 0
    if vmem_limit_bytes is None:
        vmem_limit_bytes = _default_vmem_limit()

    def _call(precision):
        return pl.pallas_call(
            functools.partial(_search_node_kernel, precision=precision),
            out_shape=jax.ShapeDtypeStruct((B, L, C), jnp.float32),
            grid=(B // tb,),
            in_specs=[
                pl.BlockSpec(memory_space=pltpu.MemorySpace.SMEM),        # alpha
                pl.BlockSpec((E, tb, L, C), lambda b: (0, b, 0, 0)),      # x (raw)
                # Constant index maps => all-edge weights/biases stay VMEM
                # resident, fetched once, never re-DMA'd across grid steps.
                pl.BlockSpec((E, N_OFF, C, C), lambda b: (0, 0, 0, 0)),   # W_fold
                pl.BlockSpec((E, 1, C), lambda b: (0, 0, 0)),             # b_fold
            ],
            out_specs=pl.BlockSpec((tb, L, C), lambda b: (b, 0, 0)),
            scratch_shapes=[pltpu.VMEM((tb, L + 2 * PAD, C), jnp.float32)],
            compiler_params=pltpu.CompilerParams(
                dimension_semantics=("parallel",),
                vmem_limit_bytes=vmem_limit_bytes),
        )(alpha, inputs_blc, w_fold, bias_fold)

    try:
        # HIGH (bf16_3x) halves MXU passes vs HIGHEST at ~f32 accuracy.
        return _call(jax.lax.Precision.HIGH)
    except Exception:
        # TODO(synk): some Mosaic versions only lower DEFAULT/HIGHEST matmul
        #             precision; fall back to the known-good HIGHEST.
        return _call(jax.lax.Precision.HIGHEST)


# ---------------------------------------------------------------------------
# Wrapper-side parameter folding (tiny: O(E * 9 * C * C))
# ---------------------------------------------------------------------------
def pack_params(alpha, Ws_all, bs_all):
    """alpha (E,10); Ws_all[e][p]: (C_out, C_in, k) PyTorch Conv1d weights;
       bs_all[e][p]: (C,).  Returns (w_fold (E,9,C,C), bias_fold (E,1,C))."""
    E = alpha.shape[0]
    C = Ws_all[0][0].shape[0]
    off_idx = {o: i for i, o in enumerate(UNIQUE_OFFSETS)}
    w_fold = jnp.zeros((E, N_OFF, C, C), jnp.float32)
    bias_fold = jnp.zeros((E, C), jnp.float32)
    for e in range(E):
        for p, (k, dil, lpad) in enumerate(CONV_CFG):
            a = alpha[e, p]
            for t in range(k):
                off = PAD - lpad + t * dil
                wt = jnp.transpose(Ws_all[e][p][:, :, t])        # (C_in, C_out)
                w_fold = w_fold.at[e, off_idx[off]].add(a * wt)
            bias_fold = bias_fold.at[e].add(a * bs_all[e][p])
    return w_fold, bias_fold.reshape(E, 1, C)


# ---------------------------------------------------------------------------
# Pure-JAX reference (NCL layout, mirrors the PyTorch module semantics)
# ---------------------------------------------------------------------------
def _edge_ref(x_ncl, alpha, Ws, bs):
    xr = jax.nn.relu(x_ncl)
    conv_cfg = [(1, (1, 1)), (2, (2, 2)), (2, (4, 0)),
                (1, (2, 2)), (2, (4, 4)), (2, (8, 0))]
    outs = []
    for i, (dil, pad) in enumerate(conv_cfg):
        y = jax.lax.conv_general_dilated(
            xr, Ws[i], window_strides=(1,), padding=[pad],
            rhs_dilation=(dil,), dimension_numbers=('NCH', 'OIH', 'NCH'),
            precision=jax.lax.Precision.HIGHEST)
        outs.append(y + bs[i][None, :, None])
    mp = jax.lax.reduce_window(xr, -jnp.inf, jax.lax.max,
                               (1, 1, 3), (1, 1, 1), [(0, 0), (0, 0), (1, 1)])
    ap = jax.lax.reduce_window(xr, 0.0, jax.lax.add,
                               (1, 1, 3), (1, 1, 1), [(0, 0), (0, 0), (1, 1)]) / 3.0
    outs += [mp, ap, xr, jnp.zeros_like(xr)]
    h = jnp.stack(outs)                                   # (10, B, C, L)
    return jnp.sum(h * alpha[:, None, None, None], axis=0)


def _search_node_ref(inputs_ncl, alpha, Ws_all, bs_all):
    total = 0.0
    for e in range(inputs_ncl.shape[0]):
        total = total + _edge_ref(inputs_ncl[e], alpha[e], Ws_all[e], bs_all[e])
    return total


if __name__ == "__main__":
    E, B, C, L = 2, 2, 32, 16            # num_input=2, num_hidden=32, seq len 16
    conv_ks = [3, 3, 3, 5, 5, 5]

    key = jax.random.PRNGKey(0)
    kx, ka, kw = jax.random.split(key, 3)
    inputs_ncl = jax.random.normal(kx, (E, B, C, L), jnp.float32)
    alpha = jax.random.uniform(ka, (E, 10), jnp.float32)

    # Deterministic per-edge conv parameters (PyTorch Conv1d layout: (O, I, k)).
    wkeys = jax.random.split(kw, E * len(conv_ks) * 2)
    Ws_all, bs_all = [], []
    idx = 0
    for e in range(E):
        we, be = [], []
        for k in conv_ks:
            we.append(jax.random.normal(wkeys[idx], (C, C, k), jnp.float32) * 0.1); idx += 1
            be.append(jax.random.normal(wkeys[idx], (C,), jnp.float32) * 0.1);      idx += 1
        Ws_all.append(we); bs_all.append(be)

    # Pack alpha-folded per-tap conv weights/biases for the kernel.
    w_fold, bias_fold = pack_params(alpha, Ws_all, bs_all)

    # NCL -> (E, B, L, C): swap only the last two axes.
    inputs_blc = jnp.transpose(inputs_ncl, (0, 1, 3, 2))

    out_blc = search_node_forward(inputs_blc, alpha, w_fold, bias_fold)
    out_blc = jax.block_until_ready(out_blc)

    ref_ncl = _search_node_ref(inputs_ncl, alpha, Ws_all, bs_all)
    out_ncl = jnp.transpose(out_blc, (0, 2, 1))            # back to (B, C, L)

    np.testing.assert_allclose(np.asarray(out_ncl), np.asarray(ref_ncl),
                               rtol=1e-3, atol=1e-3)
    print("KERNEL_OK")
</pallas_src>

<mosaic_0001>
module attributes {stable_mosaic.version = 11 : i64} {
  func.func @_search_node_kernel(%arg0: i32, %arg1: memref<2x10xf32, #tpu.memory_space<smem>>, %arg2: memref<2x2x16x32xf32, #tpu.memory_space<vmem>>, %arg3: memref<2x9x32x32xf32, #tpu.memory_space<vmem>>, %arg4: memref<2x1x32xf32, #tpu.memory_space<vmem>>, %arg5: memref<2x16x32xf32, #tpu.memory_space<vmem>>, %arg6: memref<2x32x32xf32, #tpu.memory_space<vmem>>) attributes {dimension_semantics = [#tpu.dimension_semantics<parallel>], iteration_bounds = array<i64: 1>, scalar_prefetch = 0 : i64, scratch_operands = 1 : i64, tpu.core_type = #tpu.core_type<tc>, window_params = [{transform_indices = @transform_0, window_bounds = array<i64: 2, 10>}, {transform_indices = @transform_1, window_bounds = array<i64: 2, 2, 16, 32>}, {pipeline_mode = #tpu.pipeline_mode<synchronous>, transform_indices = @transform_2, window_bounds = array<i64: 2, 9, 32, 32>}, {pipeline_mode = #tpu.pipeline_mode<synchronous>, transform_indices = @transform_3, window_bounds = array<i64: 2, 1, 32>}, {transform_indices = @transform_4, window_bounds = array<i64: 2, 16, 32>}]} {
    %cst = arith.constant 0.000000e+00 : f32
    %0 = vector.broadcast %cst : f32 to vector<2x8x32xf32>
    %c0 = arith.constant 0 : index
    %c0_0 = arith.constant 0 : index
    %c0_1 = arith.constant 0 : index
    %1 = vector.load %arg6[%c0, %c0_0, %c0_1] : memref<2x32x32xf32, #tpu.memory_space<vmem>>, vector<2x8x32xf32>
    tpu.vector_store %arg6[%c0, %c0_0, %c0_1], %0 {strides = array<i32>} : memref<2x32x32xf32, #tpu.memory_space<vmem>>, vector<2x8x32xf32>,
    %c0_2 = arith.constant 0 : index
    %c24 = arith.constant 24 : index
    %c0_3 = arith.constant 0 : index
    %2 = vector.load %arg6[%c0_2, %c24, %c0_3] : memref<2x32x32xf32, #tpu.memory_space<vmem>>, vector<2x8x32xf32>
    tpu.vector_store %arg6[%c0_2, %c24, %c0_3], %0 {strides = array<i32>} : memref<2x32x32xf32, #tpu.memory_space<vmem>>, vector<2x8x32xf32>,
    %cst_4 = arith.constant 0.000000e+00 : f32
    %3 = vector.broadcast %cst_4 : f32 to vector<2x16x32xf32>
    %c0_5 = arith.constant 0 : index
    %c0_6 = arith.constant 0 : index
    %c0_7 = arith.constant 0 : index
    %c0_8 = arith.constant 0 : index
    %4 = vector.load %arg2[%c0_5, %c0_6, %c0_7, %c0_8] : memref<2x2x16x32xf32, #tpu.memory_space<vmem>>, vector<1x2x16x32xf32>
    %5 = vector.shape_cast %4 : vector<1x2x16x32xf32> to vector<2x16x32xf32>
    %cst_9 = arith.constant 0.000000e+00 : f32
    %6 = vector.broadcast %cst_9 : f32 to vector<2x16x32xf32>
    %7 = arith.maximumf %5, %6 : vector<2x16x32xf32>
    %c0_10 = arith.constant 0 : index
    %c8 = arith.constant 8 : index
    %c0_11 = arith.constant 0 : index
    %8 = vector.load %arg6[%c0_10, %c8, %c0_11] : memref<2x32x32xf32, #tpu.memory_space<vmem>>, vector<2x16x32xf32>
    tpu.vector_store %arg6[%c0_10, %c8, %c0_11], %7 {strides = array<i32>} : memref<2x32x32xf32, #tpu.memory_space<vmem>>, vector<2x16x32xf32>,
    %cst_12 = arith.constant 0.000000e+00 : f32
    %9 = vector.broadcast %cst_12 : f32 to vector<32x32xf32>
    %c0_13 = arith.constant 0 : index
    %c0_14 = arith.constant 0 : index
    %c0_15 = arith.constant 0 : index
    %10 = vector.load %arg6[%c0_13, %c0_14, %c0_15] : memref<2x32x32xf32, #tpu.memory_space<vmem>>, vector<2x16x32xf32>
    %11 = vector.shape_cast %10 : vector<2x16x32xf32> to vector<32x32xf32>
    %c0_16 = arith.constant 0 : index
    %c0_17 = arith.constant 0 : index
    %c0_18 = arith.constant 0 : index
    %c0_19 = arith.constant 0 : index
    %12 = vector.load %arg3[%c0_16, %c0_17, %c0_18, %c0_19] : memref<2x9x32x32xf32, #tpu.memory_space<vmem>>, vector<1x1x32x32xf32>
    %13 = vector.shape_cast %12 : vector<1x1x32x32xf32> to vector<32x32xf32>
    %cst_20 = arith.constant dense<0.000000e+00> : vector<32x32xf32>
    %14 = tpu.matmul %11, %13, %cst_20 {dimension_numbers = #tpu.dot_dimension_numbers<[1], [0], [0], [1], [0, 0, 1, 1], [], []>, precision = #tpu.contract_precision<fp32>} : vector<32x32xf32>, vector<32x32xf32>, vector<32x32xf32> -> vector<32x32xf32>
    %15 = arith.addf %9, %14 : vector<32x32xf32>
    %c0_21 = arith.constant 0 : index
    %c2 = arith.constant 2 : index
    %c0_22 = arith.constant 0 : index
    %16 = vector.load %arg6[%c0_21, %c2, %c0_22] : memref<2x32x32xf32, #tpu.memory_space<vmem>>, vector<2x16x32xf32>
    %17 = vector.shape_cast %16 : vector<2x16x32xf32> to vector<32x32xf32>
    %c0_23 = arith.constant 0 : index
    %c1 = arith.constant 1 : index
    %c0_24 = arith.constant 0 : index
    %c0_25 = arith.constant 0 : index
    %18 = vector.load %arg3[%c0_23, %c1, %c0_24, %c0_25] : memref<2x9x32x32xf32, #tpu.memory_space<vmem>>, vector<1x1x32x32xf32>
    %19 = vector.shape_cast %18 : vector<1x1x32x32xf32> to vector<32x32xf32>
    %cst_26 = arith.constant dense<0.000000e+00> : vector<32x32xf32>
    %20 = tpu.matmul %17, %19, %cst_26 {dimension_numbers = #tpu.dot_dimension_numbers<[1], [0], [0], [1], [0, 0, 1, 1], [], []>, precision = #tpu.contract_precision<fp32>} : vector<32x32xf32>, vector<32x32xf32>, vector<32x32xf32> -> vector<32x32xf32>
    %21 = arith.addf %15, %20 : vector<32x32xf32>
    %c0_27 = arith.constant 0 : index
    %c4 = arith.constant 4 : index
    %c0_28 = arith.constant 0 : index
    %22 = vector.load %arg6[%c0_27, %c4, %c0_28] : memref<2x32x32xf32, #tpu.memory_space<vmem>>, vector<2x16x32xf32>
    %23 = vector.shape_cast %22 : vector<2x16x32xf32> to vector<32x32xf32>
    %c0_29 = arith.constant 0 : index
    %c2_30 = arith.constant 2 : index
    %c0_31 = arith.constant 0 : index
    %c0_32 = arith.constant 0 : index
    %24 = vector.load %arg3[%c0_29, %c2_30, %c0_31, %c0_32] : memref<2x9x32x32xf32, #tpu.memory_space<vmem>>, vector<1x1x32x32xf32>
    %25 = vector.shape_cast %24 : vector<1x1x32x32xf32> to vector<32x32xf32>
    %cst_33 = arith.constant dense<0.000000e+00> : vector<32x32xf32>
    %26 = tpu.matmul %23, %25, %cst_33 {dimension_numbers = #tpu.dot_dimension_numbers<[1], [0], [0], [1], [0, 0, 1, 1], [], []>, precision = #tpu.contract_precision<fp32>} : vector<32x32xf32>, vector<32x32xf32>, vector<32x32xf32> -> vector<32x32xf32>
    %27 = arith.addf %21, %26 : vector<32x32xf32>
    %c0_34 = arith.constant 0 : index
    %c6 = arith.constant 6 : index
    %c0_35 = arith.constant 0 : index
    %28 = vector.load %arg6[%c0_34, %c6, %c0_35] : memref<2x32x32xf32, #tpu.memory_space<vmem>>, vector<2x16x32xf32>
    %29 = vector.shape_cast %28 : vector<2x16x32xf32> to vector<32x32xf32>
    %c0_36 = arith.constant 0 : index
    %c3 = arith.constant 3 : index
    %c0_37 = arith.constant 0 : index
    %c0_38 = arith.constant 0 : index
    %30 = vector.load %arg3[%c0_36, %c3, %c0_37, %c0_38] : memref<2x9x32x32xf32, #tpu.memory_space<vmem>>, vector<1x1x32x32xf32>
    %31 = vector.shape_cast %30 : vector<1x1x32x32xf32> to vector<32x32xf32>
    %cst_39 = arith.constant dense<0.000000e+00> : vector<32x32xf32>
    %32 = tpu.matmul %29, %31, %cst_39 {dimension_numbers = #tpu.dot_dimension_numbers<[1], [0], [0], [1], [0, 0, 1, 1], [], []>, precision = #tpu.contract_precision<fp32>} : vector<32x32xf32>, vector<32x32xf32>, vector<32x32xf32> -> vector<32x32xf32>
    %33 = arith.addf %27, %32 : vector<32x32xf32>
    %c0_40 = arith.constant 0 : index
    %c7 = arith.constant 7 : index
    %c0_41 = arith.constant 0 : index
    %34 = vector.load %arg6[%c0_40, %c7, %c0_41] : memref<2x32x32xf32, #tpu.memory_space<vmem>>, vector<2x16x32xf32>
    %35 = vector.shape_cast %34 : vector<2x16x32xf32> to vector<32x32xf32>
    %c0_42 = arith.constant 0 : index
    %c4_43 = arith.constant 4 : index
    %c0_44 = arith.constant 0 : index
    %c0_45 = arith.constant 0 : index
    %36 = vector.load %arg3[%c0_42, %c4_43, %c0_44, %c0_45] : memref<2x9x32x32xf32, #tpu.memory_space<vmem>>, vector<1x1x32x32xf32>
    %37 = vector.shape_cast %36 : vector<1x1x32x32xf32> to vector<32x32xf32>
    %cst_46 = arith.constant dense<0.000000e+00> : vector<32x32xf32>
    %38 = tpu.matmul %35, %37, %cst_46 {dimension_numbers = #tpu.dot_dimension_numbers<[1], [0], [0], [1], [0, 0, 1, 1], [], []>, precision = #tpu.contract_precision<fp32>} : vector<32x32xf32>, vector<32x32xf32>, vector<32x32xf32> -> vector<32x32xf32>
    %39 = arith.addf %33, %38 : vector<32x32xf32>
    %c0_47 = arith.constant 0 : index
    %c8_48 = arith.constant 8 : index
    %c0_49 = arith.constant 0 : index
    %40 = vector.load %arg6[%c0_47, %c8_48, %c0_49] : memref<2x32x32xf32, #tpu.memory_space<vmem>>, vector<2x16x32xf32>
    %41 = vector.shape_cast %40 : vector<2x16x32xf32> to vector<32x32xf32>
    %c0_50 = arith.constant 0 : index
    %c5 = arith.constant 5 : index
    %c0_51 = arith.constant 0 : index
    %c0_52 = arith.constant 0 : index
    %42 = vector.load %arg3[%c0_50, %c5, %c0_51, %c0_52] : memref<2x9x32x32xf32, #tpu.memory_space<vmem>>, vector<1x1x32x32xf32>
    %43 = vector.shape_cast %42 : vector<1x1x32x32xf32> to vector<32x32xf32>
    %cst_53 = arith.constant dense<0.000000e+00> : vector<32x32xf32>
    %44 = tpu.matmul %41, %43, %cst_53 {dimension_numbers = #tpu.dot_dimension_numbers<[1], [0], [0], [1], [0, 0, 1, 1], [], []>, precision = #tpu.contract_precision<fp32>} : vector<32x32xf32>, vector<32x32xf32>, vector<32x32xf32> -> vector<32x32xf32>
    %45 = arith.addf %39, %44 : vector<32x32xf32>
    %c0_54 = arith.constant 0 : index
    %c9 = arith.constant 9 : index
    %c0_55 = arith.constant 0 : index
    %46 = vector.load %arg6[%c0_54, %c9, %c0_55] : memref<2x32x32xf32, #tpu.memory_space<vmem>>, vector<2x16x32xf32>
    %47 = vector.shape_cast %46 : vector<2x16x32xf32> to vector<32x32xf32>
    %c0_56 = arith.constant 0 : index
    %c6_57 = arith.constant 6 : index
    %c0_58 = arith.constant 0 : index
    %c0_59 = arith.constant 0 : index
    %48 = vector.load %arg3[%c0_56, %c6_57, %c0_58, %c0_59] : memref<2x9x32x32xf32, #tpu.memory_space<vmem>>, vector<1x1x32x32xf32>
    %49 = vector.shape_cast %48 : vector<1x1x32x32xf32> to vector<32x32xf32>
    %cst_60 = arith.constant dense<0.000000e+00> : vector<32x32xf32>
    %50 = tpu.matmul %47, %49, %cst_60 {dimension_numbers = #tpu.dot_dimension_numbers<[1], [0], [0], [1], [0, 0, 1, 1], [], []>, precision = #tpu.contract_precision<fp32>} : vector<32x32xf32>, vector<32x32xf32>, vector<32x32xf32> -> vector<32x32xf32>
    %51 = arith.addf %45, %50 : vector<32x32xf32>
    %c0_61 = arith.constant 0 : index
    %c10 = arith.constant 10 : index
    %c0_62 = arith.constant 0 : index
    %52 = vector.load %arg6[%c0_61, %c10, %c0_62] : memref<2x32x32xf32, #tpu.memory_space<vmem>>, vector<2x16x32xf32>
    %53 = vector.shape_cast %52 : vector<2x16x32xf32> to vector<32x32xf32>
    %c0_63 = arith.constant 0 : index
    %c7_64 = arith.constant 7 : index
    %c0_65 = arith.constant 0 : index
    %c0_66 = arith.constant 0 : index
    %54 = vector.load %arg3[%c0_63, %c7_64, %c0_65, %c0_66] : memref<2x9x32x32xf32, #tpu.memory_space<vmem>>, vector<1x1x32x32xf32>
    %55 = vector.shape_cast %54 : vector<1x1x32x32xf32> to vector<32x32xf32>
    %cst_67 = arith.constant dense<0.000000e+00> : vector<32x32xf32>
    %56 = tpu.matmul %53, %55, %cst_67 {dimension_numbers = #tpu.dot_dimension_numbers<[1], [0], [0], [1], [0, 0, 1, 1], [], []>, precision = #tpu.contract_precision<fp32>} : vector<32x32xf32>, vector<32x32xf32>, vector<32x32xf32> -> vector<32x32xf32>
    %57 = arith.addf %51, %56 : vector<32x32xf32>
    %c0_68 = arith.constant 0 : index
    %c12 = arith.constant 12 : index
    %c0_69 = arith.constant 0 : index
    %58 = vector.load %arg6[%c0_68, %c12, %c0_69] : memref<2x32x32xf32, #tpu.memory_space<vmem>>, vector<2x16x32xf32>
    %59 = vector.shape_cast %58 : vector<2x16x32xf32> to vector<32x32xf32>
    %c0_70 = arith.constant 0 : index
    %c8_71 = arith.constant 8 : index
    %c0_72 = arith.constant 0 : index
    %c0_73 = arith.constant 0 : index
    %60 = vector.load %arg3[%c0_70, %c8_71, %c0_72, %c0_73] : memref<2x9x32x32xf32, #tpu.memory_space<vmem>>, vector<1x1x32x32xf32>
    %61 = vector.shape_cast %60 : vector<1x1x32x32xf32> to vector<32x32xf32>
    %cst_74 = arith.constant dense<0.000000e+00> : vector<32x32xf32>
    %62 = tpu.matmul %59, %61, %cst_74 {dimension_numbers = #tpu.dot_dimension_numbers<[1], [0], [0], [1], [0, 0, 1, 1], [], []>, precision = #tpu.contract_precision<fp32>} : vector<32x32xf32>, vector<32x32xf32>, vector<32x32xf32> -> vector<32x32xf32>
    %63 = arith.addf %57, %62 : vector<32x32xf32>
    %64 = vector.shape_cast %63 : vector<32x32xf32> to vector<2x16x32xf32>
    %65 = arith.addf %3, %64 : vector<2x16x32xf32>
    %c0_75 = arith.constant 0 : index
    %c0_76 = arith.constant 0 : index
    %c0_77 = arith.constant 0 : index
    %66 = vector.load %arg4[%c0_75, %c0_76, %c0_77] : memref<2x1x32xf32, #tpu.memory_space<vmem>>, vector<1x1x32xf32>
    %67 = vector.shape_cast %66 : vector<1x1x32xf32> to vector<1x32xf32>
    %68 = vector.shape_cast %67 : vector<1x32xf32> to vector<1x1x32xf32>
    %69 = vector.broadcast %68 : vector<1x1x32xf32> to vector<2x16x32xf32>
    %70 = arith.addf %65, %69 : vector<2x16x32xf32>
    %c0_78 = arith.constant 0 : index
    %c7_79 = arith.constant 7 : index
    %c0_80 = arith.constant 0 : index
    %71 = vector.load %arg6[%c0_78, %c7_79, %c0_80] : memref<2x32x32xf32, #tpu.memory_space<vmem>>, vector<2x16x32xf32>
    %c0_81 = arith.constant 0 : index
    %c9_82 = arith.constant 9 : index
    %c0_83 = arith.constant 0 : index
    %72 = vector.load %arg6[%c0_81, %c9_82, %c0_83] : memref<2x32x32xf32, #tpu.memory_space<vmem>>, vector<2x16x32xf32>
    %c0_84 = arith.constant 0 : index
    %c6_85 = arith.constant 6 : index
    %73 = memref.load %arg1[%c0_84, %c6_85] : memref<2x10xf32, #tpu.memory_space<smem>>
    %c0_86 = arith.constant 0 : index
    %c7_87 = arith.constant 7 : index
    %74 = memref.load %arg1[%c0_86, %c7_87] : memref<2x10xf32, #tpu.memory_space<smem>>
    %c0_88 = arith.constant 0 : index
    %c8_89 = arith.constant 8 : index
    %75 = memref.load %arg1[%c0_88, %c8_89] : memref<2x10xf32, #tpu.memory_space<smem>>
    %76 = arith.maximumf %71, %7 : vector<2x16x32xf32>
    %77 = arith.maximumf %76, %72 : vector<2x16x32xf32>
    %78 = vector.broadcast %73 : f32 to vector<2x16x32xf32>
    %79 = arith.mulf %78, %77 : vector<2x16x32xf32>
    %80 = arith.addf %70, %79 : vector<2x16x32xf32>
    %cst_90 = arith.constant 0.333333343 : f32
    %81 = arith.mulf %74, %cst_90 : f32
    %82 = arith.addf %71, %7 : vector<2x16x32xf32>
    %83 = arith.addf %82, %72 : vector<2x16x32xf32>
    %84 = vector.broadcast %81 : f32 to vector<2x16x32xf32>
    %85 = arith.mulf %84, %83 : vector<2x16x32xf32>
    %86 = arith.addf %80, %85 : vector<2x16x32xf32>
    %87 = vector.broadcast %75 : f32 to vector<2x16x32xf32>
    %88 = arith.mulf %87, %7 : vector<2x16x32xf32>
    %89 = arith.addf %86, %88 : vector<2x16x32xf32>
    %c1_91 = arith.constant 1 : index
    %c0_92 = arith.constant 0 : index
    %c0_93 = arith.constant 0 : index
    %c0_94 = arith.constant 0 : index
    %90 = vector.load %arg2[%c1_91, %c0_92, %c0_93, %c0_94] : memref<2x2x16x32xf32, #tpu.memory_space<vmem>>, vector<1x2x16x32xf32>
    %91 = vector.shape_cast %90 : vector<1x2x16x32xf32> to vector<2x16x32xf32>
    %cst_95 = arith.constant 0.000000e+00 : f32
    %92 = vector.broadcast %cst_95 : f32 to vector<2x16x32xf32>
    %93 = arith.maximumf %91, %92 : vector<2x16x32xf32>
    %c0_96 = arith.constant 0 : index
    %c8_97 = arith.constant 8 : index
    %c0_98 = arith.constant 0 : index
    %94 = vector.load %arg6[%c0_96, %c8_97, %c0_98] : memref<2x32x32xf32, #tpu.memory_space<vmem>>, vector<2x16x32xf32>
    tpu.vector_store %arg6[%c0_96, %c8_97, %c0_98], %93 {strides = array<i32>} : memref<2x32x32xf32, #tpu.memory_space<vmem>>, vector<2x16x32xf32>,
    %cst_99 = arith.constant 0.000000e+00 : f32
    %95 = vector.broadcast %cst_99 : f32 to vector<32x32xf32>
    %c0_100 = arith.constant 0 : index
    %c0_101 = arith.constant 0 : index
    %c0_102 = arith.constant 0 : index
    %96 = vector.load %arg6[%c0_100, %c0_101, %c0_102] : memref<2x32x32xf32, #tpu.memory_space<vmem>>, vector<2x16x32xf32>
    %97 = vector.shape_cast %96 : vector<2x16x32xf32> to vector<32x32xf32>
    %c1_103 = arith.constant 1 : index
    %c0_104 = arith.constant 0 : index
    %c0_105 = arith.constant 0 : index
    %c0_106 = arith.constant 0 : index
    %98 = vector.load %arg3[%c1_103, %c0_104, %c0_105, %c0_106] : memref<2x9x32x32xf32, #tpu.memory_space<vmem>>, vector<1x1x32x32xf32>
    %99 = vector.shape_cast %98 : vector<1x1x32x32xf32> to vector<32x32xf32>
    %cst_107 = arith.constant dense<0.000000e+00> : vector<32x32xf32>
    %100 = tpu.matmul %97, %99, %cst_107 {dimension_numbers = #tpu.dot_dimension_numbers<[1], [0], [0], [1], [0, 0, 1, 1], [], []>, precision = #tpu.contract_precision<fp32>} : vector<32x32xf32>, vector<32x32xf32>, vector<32x32xf32> -> vector<32x32xf32>
    %101 = arith.addf %95, %100 : vector<32x32xf32>
    %c0_108 = arith.constant 0 : index
    %c2_109 = arith.constant 2 : index
    %c0_110 = arith.constant 0 : index
    %102 = vector.load %arg6[%c0_108, %c2_109, %c0_110] : memref<2x32x32xf32, #tpu.memory_space<vmem>>, vector<2x16x32xf32>
    %103 = vector.shape_cast %102 : vector<2x16x32xf32> to vector<32x32xf32>
    %c1_111 = arith.constant 1 : index
    %c1_112 = arith.constant 1 : index
    %c0_113 = arith.constant 0 : index
    %c0_114 = arith.constant 0 : index
    %104 = vector.load %arg3[%c1_111, %c1_112, %c0_113, %c0_114] : memref<2x9x32x32xf32, #tpu.memory_space<vmem>>, vector<1x1x32x32xf32>
    %105 = vector.shape_cast %104 : vector<1x1x32x32xf32> to vector<32x32xf32>
    %cst_115 = arith.constant dense<0.000000e+00> : vector<32x32xf32>
    %106 = tpu.matmul %103, %105, %cst_115 {dimension_numbers = #tpu.dot_dimension_numbers<[1], [0], [0], [1], [0, 0, 1, 1], [], []>, precision = #tpu.contract_precision<fp32>} : vector<32x32xf32>, vector<32x32xf32>, vector<32x32xf32> -> vector<32x32xf32>
    %107 = arith.addf %101, %106 : vector<32x32xf32>
    %c0_116 = arith.constant 0 : index
    %c4_117 = arith.constant 4 : index
    %c0_118 = arith.constant 0 : index
    %108 = vector.load %arg6[%c0_116, %c4_117, %c0_118] : memref<2x32x32xf32, #tpu.memory_space<vmem>>, vector<2x16x32xf32>
    %109 = vector.shape_cast %108 : vector<2x16x32xf32> to vector<32x32xf32>
    %c1_119 = arith.constant 1 : index
    %c2_120 = arith.constant 2 : index
    %c0_121 = arith.constant 0 : index
    %c0_122 = arith.constant 0 : index
    %110 = vector.load %arg3[%c1_119, %c2_120, %c0_121, %c0_122] : memref<2x9x32x32xf32, #tpu.memory_space<vmem>>, vector<1x1x32x32xf32>
    %111 = vector.shape_cast %110 : vector<1x1x32x32xf32> to vector<32x32xf32>
    %cst_123 = arith.constant dense<0.000000e+00> : vector<32x32xf32>
    %112 = tpu.matmul %109, %111, %cst_123 {dimension_numbers = #tpu.dot_dimension_numbers<[1], [0], [0], [1], [0, 0, 1, 1], [], []>, precision = #tpu.contract_precision<fp32>} : vector<32x32xf32>, vector<32x32xf32>, vector<32x32xf32> -> vector<32x32xf32>
    %113 = arith.addf %107, %112 : vector<32x32xf32>
    %c0_124 = arith.constant 0 : index
    %c6_125 = arith.constant 6 : index
    %c0_126 = arith.constant 0 : index
    %114 = vector.load %arg6[%c0_124, %c6_125, %c0_126] : memref<2x32x32xf32, #tpu.memory_space<vmem>>, vector<2x16x32xf32>
    %115 = vector.shape_cast %114 : vector<2x16x32xf32> to vector<32x32xf32>
    %c1_127 = arith.constant 1 : index
    %c3_128 = arith.constant 3 : index
    %c0_129 = arith.constant 0 : index
    %c0_130 = arith.constant 0 : index
    %116 = vector.load %arg3[%c1_127, %c3_128, %c0_129, %c0_130] : memref<2x9x32x32xf32, #tpu.memory_space<vmem>>, vector<1x1x32x32xf32>
    %117 = vector.shape_cast %116 : vector<1x1x32x32xf32> to vector<32x32xf32>
    %cst_131 = arith.constant dense<0.000000e+00> : vector<32x32xf32>
    %118 = tpu.matmul %115, %117, %cst_131 {dimension_numbers = #tpu.dot_dimension_numbers<[1], [0], [0], [1], [0, 0, 1, 1], [], []>, precision = #tpu.contract_precision<fp32>} : vector<32x32xf32>, vector<32x32xf32>, vector<32x32xf32> -> vector<32x32xf32>
    %119 = arith.addf %113, %118 : vector<32x32xf32>
    %c0_132 = arith.constant 0 : index
    %c7_133 = arith.constant 7 : index
    %c0_134 = arith.constant 0 : index
    %120 = vector.load %arg6[%c0_132, %c7_133, %c0_134] : memref<2x32x32xf32, #tpu.memory_space<vmem>>, vector<2x16x32xf32>
    %121 = vector.shape_cast %120 : vector<2x16x32xf32> to vector<32x32xf32>
    %c1_135 = arith.constant 1 : index
    %c4_136 = arith.constant 4 : index
    %c0_137 = arith.constant 0 : index
    %c0_138 = arith.constant 0 : index
    %122 = vector.load %arg3[%c1_135, %c4_136, %c0_137, %c0_138] : memref<2x9x32x32xf32, #tpu.memory_space<vmem>>, vector<1x1x32x32xf32>
    %123 = vector.shape_cast %122 : vector<1x1x32x32xf32> to vector<32x32xf32>
    %cst_139 = arith.constant dense<0.000000e+00> : vector<32x32xf32>
    %124 = tpu.matmul %121, %123, %cst_139 {dimension_numbers = #tpu.dot_dimension_numbers<[1], [0], [0], [1], [0, 0, 1, 1], [], []>, precision = #tpu.contract_precision<fp32>} : vector<32x32xf32>, vector<32x32xf32>, vector<32x32xf32> -> vector<32x32xf32>
    %125 = arith.addf %119, %124 : vector<32x32xf32>
    %c0_140 = arith.constant 0 : index
    %c8_141 = arith.constant 8 : index
    %c0_142 = arith.constant 0 : index
    %126 = vector.load %arg6[%c0_140, %c8_141, %c0_142] : memref<2x32x32xf32, #tpu.memory_space<vmem>>, vector<2x16x32xf32>
    %127 = vector.shape_cast %126 : vector<2x16x32xf32> to vector<32x32xf32>
    %c1_143 = arith.constant 1 : index
    %c5_144 = arith.constant 5 : index
    %c0_145 = arith.constant 0 : index
    %c0_146 = arith.constant 0 : index
    %128 = vector.load %arg3[%c1_143, %c5_144, %c0_145, %c0_146] : memref<2x9x32x32xf32, #tpu.memory_space<vmem>>, vector<1x1x32x32xf32>
    %129 = vector.shape_cast %128 : vector<1x1x32x32xf32> to vector<32x32xf32>
    %cst_147 = arith.constant dense<0.000000e+00> : vector<32x32xf32>
    %130 = tpu.matmul %127, %129, %cst_147 {dimension_numbers = #tpu.dot_dimension_numbers<[1], [0], [0], [1], [0, 0, 1, 1], [], []>, precision = #tpu.contract_precision<fp32>} : vector<32x32xf32>, vector<32x32xf32>, vector<32x32xf32> -> vector<32x32xf32>
    %131 = arith.addf %125, %130 : vector<32x32xf32>
    %c0_148 = arith.constant 0 : index
    %c9_149 = arith.constant 9 : index
    %c0_150 = arith.constant 0 : index
    %132 = vector.load %arg6[%c0_148, %c9_149, %c0_150] : memref<2x32x32xf32, #tpu.memory_space<vmem>>, vector<2x16x32xf32>
    %133 = vector.shape_cast %132 : vector<2x16x32xf32> to vector<32x32xf32>
    %c1_151 = arith.constant 1 : index
    %c6_152 = arith.constant 6 : index
    %c0_153 = arith.constant 0 : index
    %c0_154 = arith.constant 0 : index
    %134 = vector.load %arg3[%c1_151, %c6_152, %c0_153, %c0_154] : memref<2x9x32x32xf32, #tpu.memory_space<vmem>>, vector<1x1x32x32xf32>
    %135 = vector.shape_cast %134 : vector<1x1x32x32xf32> to vector<32x32xf32>
    %cst_155 = arith.constant dense<0.000000e+00> : vector<32x32xf32>
    %136 = tpu.matmul %133, %135, %cst_155 {dimension_numbers = #tpu.dot_dimension_numbers<[1], [0], [0], [1], [0, 0, 1, 1], [], []>, precision = #tpu.contract_precision<fp32>} : vector<32x32xf32>, vector<32x32xf32>, vector<32x32xf32> -> vector<32x32xf32>
    %137 = arith.addf %131, %136 : vector<32x32xf32>
    %c0_156 = arith.constant 0 : index
    %c10_157 = arith.constant 10 : index
    %c0_158 = arith.constant 0 : index
    %138 = vector.load %arg6[%c0_156, %c10_157, %c0_158] : memref<2x32x32xf32, #tpu.memory_space<vmem>>, vector<2x16x32xf32>
    %139 = vector.shape_cast %138 : vector<2x16x32xf32> to vector<32x32xf32>
    %c1_159 = arith.constant 1 : index
    %c7_160 = arith.constant 7 : index
    %c0_161 = arith.constant 0 : index
    %c0_162 = arith.constant 0 : index
    %140 = vector.load %arg3[%c1_159, %c7_160, %c0_161, %c0_162] : memref<2x9x32x32xf32, #tpu.memory_space<vmem>>, vector<1x1x32x32xf32>
    %141 = vector.shape_cast %140 : vector<1x1x32x32xf32> to vector<32x32xf32>
    %cst_163 = arith.constant dense<0.000000e+00> : vector<32x32xf32>
    %142 = tpu.matmul %139, %141, %cst_163 {dimension_numbers = #tpu.dot_dimension_numbers<[1], [0], [0], [1], [0, 0, 1, 1], [], []>, precision = #tpu.contract_precision<fp32>} : vector<32x32xf32>, vector<32x32xf32>, vector<32x32xf32> -> vector<32x32xf32>
    %143 = arith.addf %137, %142 : vector<32x32xf32>
    %c0_164 = arith.constant 0 : index
    %c12_165 = arith.constant 12 : index
    %c0_166 = arith.constant 0 : index
    %144 = vector.load %arg6[%c0_164, %c12_165, %c0_166] : memref<2x32x32xf32, #tpu.memory_space<vmem>>, vector<2x16x32xf32>
    %145 = vector.shape_cast %144 : vector<2x16x32xf32> to vector<32x32xf32>
    %c1_167 = arith.constant 1 : index
    %c8_168 = arith.constant 8 : index
    %c0_169 = arith.constant 0 : index
    %c0_170 = arith.constant 0 : index
    %146 = vector.load %arg3[%c1_167, %c8_168, %c0_169, %c0_170] : memref<2x9x32x32xf32, #tpu.memory_space<vmem>>, vector<1x1x32x32xf32>
    %147 = vector.shape_cast %146 : vector<1x1x32x32xf32> to vector<32x32xf32>
    %cst_171 = arith.constant dense<0.000000e+00> : vector<32x32xf32>
    %148 = tpu.matmul %145, %147, %cst_171 {dimension_numbers = #tpu.dot_dimension_numbers<[1], [0], [0], [1], [0, 0, 1, 1], [], []>, precision = #tpu.contract_precision<fp32>} : vector<32x32xf32>, vector<32x32xf32>, vector<32x32xf32> -> vector<32x32xf32>
    %149 = arith.addf %143, %148 : vector<32x32xf32>
    %150 = vector.shape_cast %149 : vector<32x32xf32> to vector<2x16x32xf32>
    %151 = arith.addf %89, %150 : vector<2x16x32xf32>
    %c1_172 = arith.constant 1 : index
    %c0_173 = arith.constant 0 : index
    %c0_174 = arith.constant 0 : index
    %152 = vector.load %arg4[%c1_172, %c0_173, %c0_174] : memref<2x1x32xf32, #tpu.memory_space<vmem>>, vector<1x1x32xf32>
    %153 = vector.shape_cast %152 : vector<1x1x32xf32> to vector<1x32xf32>
    %154 = vector.shape_cast %153 : vector<1x32xf32> to vector<1x1x32xf32>
    %155 = vector.broadcast %154 : vector<1x1x32xf32> to vector<2x16x32xf32>
    %156 = arith.addf %151, %155 : vector<2x16x32xf32>
    %c0_175 = arith.constant 0 : index
    %c7_176 = arith.constant 7 : index
    %c0_177 = arith.constant 0 : index
    %157 = vector.load %arg6[%c0_175, %c7_176, %c0_177] : memref<2x32x32xf32, #tpu.memory_space<vmem>>, vector<2x16x32xf32>
    %c0_178 = arith.constant 0 : index
    %c9_179 = arith.constant 9 : index
    %c0_180 = arith.constant 0 : index
    %158 = vector.load %arg6[%c0_178, %c9_179, %c0_180] : memref<2x32x32xf32, #tpu.memory_space<vmem>>, vector<2x16x32xf32>
    %c1_181 = arith.constant 1 : index
    %c6_182 = arith.constant 6 : index
    %159 = memref.load %arg1[%c1_181, %c6_182] : memref<2x10xf32, #tpu.memory_space<smem>>
    %c1_183 = arith.constant 1 : index
    %c7_184 = arith.constant 7 : index
    %160 = memref.load %arg1[%c1_183, %c7_184] : memref<2x10xf32, #tpu.memory_space<smem>>
    %c1_185 = arith.constant 1 : index
    %c8_186 = arith.constant 8 : index
    %161 = memref.load %arg1[%c1_185, %c8_186] : memref<2x10xf32, #tpu.memory_space<smem>>
    %162 = arith.maximumf %157, %93 : vector<2x16x32xf32>
    %163 = arith.maximumf %162, %158 : vector<2x16x32xf32>
    %164 = vector.broadcast %159 : f32 to vector<2x16x32xf32>
    %165 = arith.mulf %164, %163 : vector<2x16x32xf32>
    %166 = arith.addf %156, %165 : vector<2x16x32xf32>
    %cst_187 = arith.constant 0.333333343 : f32
    %167 = arith.mulf %160, %cst_187 : f32
    %168 = arith.addf %157, %93 : vector<2x16x32xf32>
    %169 = arith.addf %168, %158 : vector<2x16x32xf32>
    %170 = vector.broadcast %167 : f32 to vector<2x16x32xf32>
    %171 = arith.mulf %170, %169 : vector<2x16x32xf32>
    %172 = arith.addf %166, %171 : vector<2x16x32xf32>
    %173 = vector.broadcast %161 : f32 to vector<2x16x32xf32>
    %174 = arith.mulf %173, %93 : vector<2x16x32xf32>
    %175 = arith.addf %172, %174 : vector<2x16x32xf32>
    %c0_188 = arith.constant 0 : index
    %c0_189 = arith.constant 0 : index
    %c0_190 = arith.constant 0 : index
    %176 = vector.load %arg5[%c0_188, %c0_189, %c0_190] : memref<2x16x32xf32, #tpu.memory_space<vmem>>, vector<2x16x32xf32>
    tpu.vector_store %arg5[%c0_188, %c0_189, %c0_190], %175 {strides = array<i32>} : memref<2x16x32xf32, #tpu.memory_space<vmem>>, vector<2x16x32xf32>,
    return
  }
  func.func @transform_0(%arg0: i32) -> (i32, i32) {
    %c0_i32 = arith.constant 0 : i32
    %c0_i32_0 = arith.constant 0 : i32
    %c0_i32_1 = arith.constant 0 : i32
    return %c0_i32, %c0_i32_0 : i32, i32
  }
  func.func @transform_1(%arg0: i32) -> (i32, i32, i32, i32) {
    %c0_i32 = arith.constant 0 : i32
    %c0_i32_0 = arith.constant 0 : i32
    %c0_i32_1 = arith.constant 0 : i32
    %c0_i32_2 = arith.constant 0 : i32
    return %c0_i32, %arg0, %c0_i32_0, %c0_i32_1 : i32, i32, i32, i32
  }
  func.func @transform_2(%arg0: i32) -> (i32, i32, i32, i32) {
    %c0_i32 = arith.constant 0 : i32
    %c0_i32_0 = arith.constant 0 : i32
    %c0_i32_1 = arith.constant 0 : i32
    %c0_i32_2 = arith.constant 0 : i32
    %c0_i32_3 = arith.constant 0 : i32
    return %c0_i32, %c0_i32_0, %c0_i32_1, %c0_i32_2 : i32, i32, i32, i32
  }
  func.func @transform_3(%arg0: i32) -> (i32, i32, i32) {
    %c0_i32 = arith.constant 0 : i32
    %c0_i32_0 = arith.constant 0 : i32
    %c0_i32_1 = arith.constant 0 : i32
    %c0_i32_2 = arith.constant 0 : i32
    return %c0_i32, %c0_i32_0, %c0_i32_1 : i32, i32, i32
  }
  func.func @transform_4(%arg0: i32) -> (i32, i32, i32) {
    %c0_i32 = arith.constant 0 : i32
    %c0_i32_0 = arith.constant 0 : i32
    %c0_i32_1 = arith.constant 0 : i32
    return %arg0, %c0_i32, %c0_i32_0 : i32, i32, i32
  }
}

</mosaic_0001>

<llo_original>
// kernel: tpu_custom_call.1
$region0: #{tpu_custom_call.1}
  #allocation0 [shape = 'u32[]', space=smem, size = 0x4, offset = 0x4, fixed_abs, tag = 'smem constant byte address 0x4 - core index']
  #allocation1 [shape = 'u32[144,128]{1,0:T(1,128)}', space=vmem, size = 0x12000, scoped, tag = 'internal scratch']
  #allocation2 [shape = 'f32[2,32,32]{2,1,0:T(8,128)}', space=vmem, size = 0x8000, scoped, tag = 'scratch operand']
  %s0 = inlined_call_operand.hbm [shape: f32[2,10], index: 0, kind: input, shape index: {}]
  %s1 = inlined_call_operand.hbm [shape: f32[2,2,16,32], index: 1, kind: input, shape index: {}]
  %s2 = inlined_call_operand.hbm [shape: f32[2,9,32,32], index: 2, kind: input, shape index: {}]
  %s3 = inlined_call_operand.vmem [shape: f32[2,1,32], index: 3, kind: input, shape index: {}]
  %s4 = inlined_call_operand.hbm [shape: f32[2,16,32], index: 4, kind: output, shape index: {}]
  %s5 = sld [smem:[#allocation0]]
  $region38: #{tpu_custom_call.1} parent=0
    _
  %s7 = ssub.s32 1, %s5
  %s8 = scalar_select 0, %s7, %s5
  $region1: #{tpu_custom_call.1} parent=0
    #allocation3 [shape = 'u8[1024]{0}', space=smem, size = 0x400, scoped, tag = 'input window, operand 0, single buffered']
    #allocation4 [shape = 's32[1]{0}', space=sflag, size = 0x4, scoped, tag = 'scoped memory for tpu_custom_call.1']
    #allocation5 [shape = 's32[1]{0}', space=sflag, size = 0x4, scoped, tag = 'scoped memory for tpu_custom_call.1']
    #allocation6 [shape = 's32[1]{0}', space=sflag, size = 0x4, scoped, tag = 'scoped memory for tpu_custom_call.1']
    #allocation7 [shape = 'u8[32768]{0}', space=vmem, size = 0x8000, scoped, tag = 'input window, operand 1, single buffered']
    #allocation8 [shape = 'u8[294912]{0}', space=vmem, size = 0x48000, scoped, tag = 'input window, operand 2, single buffered']
    #allocation9 [shape = 's32[1]{0}', space=sflag, size = 0x4, scoped, tag = 'scoped memory for tpu_custom_call.1']
    #allocation10 [shape = 'u8[16384]{0}', space=vmem, size = 0x4000, scoped, tag = 'output window, operand 0, single buffered']
    %9 = vsyncpa [#allocation6], 0
    %10 = vsyncpa [#allocation4], 0
    %11 = vsyncpa [#allocation9], 0
    %12 = vsyncpa [#allocation5], 0
    // Predicated region
    $region2: #{tpu_custom_call.1} parent=1 // pred_check
      _
    $region3: #{tpu_custom_call.1} parent=1 // pred_check_branch
      %14 = sbr.rel (0) target = $region5
    $region4: #{tpu_custom_call.1} parent=1 // pred_region
      %s16 = ssub.s32 32, 32
      %17 = vsyncadd [#allocation6], %s16
      %20 = dma.hbm_to_smem %s0, 32, [#allocation3], [#allocation6]
    $region5: #{tpu_custom_call.1} parent=1 // pred_fallthru
      _
    // Predicated region
    $region6: #{tpu_custom_call.1} parent=1 // pred_check
      _
    $region7: #{tpu_custom_call.1} parent=1 // pred_check_branch
      %22 = sbr.rel (0) target = $region9
    $region8: #{tpu_custom_call.1} parent=1 // pred_region
      %s24 = ssub.s32 1024, 1024
      %25 = vsyncadd [#allocation4], %s24
      %s26 = sshll.u32 [#allocation7], 4
      %s27 = int_to_ptr.vmem [resolvable:$true] %s26
      %32 = dma.hbm_to_vmem [thread:$0]  %s1, 1024, %s27, [#allocation4], 128, 128, 8
    $region9: #{tpu_custom_call.1} parent=1 // pred_fallthru
      _
    // Predicated region
    $region10: #{tpu_custom_call.1} parent=1 // pred_check
      _
    $region11: #{tpu_custom_call.1} parent=1 // pred_check_branch
      %34 = sbr.rel (0) target = $region13
    $region12: #{tpu_custom_call.1} parent=1 // pred_region
      %s36 = ssub.s32 9216, 9216
      %37 = vsyncadd [#allocation9], %s36
      %s38 = sshll.u32 [#allocation8], 4
      %s39 = int_to_ptr.vmem [resolvable:$true] %s38
      %44 = dma.hbm_to_vmem [thread:$0]  %s2, 9216, %s39, [#allocation9], 128, 128, 8
    $region13: #{tpu_custom_call.1} parent=1 // pred_fallthru
      _
    // Predicated region
    $region14: #{tpu_custom_call.1} parent=1 // pred_check
      _
    $region15: #{tpu_custom_call.1} parent=1 // pred_check_branch
      %46 = sbr.rel (0) target = $region17
    $region16: #{tpu_custom_call.1} parent=1 // pred_region
      _
    $region17: #{tpu_custom_call.1} parent=1 // pred_fallthru
      _
    // Predicated region
    $region18: #{tpu_custom_call.1} parent=1 // pred_check
      _
    $region19: #{tpu_custom_call.1} parent=1 // pred_check_branch
      %48 = sbr.rel (0) target = $region21
    $region20: #{tpu_custom_call.1} parent=1 // pred_region
      %49 = dma.done [#allocation6], 32
    $region21: #{tpu_custom_call.1} parent=1 // pred_fallthru
      _
    // Predicated region
    $region22: #{tpu_custom_call.1} parent=1 // pred_check
      _
    $region23: #{tpu_custom_call.1} parent=1 // pred_check_branch
      %51 = sbr.rel (0) target = $region25
    $region24: #{tpu_custom_call.1} parent=1 // pred_region
      %52 = dma.done [#allocation4], 1024
    $region25: #{tpu_custom_call.1} parent=1 // pred_fallthru
      _
    // Predicated region
    $region26: #{tpu_custom_call.1} parent=1 // pred_check
      _
    $region27: #{tpu_custom_call.1} parent=1 // pred_check_branch
      %54 = sbr.rel (0) target = $region29
    $region28: #{tpu_custom_call.1} parent=1 // pred_region
      %55 = dma.done [#allocation9], 9216
    $region29: #{tpu_custom_call.1} parent=1 // pred_fallthru
      _
    %56 = sfence
    %vm57 = vcmask 261120
    %58 = vst.msk [vmem:[#allocation2] sm:$0xff] %vm57, 0.0
    %59 = vst.msk [vmem:[#allocation2 + $0x20] sm:$0xff] %vm57, 0.0
    %60 = vst.msk [vmem:[#allocation2 + $0x18] sm:$0xff] %vm57, 0.0
    %61 = vst.msk [vmem:[#allocation2 + $0x38] sm:$0xff] %vm57, 0.0
    %v62 = vld [vmem:[#allocation7] sm:$0xff]
    %v63 = vld [vmem:[#allocation7 + $0x8] sm:$0xff]
    %v64 = vld [vmem:[#allocation7 + $0x10] sm:$0xff]
    %v65 = vld [vmem:[#allocation7 + $0x18] sm:$0xff]
    %v66 = vmax.f32 %v62, 0.0
    %v67 = vmax.f32 %v63, 0.0
    %v68 = vmax.f32 %v64, 0.0
    %v69 = vmax.f32 %v65, 0.0
    %70 = vst.msk [vmem:[#allocation2 + $0x8] sm:$0xff] %vm57, %v66
    %71 = vst.msk [vmem:[#allocation2 + $0x10] sm:$0xff] %vm57, %v67
    %72 = vst.msk [vmem:[#allocation2 + $0x28] sm:$0xff] %vm57, %v68
    %73 = vst.msk [vmem:[#allocation2 + $0x30] sm:$0xff] %vm57, %v69
    %v74 = vld [vmem:[#allocation2] sm:$0xff]
    %v75 = vld [vmem:[#allocation2 + $0x8] sm:$0xff]
    %v76 = vld [vmem:[#allocation2 + $0x20] sm:$0xff]
    %v77 = vld [vmem:[#allocation2 + $0x28] sm:$0xff]
    %v78 = vld [vmem:[#allocation8] sm:$0xff]
    %v79 = vld [vmem:[#allocation8 + $0x8] sm:$0xff]
    %v80 = vld [vmem:[#allocation8 + $0x10] sm:$0xff]
    %v81 = vld [vmem:[#allocation8 + $0x18] sm:$0xff]
    %v82 = vld [vmem:[#allocation2 + $0x2] sm:$0xff]
    %v83 = vld [vmem:[#allocation2 + $0xa] sm:$0xff]
    %v84 = vld [vmem:[#allocation2 + $0x22] sm:$0xff]
    %v85 = vld [vmem:[#allocation2 + $0x2a] sm:$0xff]
    %s86 = scalar_lea.vmem [#allocation8], 32
    %v87 = vld [vmem:[%s86] sm:$0xff]
    %v88 = vld [vmem:[%s86 + $0x8] sm:$0xff]
    %v89 = vld [vmem:[%s86 + $0x10] sm:$0xff]
    %v90 = vld [vmem:[%s86 + $0x18] sm:$0xff]
    %v92 = vsel %vm57, %v82, 0
    %v95 = vsel %vm57, %v83, 0
    %v98 = vsel %vm57, %v84, 0
    %v101 = vsel %vm57, %v85, 0
    %103 = vmatprep.subr.mxu0 0.0
    %104 = vmatpush1.msra.mxu0 0.0
    %105 = vmatprep.subr.mxu0 0.0
    %106 = vmatpush1.msra.mxu0 0.0
    %107 = vmatprep.subr.mxu0 0.0
    %108 = vmatpush1.msra.mxu0 0.0
    %109 = vmatprep.subr.mxu0 0.0
    %110 = vmatpush1.msra.mxu0 0.0
    %111 = vmatprep.subr.mxu0 0.0
    %112 = vmatpush1.msra.mxu0 0.0
    %113 = vmatprep.subr.mxu0 0.0
    %114 = vmatpush1.msra.mxu0 0.0
    %115 = vmatprep.subr.mxu0 0.0
    %116 = vmatpush1.msra.mxu0 0.0
    %117 = vmatprep.subr.mxu0 0.0
    %118 = vmatpush1.msra.mxu0 0.0
    %119 = vmatprep.subr.mxu0 0.0
    %120 = vmatpush1.msra.mxu0 0.0
    %121 = vmatprep.subr.mxu0 0.0
    %122 = vmatpush1.msra.mxu0 0.0
    %123 = vmatprep.subr.mxu0 0.0
    %124 = vmatpush1.msra.mxu0 0.0
    %125 = vmatprep.subr.mxu0 0.0
    %126 = vmatpush1.msra.mxu0 0.0
    %127 = vmatprep.subr.mxu0 0.0
    %v128 = vand.u32 %v90, 4294901760
    %129 = vmatpush1.msra.mxu0 %v128
    %130 = vmatprep.subr.mxu0 0.0
    %v131 = vand.u32 %v89, 4294901760
    %132 = vmatpush1.msra.mxu0 %v131
    %133 = vmatprep.subr.mxu0 0.0
    %v134 = vand.u32 %v88, 4294901760
    %135 = vmatpush1.msra.mxu0 %v134
    %136 = vmatprep.subr.mxu0 0.0
    %v137 = vand.u32 %v87, 4294901760
    %138 = vmatpush1.msra.mxu0 %v137
    %139 = vmatprep.subr.mxu0 0.0
    %140 = vmatpush2.msra.mxu0 0.0
    %141 = vmatprep.subr.mxu0 0.0
    %142 = vmatpush2.msra.mxu0 0.0
    %143 = vmatprep.subr.mxu0 0.0
    %144 = vmatpush2.msra.mxu0 0.0
    %145 = vmatprep.subr.mxu0 0.0
    %146 = vmatpush2.msra.mxu0 0.0
    %147 = vmatprep.subr.mxu0 0.0
    %148 = vmatpush2.msra.mxu0 0.0
    %149 = vmatprep.subr.mxu0 0.0
    %150 = vmatpush2.msra.mxu0 0.0
    %151 = vmatprep.subr.mxu0 0.0
    %152 = vmatpush2.msra.mxu0 0.0
    %153 = vmatprep.subr.mxu0 0.0
    %154 = vmatpush2.msra.mxu0 0.0
    %155 = vmatprep.subr.mxu0 0.0
    %156 = vmatpush2.msra.mxu0 0.0
    %157 = vmatprep.subr.mxu0 0.0
    %158 = vmatpush2.msra.mxu0 0.0
    %159 = vmatprep.subr.mxu0 0.0
    %160 = vmatpush2.msra.mxu0 0.0
    %161 = vmatprep.subr.mxu0 0.0
    %162 = vmatpush2.msra.mxu0 0.0
    %163 = vmatprep.subr.mxu0 0.0
    %164 = vmatpush2.msra.mxu0 0.0
    %165 = vmatprep.subr.mxu0 0.0
    %166 = vmatpush2.msra.mxu0 0.0
    %167 = vmatprep.subr.mxu0 0.0
    %168 = vmatpush2.msra.mxu0 0.0
    %169 = vmatprep.subr.mxu0 0.0
    %170 = vmatpush2.msra.mxu0 0.0
    %171 = vmatprep.mubr.f32.mxu0 0.0
    %v172 = vand.u32 %v92, 4294901760
    %v173 = vsub.f32 %v92, %v172
    %v174 = vand.u32 %v173, 4294901760
    %v175 = vsub.f32 %v173, %v174
    %v176 = vand.u32 %v175, 4294901760
    %177 = vmatmul.mubr.f32.gmra.mxu0 %v176
    %v178 = vpop.f32.mrf.mxu0
    %v179 = vadd.f32 0.0, %v178
    %v180 = vpop.f32.mrf.mxu0
    %181 = vmatprep.mubr.f32.mxu0 0.0
    %v182 = vand.u32 %v95, 4294901760
    %v183 = vsub.f32 %v95, %v182
    %v184 = vand.u32 %v183, 4294901760
    %v185 = vsub.f32 %v183, %v184
    %v186 = vand.u32 %v185, 4294901760
    %187 = vmatmul.mubr.f32.gmra.mxu0 %v186
    %v188 = vpop.f32.mrf.mxu0
    %v189 = vadd.f32 0.0, %v188
    %v190 = vpop.f32.mrf.mxu0
    %191 = vmatprep.mubr.f32.mxu0 0.0
    %v192 = vand.u32 %v98, 4294901760
    %v193 = vsub.f32 %v98, %v192
    %v194 = vand.u32 %v193, 4294901760
    %v195 = vsub.f32 %v193, %v194
    %v196 = vand.u32 %v195, 4294901760
    %197 = vmatmul.mubr.f32.gmra.mxu0 %v196
    %v198 = vpop.f32.mrf.mxu0
    %v199 = vadd.f32 0.0, %v198
    %v200 = vpop.f32.mrf.mxu0
    %201 = vmatprep.mubr.f32.mxu0 0.0
    %v202 = vand.u32 %v101, 4294901760
    %v203 = vsub.f32 %v101, %v202
    %v204 = vand.u32 %v203, 4294901760
    %v205 = vsub.f32 %v203, %v204
    %v206 = vand.u32 %v205, 4294901760
    %207 = vmatmul.mubr.f32.gmra.mxu0 %v206
    %v208 = vpop.f32.mrf.mxu0
    %v209 = vadd.f32 0.0, %v208
    %v210 = vpop.f32.mrf.mxu0
    %211 = vdwg.mxu0
    %212 = vmatprep.subr.mxu0 0.0
    %213 = vmatpush1.msra.mxu0 0.0
    %214 = vmatprep.subr.mxu0 0.0
    %215 = vmatpush1.msra.mxu0 0.0
    %216 = vmatprep.subr.mxu0 0.0
    %217 = vmatpush1.msra.mxu0 0.0
    %218 = vmatprep.subr.mxu0 0.0
    %219 = vmatpush1.msra.mxu0 0.0
    %220 = vmatprep.subr.mxu0 0.0
    %221 = vmatpush1.msra.mxu0 0.0
    %222 = vmatprep.subr.mxu0 0.0
    %223 = vmatpush1.msra.mxu0 0.0
    %224 = vmatprep.subr.mxu0 0.0
    %225 = vmatpush1.msra.mxu0 0.0
    %226 = vmatprep.subr.mxu0 0.0
    %227 = vmatpush1.msra.mxu0 0.0
    %228 = vmatprep.subr.mxu0 0.0
    %229 = vmatpush1.msra.mxu0 0.0
    %230 = vmatprep.subr.mxu0 0.0
    %231 = vmatpush1.msra.mxu0 0.0
    %232 = vmatprep.subr.mxu0 0.0
    %233 = vmatpush1.msra.mxu0 0.0
    %234 = vmatprep.subr.mxu0 0.0
    %235 = vmatpush1.msra.mxu0 0.0
    %236 = vmatprep.subr.mxu0 0.0
    %v237 = vand.u32 %v90, 4294901760
    %v238 = vsub.f32 %v90, %v237
    %v239 = vand.u32 %v238, 4294901760
    %v240 = vsub.f32 %v238, %v239
    %v241 = vand.u32 %v240, 4294901760
    %242 = vmatpush1.msra.mxu0 %v241
    %243 = vmatprep.subr.mxu0 0.0
    %v244 = vand.u32 %v89, 4294901760
    %v245 = vsub.f32 %v89, %v244
    %v246 = vand.u32 %v245, 4294901760
    %v247 = vsub.f32 %v245, %v246
    %v248 = vand.u32 %v247, 4294901760
    %249 = vmatpush1.msra.mxu0 %v248
    %250 = vmatprep.subr.mxu0 0.0
    %v251 = vand.u32 %v88, 4294901760
    %v252 = vsub.f32 %v88, %v251
    %v253 = vand.u32 %v252, 4294901760
    %v254 = vsub.f32 %v252, %v253
    %v255 = vand.u32 %v254, 4294901760
    %256 = vmatpush1.msra.mxu0 %v255
    %257 = vmatprep.subr.mxu0 0.0
    %v258 = vand.u32 %v87, 4294901760
    %v259 = vsub.f32 %v87, %v258
    %v260 = vand.u32 %v259, 4294901760
    %v261 = vsub.f32 %v259, %v260
    %v262 = vand.u32 %v261, 4294901760
    %263 = vmatpush1.msra.mxu0 %v262
    %264 = vmatprep.subr.mxu0 0.0
    %265 = vmatpush2.msra.mxu0 0.0
    %266 = vmatprep.subr.mxu0 0.0
    %267 = vmatpush2.msra.mxu0 0.0
    %268 = vmatprep.subr.mxu0 0.0
    %269 = vmatpush2.msra.mxu0 0.0
    %270 = vmatprep.subr.mxu0 0.0
    %271 = vmatpush2.msra.mxu0 0.0
    %272 = vmatprep.subr.mxu0 0.0
    %273 = vmatpush2.msra.mxu0 0.0
    %274 = vmatprep.subr.mxu0 0.0
    %275 = vmatpush2.msra.mxu0 0.0
    %276 = vmatprep.subr.mxu0 0.0
    %277 = vmatpush2.msra.mxu0 0.0
    %278 = vmatprep.subr.mxu0 0.0
    %279 = vmatpush2.msra.mxu0 0.0
    %280 = vmatprep.subr.mxu0 0.0
    %281 = vmatpush2.msra.mxu0 0.0
    %282 = vmatprep.subr.mxu0 0.0
    %283 = vmatpush2.msra.mxu0 0.0
    %284 = vmatprep.subr.mxu0 0.0
    %285 = vmatpush2.msra.mxu0 0.0
    %286 = vmatprep.subr.mxu0 0.0
    %287 = vmatpush2.msra.mxu0 0.0
    %288 = vmatprep.subr.mxu0 0.0
    %289 = vmatpush2.msra.mxu0 0.0
    %290 = vmatprep.subr.mxu0 0.0
    %291 = vmatpush2.msra.mxu0 0.0
    %292 = vmatprep.subr.mxu0 0.0
    %293 = vmatpush2.msra.mxu0 0.0
    %294 = vmatprep.subr.mxu0 0.0
    %295 = vmatpush2.msra.mxu0 0.0
    %296 = vmatprep.mubr.f32.mxu0 0.0
    %v297 = vand.u32 %v92, 4294901760
    %298 = vmatmul.mubr.f32.gmra.mxu0 %v297
    %v299 = vpop.f32.mrf.mxu0
    %v300 = vadd.f32 %v179, %v299
    %v301 = vpop.f32.mrf.mxu0
    %302 = vmatprep.mubr.f32.mxu0 0.0
    %v303 = vand.u32 %v95, 4294901760
    %304 = vmatmul.mubr.f32.gmra.mxu0 %v303
    %v305 = vpop.f32.mrf.mxu0
    %v306 = vadd.f32 %v189, %v305
    %v307 = vpop.f32.mrf.mxu0
    %308 = vmatprep.mubr.f32.mxu0 0.0
    %v309 = vand.u32 %v98, 4294901760
    %310 = vmatmul.mubr.f32.gmra.mxu0 %v309
    %v311 = vpop.f32.mrf.mxu0
    %v312 = vadd.f32 %v199, %v311
    %v313 = vpop.f32.mrf.mxu0
    %314 = vmatprep.mubr.f32.mxu0 0.0
    %v315 = vand.u32 %v101, 4294901760
    %316 = vmatmul.mubr.f32.gmra.mxu0 %v315
    %v317 = vpop.f32.mrf.mxu0
    %v318 = vadd.f32 %v209, %v317
    %v319 = vpop.f32.mrf.mxu0
    %320 = vdwg.mxu0
    %321 = vmatprep.subr.mxu0 0.0
    %322 = vmatpush1.msra.mxu0 0.0
    %323 = vmatprep.subr.mxu0 0.0
    %324 = vmatpush1.msra.mxu0 0.0
    %325 = vmatprep.subr.mxu0 0.0
    %326 = vmatpush1.msra.mxu0 0.0
    %327 = vmatprep.subr.mxu0 0.0
    %328 = vmatpush1.msra.mxu0 0.0
    %329 = vmatprep.subr.mxu0 0.0
    %330 = vmatpush1.msra.mxu0 0.0
    %331 = vmatprep.subr.mxu0 0.0
    %332 = vmatpush1.msra.mxu0 0.0
    %333 = vmatprep.subr.mxu0 0.0
    %334 = vmatpush1.msra.mxu0 0.0
    %335 = vmatprep.subr.mxu0 0.0
    %336 = vmatpush1.msra.mxu0 0.0
    %337 = vmatprep.subr.mxu0 0.0
    %338 = vmatpush1.msra.mxu0 0.0
    %339 = vmatprep.subr.mxu0 0.0
    %340 = vmatpush1.msra.mxu0 0.0
    %341 = vmatprep.subr.mxu0 0.0
    %342 = vmatpush1.msra.mxu0 0.0
    %343 = vmatprep.subr.mxu0 0.0
    %344 = vmatpush1.msra.mxu0 0.0
    %345 = vmatprep.subr.mxu0 0.0
    %v346 = vand.u32 %v90, 4294901760
    %v347 = vsub.f32 %v90, %v346
    %348 = vmatpush1.msra.mxu0 %v347
    %349 = vmatprep.subr.mxu0 0.0
    %v350 = vand.u32 %v89, 4294901760
    %v351 = vsub.f32 %v89, %v350
    %352 = vmatpush1.msra.mxu0 %v351
    %353 = vmatprep.subr.mxu0 0.0
    %v354 = vand.u32 %v88, 4294901760
    %v355 = vsub.f32 %v88, %v354
    %356 = vmatpush1.msra.mxu0 %v355
    %357 = vmatprep.subr.mxu0 0.0
    %v358 = vand.u32 %v87, 4294901760
    %v359 = vsub.f32 %v87, %v358
    %360 = vmatpush1.msra.mxu0 %v359
    %361 = vmatprep.subr.mxu0 0.0
    %362 = vmatpush2.msra.mxu0 0.0
    %363 = vmatprep.subr.mxu0 0.0
    %364 = vmatpush2.msra.mxu0 0.0
    %365 = vmatprep.subr.mxu0 0.0
    %366 = vmatpush2.msra.mxu0 0.0
    %367 = vmatprep.subr.mxu0 0.0
    %368 = vmatpush2.msra.mxu0 0.0
    %369 = vmatprep.subr.mxu0 0.0
    %370 = vmatpush2.msra.mxu0 0.0
    %371 = vmatprep.subr.mxu0 0.0
    %372 = vmatpush2.msra.mxu0 0.0
    %373 = vmatprep.subr.mxu0 0.0
    %374 = vmatpush2.msra.mxu0 0.0
    %375 = vmatprep.subr.mxu0 0.0
    %376 = vmatpush2.msra.mxu0 0.0
    %377 = vmatprep.subr.mxu0 0.0
    %378 = vmatpush2.msra.mxu0 0.0
    %379 = vmatprep.subr.mxu0 0.0
    %380 = vmatpush2.msra.mxu0 0.0
    %381 = vmatprep.subr.mxu0 0.0
    %382 = vmatpush2.msra.mxu0 0.0
    %383 = vmatprep.subr.mxu0 0.0
    %384 = vmatpush2.msra.mxu0 0.0
    %385 = vmatprep.subr.mxu0 0.0
    %386 = vmatpush2.msra.mxu0 0.0
    %387 = vmatprep.subr.mxu0 0.0
    %388 = vmatpush2.msra.mxu0 0.0
    %389 = vmatprep.subr.mxu0 0.0
    %390 = vmatpush2.msra.mxu0 0.0
    %391 = vmatprep.subr.mxu0 0.0
    %392 = vmatpush2.msra.mxu0 0.0
    %393 = vmatprep.mubr.f32.mxu0 0.0
    %v394 = vand.u32 %v92, 4294901760
    %v395 = vsub.f32 %v92, %v394
    %396 = vmatmul.mubr.f32.gmra.mxu0 %v395
    %v397 = vpop.f32.mrf.mxu0
    %v398 = vadd.f32 %v300, %v397
    %v399 = vpop.f32.mrf.mxu0
    %400 = vmatprep.mubr.f32.mxu0 0.0
    %v401 = vand.u32 %v95, 4294901760
    %v402 = vsub.f32 %v95, %v401
    %403 = vmatmul.mubr.f32.gmra.mxu0 %v402
    %v404 = vpop.f32.mrf.mxu0
    %v405 = vadd.f32 %v306, %v404
    %v406 = vpop.f32.mrf.mxu0
    %407 = vmatprep.mubr.f32.mxu0 0.0
    %v408 = vand.u32 %v98, 4294901760
    %v409 = vsub.f32 %v98, %v408
    %410 = vmatmul.mubr.f32.gmra.mxu0 %v409
    %v411 = vpop.f32.mrf.mxu0
    %v412 = vadd.f32 %v312, %v411
    %v413 = vpop.f32.mrf.mxu0
    %414 = vmatprep.mubr.f32.mxu0 0.0
    %v415 = vand.u32 %v101, 4294901760
    %v416 = vsub.f32 %v101, %v415
    %417 = vmatmul.mubr.f32.gmra.mxu0 %v416
    %v418 = vpop.f32.mrf.mxu0
    %v419 = vadd.f32 %v318, %v418
    %v420 = vpop.f32.mrf.mxu0
    %421 = vdwg.mxu0
    %422 = vmatprep.subr.mxu0 0.0
    %423 = vmatpush1.msra.mxu0 0.0
    %424 = vmatprep.subr.mxu0 0.0
    %425 = vmatpush1.msra.mxu0 0.0
    %426 = vmatprep.subr.mxu0 0.0
    %427 = vmatpush1.msra.mxu0 0.0
    %428 = vmatprep.subr.mxu0 0.0
    %429 = vmatpush1.msra.mxu0 0.0
    %430 = vmatprep.subr.mxu0 0.0
    %431 = vmatpush1.msra.mxu0 0.0
    %432 = vmatprep.subr.mxu0 0.0
    %433 = vmatpush1.msra.mxu0 0.0
    %434 = vmatprep.subr.mxu0 0.0
    %435 = vmatpush1.msra.mxu0 0.0
    %436 = vmatprep.subr.mxu0 0.0
    %437 = vmatpush1.msra.mxu0 0.0
    %438 = vmatprep.subr.mxu0 0.0
    %439 = vmatpush1.msra.mxu0 0.0
    %440 = vmatprep.subr.mxu0 0.0
    %441 = vmatpush1.msra.mxu0 0.0
    %442 = vmatprep.subr.mxu0 0.0
    %443 = vmatpush1.msra.mxu0 0.0
    %444 = vmatprep.subr.mxu0 0.0
    %445 = vmatpush1.msra.mxu0 0.0
    %446 = vmatprep.subr.mxu0 0.0
    %v447 = vand.u32 %v90, 4294901760
    %448 = vmatpush1.msra.mxu0 %v447
    %449 = vmatprep.subr.mxu0 0.0
    %v450 = vand.u32 %v89, 4294901760
    %451 = vmatpush1.msra.mxu0 %v450
    %452 = vmatprep.subr.mxu0 0.0
    %v453 = vand.u32 %v88, 4294901760
    %454 = vmatpush1.msra.mxu0 %v453
    %455 = vmatprep.subr.mxu0 0.0
    %v456 = vand.u32 %v87, 4294901760
    %457 = vmatpush1.msra.mxu0 %v456
    %458 = vmatprep.subr.mxu0 0.0
    %459 = vmatpush2.msra.mxu0 0.0
    %460 = vmatprep.subr.mxu0 0.0
    %461 = vmatpush2.msra.mxu0 0.0
    %462 = vmatprep.subr.mxu0 0.0
    %463 = vmatpush2.msra.mxu0 0.0
    %464 = vmatprep.subr.mxu0 0.0
    %465 = vmatpush2.msra.mxu0 0.0
    %466 = vmatprep.subr.mxu0 0.0
    %467 = vmatpush2.msra.mxu0 0.0
    %468 = vmatprep.subr.mxu0 0.0
    %469 = vmatpush2.msra.mxu0 0.0
    %470 = vmatprep.subr.mxu0 0.0
    %471 = vmatpush2.msra.mxu0 0.0
    %472 = vmatprep.subr.mxu0 0.0
    %473 = vmatpush2.msra.mxu0 0.0
    %474 = vmatprep.subr.mxu0 0.0
    %475 = vmatpush2.msra.mxu0 0.0
    %476 = vmatprep.subr.mxu0 0.0
    %477 = vmatpush2.msra.mxu0 0.0
    %478 = vmatprep.subr.mxu0 0.0
    %479 = vmatpush2.msra.mxu0 0.0
    %480 = vmatprep.subr.mxu0 0.0
    %481 = vmatpush2.msra.mxu0 0.0
    %482 = vmatprep.subr.mxu0 0.0
    %483 = vmatpush2.msra.mxu0 0.0
    %484 = vmatprep.subr.mxu0 0.0
    %485 = vmatpush2.msra.mxu0 0.0
    %486 = vmatprep.subr.mxu0 0.0
    %487 = vmatpush2.msra.mxu0 0.0
    %488 = vmatprep.subr.mxu0 0.0
    %489 = vmatpush2.msra.mxu0 0.0
    %490 = vmatprep.mubr.f32.mxu0 0.0
    %v491 = vand.u32 %v92, 4294901760
    %v492 = vsub.f32 %v92, %v491
    %v493 = vand.u32 %v492, 4294901760
    %494 = vmatmul.mubr.f32.gmra.mxu0 %v493
    %v495 = vpop.f32.mrf.mxu0
    %v496 = vadd.f32 %v398, %v495
    %v497 = vpop.f32.mrf.mxu0
    %498 = vmatprep.mubr.f32.mxu0 0.0
    %v499 = vand.u32 %v95, 4294901760
    %v500 = vsub.f32 %v95, %v499
    %v501 = vand.u32 %v500, 4294901760
    %502 = vmatmul.mubr.f32.gmra.mxu0 %v501
    %v503 = vpop.f32.mrf.mxu0
    %v504 = vadd.f32 %v405, %v503
    %v505 = vpop.f32.mrf.mxu0
    %506 = vmatprep.mubr.f32.mxu0 0.0
    %v507 = vand.u32 %v98, 4294901760
    %v508 = vsub.f32 %v98, %v507
    %v509 = vand.u32 %v508, 4294901760
    %510 = vmatmul.mubr.f32.gmra.mxu0 %v509
    %v511 = vpop.f32.mrf.mxu0
    %v512 = vadd.f32 %v412, %v511
    %v513 = vpop.f32.mrf.mxu0
    %514 = vmatprep.mubr.f32.mxu0 0.0
    %v515 = vand.u32 %v101, 4294901760
    %v516 = vsub.f32 %v101, %v515
    %v517 = vand.u32 %v516, 4294901760
    %518 = vmatmul.mubr.f32.gmra.mxu0 %v517
    %v519 = vpop.f32.mrf.mxu0
    %v520 = vadd.f32 %v419, %v519
    %v521 = vpop.f32.mrf.mxu0
    %522 = vdwg.mxu0
    %523 = vmatprep.subr.mxu0 0.0
    %524 = vmatpush1.msra.mxu0 0.0
    %525 = vmatprep.subr.mxu0 0.0
    %526 = vmatpush1.msra.mxu0 0.0
    %527 = vmatprep.subr.mxu0 0.0
    %528 = vmatpush1.msra.mxu0 0.0
    %529 = vmatprep.subr.mxu0 0.0
    %530 = vmatpush1.msra.mxu0 0.0
    %531 = vmatprep.subr.mxu0 0.0
    %532 = vmatpush1.msra.mxu0 0.0
    %533 = vmatprep.subr.mxu0 0.0
    %534 = vmatpush1.msra.mxu0 0.0
    %535 = vmatprep.subr.mxu0 0.0
    %536 = vmatpush1.msra.mxu0 0.0
    %537 = vmatprep.subr.mxu0 0.0
    %538 = vmatpush1.msra.mxu0 0.0
    %539 = vmatprep.subr.mxu0 0.0
    %540 = vmatpush1.msra.mxu0 0.0
    %541 = vmatprep.subr.mxu0 0.0
    %542 = vmatpush1.msra.mxu0 0.0
    %543 = vmatprep.subr.mxu0 0.0
    %544 = vmatpush1.msra.mxu0 0.0
    %545 = vmatprep.subr.mxu0 0.0
    %546 = vmatpush1.msra.mxu0 0.0
    %547 = vmatprep.subr.mxu0 0.0
    %v548 = vand.u32 %v90, 4294901760
    %v549 = vsub.f32 %v90, %v548
    %v550 = vand.u32 %v549, 4294901760
    %551 = vmatpush1.msra.mxu0 %v550
    %552 = vmatprep.subr.mxu0 0.0
    %v553 = vand.u32 %v89, 4294901760
    %v554 = vsub.f32 %v89, %v553
    %v555 = vand.u32 %v554, 4294901760
    %556 = vmatpush1.msra.mxu0 %v555
    %557 = vmatprep.subr.mxu0 0.0
    %v558 = vand.u32 %v88, 4294901760
    %v559 = vsub.f32 %v88, %v558
    %v560 = vand.u32 %v559, 4294901760
    %561 = vmatpush1.msra.mxu0 %v560
    %562 = vmatprep.subr.mxu0 0.0
    %v563 = vand.u32 %v87, 4294901760
    %v564 = vsub.f32 %v87, %v563
    %v565 = vand.u32 %v564, 4294901760
    %566 = vmatpush1.msra.mxu0 %v565
    %567 = vmatprep.subr.mxu0 0.0
    %568 = vmatpush2.msra.mxu0 0.0
    %569 = vmatprep.subr.mxu0 0.0
    %570 = vmatpush2.msra.mxu0 0.0
    %571 = vmatprep.subr.mxu0 0.0
    %572 = vmatpush2.msra.mxu0 0.0
    %573 = vmatprep.subr.mxu0 0.0
    %574 = vmatpush2.msra.mxu0 0.0
    %575 = vmatprep.subr.mxu0 0.0
    %576 = vmatpush2.msra.mxu0 0.0
    %577 = vmatprep.subr.mxu0 0.0
    %578 = vmatpush2.msra.mxu0 0.0
    %579 = vmatprep.subr.mxu0 0.0
    %580 = vmatpush2.msra.mxu0 0.0
    %581 = vmatprep.subr.mxu0 0.0
    %582 = vmatpush2.msra.mxu0 0.0
    %583 = vmatprep.subr.mxu0 0.0
    %584 = vmatpush2.msra.mxu0 0.0
    %585 = vmatprep.subr.mxu0 0.0
    %586 = vmatpush2.msra.mxu0 0.0
    %587 = vmatprep.subr.mxu0 0.0
    %588 = vmatpush2.msra.mxu0 0.0
    %589 = vmatprep.subr.mxu0 0.0
    %590 = vmatpush2.msra.mxu0 0.0
    %591 = vmatprep.subr.mxu0 0.0
    %592 = vmatpush2.msra.mxu0 0.0
    %593 = vmatprep.subr.mxu0 0.0
    %594 = vmatpush2.msra.mxu0 0.0
    %595 = vmatprep.subr.mxu0 0.0
    %596 = vmatpush2.msra.mxu0 0.0
    %597 = vmatprep.subr.mxu0 0.0
    %598 = vmatpush2.msra.mxu0 0.0
    %599 = vmatprep.mubr.f32.mxu0 0.0
    %v600 = vand.u32 %v92, 4294901760
    %601 = vmatmul.mubr.f32.gmra.mxu0 %v600
    %v602 = vpop.f32.mrf.mxu0
    %v603 = vadd.f32 %v496, %v602
    %v604 = vpop.f32.mrf.mxu0
    %605 = vmatprep.mubr.f32.mxu0 0.0
    %v606 = vand.u32 %v95, 4294901760
    %607 = vmatmul.mubr.f32.gmra.mxu0 %v606
    %v608 = vpop.f32.mrf.mxu0
    %v609 = vadd.f32 %v504, %v608
    %v610 = vpop.f32.mrf.mxu0
    %611 = vmatprep.mubr.f32.mxu0 0.0
    %v612 = vand.u32 %v98, 4294901760
    %613 = vmatmul.mubr.f32.gmra.mxu0 %v612
    %v614 = vpop.f32.mrf.mxu0
    %v615 = vadd.f32 %v512, %v614
    %v616 = vpop.f32.mrf.mxu0
    %617 = vmatprep.mubr.f32.mxu0 0.0
    %v618 = vand.u32 %v101, 4294901760
    %619 = vmatmul.mubr.f32.gmra.mxu0 %v618
    %v620 = vpop.f32.mrf.mxu0
    %v621 = vadd.f32 %v520, %v620
    %v622 = vpop.f32.mrf.mxu0
    %623 = vdwg.mxu0
    %624 = vmatprep.subr.mxu0 0.0
    %625 = vmatpush1.msra.mxu0 0.0
    %626 = vmatprep.subr.mxu0 0.0
    %627 = vmatpush1.msra.mxu0 0.0
    %628 = vmatprep.subr.mxu0 0.0
    %629 = vmatpush1.msra.mxu0 0.0
    %630 = vmatprep.subr.mxu0 0.0
    %631 = vmatpush1.msra.mxu0 0.0
    %632 = vmatprep.subr.mxu0 0.0
    %633 = vmatpush1.msra.mxu0 0.0
    %634 = vmatprep.subr.mxu0 0.0
    %635 = vmatpush1.msra.mxu0 0.0
    %636 = vmatprep.subr.mxu0 0.0
    %637 = vmatpush1.msra.mxu0 0.0
    %638 = vmatprep.subr.mxu0 0.0
    %639 = vmatpush1.msra.mxu0 0.0
    %640 = vmatprep.subr.mxu0 0.0
    %641 = vmatpush1.msra.mxu0 0.0
    %642 = vmatprep.subr.mxu0 0.0
    %643 = vmatpush1.msra.mxu0 0.0
    %644 = vmatprep.subr.mxu0 0.0
    %645 = vmatpush1.msra.mxu0 0.0
    %646 = vmatprep.subr.mxu0 0.0
    %647 = vmatpush1.msra.mxu0 0.0
    %648 = vmatprep.subr.mxu0 0.0
    %v649 = vand.u32 %v90, 4294901760
    %650 = vmatpush1.msra.mxu0 %v649
    %651 = vmatprep.subr.mxu0 0.0
    %v652 = vand.u32 %v89, 4294901760
    %653 = vmatpush1.msra.mxu0 %v652
    %654 = vmatprep.subr.mxu0 0.0
    %v655 = vand.u32 %v88, 4294901760
    %656 = vmatpush1.msra.mxu0 %v655
    %657 = vmatprep.subr.mxu0 0.0
    %v658 = vand.u32 %v87, 4294901760
    %659 = vmatpush1.msra.mxu0 %v658
    %660 = vmatprep.subr.mxu0 0.0
    %661 = vmatpush2.msra.mxu0 0.0
    %662 = vmatprep.subr.mxu0 0.0
    %663 = vmatpush2.msra.mxu0 0.0
    %664 = vmatprep.subr.mxu0 0.0
    %665 = vmatpush2.msra.mxu0 0.0
    %666 = vmatprep.subr.mxu0 0.0
    %667 = vmatpush2.msra.mxu0 0.0
    %668 = vmatprep.subr.mxu0 0.0
    %669 = vmatpush2.msra.mxu0 0.0
    %670 = vmatprep.subr.mxu0 0.0
    %671 = vmatpush2.msra.mxu0 0.0
    %672 = vmatprep.subr.mxu0 0.0
    %673 = vmatpush2.msra.mxu0 0.0
    %674 = vmatprep.subr.mxu0 0.0
    %675 = vmatpush2.msra.mxu0 0.0
    %676 = vmatprep.subr.mxu0 0.0
    %677 = vmatpush2.msra.mxu0 0.0
    %678 = vmatprep.subr.mxu0 0.0
    %679 = vmatpush2.msra.mxu0 0.0
    %680 = vmatprep.subr.mxu0 0.0
    %681 = vmatpush2.msra.mxu0 0.0
    %682 = vmatprep.subr.mxu0 0.0
    %683 = vmatpush2.msra.mxu0 0.0
    %684 = vmatprep.subr.mxu0 0.0
    %685 = vmatpush2.msra.mxu0 0.0
    %686 = vmatprep.subr.mxu0 0.0
    %687 = vmatpush2.msra.mxu0 0.0
    %688 = vmatprep.subr.mxu0 0.0
    %689 = vmatpush2.msra.mxu0 0.0
    %690 = vmatprep.subr.mxu0 0.0
    %691 = vmatpush2.msra.mxu0 0.0
    %692 = vmatprep.mubr.f32.mxu0 0.0
    %v693 = vand.u32 %v92, 4294901760
    %694 = vmatmul.mubr.f32.gmra.mxu0 %v693
    %v695 = vpop.f32.mrf.mxu0
    %v696 = vadd.f32 %v603, %v695
    %v697 = vpop.f32.mrf.mxu0
    %698 = vmatprep.mubr.f32.mxu0 0.0
    %v699 = vand.u32 %v95, 4294901760
    %700 = vmatmul.mubr.f32.gmra.mxu0 %v699
    %v701 = vpop.f32.mrf.mxu0
    %v702 = vadd.f32 %v609, %v701
    %v703 = vpop.f32.mrf.mxu0
    %704 = vmatprep.mubr.f32.mxu0 0.0
    %v705 = vand.u32 %v98, 4294901760
    %706 = vmatmul.mubr.f32.gmra.mxu0 %v705
    %v707 = vpop.f32.mrf.mxu0
    %v708 = vadd.f32 %v615, %v707
    %v709 = vpop.f32.mrf.mxu0
    %710 = vmatprep.mubr.f32.mxu0 0.0
    %v711 = vand.u32 %v101, 4294901760
    %712 = vmatmul.mubr.f32.gmra.mxu0 %v711
    %v713 = vpop.f32.mrf.mxu0
    %v714 = vadd.f32 %v621, %v713
    %v715 = vpop.f32.mrf.mxu0
    %716 = vdwg.mxu0
    %v718 = vsel %vm57, %v74, 0
    %v721 = vsel %vm57, %v75, 0
    %v724 = vsel %vm57, %v76, 0
    %v727 = vsel %vm57, %v77, 0
    %729 = vmatprep.subr.mxu0 0.0
    %730 = vmatpush1.msra.mxu0 0.0
    %731 = vmatprep.subr.mxu0 0.0
    %732 = vmatpush1.msra.mxu0 0.0
    %733 = vmatprep.subr.mxu0 0.0
    %734 = vmatpush1.msra.mxu0 0.0
    %735 = vmatprep.subr.mxu0 0.0
    %736 = vmatpush1.msra.mxu0 0.0
    %737 = vmatprep.subr.mxu0 0.0
    %738 = vmatpush1.msra.mxu0 0.0
    %739 = vmatprep.subr.mxu0 0.0
    %740 = vmatpush1.msra.mxu0 0.0
    %741 = vmatprep.subr.mxu0 0.0
    %742 = vmatpush1.msra.mxu0 0.0
    %743 = vmatprep.subr.mxu0 0.0
    %744 = vmatpush1.msra.mxu0 0.0
    %745 = vmatprep.subr.mxu0 0.0
    %746 = vmatpush1.msra.mxu0 0.0
    %747 = vmatprep.subr.mxu0 0.0
    %748 = vmatpush1.msra.mxu0 0.0
    %749 = vmatprep.subr.mxu0 0.0
    %750 = vmatpush1.msra.mxu0 0.0
    %751 = vmatprep.subr.mxu0 0.0
    %752 = vmatpush1.msra.mxu0 0.0
    %753 = vmatprep.subr.mxu0 0.0
    %v754 = vand.u32 %v81, 4294901760
    %755 = vmatpush1.msra.mxu0 %v754
    %756 = vmatprep.subr.mxu0 0.0
    %v757 = vand.u32 %v80, 4294901760
    %758 = vmatpush1.msra.mxu0 %v757
    %759 = vmatprep.subr.mxu0 0.0
    %v760 = vand.u32 %v79, 4294901760
    %761 = vmatpush1.msra.mxu0 %v760
    %762 = vmatprep.subr.mxu0 0.0
    %v763 = vand.u32 %v78, 4294901760
    %764 = vmatpush1.msra.mxu0 %v763
    %765 = vmatprep.subr.mxu0 0.0
    %766 = vmatpush2.msra.mxu0 0.0
    %767 = vmatprep.subr.mxu0 0.0
    %768 = vmatpush2.msra.mxu0 0.0
    %769 = vmatprep.subr.mxu0 0.0
    %770 = vmatpush2.msra.mxu0 0.0
    %771 = vmatprep.subr.mxu0 0.0
    %772 = vmatpush2.msra.mxu0 0.0
    %773 = vmatprep.subr.mxu0 0.0
    %774 = vmatpush2.msra.mxu0 0.0
    %775 = vmatprep.subr.mxu0 0.0
    %776 = vmatpush2.msra.mxu0 0.0
    %777 = vmatprep.subr.mxu0 0.0
    %778 = vmatpush2.msra.mxu0 0.0
    %779 = vmatprep.subr.mxu0 0.0
    %780 = vmatpush2.msra.mxu0 0.0
    %781 = vmatprep.subr.mxu0 0.0
    %782 = vmatpush2.msra.mxu0 0.0
    %783 = vmatprep.subr.mxu0 0.0
    %784 = vmatpush2.msra.mxu0 0.0
    %785 = vmatprep.subr.mxu0 0.0
    %786 = vmatpush2.msra.mxu0 0.0
    %787 = vmatprep.subr.mxu0 0.0
    %788 = vmatpush2.msra.mxu0 0.0
    %789 = vmatprep.subr.mxu0 0.0
    %790 = vmatpush2.msra.mxu0 0.0
    %791 = vmatprep.subr.mxu0 0.0
    %792 = vmatpush2.msra.mxu0 0.0
    %793 = vmatprep.subr.mxu0 0.0
    %794 = vmatpush2.msra.mxu0 0.0
    %795 = vmatprep.subr.mxu0 0.0
    %796 = vmatpush2.msra.mxu0 0.0
    %797 = vmatprep.mubr.f32.mxu0 0.0
    %v798 = vand.u32 %v718, 4294901760
    %v799 = vsub.f32 %v718, %v798
    %v800 = vand.u32 %v799, 4294901760
    %v801 = vsub.f32 %v799, %v800
    %v802 = vand.u32 %v801, 4294901760
    %803 = vmatmul.mubr.f32.gmra.mxu0 %v802
    %v804 = vpop.f32.mrf.mxu0
    %v805 = vadd.f32 %v696, %v804
    %v806 = vpop.f32.mrf.mxu0
    %807 = vmatprep.mubr.f32.mxu0 0.0
    %v808 = vand.u32 %v721, 4294901760
    %v809 = vsub.f32 %v721, %v808
    %v810 = vand.u32 %v809, 4294901760
    %v811 = vsub.f32 %v809, %v810
    %v812 = vand.u32 %v811, 4294901760
    %813 = vmatmul.mubr.f32.gmra.mxu0 %v812
    %v814 = vpop.f32.mrf.mxu0
    %v815 = vadd.f32 %v702, %v814
    %v816 = vpop.f32.mrf.mxu0
    %817 = vmatprep.mubr.f32.mxu0 0.0
    %v818 = vand.u32 %v724, 4294901760
    %v819 = vsub.f32 %v724, %v818
    %v820 = vand.u32 %v819, 4294901760
    %v821 = vsub.f32 %v819, %v820
    %v822 = vand.u32 %v821, 4294901760
    %823 = vmatmul.mubr.f32.gmra.mxu0 %v822
    %v824 = vpop.f32.mrf.mxu0
    %v825 = vadd.f32 %v708, %v824
    %v826 = vpop.f32.mrf.mxu0
    %827 = vmatprep.mubr.f32.mxu0 0.0
    %v828 = vand.u32 %v727, 4294901760
    %v829 = vsub.f32 %v727, %v828
    %v830 = vand.u32 %v829, 4294901760
    %v831 = vsub.f32 %v829, %v830
    %v832 = vand.u32 %v831, 4294901760
    %833 = vmatmul.mubr.f32.gmra.mxu0 %v832
    %v834 = vpop.f32.mrf.mxu0
    %v835 = vadd.f32 %v714, %v834
    %v836 = vpop.f32.mrf.mxu0
    %837 = vdwg.mxu0
    %838 = vmatprep.subr.mxu0 0.0
    %839 = vmatpush1.msra.mxu0 0.0
    %840 = vmatprep.subr.mxu0 0.0
    %841 = vmatpush1.msra.mxu0 0.0
    %842 = vmatprep.subr.mxu0 0.0
    %843 = vmatpush1.msra.mxu0 0.0
    %844 = vmatprep.subr.mxu0 0.0
    %845 = vmatpush1.msra.mxu0 0.0
    %846 = vmatprep.subr.mxu0 0.0
    %847 = vmatpush1.msra.mxu0 0.0
    %848 = vmatprep.subr.mxu0 0.0
    %849 = vmatpush1.msra.mxu0 0.0
    %850 = vmatprep.subr.mxu0 0.0
    %851 = vmatpush1.msra.mxu0 0.0
    %852 = vmatprep.subr.mxu0 0.0
    %853 = vmatpush1.msra.mxu0 0.0
    %854 = vmatprep.subr.mxu0 0.0
    %855 = vmatpush1.msra.mxu0 0.0
    %856 = vmatprep.subr.mxu0 0.0
    %857 = vmatpush1.msra.mxu0 0.0
    %858 = vmatprep.subr.mxu0 0.0
    %859 = vmatpush1.msra.mxu0 0.0
    %860 = vmatprep.subr.mxu0 0.0
    %861 = vmatpush1.msra.mxu0 0.0
    %862 = vmatprep.subr.mxu0 0.0
    %v863 = vand.u32 %v81, 4294901760
    %v864 = vsub.f32 %v81, %v863
    %v865 = vand.u32 %v864, 4294901760
    %v866 = vsub.f32 %v864, %v865
    %v867 = vand.u32 %v866, 4294901760
    %868 = vmatpush1.msra.mxu0 %v867
    %869 = vmatprep.subr.mxu0 0.0
    %v870 = vand.u32 %v80, 4294901760
    %v871 = vsub.f32 %v80, %v870
    %v872 = vand.u32 %v871, 4294901760
    %v873 = vsub.f32 %v871, %v872
    %v874 = vand.u32 %v873, 4294901760
    %875 = vmatpush1.msra.mxu0 %v874
    %876 = vmatprep.subr.mxu0 0.0
    %v877 = vand.u32 %v79, 4294901760
    %v878 = vsub.f32 %v79, %v877
    %v879 = vand.u32 %v878, 4294901760
    %v880 = vsub.f32 %v878, %v879
    %v881 = vand.u32 %v880, 4294901760
    %882 = vmatpush1.msra.mxu0 %v881
    %883 = vmatprep.subr.mxu0 0.0
    %v884 = vand.u32 %v78, 4294901760
    %v885 = vsub.f32 %v78, %v884
    %v886 = vand.u32 %v885, 4294901760
    %v887 = vsub.f32 %v885, %v886
    %v888 = vand.u32 %v887, 4294901760
    %889 = vmatpush1.msra.mxu0 %v888
    %890 = vmatprep.subr.mxu0 0.0
    %891 = vmatpush2.msra.mxu0 0.0
    %892 = vmatprep.subr.mxu0 0.0
    %893 = vmatpush2.msra.mxu0 0.0
    %894 = vmatprep.subr.mxu0 0.0
    %895 = vmatpush2.msra.mxu0 0.0
    %896 = vmatprep.subr.mxu0 0.0
    %897 = vmatpush2.msra.mxu0 0.0
    %898 = vmatprep.subr.mxu0 0.0
    %899 = vmatpush2.msra.mxu0 0.0
    %900 = vmatprep.subr.mxu0 0.0
    %901 = vmatpush2.msra.mxu0 0.0
    %902 = vmatprep.subr.mxu0 0.0
    %903 = vmatpush2.msra.mxu0 0.0
    %904 = vmatprep.subr.mxu0 0.0
    %905 = vmatpush2.msra.mxu0 0.0
    %906 = vmatprep.subr.mxu0 0.0
    %907 = vmatpush2.msra.mxu0 0.0
    %908 = vmatprep.subr.mxu0 0.0
    %909 = vmatpush2.msra.mxu0 0.0
    %910 = vmatprep.subr.mxu0 0.0
    %911 = vmatpush2.msra.mxu0 0.0
    %912 = vmatprep.subr.mxu0 0.0
    %913 = vmatpush2.msra.mxu0 0.0
    %914 = vmatprep.subr.mxu0 0.0
    %915 = vmatpush2.msra.mxu0 0.0
    %916 = vmatprep.subr.mxu0 0.0
    %917 = vmatpush2.msra.mxu0 0.0
    %918 = vmatprep.subr.mxu0 0.0
    %919 = vmatpush2.msra.mxu0 0.0
    %920 = vmatprep.subr.mxu0 0.0
    %921 = vmatpush2.msra.mxu0 0.0
    %922 = vmatprep.mubr.f32.mxu0 0.0
    %v923 = vand.u32 %v718, 4294901760
    %924 = vmatmul.mubr.f32.gmra.mxu0 %v923
    %v925 = vpop.f32.mrf.mxu0
    %v926 = vadd.f32 %v805, %v925
    %v927 = vpop.f32.mrf.mxu0
    %928 = vmatprep.mubr.f32.mxu0 0.0
    %v929 = vand.u32 %v721, 4294901760
    %930 = vmatmul.mubr.f32.gmra.mxu0 %v929
    %v931 = vpop.f32.mrf.mxu0
    %v932 = vadd.f32 %v815, %v931
    %v933 = vpop.f32.mrf.mxu0
    %934 = vmatprep.mubr.f32.mxu0 0.0
    %v935 = vand.u32 %v724, 4294901760
    %936 = vmatmul.mubr.f32.gmra.mxu0 %v935
    %v937 = vpop.f32.mrf.mxu0
    %v938 = vadd.f32 %v825, %v937
    %v939 = vpop.f32.mrf.mxu0
    %940 = vmatprep.mubr.f32.mxu0 0.0
    %v941 = vand.u32 %v727, 4294901760
    %942 = vmatmul.mubr.f32.gmra.mxu0 %v941
    %v943 = vpop.f32.mrf.mxu0
    %v944 = vadd.f32 %v835, %v943
    %v945 = vpop.f32.mrf.mxu0
    %946 = vdwg.mxu0
    %947 = vmatprep.subr.mxu0 0.0
    %948 = vmatpush1.msra.mxu0 0.0
    %949 = vmatprep.subr.mxu0 0.0
    %950 = vmatpush1.msra.mxu0 0.0
    %951 = vmatprep.subr.mxu0 0.0
    %952 = vmatpush1.msra.mxu0 0.0
    %953 = vmatprep.subr.mxu0 0.0
    %954 = vmatpush1.msra.mxu0 0.0
    %955 = vmatprep.subr.mxu0 0.0
    %956 = vmatpush1.msra.mxu0 0.0
    %957 = vmatprep.subr.mxu0 0.0
    %958 = vmatpush1.msra.mxu0 0.0
    %959 = vmatprep.subr.mxu0 0.0
    %960 = vmatpush1.msra.mxu0 0.0
    %961 = vmatprep.subr.mxu0 0.0
    %962 = vmatpush1.msra.mxu0 0.0
    %963 = vmatprep.subr.mxu0 0.0
    %964 = vmatpush1.msra.mxu0 0.0
    %965 = vmatprep.subr.mxu0 0.0
    %966 = vmatpush1.msra.mxu0 0.0
    %967 = vmatprep.subr.mxu0 0.0
    %968 = vmatpush1.msra.mxu0 0.0
    %969 = vmatprep.subr.mxu0 0.0
    %970 = vmatpush1.msra.mxu0 0.0
    %971 = vmatprep.subr.mxu0 0.0
    %v972 = vand.u32 %v81, 4294901760
    %v973 = vsub.f32 %v81, %v972
    %974 = vmatpush1.msra.mxu0 %v973
    %975 = vmatprep.subr.mxu0 0.0
    %v976 = vand.u32 %v80, 4294901760
    %v977 = vsub.f32 %v80, %v976
    %978 = vmatpush1.msra.mxu0 %v977
    %979 = vmatprep.subr.mxu0 0.0
    %v980 = vand.u32 %v79, 4294901760
    %v981 = vsub.f32 %v79, %v980
    %982 = vmatpush1.msra.mxu0 %v981
    %983 = vmatprep.subr.mxu0 0.0
    %v984 = vand.u32 %v78, 4294901760
    %v985 = vsub.f32 %v78, %v984
    %986 = vmatpush1.msra.mxu0 %v985
    %987 = vmatprep.subr.mxu0 0.0
    %988 = vmatpush2.msra.mxu0 0.0
    %989 = vmatprep.subr.mxu0 0.0
    %990 = vmatpush2.msra.mxu0 0.0
    %991 = vmatprep.subr.mxu0 0.0
    %992 = vmatpush2.msra.mxu0 0.0
    %993 = vmatprep.subr.mxu0 0.0
    %994 = vmatpush2.msra.mxu0 0.0
    %995 = vmatprep.subr.mxu0 0.0
    %996 = vmatpush2.msra.mxu0 0.0
    %997 = vmatprep.subr.mxu0 0.0
    %998 = vmatpush2.msra.mxu0 0.0
    %999 = vmatprep.subr.mxu0 0.0
    %1000 = vmatpush2.msra.mxu0 0.0
    %1001 = vmatprep.subr.mxu0 0.0
    %1002 = vmatpush2.msra.mxu0 0.0
    %1003 = vmatprep.subr.mxu0 0.0
    %1004 = vmatpush2.msra.mxu0 0.0
    %1005 = vmatprep.subr.mxu0 0.0
    %1006 = vmatpush2.msra.mxu0 0.0
    %1007 = vmatprep.subr.mxu0 0.0
    %1008 = vmatpush2.msra.mxu0 0.0
    %1009 = vmatprep.subr.mxu0 0.0
    %1010 = vmatpush2.msra.mxu0 0.0
    %1011 = vmatprep.subr.mxu0 0.0
    %1012 = vmatpush2.msra.mxu0 0.0
    %1013 = vmatprep.subr.mxu0 0.0
    %1014 = vmatpush2.msra.mxu0 0.0
    %1015 = vmatprep.subr.mxu0 0.0
    %1016 = vmatpush2.msra.mxu0 0.0
    %1017 = vmatprep.subr.mxu0 0.0
    %1018 = vmatpush2.msra.mxu0 0.0
    %1019 = vmatprep.mubr.f32.mxu0 0.0
    %v1020 = vand.u32 %v718, 4294901760
    %v1021 = vsub.f32 %v718, %v1020
    %1022 = vmatmul.mubr.f32.gmra.mxu0 %v1021
    %v1023 = vpop.f32.mrf.mxu0
    %v1024 = vadd.f32 %v926, %v1023
    %v1025 = vpop.f32.mrf.mxu0
    %1026 = vmatprep.mubr.f32.mxu0 0.0
    %v1027 = vand.u32 %v721, 4294901760
    %v1028 = vsub.f32 %v721, %v1027
    %1029 = vmatmul.mubr.f32.gmra.mxu0 %v1028
    %v1030 = vpop.f32.mrf.mxu0
    %v1031 = vadd.f32 %v932, %v1030
    %v1032 = vpop.f32.mrf.mxu0
    %1033 = vmatprep.mubr.f32.mxu0 0.0
    %v1034 = vand.u32 %v724, 4294901760
    %v1035 = vsub.f32 %v724, %v1034
    %1036 = vmatmul.mubr.f32.gmra.mxu0 %v1035
    %v1037 = vpop.f32.mrf.mxu0
    %v1038 = vadd.f32 %v938, %v1037
    %v1039 = vpop.f32.mrf.mxu0
    %1040 = vmatprep.mubr.f32.mxu0 0.0
    %v1041 = vand.u32 %v727, 4294901760
    %v1042 = vsub.f32 %v727, %v1041
    %1043 = vmatmul.mubr.f32.gmra.mxu0 %v1042
    %v1044 = vpop.f32.mrf.mxu0
    %v1045 = vadd.f32 %v944, %v1044
    %v1046 = vpop.f32.mrf.mxu0
    %1047 = vdwg.mxu0
    %1048 = vmatprep.subr.mxu0 0.0
    %1049 = vmatpush1.msra.mxu0 0.0
    %1050 = vmatprep.subr.mxu0 0.0
    %1051 = vmatpush1.msra.mxu0 0.0
    %1052 = vmatprep.subr.mxu0 0.0
    %1053 = vmatpush1.msra.mxu0 0.0
    %1054 = vmatprep.subr.mxu0 0.0
    %1055 = vmatpush1.msra.mxu0 0.0
    %1056 = vmatprep.subr.mxu0 0.0
    %1057 = vmatpush1.msra.mxu0 0.0
    %1058 = vmatprep.subr.mxu0 0.0
    %1059 = vmatpush1.msra.mxu0 0.0
    %1060 = vmatprep.subr.mxu0 0.0
    %1061 = vmatpush1.msra.mxu0 0.0
    %1062 = vmatprep.subr.mxu0 0.0
    %1063 = vmatpush1.msra.mxu0 0.0
    %1064 = vmatprep.subr.mxu0 0.0
    %1065 = vmatpush1.msra.mxu0 0.0
    %1066 = vmatprep.subr.mxu0 0.0
    %1067 = vmatpush1.msra.mxu0 0.0
    %1068 = vmatprep.subr.mxu0 0.0
    %1069 = vmatpush1.msra.mxu0 0.0
    %1070 = vmatprep.subr.mxu0 0.0
    %1071 = vmatpush1.msra.mxu0 0.0
    %1072 = vmatprep.subr.mxu0 0.0
    %v1073 = vand.u32 %v81, 4294901760
    %1074 = vmatpush1.msra.mxu0 %v1073
    %1075 = vmatprep.subr.mxu0 0.0
    %v1076 = vand.u32 %v80, 4294901760
    %1077 = vmatpush1.msra.mxu0 %v1076
    %1078 = vmatprep.subr.mxu0 0.0
    %v1079 = vand.u32 %v79, 4294901760
    %1080 = vmatpush1.msra.mxu0 %v1079
    %1081 = vmatprep.subr.mxu0 0.0
    %v1082 = vand.u32 %v78, 4294901760
    %1083 = vmatpush1.msra.mxu0 %v1082
    %1084 = vmatprep.subr.mxu0 0.0
    %1085 = vmatpush2.msra.mxu0 0.0
    %1086 = vmatprep.subr.mxu0 0.0
    %1087 = vmatpush2.msra.mxu0 0.0
    %1088 = vmatprep.subr.mxu0 0.0
    %1089 = vmatpush2.msra.mxu0 0.0
    %1090 = vmatprep.subr.mxu0 0.0
    %1091 = vmatpush2.msra.mxu0 0.0
    %1092 = vmatprep.subr.mxu0 0.0
    %1093 = vmatpush2.msra.mxu0 0.0
    %1094 = vmatprep.subr.mxu0 0.0
    %1095 = vmatpush2.msra.mxu0 0.0
    %1096 = vmatprep.subr.mxu0 0.0
    %1097 = vmatpush2.msra.mxu0 0.0
    %1098 = vmatprep.subr.mxu0 0.0
    %1099 = vmatpush2.msra.mxu0 0.0
    %1100 = vmatprep.subr.mxu0 0.0
    %1101 = vmatpush2.msra.mxu0 0.0
    %1102 = vmatprep.subr.mxu0 0.0
    %1103 = vmatpush2.msra.mxu0 0.0
    %1104 = vmatprep.subr.mxu0 0.0
    %1105 = vmatpush2.msra.mxu0 0.0
    %1106 = vmatprep.subr.mxu0 0.0
    %1107 = vmatpush2.msra.mxu0 0.0
    %1108 = vmatprep.subr.mxu0 0.0
    %1109 = vmatpush2.msra.mxu0 0.0
    %1110 = vmatprep.subr.mxu0 0.0
    %1111 = vmatpush2.msra.mxu0 0.0
    %1112 = vmatprep.subr.mxu0 0.0
    %1113 = vmatpush2.msra.mxu0 0.0
    %1114 = vmatprep.subr.mxu0 0.0
    %1115 = vmatpush2.msra.mxu0 0.0
    %1116 = vmatprep.mubr.f32.mxu0 0.0
    %v1117 = vand.u32 %v718, 4294901760
    %v1118 = vsub.f32 %v718, %v1117
    %v1119 = vand.u32 %v1118, 4294901760
    %1120 = vmatmul.mubr.f32.gmra.mxu0 %v1119
    %v1121 = vpop.f32.mrf.mxu0
    %v1122 = vadd.f32 %v1024, %v1121
    %v1123 = vpop.f32.mrf.mxu0
    %1124 = vmatprep.mubr.f32.mxu0 0.0
    %v1125 = vand.u32 %v721, 4294901760
    %v1126 = vsub.f32 %v721, %v1125
    %v1127 = vand.u32 %v1126, 4294901760
    %1128 = vmatmul.mubr.f32.gmra.mxu0 %v1127
    %v1129 = vpop.f32.mrf.mxu0
    %v1130 = vadd.f32 %v1031, %v1129
    %v1131 = vpop.f32.mrf.mxu0
    %1132 = vmatprep.mubr.f32.mxu0 0.0
    %v1133 = vand.u32 %v724, 4294901760
    %v1134 = vsub.f32 %v724, %v1133
    %v1135 = vand.u32 %v1134, 4294901760
    %1136 = vmatmul.mubr.f32.gmra.mxu0 %v1135
    %v1137 = vpop.f32.mrf.mxu0
    %v1138 = vadd.f32 %v1038, %v1137
    %v1139 = vpop.f32.mrf.mxu0
    %1140 = vmatprep.mubr.f32.mxu0 0.0
    %v1141 = vand.u32 %v727, 4294901760
    %v1142 = vsub.f32 %v727, %v1141
    %v1143 = vand.u32 %v1142, 4294901760
    %1144 = vmatmul.mubr.f32.gmra.mxu0 %v1143
    %v1145 = vpop.f32.mrf.mxu0
    %v1146 = vadd.f32 %v1045, %v1145
    %v1147 = vpop.f32.mrf.mxu0
    %1148 = vdwg.mxu0
    %1149 = vmatprep.subr.mxu0 0.0
    %1150 = vmatpush1.msra.mxu0 0.0
    %1151 = vmatprep.subr.mxu0 0.0
    %1152 = vmatpush1.msra.mxu0 0.0
    %1153 = vmatprep.subr.mxu0 0.0
    %1154 = vmatpush1.msra.mxu0 0.0
    %1155 = vmatprep.subr.mxu0 0.0
    %1156 = vmatpush1.msra.mxu0 0.0
    %1157 = vmatprep.subr.mxu0 0.0
    %1158 = vmatpush1.msra.mxu0 0.0
    %1159 = vmatprep.subr.mxu0 0.0
    %1160 = vmatpush1.msra.mxu0 0.0
    %1161 = vmatprep.subr.mxu0 0.0
    %1162 = vmatpush1.msra.mxu0 0.0
    %1163 = vmatprep.subr.mxu0 0.0
    %1164 = vmatpush1.msra.mxu0 0.0
    %1165 = vmatprep.subr.mxu0 0.0
    %1166 = vmatpush1.msra.mxu0 0.0
    %1167 = vmatprep.subr.mxu0 0.0
    %1168 = vmatpush1.msra.mxu0 0.0
    %1169 = vmatprep.subr.mxu0 0.0
    %1170 = vmatpush1.msra.mxu0 0.0
    %1171 = vmatprep.subr.mxu0 0.0
    %1172 = vmatpush1.msra.mxu0 0.0
    %1173 = vmatprep.subr.mxu0 0.0
    %v1174 = vand.u32 %v81, 4294901760
    %v1175 = vsub.f32 %v81, %v1174
    %v1176 = vand.u32 %v1175, 4294901760
    %1177 = vmatpush1.msra.mxu0 %v1176
    %1178 = vmatprep.subr.mxu0 0.0
    %v1179 = vand.u32 %v80, 4294901760
    %v1180 = vsub.f32 %v80, %v1179
    %v1181 = vand.u32 %v1180, 4294901760
    %1182 = vmatpush1.msra.mxu0 %v1181
    %1183 = vmatprep.subr.mxu0 0.0
    %v1184 = vand.u32 %v79, 4294901760
    %v1185 = vsub.f32 %v79, %v1184
    %v1186 = vand.u32 %v1185, 4294901760
    %1187 = vmatpush1.msra.mxu0 %v1186
    %1188 = vmatprep.subr.mxu0 0.0
    %v1189 = vand.u32 %v78, 4294901760
    %v1190 = vsub.f32 %v78, %v1189
    %v1191 = vand.u32 %v1190, 4294901760
    %1192 = vmatpush1.msra.mxu0 %v1191
    %1193 = vmatprep.subr.mxu0 0.0
    %1194 = vmatpush2.msra.mxu0 0.0
    %1195 = vmatprep.subr.mxu0 0.0
    %1196 = vmatpush2.msra.mxu0 0.0
    %1197 = vmatprep.subr.mxu0 0.0
    %1198 = vmatpush2.msra.mxu0 0.0
    %1199 = vmatprep.subr.mxu0 0.0
    %1200 = vmatpush2.msra.mxu0 0.0
    %1201 = vmatprep.subr.mxu0 0.0
    %1202 = vmatpush2.msra.mxu0 0.0
    %1203 = vmatprep.subr.mxu0 0.0
    %1204 = vmatpush2.msra.mxu0 0.0
    %1205 = vmatprep.subr.mxu0 0.0
    %1206 = vmatpush2.msra.mxu0 0.0
    %1207 = vmatprep.subr.mxu0 0.0
    %1208 = vmatpush2.msra.mxu0 0.0
    %1209 = vmatprep.subr.mxu0 0.0
    %1210 = vmatpush2.msra.mxu0 0.0
    %1211 = vmatprep.subr.mxu0 0.0
    %1212 = vmatpush2.msra.mxu0 0.0
    %1213 = vmatprep.subr.mxu0 0.0
    %1214 = vmatpush2.msra.mxu0 0.0
    %1215 = vmatprep.subr.mxu0 0.0
    %1216 = vmatpush2.msra.mxu0 0.0
    %1217 = vmatprep.subr.mxu0 0.0
    %1218 = vmatpush2.msra.mxu0 0.0
    %1219 = vmatprep.subr.mxu0 0.0
    %1220 = vmatpush2.msra.mxu0 0.0
    %1221 = vmatprep.subr.mxu0 0.0
    %1222 = vmatpush2.msra.mxu0 0.0
    %1223 = vmatprep.subr.mxu0 0.0
    %1224 = vmatpush2.msra.mxu0 0.0
    %1225 = vmatprep.mubr.f32.mxu0 0.0
    %v1226 = vand.u32 %v718, 4294901760
    %1227 = vmatmul.mubr.f32.gmra.mxu0 %v1226
    %v1228 = vpop.f32.mrf.mxu0
    %v1229 = vadd.f32 %v1122, %v1228
    %v1230 = vpop.f32.mrf.mxu0
    %1231 = vmatprep.mubr.f32.mxu0 0.0
    %v1232 = vand.u32 %v721, 4294901760
    %1233 = vmatmul.mubr.f32.gmra.mxu0 %v1232
    %v1234 = vpop.f32.mrf.mxu0
    %v1235 = vadd.f32 %v1130, %v1234
    %v1236 = vpop.f32.mrf.mxu0
    %1237 = vmatprep.mubr.f32.mxu0 0.0
    %v1238 = vand.u32 %v724, 4294901760
    %1239 = vmatmul.mubr.f32.gmra.mxu0 %v1238
    %v1240 = vpop.f32.mrf.mxu0
    %v1241 = vadd.f32 %v1138, %v1240
    %v1242 = vpop.f32.mrf.mxu0
    %1243 = vmatprep.mubr.f32.mxu0 0.0
    %v1244 = vand.u32 %v727, 4294901760
    %1245 = vmatmul.mubr.f32.gmra.mxu0 %v1244
    %v1246 = vpop.f32.mrf.mxu0
    %v1247 = vadd.f32 %v1146, %v1246
    %v1248 = vpop.f32.mrf.mxu0
    %1249 = vdwg.mxu0
    %1250 = vmatprep.subr.mxu0 0.0
    %1251 = vmatpush1.msra.mxu0 0.0
    %1252 = vmatprep.subr.mxu0 0.0
    %1253 = vmatpush1.msra.mxu0 0.0
    %1254 = vmatprep.subr.mxu0 0.0
    %1255 = vmatpush1.msra.mxu0 0.0
    %1256 = vmatprep.subr.mxu0 0.0
    %1257 = vmatpush1.msra.mxu0 0.0
    %1258 = vmatprep.subr.mxu0 0.0
    %1259 = vmatpush1.msra.mxu0 0.0
    %1260 = vmatprep.subr.mxu0 0.0
    %1261 = vmatpush1.msra.mxu0 0.0
    %1262 = vmatprep.subr.mxu0 0.0
    %1263 = vmatpush1.msra.mxu0 0.0
    %1264 = vmatprep.subr.mxu0 0.0
    %1265 = vmatpush1.msra.mxu0 0.0
    %1266 = vmatprep.subr.mxu0 0.0
    %1267 = vmatpush1.msra.mxu0 0.0
    %1268 = vmatprep.subr.mxu0 0.0
    %1269 = vmatpush1.msra.mxu0 0.0
    %1270 = vmatprep.subr.mxu0 0.0
    %1271 = vmatpush1.msra.mxu0 0.0
    %1272 = vmatprep.subr.mxu0 0.0
    %1273 = vmatpush1.msra.mxu0 0.0
    %1274 = vmatprep.subr.mxu0 0.0
    %v1275 = vand.u32 %v81, 4294901760
    %1276 = vmatpush1.msra.mxu0 %v1275
    %1277 = vmatprep.subr.mxu0 0.0
    %v1278 = vand.u32 %v80, 4294901760
    %1279 = vmatpush1.msra.mxu0 %v1278
    %1280 = vmatprep.subr.mxu0 0.0
    %v1281 = vand.u32 %v79, 4294901760
    %1282 = vmatpush1.msra.mxu0 %v1281
    %1283 = vmatprep.subr.mxu0 0.0
    %v1284 = vand.u32 %v78, 4294901760
    %1285 = vmatpush1.msra.mxu0 %v1284
    %1286 = vmatprep.subr.mxu0 0.0
    %1287 = vmatpush2.msra.mxu0 0.0
    %1288 = vmatprep.subr.mxu0 0.0
    %1289 = vmatpush2.msra.mxu0 0.0
    %1290 = vmatprep.subr.mxu0 0.0
    %1291 = vmatpush2.msra.mxu0 0.0
    %1292 = vmatprep.subr.mxu0 0.0
    %1293 = vmatpush2.msra.mxu0 0.0
    %1294 = vmatprep.subr.mxu0 0.0
    %1295 = vmatpush2.msra.mxu0 0.0
    %1296 = vmatprep.subr.mxu0 0.0
    %1297 = vmatpush2.msra.mxu0 0.0
    %1298 = vmatprep.subr.mxu0 0.0
    %1299 = vmatpush2.msra.mxu0 0.0
    %1300 = vmatprep.subr.mxu0 0.0
    %1301 = vmatpush2.msra.mxu0 0.0
    %1302 = vmatprep.subr.mxu0 0.0
    %1303 = vmatpush2.msra.mxu0 0.0
    %1304 = vmatprep.subr.mxu0 0.0
    %1305 = vmatpush2.msra.mxu0 0.0
    %1306 = vmatprep.subr.mxu0 0.0
    %1307 = vmatpush2.msra.mxu0 0.0
    %1308 = vmatprep.subr.mxu0 0.0
    %1309 = vmatpush2.msra.mxu0 0.0
    %1310 = vmatprep.subr.mxu0 0.0
    %1311 = vmatpush2.msra.mxu0 0.0
    %1312 = vmatprep.subr.mxu0 0.0
    %1313 = vmatpush2.msra.mxu0 0.0
    %1314 = vmatprep.subr.mxu0 0.0
    %1315 = vmatpush2.msra.mxu0 0.0
    %1316 = vmatprep.subr.mxu0 0.0
    %1317 = vmatpush2.msra.mxu0 0.0
    %1318 = vmatprep.mubr.f32.mxu0 0.0
    %v1319 = vand.u32 %v718, 4294901760
    %1320 = vmatmul.mubr.f32.gmra.mxu0 %v1319
    %v1321 = vpop.f32.mrf.mxu0
    %v1322 = vadd.f32 %v1229, %v1321
    %v1323 = vpop.f32.mrf.mxu0
    %1324 = vmatprep.mubr.f32.mxu0 0.0
    %v1325 = vand.u32 %v721, 4294901760
    %1326 = vmatmul.mubr.f32.gmra.mxu0 %v1325
    %v1327 = vpop.f32.mrf.mxu0
    %v1328 = vadd.f32 %v1235, %v1327
    %v1329 = vpop.f32.mrf.mxu0
    %1330 = vmatprep.mubr.f32.mxu0 0.0
    %v1331 = vand.u32 %v724, 4294901760
    %1332 = vmatmul.mubr.f32.gmra.mxu0 %v1331
    %v1333 = vpop.f32.mrf.mxu0
    %v1334 = vadd.f32 %v1241, %v1333
    %v1335 = vpop.f32.mrf.mxu0
    %1336 = vmatprep.mubr.f32.mxu0 0.0
    %v1337 = vand.u32 %v727, 4294901760
    %1338 = vmatmul.mubr.f32.gmra.mxu0 %v1337
    %v1339 = vpop.f32.mrf.mxu0
    %v1340 = vadd.f32 %v1247, %v1339
    %v1341 = vpop.f32.mrf.mxu0
    %1342 = vdwg.mxu0
    %v1343 = vld [vmem:[#allocation2 + $0x4] sm:$0xff]
    %v1344 = vld [vmem:[#allocation2 + $0xc] sm:$0xff]
    %v1345 = vld [vmem:[#allocation2 + $0x24] sm:$0xff]
    %v1346 = vld [vmem:[#allocation2 + $0x2c] sm:$0xff]
    %s1347 = scalar_lea.vmem [#allocation8], 64
    %v1348 = vld [vmem:[%s1347] sm:$0xff]
    %v1349 = vld [vmem:[%s1347 + $0x8] sm:$0xff]
    %v1350 = vld [vmem:[%s1347 + $0x10] sm:$0xff]
    %v1351 = vld [vmem:[%s1347 + $0x18] sm:$0xff]
    %v1353 = vsel %vm57, %v1343, 0
    %v1356 = vsel %vm57, %v1344, 0
    %v1359 = vsel %vm57, %v1345, 0
    %v1362 = vsel %vm57, %v1346, 0
    %1364 = vmatprep.subr.mxu0 0.0
    %1365 = vmatpush1.msra.mxu0 0.0
    %1366 = vmatprep.subr.mxu0 0.0
    %1367 = vmatpush1.msra.mxu0 0.0
    %1368 = vmatprep.subr.mxu0 0.0
    %1369 = vmatpush1.msra.mxu0 0.0
    %1370 = vmatprep.subr.mxu0 0.0
    %1371 = vmatpush1.msra.mxu0 0.0
    %1372 = vmatprep.subr.mxu0 0.0
    %1373 = vmatpush1.msra.mxu0 0.0
    %1374 = vmatprep.subr.mxu0 0.0
    %1375 = vmatpush1.msra.mxu0 0.0
    %1376 = vmatprep.subr.mxu0 0.0
    %1377 = vmatpush1.msra.mxu0 0.0
    %1378 = vmatprep.subr.mxu0 0.0
    %1379 = vmatpush1.msra.mxu0 0.0
    %1380 = vmatprep.subr.mxu0 0.0
    %1381 = vmatpush1.msra.mxu0 0.0
    %1382 = vmatprep.subr.mxu0 0.0
    %1383 = vmatpush1.msra.mxu0 0.0
    %1384 = vmatprep.subr.mxu0 0.0
    %1385 = vmatpush1.msra.mxu0 0.0
    %1386 = vmatprep.subr.mxu0 0.0
    %1387 = vmatpush1.msra.mxu0 0.0
    %1388 = vmatprep.subr.mxu0 0.0
    %v1389 = vand.u32 %v1351, 4294901760
    %1390 = vmatpush1.msra.mxu0 %v1389
    %1391 = vmatprep.subr.mxu0 0.0
    %v1392 = vand.u32 %v1350, 4294901760
    %1393 = vmatpush1.msra.mxu0 %v1392
    %1394 = vmatprep.subr.mxu0 0.0
    %v1395 = vand.u32 %v1349, 4294901760
    %1396 = vmatpush1.msra.mxu0 %v1395
    %1397 = vmatprep.subr.mxu0 0.0
    %v1398 = vand.u32 %v1348, 4294901760
    %1399 = vmatpush1.msra.mxu0 %v1398
    %1400 = vmatprep.subr.mxu0 0.0
    %1401 = vmatpush2.msra.mxu0 0.0
    %1402 = vmatprep.subr.mxu0 0.0
    %1403 = vmatpush2.msra.mxu0 0.0
    %1404 = vmatprep.subr.mxu0 0.0
    %1405 = vmatpush2.msra.mxu0 0.0
    %1406 = vmatprep.subr.mxu0 0.0
    %1407 = vmatpush2.msra.mxu0 0.0
    %1408 = vmatprep.subr.mxu0 0.0
    %1409 = vmatpush2.msra.mxu0 0.0
    %1410 = vmatprep.subr.mxu0 0.0
    %1411 = vmatpush2.msra.mxu0 0.0
    %1412 = vmatprep.subr.mxu0 0.0
    %1413 = vmatpush2.msra.mxu0 0.0
    %1414 = vmatprep.subr.mxu0 0.0
    %1415 = vmatpush2.msra.mxu0 0.0
    %1416 = vmatprep.subr.mxu0 0.0
    %1417 = vmatpush2.msra.mxu0 0.0
    %1418 = vmatprep.subr.mxu0 0.0
    %1419 = vmatpush2.msra.mxu0 0.0
    %1420 = vmatprep.subr.mxu0 0.0
    %1421 = vmatpush2.msra.mxu0 0.0
    %1422 = vmatprep.subr.mxu0 0.0
    %1423 = vmatpush2.msra.mxu0 0.0
    %1424 = vmatprep.subr.mxu0 0.0
    %1425 = vmatpush2.msra.mxu0 0.0
    %1426 = vmatprep.subr.mxu0 0.0
    %1427 = vmatpush2.msra.mxu0 0.0
    %1428 = vmatprep.subr.mxu0 0.0
    %1429 = vmatpush2.msra.mxu0 0.0
    %1430 = vmatprep.subr.mxu0 0.0
    %1431 = vmatpush2.msra.mxu0 0.0
    %1432 = vmatprep.mubr.f32.mxu0 0.0
    %v1433 = vand.u32 %v1353, 4294901760
    %v1434 = vsub.f32 %v1353, %v1433
    %v1435 = vand.u32 %v1434, 4294901760
    %v1436 = vsub.f32 %v1434, %v1435
    %v1437 = vand.u32 %v1436, 4294901760
    %1438 = vmatmul.mubr.f32.gmra.mxu0 %v1437
    %v1439 = vpop.f32.mrf.mxu0
    %v1440 = vadd.f32 0.0, %v1439
    %v1441 = vpop.f32.mrf.mxu0
    %1442 = vmatprep.mubr.f32.mxu0 0.0
    %v1443 = vand.u32 %v1356, 4294901760
    %v1444 = vsub.f32 %v1356, %v1443
    %v1445 = vand.u32 %v1444, 4294901760
    %v1446 = vsub.f32 %v1444, %v1445
    %v1447 = vand.u32 %v1446, 4294901760
    %1448 = vmatmul.mubr.f32.gmra.mxu0 %v1447
    %v1449 = vpop.f32.mrf.mxu0
    %v1450 = vadd.f32 0.0, %v1449
    %v1451 = vpop.f32.mrf.mxu0
    %1452 = vmatprep.mubr.f32.mxu0 0.0
    %v1453 = vand.u32 %v1359, 4294901760
    %v1454 = vsub.f32 %v1359, %v1453
    %v1455 = vand.u32 %v1454, 4294901760
    %v1456 = vsub.f32 %v1454, %v1455
    %v1457 = vand.u32 %v1456, 4294901760
    %1458 = vmatmul.mubr.f32.gmra.mxu0 %v1457
    %v1459 = vpop.f32.mrf.mxu0
    %v1460 = vadd.f32 0.0, %v1459
    %v1461 = vpop.f32.mrf.mxu0
    %1462 = vmatprep.mubr.f32.mxu0 0.0
    %v1463 = vand.u32 %v1362, 4294901760
    %v1464 = vsub.f32 %v1362, %v1463
    %v1465 = vand.u32 %v1464, 4294901760
    %v1466 = vsub.f32 %v1464, %v1465
    %v1467 = vand.u32 %v1466, 4294901760
    %1468 = vmatmul.mubr.f32.gmra.mxu0 %v1467
    %v1469 = vpop.f32.mrf.mxu0
    %v1470 = vadd.f32 0.0, %v1469
    %v1471 = vpop.f32.mrf.mxu0
    %1472 = vdwg.mxu0
    %1473 = vmatprep.subr.mxu0 0.0
    %1474 = vmatpush1.msra.mxu0 0.0
    %1475 = vmatprep.subr.mxu0 0.0
    %1476 = vmatpush1.msra.mxu0 0.0
    %1477 = vmatprep.subr.mxu0 0.0
    %1478 = vmatpush1.msra.mxu0 0.0
    %1479 = vmatprep.subr.mxu0 0.0
    %1480 = vmatpush1.msra.mxu0 0.0
    %1481 = vmatprep.subr.mxu0 0.0
    %1482 = vmatpush1.msra.mxu0 0.0
    %1483 = vmatprep.subr.mxu0 0.0
    %1484 = vmatpush1.msra.mxu0 0.0
    %1485 = vmatprep.subr.mxu0 0.0
    %1486 = vmatpush1.msra.mxu0 0.0
    %1487 = vmatprep.subr.mxu0 0.0
    %1488 = vmatpush1.msra.mxu0 0.0
    %1489 = vmatprep.subr.mxu0 0.0
    %1490 = vmatpush1.msra.mxu0 0.0
    %1491 = vmatprep.subr.mxu0 0.0
    %1492 = vmatpush1.msra.mxu0 0.0
    %1493 = vmatprep.subr.mxu0 0.0
    %1494 = vmatpush1.msra.mxu0 0.0
    %1495 = vmatprep.subr.mxu0 0.0
    %1496 = vmatpush1.msra.mxu0 0.0
    %1497 = vmatprep.subr.mxu0 0.0
    %v1498 = vand.u32 %v1351, 4294901760
    %v1499 = vsub.f32 %v1351, %v1498
    %v1500 = vand.u32 %v1499, 4294901760
    %v1501 = vsub.f32 %v1499, %v1500
    %v1502 = vand.u32 %v1501, 4294901760
    %1503 = vmatpush1.msra.mxu0 %v1502
    %1504 = vmatprep.subr.mxu0 0.0
    %v1505 = vand.u32 %v1350, 4294901760
    %v1506 = vsub.f32 %v1350, %v1505
    %v1507 = vand.u32 %v1506, 4294901760
    %v1508 = vsub.f32 %v1506, %v1507
    %v1509 = vand.u32 %v1508, 4294901760
    %1510 = vmatpush1.msra.mxu0 %v1509
    %1511 = vmatprep.subr.mxu0 0.0
    %v1512 = vand.u32 %v1349, 4294901760
    %v1513 = vsub.f32 %v1349, %v1512
    %v1514 = vand.u32 %v1513, 4294901760
    %v1515 = vsub.f32 %v1513, %v1514
    %v1516 = vand.u32 %v1515, 4294901760
    %1517 = vmatpush1.msra.mxu0 %v1516
    %1518 = vmatprep.subr.mxu0 0.0
    %v1519 = vand.u32 %v1348, 4294901760
    %v1520 = vsub.f32 %v1348, %v1519
    %v1521 = vand.u32 %v1520, 4294901760
    %v1522 = vsub.f32 %v1520, %v1521
    %v1523 = vand.u32 %v1522, 4294901760
    %1524 = vmatpush1.msra.mxu0 %v1523
    %1525 = vmatprep.subr.mxu0 0.0
    %1526 = vmatpush2.msra.mxu0 0.0
    %1527 = vmatprep.subr.mxu0 0.0
    %1528 = vmatpush2.msra.mxu0 0.0
    %1529 = vmatprep.subr.mxu0 0.0
    %1530 = vmatpush2.msra.mxu0 0.0
    %1531 = vmatprep.subr.mxu0 0.0
    %1532 = vmatpush2.msra.mxu0 0.0
    %1533 = vmatprep.subr.mxu0 0.0
    %1534 = vmatpush2.msra.mxu0 0.0
    %1535 = vmatprep.subr.mxu0 0.0
    %1536 = vmatpush2.msra.mxu0 0.0
    %1537 = vmatprep.subr.mxu0 0.0
    %1538 = vmatpush2.msra.mxu0 0.0
    %1539 = vmatprep.subr.mxu0 0.0
    %1540 = vmatpush2.msra.mxu0 0.0
    %1541 = vmatprep.subr.mxu0 0.0
    %1542 = vmatpush2.msra.mxu0 0.0
    %1543 = vmatprep.subr.mxu0 0.0
    %1544 = vmatpush2.msra.mxu0 0.0
    %1545 = vmatprep.subr.mxu0 0.0
    %1546 = vmatpush2.msra.mxu0 0.0
    %1547 = vmatprep.subr.mxu0 0.0
    %1548 = vmatpush2.msra.mxu0 0.0
    %1549 = vmatprep.subr.mxu0 0.0
    %1550 = vmatpush2.msra.mxu0 0.0
    %1551 = vmatprep.subr.mxu0 0.0
    %1552 = vmatpush2.msra.mxu0 0.0
    %1553 = vmatprep.subr.mxu0 0.0
    %1554 = vmatpush2.msra.mxu0 0.0
    %1555 = vmatprep.subr.mxu0 0.0
    %1556 = vmatpush2.msra.mxu0 0.0
    %1557 = vmatprep.mubr.f32.mxu0 0.0
    %v1558 = vand.u32 %v1353, 4294901760
    %1559 = vmatmul.mubr.f32.gmra.mxu0 %v1558
    %v1560 = vpop.f32.mrf.mxu0
    %v1561 = vadd.f32 %v1440, %v1560
    %v1562 = vpop.f32.mrf.mxu0
    %1563 = vmatprep.mubr.f32.mxu0 0.0
    %v1564 = vand.u32 %v1356, 4294901760
    %1565 = vmatmul.mubr.f32.gmra.mxu0 %v1564
    %v1566 = vpop.f32.mrf.mxu0
    %v1567 = vadd.f32 %v1450, %v1566
    %v1568 = vpop.f32.mrf.mxu0
    %1569 = vmatprep.mubr.f32.mxu0 0.0
    %v1570 = vand.u32 %v1359, 4294901760
    %1571 = vmatmul.mubr.f32.gmra.mxu0 %v1570
    %v1572 = vpop.f32.mrf.mxu0
    %v1573 = vadd.f32 %v1460, %v1572
    %v1574 = vpop.f32.mrf.mxu0
    %1575 = vmatprep.mubr.f32.mxu0 0.0
    %v1576 = vand.u32 %v1362, 4294901760
    %1577 = vmatmul.mubr.f32.gmra.mxu0 %v1576
    %v1578 = vpop.f32.mrf.mxu0
    %v1579 = vadd.f32 %v1470, %v1578
    %v1580 = vpop.f32.mrf.mxu0
    %1581 = vdwg.mxu0
    %1582 = vmatprep.subr.mxu0 0.0
    %1583 = vmatpush1.msra.mxu0 0.0
    %1584 = vmatprep.subr.mxu0 0.0
    %1585 = vmatpush1.msra.mxu0 0.0
    %1586 = vmatprep.subr.mxu0 0.0
    %1587 = vmatpush1.msra.mxu0 0.0
    %1588 = vmatprep.subr.mxu0 0.0
    %1589 = vmatpush1.msra.mxu0 0.0
    %1590 = vmatprep.subr.mxu0 0.0
    %1591 = vmatpush1.msra.mxu0 0.0
    %1592 = vmatprep.subr.mxu0 0.0
    %1593 = vmatpush1.msra.mxu0 0.0
    %1594 = vmatprep.subr.mxu0 0.0
    %1595 = vmatpush1.msra.mxu0 0.0
    %1596 = vmatprep.subr.mxu0 0.0
    %1597 = vmatpush1.msra.mxu0 0.0
    %1598 = vmatprep.subr.mxu0 0.0
    %1599 = vmatpush1.msra.mxu0 0.0
    %1600 = vmatprep.subr.mxu0 0.0
    %1601 = vmatpush1.msra.mxu0 0.0
    %1602 = vmatprep.subr.mxu0 0.0
    %1603 = vmatpush1.msra.mxu0 0.0
    %1604 = vmatprep.subr.mxu0 0.0
    %1605 = vmatpush1.msra.mxu0 0.0
    %1606 = vmatprep.subr.mxu0 0.0
    %v1607 = vand.u32 %v1351, 4294901760
    %v1608 = vsub.f32 %v1351, %v1607
    %1609 = vmatpush1.msra.mxu0 %v1608
    %1610 = vmatprep.subr.mxu0 0.0
    %v1611 = vand.u32 %v1350, 4294901760
    %v1612 = vsub.f32 %v1350, %v1611
    %1613 = vmatpush1.msra.mxu0 %v1612
    %1614 = vmatprep.subr.mxu0 0.0
    %v1615 = vand.u32 %v1349, 4294901760
    %v1616 = vsub.f32 %v1349, %v1615
    %1617 = vmatpush1.msra.mxu0 %v1616
    %1618 = vmatprep.subr.mxu0 0.0
    %v1619 = vand.u32 %v1348, 4294901760
    %v1620 = vsub.f32 %v1348, %v1619
    %1621 = vmatpush1.msra.mxu0 %v1620
    %1622 = vmatprep.subr.mxu0 0.0
    %1623 = vmatpush2.msra.mxu0 0.0
    %1624 = vmatprep.subr.mxu0 0.0
    %1625 = vmatpush2.msra.mxu0 0.0
    %1626 = vmatprep.subr.mxu0 0.0
    %1627 = vmatpush2.msra.mxu0 0.0
    %1628 = vmatprep.subr.mxu0 0.0
    %1629 = vmatpush2.msra.mxu0 0.0
    %1630 = vmatprep.subr.mxu0 0.0
    %1631 = vmatpush2.msra.mxu0 0.0
    %1632 = vmatprep.subr.mxu0 0.0
    %1633 = vmatpush2.msra.mxu0 0.0
    %1634 = vmatprep.subr.mxu0 0.0
    %1635 = vmatpush2.msra.mxu0 0.0
    %1636 = vmatprep.subr.mxu0 0.0
    %1637 = vmatpush2.msra.mxu0 0.0
    %1638 = vmatprep.subr.mxu0 0.0
    %1639 = vmatpush2.msra.mxu0 0.0
    %1640 = vmatprep.subr.mxu0 0.0
    %1641 = vmatpush2.msra.mxu0 0.0
    %1642 = vmatprep.subr.mxu0 0.0
    %1643 = vmatpush2.msra.mxu0 0.0
    %1644 = vmatprep.subr.mxu0 0.0
    %1645 = vmatpush2.msra.mxu0 0.0
    %1646 = vmatprep.subr.mxu0 0.0
    %1647 = vmatpush2.msra.mxu0 0.0
    %1648 = vmatprep.subr.mxu0 0.0
    %1649 = vmatpush2.msra.mxu0 0.0
    %1650 = vmatprep.subr.mxu0 0.0
    %1651 = vmatpush2.msra.mxu0 0.0
    %1652 = vmatprep.subr.mxu0 0.0
    %1653 = vmatpush2.msra.mxu0 0.0
    %1654 = vmatprep.mubr.f32.mxu0 0.0
    %v1655 = vand.u32 %v1353, 4294901760
    %v1656 = vsub.f32 %v1353, %v1655
    %1657 = vmatmul.mubr.f32.gmra.mxu0 %v1656
    %v1658 = vpop.f32.mrf.mxu0
    %v1659 = vadd.f32 %v1561, %v1658
    %v1660 = vpop.f32.mrf.mxu0
    %1661 = vmatprep.mubr.f32.mxu0 0.0
    %v1662 = vand.u32 %v1356, 4294901760
    %v1663 = vsub.f32 %v1356, %v1662
    %1664 = vmatmul.mubr.f32.gmra.mxu0 %v1663
    %v1665 = vpop.f32.mrf.mxu0
    %v1666 = vadd.f32 %v1567, %v1665
    %v1667 = vpop.f32.mrf.mxu0
    %1668 = vmatprep.mubr.f32.mxu0 0.0
    %v1669 = vand.u32 %v1359, 4294901760
    %v1670 = vsub.f32 %v1359, %v1669
    %1671 = vmatmul.mubr.f32.gmra.mxu0 %v1670
    %v1672 = vpop.f32.mrf.mxu0
    %v1673 = vadd.f32 %v1573, %v1672
    %v1674 = vpop.f32.mrf.mxu0
    %1675 = vmatprep.mubr.f32.mxu0 0.0
    %v1676 = vand.u32 %v1362, 4294901760
    %v1677 = vsub.f32 %v1362, %v1676
    %1678 = vmatmul.mubr.f32.gmra.mxu0 %v1677
    %v1679 = vpop.f32.mrf.mxu0
    %v1680 = vadd.f32 %v1579, %v1679
    %v1681 = vpop.f32.mrf.mxu0
    %1682 = vdwg.mxu0
    %1683 = vmatprep.subr.mxu0 0.0
    %1684 = vmatpush1.msra.mxu0 0.0
    %1685 = vmatprep.subr.mxu0 0.0
    %1686 = vmatpush1.msra.mxu0 0.0
    %1687 = vmatprep.subr.mxu0 0.0
    %1688 = vmatpush1.msra.mxu0 0.0
    %1689 = vmatprep.subr.mxu0 0.0
    %1690 = vmatpush1.msra.mxu0 0.0
    %1691 = vmatprep.subr.mxu0 0.0
    %1692 = vmatpush1.msra.mxu0 0.0
    %1693 = vmatprep.subr.mxu0 0.0
    %1694 = vmatpush1.msra.mxu0 0.0
    %1695 = vmatprep.subr.mxu0 0.0
    %1696 = vmatpush1.msra.mxu0 0.0
    %1697 = vmatprep.subr.mxu0 0.0
    %1698 = vmatpush1.msra.mxu0 0.0
    %1699 = vmatprep.subr.mxu0 0.0
    %1700 = vmatpush1.msra.mxu0 0.0
    %1701 = vmatprep.subr.mxu0 0.0
    %1702 = vmatpush1.msra.mxu0 0.0
    %1703 = vmatprep.subr.mxu0 0.0
    %1704 = vmatpush1.msra.mxu0 0.0
    %1705 = vmatprep.subr.mxu0 0.0
    %1706 = vmatpush1.msra.mxu0 0.0
    %1707 = vmatprep.subr.mxu0 0.0
    %v1708 = vand.u32 %v1351, 4294901760
    %1709 = vmatpush1.msra.mxu0 %v1708
    %1710 = vmatprep.subr.mxu0 0.0
    %v1711 = vand.u32 %v1350, 4294901760
    %1712 = vmatpush1.msra.mxu0 %v1711
    %1713 = vmatprep.subr.mxu0 0.0
    %v1714 = vand.u32 %v1349, 4294901760
    %1715 = vmatpush1.msra.mxu0 %v1714
    %1716 = vmatprep.subr.mxu0 0.0
    %v1717 = vand.u32 %v1348, 4294901760
    %1718 = vmatpush1.msra.mxu0 %v1717
    %1719 = vmatprep.subr.mxu0 0.0
    %1720 = vmatpush2.msra.mxu0 0.0
    %1721 = vmatprep.subr.mxu0 0.0
    %1722 = vmatpush2.msra.mxu0 0.0
    %1723 = vmatprep.subr.mxu0 0.0
    %1724 = vmatpush2.msra.mxu0 0.0
    %1725 = vmatprep.subr.mxu0 0.0
    %1726 = vmatpush2.msra.mxu0 0.0
    %1727 = vmatprep.subr.mxu0 0.0
    %1728 = vmatpush2.msra.mxu0 0.0
    %1729 = vmatprep.subr.mxu0 0.0
    %1730 = vmatpush2.msra.mxu0 0.0
    %1731 = vmatprep.subr.mxu0 0.0
    %1732 = vmatpush2.msra.mxu0 0.0
    %1733 = vmatprep.subr.mxu0 0.0
    %1734 = vmatpush2.msra.mxu0 0.0
    %1735 = vmatprep.subr.mxu0 0.0
    %1736 = vmatpush2.msra.mxu0 0.0
    %1737 = vmatprep.subr.mxu0 0.0
    %1738 = vmatpush2.msra.mxu0 0.0
    %1739 = vmatprep.subr.mxu0 0.0
    %1740 = vmatpush2.msra.mxu0 0.0
    %1741 = vmatprep.subr.mxu0 0.0
    %1742 = vmatpush2.msra.mxu0 0.0
    %1743 = vmatprep.subr.mxu0 0.0
    %1744 = vmatpush2.msra.mxu0 0.0
    %1745 = vmatprep.subr.mxu0 0.0
    %1746 = vmatpush2.msra.mxu0 0.0
    %1747 = vmatprep.subr.mxu0 0.0
    %1748 = vmatpush2.msra.mxu0 0.0
    %1749 = vmatprep.subr.mxu0 0.0
    %1750 = vmatpush2.msra.mxu0 0.0
    %1751 = vmatprep.mubr.f32.mxu0 0.0
    %v1752 = vand.u32 %v1353, 4294901760
    %v1753 = vsub.f32 %v1353, %v1752
    %v1754 = vand.u32 %v1753, 4294901760
    %1755 = vmatmul.mubr.f32.gmra.mxu0 %v1754
    %v1756 = vpop.f32.mrf.mxu0
    %v1757 = vadd.f32 %v1659, %v1756
    %v1758 = vpop.f32.mrf.mxu0
    %1759 = vmatprep.mubr.f32.mxu0 0.0
    %v1760 = vand.u32 %v1356, 4294901760
    %v1761 = vsub.f32 %v1356, %v1760
    %v1762 = vand.u32 %v1761, 4294901760
    %1763 = vmatmul.mubr.f32.gmra.mxu0 %v1762
    %v1764 = vpop.f32.mrf.mxu0
    %v1765 = vadd.f32 %v1666, %v1764
    %v1766 = vpop.f32.mrf.mxu0
    %1767 = vmatprep.mubr.f32.mxu0 0.0
    %v1768 = vand.u32 %v1359, 4294901760
    %v1769 = vsub.f32 %v1359, %v1768
    %v1770 = vand.u32 %v1769, 4294901760
    %1771 = vmatmul.mubr.f32.gmra.mxu0 %v1770
    %v1772 = vpop.f32.mrf.mxu0
    %v1773 = vadd.f32 %v1673, %v1772
    %v1774 = vpop.f32.mrf.mxu0
    %1775 = vmatprep.mubr.f32.mxu0 0.0
    %v1776 = vand.u32 %v1362, 4294901760
    %v1777 = vsub.f32 %v1362, %v1776
    %v1778 = vand.u32 %v1777, 4294901760
    %1779 = vmatmul.mubr.f32.gmra.mxu0 %v1778
    %v1780 = vpop.f32.mrf.mxu0
    %v1781 = vadd.f32 %v1680, %v1780
    %v1782 = vpop.f32.mrf.mxu0
    %1783 = vdwg.mxu0
    %1784 = vmatprep.subr.mxu0 0.0
    %1785 = vmatpush1.msra.mxu0 0.0
    %1786 = vmatprep.subr.mxu0 0.0
    %1787 = vmatpush1.msra.mxu0 0.0
    %1788 = vmatprep.subr.mxu0 0.0
    %1789 = vmatpush1.msra.mxu0 0.0
    %1790 = vmatprep.subr.mxu0 0.0
    %1791 = vmatpush1.msra.mxu0 0.0
    %1792 = vmatprep.subr.mxu0 0.0
    %1793 = vmatpush1.msra.mxu0 0.0
    %1794 = vmatprep.subr.mxu0 0.0
    %1795 = vmatpush1.msra.mxu0 0.0
    %1796 = vmatprep.subr.mxu0 0.0
    %1797 = vmatpush1.msra.mxu0 0.0
    %1798 = vmatprep.subr.mxu0 0.0
    %1799 = vmatpush1.msra.mxu0 0.0
    %1800 = vmatprep.subr.mxu0 0.0
    %1801 = vmatpush1.msra.mxu0 0.0
    %1802 = vmatprep.subr.mxu0 0.0
    %1803 = vmatpush1.msra.mxu0 0.0
    %1804 = vmatprep.subr.mxu0 0.0
    %1805 = vmatpush1.msra.mxu0 0.0
    %1806 = vmatprep.subr.mxu0 0.0
    %1807 = vmatpush1.msra.mxu0 0.0
    %1808 = vmatprep.subr.mxu0 0.0
    %v1809 = vand.u32 %v1351, 4294901760
    %v1810 = vsub.f32 %v1351, %v1809
    %v1811 = vand.u32 %v1810, 4294901760
    %1812 = vmatpush1.msra.mxu0 %v1811
    %1813 = vmatprep.subr.mxu0 0.0
    %v1814 = vand.u32 %v1350, 4294901760
    %v1815 = vsub.f32 %v1350, %v1814
    %v1816 = vand.u32 %v1815, 4294901760
    %1817 = vmatpush1.msra.mxu0 %v1816
    %1818 = vmatprep.subr.mxu0 0.0
    %v1819 = vand.u32 %v1349, 4294901760
    %v1820 = vsub.f32 %v1349, %v1819
    %v1821 = vand.u32 %v1820, 4294901760
    %1822 = vmatpush1.msra.mxu0 %v1821
    %1823 = vmatprep.subr.mxu0 0.0
    %v1824 = vand.u32 %v1348, 4294901760
    %v1825 = vsub.f32 %v1348, %v1824
    %v1826 = vand.u32 %v1825, 4294901760
    %1827 = vmatpush1.msra.mxu0 %v1826
    %1828 = vmatprep.subr.mxu0 0.0
    %1829 = vmatpush2.msra.mxu0 0.0
    %1830 = vmatprep.subr.mxu0 0.0
    %1831 = vmatpush2.msra.mxu0 0.0
    %1832 = vmatprep.subr.mxu0 0.0
    %1833 = vmatpush2.msra.mxu0 0.0
    %1834 = vmatprep.subr.mxu0 0.0
    %1835 = vmatpush2.msra.mxu0 0.0
    %1836 = vmatprep.subr.mxu0 0.0
    %1837 = vmatpush2.msra.mxu0 0.0
    %1838 = vmatprep.subr.mxu0 0.0
    %1839 = vmatpush2.msra.mxu0 0.0
    %1840 = vmatprep.subr.mxu0 0.0
    %1841 = vmatpush2.msra.mxu0 0.0
    %1842 = vmatprep.subr.mxu0 0.0
    %1843 = vmatpush2.msra.mxu0 0.0
    %1844 = vmatprep.subr.mxu0 0.0
    %1845 = vmatpush2.msra.mxu0 0.0
    %1846 = vmatprep.subr.mxu0 0.0
    %1847 = vmatpush2.msra.mxu0 0.0
    %1848 = vmatprep.subr.mxu0 0.0
    %1849 = vmatpush2.msra.mxu0 0.0
    %1850 = vmatprep.subr.mxu0 0.0
    %1851 = vmatpush2.msra.mxu0 0.0
    %1852 = vmatprep.subr.mxu0 0.0
    %1853 = vmatpush2.msra.mxu0 0.0
    %1854 = vmatprep.subr.mxu0 0.0
    %1855 = vmatpush2.msra.mxu0 0.0
    %1856 = vmatprep.subr.mxu0 0.0
    %1857 = vmatpush2.msra.mxu0 0.0
    %1858 = vmatprep.subr.mxu0 0.0
    %1859 = vmatpush2.msra.mxu0 0.0
    %1860 = vmatprep.mubr.f32.mxu0 0.0
    %v1861 = vand.u32 %v1353, 4294901760
    %1862 = vmatmul.mubr.f32.gmra.mxu0 %v1861
    %v1863 = vpop.f32.mrf.mxu0
    %v1864 = vadd.f32 %v1757, %v1863
    %v1865 = vpop.f32.mrf.mxu0
    %1866 = vmatprep.mubr.f32.mxu0 0.0
    %v1867 = vand.u32 %v1356, 4294901760
    %1868 = vmatmul.mubr.f32.gmra.mxu0 %v1867
    %v1869 = vpop.f32.mrf.mxu0
    %v1870 = vadd.f32 %v1765, %v1869
    %v1871 = vpop.f32.mrf.mxu0
    %1872 = vmatprep.mubr.f32.mxu0 0.0
    %v1873 = vand.u32 %v1359, 4294901760
    %1874 = vmatmul.mubr.f32.gmra.mxu0 %v1873
    %v1875 = vpop.f32.mrf.mxu0
    %v1876 = vadd.f32 %v1773, %v1875
    %v1877 = vpop.f32.mrf.mxu0
    %1878 = vmatprep.mubr.f32.mxu0 0.0
    %v1879 = vand.u32 %v1362, 4294901760
    %1880 = vmatmul.mubr.f32.gmra.mxu0 %v1879
    %v1881 = vpop.f32.mrf.mxu0
    %v1882 = vadd.f32 %v1781, %v1881
    %v1883 = vpop.f32.mrf.mxu0
    %1884 = vdwg.mxu0
    %1885 = vmatprep.subr.mxu0 0.0
    %1886 = vmatpush1.msra.mxu0 0.0
    %1887 = vmatprep.subr.mxu0 0.0
    %1888 = vmatpush1.msra.mxu0 0.0
    %1889 = vmatprep.subr.mxu0 0.0
    %1890 = vmatpush1.msra.mxu0 0.0
    %1891 = vmatprep.subr.mxu0 0.0
    %1892 = vmatpush1.msra.mxu0 0.0
    %1893 = vmatprep.subr.mxu0 0.0
    %1894 = vmatpush1.msra.mxu0 0.0
    %1895 = vmatprep.subr.mxu0 0.0
    %1896 = vmatpush1.msra.mxu0 0.0
    %1897 = vmatprep.subr.mxu0 0.0
    %1898 = vmatpush1.msra.mxu0 0.0
    %1899 = vmatprep.subr.mxu0 0.0
    %1900 = vmatpush1.msra.mxu0 0.0
    %1901 = vmatprep.subr.mxu0 0.0
    %1902 = vmatpush1.msra.mxu0 0.0
    %1903 = vmatprep.subr.mxu0 0.0
    %1904 = vmatpush1.msra.mxu0 0.0
    %1905 = vmatprep.subr.mxu0 0.0
    %1906 = vmatpush1.msra.mxu0 0.0
    %1907 = vmatprep.subr.mxu0 0.0
    %1908 = vmatpush1.msra.mxu0 0.0
    %1909 = vmatprep.subr.mxu0 0.0
    %v1910 = vand.u32 %v1351, 4294901760
    %1911 = vmatpush1.msra.mxu0 %v1910
    %1912 = vmatprep.subr.mxu0 0.0
    %v1913 = vand.u32 %v1350, 4294901760
    %1914 = vmatpush1.msra.mxu0 %v1913
    %1915 = vmatprep.subr.mxu0 0.0
    %v1916 = vand.u32 %v1349, 4294901760
    %1917 = vmatpush1.msra.mxu0 %v1916
    %1918 = vmatprep.subr.mxu0 0.0
    %v1919 = vand.u32 %v1348, 4294901760
    %1920 = vmatpush1.msra.mxu0 %v1919
    %1921 = vmatprep.subr.mxu0 0.0
    %1922 = vmatpush2.msra.mxu0 0.0
    %1923 = vmatprep.subr.mxu0 0.0
    %1924 = vmatpush2.msra.mxu0 0.0
    %1925 = vmatprep.subr.mxu0 0.0
    %1926 = vmatpush2.msra.mxu0 0.0
    %1927 = vmatprep.subr.mxu0 0.0
    %1928 = vmatpush2.msra.mxu0 0.0
    %1929 = vmatprep.subr.mxu0 0.0
    %1930 = vmatpush2.msra.mxu0 0.0
    %1931 = vmatprep.subr.mxu0 0.0
    %1932 = vmatpush2.msra.mxu0 0.0
    %1933 = vmatprep.subr.mxu0 0.0
    %1934 = vmatpush2.msra.mxu0 0.0
    %1935 = vmatprep.subr.mxu0 0.0
    %1936 = vmatpush2.msra.mxu0 0.0
    %1937 = vmatprep.subr.mxu0 0.0
    %1938 = vmatpush2.msra.mxu0 0.0
    %1939 = vmatprep.subr.mxu0 0.0
    %1940 = vmatpush2.msra.mxu0 0.0
    %1941 = vmatprep.subr.mxu0 0.0
    %1942 = vmatpush2.msra.mxu0 0.0
    %1943 = vmatprep.subr.mxu0 0.0
    %1944 = vmatpush2.msra.mxu0 0.0
    %1945 = vmatprep.subr.mxu0 0.0
    %1946 = vmatpush2.msra.mxu0 0.0
    %1947 = vmatprep.subr.mxu0 0.0
    %1948 = vmatpush2.msra.mxu0 0.0
    %1949 = vmatprep.subr.mxu0 0.0
    %1950 = vmatpush2.msra.mxu0 0.0
    %1951 = vmatprep.subr.mxu0 0.0
    %1952 = vmatpush2.msra.mxu0 0.0
    %1953 = vmatprep.mubr.f32.mxu0 0.0
    %v1954 = vand.u32 %v1353, 4294901760
    %1955 = vmatmul.mubr.f32.gmra.mxu0 %v1954
    %v1956 = vpop.f32.mrf.mxu0
    %v1957 = vadd.f32 %v1864, %v1956
    %v1958 = vpop.f32.mrf.mxu0
    %1959 = vmatprep.mubr.f32.mxu0 0.0
    %v1960 = vand.u32 %v1356, 4294901760
    %1961 = vmatmul.mubr.f32.gmra.mxu0 %v1960
    %v1962 = vpop.f32.mrf.mxu0
    %v1963 = vadd.f32 %v1870, %v1962
    %v1964 = vpop.f32.mrf.mxu0
    %1965 = vmatprep.mubr.f32.mxu0 0.0
    %v1966 = vand.u32 %v1359, 4294901760
    %1967 = vmatmul.mubr.f32.gmra.mxu0 %v1966
    %v1968 = vpop.f32.mrf.mxu0
    %v1969 = vadd.f32 %v1876, %v1968
    %v1970 = vpop.f32.mrf.mxu0
    %1971 = vmatprep.mubr.f32.mxu0 0.0
    %v1972 = vand.u32 %v1362, 4294901760
    %1973 = vmatmul.mubr.f32.gmra.mxu0 %v1972
    %v1974 = vpop.f32.mrf.mxu0
    %v1975 = vadd.f32 %v1882, %v1974
    %v1976 = vpop.f32.mrf.mxu0
    %1977 = vdwg.mxu0
    %v1978 = vadd.f32 %v1322, %v1957
    %v1979 = vadd.f32 %v1328, %v1963
    %v1980 = vadd.f32 %v1334, %v1969
    %v1981 = vadd.f32 %v1340, %v1975
    %v1982 = vld [vmem:[#allocation2 + $0x6] sm:$0xff]
    %v1983 = vld [vmem:[#allocation2 + $0xe] sm:$0xff]
    %v1984 = vld [vmem:[#allocation2 + $0x26] sm:$0xff]
    %v1985 = vld [vmem:[#allocation2 + $0x2e] sm:$0xff]
    %s1986 = scalar_lea.vmem [#allocation8], 96
    %v1987 = vld [vmem:[%s1986] sm:$0xff]
    %v1988 = vld [vmem:[%s1986 + $0x8] sm:$0xff]
    %v1989 = vld [vmem:[%s1986 + $0x10] sm:$0xff]
    %v1990 = vld [vmem:[%s1986 + $0x18] sm:$0xff]
    %v1992 = vsel %vm57, %v1982, 0
    %v1995 = vsel %vm57, %v1983, 0
    %v1998 = vsel %vm57, %v1984, 0
    %v2001 = vsel %vm57, %v1985, 0
    %2003 = vmatprep.subr.mxu0 0.0
    %2004 = vmatpush1.msra.mxu0 0.0
    %2005 = vmatprep.subr.mxu0 0.0
    %2006 = vmatpush1.msra.mxu0 0.0
    %2007 = vmatprep.subr.mxu0 0.0
    %2008 = vmatpush1.msra.mxu0 0.0
    %2009 = vmatprep.subr.mxu0 0.0
    %2010 = vmatpush1.msra.mxu0 0.0
    %2011 = vmatprep.subr.mxu0 0.0
    %2012 = vmatpush1.msra.mxu0 0.0
    %2013 = vmatprep.subr.mxu0 0.0
    %2014 = vmatpush1.msra.mxu0 0.0
    %2015 = vmatprep.subr.mxu0 0.0
    %2016 = vmatpush1.msra.mxu0 0.0
    %2017 = vmatprep.subr.mxu0 0.0
    %2018 = vmatpush1.msra.mxu0 0.0
    %2019 = vmatprep.subr.mxu0 0.0
    %2020 = vmatpush1.msra.mxu0 0.0
    %2021 = vmatprep.subr.mxu0 0.0
    %2022 = vmatpush1.msra.mxu0 0.0
    %2023 = vmatprep.subr.mxu0 0.0
    %2024 = vmatpush1.msra.mxu0 0.0
    %2025 = vmatprep.subr.mxu0 0.0
    %2026 = vmatpush1.msra.mxu0 0.0
    %2027 = vmatprep.subr.mxu0 0.0
    %v2028 = vand.u32 %v1990, 4294901760
    %2029 = vmatpush1.msra.mxu0 %v2028
    %2030 = vmatprep.subr.mxu0 0.0
    %v2031 = vand.u32 %v1989, 4294901760
    %2032 = vmatpush1.msra.mxu0 %v2031
    %2033 = vmatprep.subr.mxu0 0.0
    %v2034 = vand.u32 %v1988, 4294901760
    %2035 = vmatpush1.msra.mxu0 %v2034
    %2036 = vmatprep.subr.mxu0 0.0
    %v2037 = vand.u32 %v1987, 4294901760
    %2038 = vmatpush1.msra.mxu0 %v2037
    %2039 = vmatprep.subr.mxu0 0.0
    %2040 = vmatpush2.msra.mxu0 0.0
    %2041 = vmatprep.subr.mxu0 0.0
    %2042 = vmatpush2.msra.mxu0 0.0
    %2043 = vmatprep.subr.mxu0 0.0
    %2044 = vmatpush2.msra.mxu0 0.0
    %2045 = vmatprep.subr.mxu0 0.0
    %2046 = vmatpush2.msra.mxu0 0.0
    %2047 = vmatprep.subr.mxu0 0.0
    %2048 = vmatpush2.msra.mxu0 0.0
    %2049 = vmatprep.subr.mxu0 0.0
    %2050 = vmatpush2.msra.mxu0 0.0
    %2051 = vmatprep.subr.mxu0 0.0
    %2052 = vmatpush2.msra.mxu0 0.0
    %2053 = vmatprep.subr.mxu0 0.0
    %2054 = vmatpush2.msra.mxu0 0.0
    %2055 = vmatprep.subr.mxu0 0.0
    %2056 = vmatpush2.msra.mxu0 0.0
    %2057 = vmatprep.subr.mxu0 0.0
    %2058 = vmatpush2.msra.mxu0 0.0
    %2059 = vmatprep.subr.mxu0 0.0
    %2060 = vmatpush2.msra.mxu0 0.0
    %2061 = vmatprep.subr.mxu0 0.0
    %2062 = vmatpush2.msra.mxu0 0.0
    %2063 = vmatprep.subr.mxu0 0.0
    %2064 = vmatpush2.msra.mxu0 0.0
    %2065 = vmatprep.subr.mxu0 0.0
    %2066 = vmatpush2.msra.mxu0 0.0
    %2067 = vmatprep.subr.mxu0 0.0
    %2068 = vmatpush2.msra.mxu0 0.0
    %2069 = vmatprep.subr.mxu0 0.0
    %2070 = vmatpush2.msra.mxu0 0.0
    %2071 = vmatprep.mubr.f32.mxu0 0.0
    %v2072 = vand.u32 %v1992, 4294901760
    %v2073 = vsub.f32 %v1992, %v2072
    %v2074 = vand.u32 %v2073, 4294901760
    %v2075 = vsub.f32 %v2073, %v2074
    %v2076 = vand.u32 %v2075, 4294901760
    %2077 = vmatmul.mubr.f32.gmra.mxu0 %v2076
    %v2078 = vpop.f32.mrf.mxu0
    %v2079 = vadd.f32 0.0, %v2078
    %v2080 = vpop.f32.mrf.mxu0
    %2081 = vmatprep.mubr.f32.mxu0 0.0
    %v2082 = vand.u32 %v1995, 4294901760
    %v2083 = vsub.f32 %v1995, %v2082
    %v2084 = vand.u32 %v2083, 4294901760
    %v2085 = vsub.f32 %v2083, %v2084
    %v2086 = vand.u32 %v2085, 4294901760
    %2087 = vmatmul.mubr.f32.gmra.mxu0 %v2086
    %v2088 = vpop.f32.mrf.mxu0
    %v2089 = vadd.f32 0.0, %v2088
    %v2090 = vpop.f32.mrf.mxu0
    %2091 = vmatprep.mubr.f32.mxu0 0.0
    %v2092 = vand.u32 %v1998, 4294901760
    %v2093 = vsub.f32 %v1998, %v2092
    %v2094 = vand.u32 %v2093, 4294901760
    %v2095 = vsub.f32 %v2093, %v2094
    %v2096 = vand.u32 %v2095, 4294901760
    %2097 = vmatmul.mubr.f32.gmra.mxu0 %v2096
    %v2098 = vpop.f32.mrf.mxu0
    %v2099 = vadd.f32 0.0, %v2098
    %v2100 = vpop.f32.mrf.mxu0
    %2101 = vmatprep.mubr.f32.mxu0 0.0
    %v2102 = vand.u32 %v2001, 4294901760
    %v2103 = vsub.f32 %v2001, %v2102
    %v2104 = vand.u32 %v2103, 4294901760
    %v2105 = vsub.f32 %v2103, %v2104
    %v2106 = vand.u32 %v2105, 4294901760
    %2107 = vmatmul.mubr.f32.gmra.mxu0 %v2106
    %v2108 = vpop.f32.mrf.mxu0
    %v2109 = vadd.f32 0.0, %v2108
    %v2110 = vpop.f32.mrf.mxu0
    %2111 = vdwg.mxu0
    %2112 = vmatprep.subr.mxu0 0.0
    %2113 = vmatpush1.msra.mxu0 0.0
    %2114 = vmatprep.subr.mxu0 0.0
    %2115 = vmatpush1.msra.mxu0 0.0
    %2116 = vmatprep.subr.mxu0 0.0
    %2117 = vmatpush1.msra.mxu0 0.0
    %2118 = vmatprep.subr.mxu0 0.0
    %2119 = vmatpush1.msra.mxu0 0.0
    %2120 = vmatprep.subr.mxu0 0.0
    %2121 = vmatpush1.msra.mxu0 0.0
    %2122 = vmatprep.subr.mxu0 0.0
    %2123 = vmatpush1.msra.mxu0 0.0
    %2124 = vmatprep.subr.mxu0 0.0
    %2125 = vmatpush1.msra.mxu0 0.0
    %2126 = vmatprep.subr.mxu0 0.0
    %2127 = vmatpush1.msra.mxu0 0.0
    %2128 = vmatprep.subr.mxu0 0.0
    %2129 = vmatpush1.msra.mxu0 0.0
    %2130 = vmatprep.subr.mxu0 0.0
    %2131 = vmatpush1.msra.mxu0 0.0
    %2132 = vmatprep.subr.mxu0 0.0
    %2133 = vmatpush1.msra.mxu0 0.0
    %2134 = vmatprep.subr.mxu0 0.0
    %2135 = vmatpush1.msra.mxu0 0.0
    %2136 = vmatprep.subr.mxu0 0.0
    %v2137 = vand.u32 %v1990, 4294901760
    %v2138 = vsub.f32 %v1990, %v2137
    %v2139 = vand.u32 %v2138, 4294901760
    %v2140 = vsub.f32 %v2138, %v2139
    %v2141 = vand.u32 %v2140, 4294901760
    %2142 = vmatpush1.msra.mxu0 %v2141
    %2143 = vmatprep.subr.mxu0 0.0
    %v2144 = vand.u32 %v1989, 4294901760
    %v2145 = vsub.f32 %v1989, %v2144
    %v2146 = vand.u32 %v2145, 4294901760
    %v2147 = vsub.f32 %v2145, %v2146
    %v2148 = vand.u32 %v2147, 4294901760
    %2149 = vmatpush1.msra.mxu0 %v2148
    %2150 = vmatprep.subr.mxu0 0.0
    %v2151 = vand.u32 %v1988, 4294901760
    %v2152 = vsub.f32 %v1988, %v2151
    %v2153 = vand.u32 %v2152, 4294901760
    %v2154 = vsub.f32 %v2152, %v2153
    %v2155 = vand.u32 %v2154, 4294901760
    %2156 = vmatpush1.msra.mxu0 %v2155
    %2157 = vmatprep.subr.mxu0 0.0
    %v2158 = vand.u32 %v1987, 4294901760
    %v2159 = vsub.f32 %v1987, %v2158
    %v2160 = vand.u32 %v2159, 4294901760
    %v2161 = vsub.f32 %v2159, %v2160
    %v2162 = vand.u32 %v2161, 4294901760
    %2163 = vmatpush1.msra.mxu0 %v2162
    %2164 = vmatprep.subr.mxu0 0.0
    %2165 = vmatpush2.msra.mxu0 0.0
    %2166 = vmatprep.subr.mxu0 0.0
    %2167 = vmatpush2.msra.mxu0 0.0
    %2168 = vmatprep.subr.mxu0 0.0
    %2169 = vmatpush2.msra.mxu0 0.0
    %2170 = vmatprep.subr.mxu0 0.0
    %2171 = vmatpush2.msra.mxu0 0.0
    %2172 = vmatprep.subr.mxu0 0.0
    %2173 = vmatpush2.msra.mxu0 0.0
    %2174 = vmatprep.subr.mxu0 0.0
    %2175 = vmatpush2.msra.mxu0 0.0
    %2176 = vmatprep.subr.mxu0 0.0
    %2177 = vmatpush2.msra.mxu0 0.0
    %2178 = vmatprep.subr.mxu0 0.0
    %2179 = vmatpush2.msra.mxu0 0.0
    %2180 = vmatprep.subr.mxu0 0.0
    %2181 = vmatpush2.msra.mxu0 0.0
    %2182 = vmatprep.subr.mxu0 0.0
    %2183 = vmatpush2.msra.mxu0 0.0
    %2184 = vmatprep.subr.mxu0 0.0
    %2185 = vmatpush2.msra.mxu0 0.0
    %2186 = vmatprep.subr.mxu0 0.0
    %2187 = vmatpush2.msra.mxu0 0.0
    %2188 = vmatprep.subr.mxu0 0.0
    %2189 = vmatpush2.msra.mxu0 0.0
    %2190 = vmatprep.subr.mxu0 0.0
    %2191 = vmatpush2.msra.mxu0 0.0
    %2192 = vmatprep.subr.mxu0 0.0
    %2193 = vmatpush2.msra.mxu0 0.0
    %2194 = vmatprep.subr.mxu0 0.0
    %2195 = vmatpush2.msra.mxu0 0.0
    %2196 = vmatprep.mubr.f32.mxu0 0.0
    %v2197 = vand.u32 %v1992, 4294901760
    %2198 = vmatmul.mubr.f32.gmra.mxu0 %v2197
    %v2199 = vpop.f32.mrf.mxu0
    %v2200 = vadd.f32 %v2079, %v2199
    %v2201 = vpop.f32.mrf.mxu0
    %2202 = vmatprep.mubr.f32.mxu0 0.0
    %v2203 = vand.u32 %v1995, 4294901760
    %2204 = vmatmul.mubr.f32.gmra.mxu0 %v2203
    %v2205 = vpop.f32.mrf.mxu0
    %v2206 = vadd.f32 %v2089, %v2205
    %v2207 = vpop.f32.mrf.mxu0
    %2208 = vmatprep.mubr.f32.mxu0 0.0
    %v2209 = vand.u32 %v1998, 4294901760
    %2210 = vmatmul.mubr.f32.gmra.mxu0 %v2209
    %v2211 = vpop.f32.mrf.mxu0
    %v2212 = vadd.f32 %v2099, %v2211
    %v2213 = vpop.f32.mrf.mxu0
    %2214 = vmatprep.mubr.f32.mxu0 0.0
    %v2215 = vand.u32 %v2001, 4294901760
    %2216 = vmatmul.mubr.f32.gmra.mxu0 %v2215
    %v2217 = vpop.f32.mrf.mxu0
    %v2218 = vadd.f32 %v2109, %v2217
    %v2219 = vpop.f32.mrf.mxu0
    %2220 = vdwg.mxu0
    %2221 = vmatprep.subr.mxu0 0.0
    %2222 = vmatpush1.msra.mxu0 0.0
    %2223 = vmatprep.subr.mxu0 0.0
    %2224 = vmatpush1.msra.mxu0 0.0
    %2225 = vmatprep.subr.mxu0 0.0
    %2226 = vmatpush1.msra.mxu0 0.0
    %2227 = vmatprep.subr.mxu0 0.0
    %2228 = vmatpush1.msra.mxu0 0.0
    %2229 = vmatprep.subr.mxu0 0.0
    %2230 = vmatpush1.msra.mxu0 0.0
    %2231 = vmatprep.subr.mxu0 0.0
    %2232 = vmatpush1.msra.mxu0 0.0
    %2233 = vmatprep.subr.mxu0 0.0
    %2234 = vmatpush1.msra.mxu0 0.0
    %2235 = vmatprep.subr.mxu0 0.0
    %2236 = vmatpush1.msra.mxu0 0.0
    %2237 = vmatprep.subr.mxu0 0.0
    %2238 = vmatpush1.msra.mxu0 0.0
    %2239 = vmatprep.subr.mxu0 0.0
    %2240 = vmatpush1.msra.mxu0 0.0
    %2241 = vmatprep.subr.mxu0 0.0
    %2242 = vmatpush1.msra.mxu0 0.0
    %2243 = vmatprep.subr.mxu0 0.0
    %2244 = vmatpush1.msra.mxu0 0.0
    %2245 = vmatprep.subr.mxu0 0.0
    %v2246 = vand.u32 %v1990, 4294901760
    %v2247 = vsub.f32 %v1990, %v2246
    %2248 = vmatpush1.msra.mxu0 %v2247
    %2249 = vmatprep.subr.mxu0 0.0
    %v2250 = vand.u32 %v1989, 4294901760
    %v2251 = vsub.f32 %v1989, %v2250
    %2252 = vmatpush1.msra.mxu0 %v2251
    %2253 = vmatprep.subr.mxu0 0.0
    %v2254 = vand.u32 %v1988, 4294901760
    %v2255 = vsub.f32 %v1988, %v2254
    %2256 = vmatpush1.msra.mxu0 %v2255
    %2257 = vmatprep.subr.mxu0 0.0
    %v2258 = vand.u32 %v1987, 4294901760
    %v2259 = vsub.f32 %v1987, %v2258
    %2260 = vmatpush1.msra.mxu0 %v2259
    %2261 = vmatprep.subr.mxu0 0.0
    %2262 = vmatpush2.msra.mxu0 0.0
    %2263 = vmatprep.subr.mxu0 0.0
    %2264 = vmatpush2.msra.mxu0 0.0
    %2265 = vmatprep.subr.mxu0 0.0
    %2266 = vmatpush2.msra.mxu0 0.0
    %2267 = vmatprep.subr.mxu0 0.0
    %2268 = vmatpush2.msra.mxu0 0.0
    %2269 = vmatprep.subr.mxu0 0.0
    %2270 = vmatpush2.msra.mxu0 0.0
    %2271 = vmatprep.subr.mxu0 0.0
    %2272 = vmatpush2.msra.mxu0 0.0
    %2273 = vmatprep.subr.mxu0 0.0
    %2274 = vmatpush2.msra.mxu0 0.0
    %2275 = vmatprep.subr.mxu0 0.0
    %2276 = vmatpush2.msra.mxu0 0.0
    %2277 = vmatprep.subr.mxu0 0.0
    %2278 = vmatpush2.msra.mxu0 0.0
    %2279 = vmatprep.subr.mxu0 0.0
    %2280 = vmatpush2.msra.mxu0 0.0
    %2281 = vmatprep.subr.mxu0 0.0
    %2282 = vmatpush2.msra.mxu0 0.0
    %2283 = vmatprep.subr.mxu0 0.0
    %2284 = vmatpush2.msra.mxu0 0.0
    %2285 = vmatprep.subr.mxu0 0.0
    %2286 = vmatpush2.msra.mxu0 0.0
    %2287 = vmatprep.subr.mxu0 0.0
    %2288 = vmatpush2.msra.mxu0 0.0
    %2289 = vmatprep.subr.mxu0 0.0
    %2290 = vmatpush2.msra.mxu0 0.0
    %2291 = vmatprep.subr.mxu0 0.0
    %2292 = vmatpush2.msra.mxu0 0.0
    %2293 = vmatprep.mubr.f32.mxu0 0.0
    %v2294 = vand.u32 %v1992, 4294901760
    %v2295 = vsub.f32 %v1992, %v2294
    %2296 = vmatmul.mubr.f32.gmra.mxu0 %v2295
    %v2297 = vpop.f32.mrf.mxu0
    %v2298 = vadd.f32 %v2200, %v2297
    %v2299 = vpop.f32.mrf.mxu0
    %2300 = vmatprep.mubr.f32.mxu0 0.0
    %v2301 = vand.u32 %v1995, 4294901760
    %v2302 = vsub.f32 %v1995, %v2301
    %2303 = vmatmul.mubr.f32.gmra.mxu0 %v2302
    %v2304 = vpop.f32.mrf.mxu0
    %v2305 = vadd.f32 %v2206, %v2304
    %v2306 = vpop.f32.mrf.mxu0
    %2307 = vmatprep.mubr.f32.mxu0 0.0
    %v2308 = vand.u32 %v1998, 4294901760
    %v2309 = vsub.f32 %v1998, %v2308
    %2310 = vmatmul.mubr.f32.gmra.mxu0 %v2309
    %v2311 = vpop.f32.mrf.mxu0
    %v2312 = vadd.f32 %v2212, %v2311
    %v2313 = vpop.f32.mrf.mxu0
    %2314 = vmatprep.mubr.f32.mxu0 0.0
    %v2315 = vand.u32 %v2001, 4294901760
    %v2316 = vsub.f32 %v2001, %v2315
    %2317 = vmatmul.mubr.f32.gmra.mxu0 %v2316
    %v2318 = vpop.f32.mrf.mxu0
    %v2319 = vadd.f32 %v2218, %v2318
    %v2320 = vpop.f32.mrf.mxu0
    %2321 = vdwg.mxu0
    %2322 = vmatprep.subr.mxu0 0.0
    %2323 = vmatpush1.msra.mxu0 0.0
    %2324 = vmatprep.subr.mxu0 0.0
    %2325 = vmatpush1.msra.mxu0 0.0
    %2326 = vmatprep.subr.mxu0 0.0
    %2327 = vmatpush1.msra.mxu0 0.0
    %2328 = vmatprep.subr.mxu0 0.0
    %2329 = vmatpush1.msra.mxu0 0.0
    %2330 = vmatprep.subr.mxu0 0.0
    %2331 = vmatpush1.msra.mxu0 0.0
    %2332 = vmatprep.subr.mxu0 0.0
    %2333 = vmatpush1.msra.mxu0 0.0
    %2334 = vmatprep.subr.mxu0 0.0
    %2335 = vmatpush1.msra.mxu0 0.0
    %2336 = vmatprep.subr.mxu0 0.0
    %2337 = vmatpush1.msra.mxu0 0.0
    %2338 = vmatprep.subr.mxu0 0.0
    %2339 = vmatpush1.msra.mxu0 0.0
    %2340 = vmatprep.subr.mxu0 0.0
    %2341 = vmatpush1.msra.mxu0 0.0
    %2342 = vmatprep.subr.mxu0 0.0
    %2343 = vmatpush1.msra.mxu0 0.0
    %2344 = vmatprep.subr.mxu0 0.0
    %2345 = vmatpush1.msra.mxu0 0.0
    %2346 = vmatprep.subr.mxu0 0.0
    %v2347 = vand.u32 %v1990, 4294901760
    %2348 = vmatpush1.msra.mxu0 %v2347
    %2349 = vmatprep.subr.mxu0 0.0
    %v2350 = vand.u32 %v1989, 4294901760
    %2351 = vmatpush1.msra.mxu0 %v2350
    %2352 = vmatprep.subr.mxu0 0.0
    %v2353 = vand.u32 %v1988, 4294901760
    %2354 = vmatpush1.msra.mxu0 %v2353
    %2355 = vmatprep.subr.mxu0 0.0
    %v2356 = vand.u32 %v1987, 4294901760
    %2357 = vmatpush1.msra.mxu0 %v2356
    %2358 = vmatprep.subr.mxu0 0.0
    %2359 = vmatpush2.msra.mxu0 0.0
    %2360 = vmatprep.subr.mxu0 0.0
    %2361 = vmatpush2.msra.mxu0 0.0
    %2362 = vmatprep.subr.mxu0 0.0
    %2363 = vmatpush2.msra.mxu0 0.0
    %2364 = vmatprep.subr.mxu0 0.0
    %2365 = vmatpush2.msra.mxu0 0.0
    %2366 = vmatprep.subr.mxu0 0.0
    %2367 = vmatpush2.msra.mxu0 0.0
    %2368 = vmatprep.subr.mxu0 0.0
    %2369 = vmatpush2.msra.mxu0 0.0
    %2370 = vmatprep.subr.mxu0 0.0
    %2371 = vmatpush2.msra.mxu0 0.0
    %2372 = vmatprep.subr.mxu0 0.0
    %2373 = vmatpush2.msra.mxu0 0.0
    %2374 = vmatprep.subr.mxu0 0.0
    %2375 = vmatpush2.msra.mxu0 0.0
    %2376 = vmatprep.subr.mxu0 0.0
    %2377 = vmatpush2.msra.mxu0 0.0
    %2378 = vmatprep.subr.mxu0 0.0
    %2379 = vmatpush2.msra.mxu0 0.0
    %2380 = vmatprep.subr.mxu0 0.0
    %2381 = vmatpush2.msra.mxu0 0.0
    %2382 = vmatprep.subr.mxu0 0.0
    %2383 = vmatpush2.msra.mxu0 0.0
    %2384 = vmatprep.subr.mxu0 0.0
    %2385 = vmatpush2.msra.mxu0 0.0
    %2386 = vmatprep.subr.mxu0 0.0
    %2387 = vmatpush2.msra.mxu0 0.0
    %2388 = vmatprep.subr.mxu0 0.0
    %2389 = vmatpush2.msra.mxu0 0.0
    %2390 = vmatprep.mubr.f32.mxu0 0.0
    %v2391 = vand.u32 %v1992, 4294901760
    %v2392 = vsub.f32 %v1992, %v2391
    %v2393 = vand.u32 %v2392, 4294901760
    %2394 = vmatmul.mubr.f32.gmra.mxu0 %v2393
    %v2395 = vpop.f32.mrf.mxu0
    %v2396 = vadd.f32 %v2298, %v2395
    %v2397 = vpop.f32.mrf.mxu0
    %2398 = vmatprep.mubr.f32.mxu0 0.0
    %v2399 = vand.u32 %v1995, 4294901760
    %v2400 = vsub.f32 %v1995, %v2399
    %v2401 = vand.u32 %v2400, 4294901760
    %2402 = vmatmul.mubr.f32.gmra.mxu0 %v2401
    %v2403 = vpop.f32.mrf.mxu0
    %v2404 = vadd.f32 %v2305, %v2403
    %v2405 = vpop.f32.mrf.mxu0
    %2406 = vmatprep.mubr.f32.mxu0 0.0
    %v2407 = vand.u32 %v1998, 4294901760
    %v2408 = vsub.f32 %v1998, %v2407
    %v2409 = vand.u32 %v2408, 4294901760
    %2410 = vmatmul.mubr.f32.gmra.mxu0 %v2409
    %v2411 = vpop.f32.mrf.mxu0
    %v2412 = vadd.f32 %v2312, %v2411
    %v2413 = vpop.f32.mrf.mxu0
    %2414 = vmatprep.mubr.f32.mxu0 0.0
    %v2415 = vand.u32 %v2001, 4294901760
    %v2416 = vsub.f32 %v2001, %v2415
    %v2417 = vand.u32 %v2416, 4294901760
    %2418 = vmatmul.mubr.f32.gmra.mxu0 %v2417
    %v2419 = vpop.f32.mrf.mxu0
    %v2420 = vadd.f32 %v2319, %v2419
    %v2421 = vpop.f32.mrf.mxu0
    %2422 = vdwg.mxu0
    %2423 = vmatprep.subr.mxu0 0.0
    %2424 = vmatpush1.msra.mxu0 0.0
    %2425 = vmatprep.subr.mxu0 0.0
    %2426 = vmatpush1.msra.mxu0 0.0
    %2427 = vmatprep.subr.mxu0 0.0
    %2428 = vmatpush1.msra.mxu0 0.0
    %2429 = vmatprep.subr.mxu0 0.0
    %2430 = vmatpush1.msra.mxu0 0.0
    %2431 = vmatprep.subr.mxu0 0.0
    %2432 = vmatpush1.msra.mxu0 0.0
    %2433 = vmatprep.subr.mxu0 0.0
    %2434 = vmatpush1.msra.mxu0 0.0
    %2435 = vmatprep.subr.mxu0 0.0
    %2436 = vmatpush1.msra.mxu0 0.0
    %2437 = vmatprep.subr.mxu0 0.0
    %2438 = vmatpush1.msra.mxu0 0.0
    %2439 = vmatprep.subr.mxu0 0.0
    %2440 = vmatpush1.msra.mxu0 0.0
    %2441 = vmatprep.subr.mxu0 0.0
    %2442 = vmatpush1.msra.mxu0 0.0
    %2443 = vmatprep.subr.mxu0 0.0
    %2444 = vmatpush1.msra.mxu0 0.0
    %2445 = vmatprep.subr.mxu0 0.0
    %2446 = vmatpush1.msra.mxu0 0.0
    %2447 = vmatprep.subr.mxu0 0.0
    %v2448 = vand.u32 %v1990, 4294901760
    %v2449 = vsub.f32 %v1990, %v2448
    %v2450 = vand.u32 %v2449, 4294901760
    %2451 = vmatpush1.msra.mxu0 %v2450
    %2452 = vmatprep.subr.mxu0 0.0
    %v2453 = vand.u32 %v1989, 4294901760
    %v2454 = vsub.f32 %v1989, %v2453
    %v2455 = vand.u32 %v2454, 4294901760
    %2456 = vmatpush1.msra.mxu0 %v2455
    %2457 = vmatprep.subr.mxu0 0.0
    %v2458 = vand.u32 %v1988, 4294901760
    %v2459 = vsub.f32 %v1988, %v2458
    %v2460 = vand.u32 %v2459, 4294901760
    %2461 = vmatpush1.msra.mxu0 %v2460
    %2462 = vmatprep.subr.mxu0 0.0
    %v2463 = vand.u32 %v1987, 4294901760
    %v2464 = vsub.f32 %v1987, %v2463
    %v2465 = vand.u32 %v2464, 4294901760
    %2466 = vmatpush1.msra.mxu0 %v2465
    %2467 = vmatprep.subr.mxu0 0.0
    %2468 = vmatpush2.msra.mxu0 0.0
    %2469 = vmatprep.subr.mxu0 0.0
    %2470 = vmatpush2.msra.mxu0 0.0
    %2471 = vmatprep.subr.mxu0 0.0
    %2472 = vmatpush2.msra.mxu0 0.0
    %2473 = vmatprep.subr.mxu0 0.0
    %2474 = vmatpush2.msra.mxu0 0.0
    %2475 = vmatprep.subr.mxu0 0.0
    %2476 = vmatpush2.msra.mxu0 0.0
    %2477 = vmatprep.subr.mxu0 0.0
    %2478 = vmatpush2.msra.mxu0 0.0
    %2479 = vmatprep.subr.mxu0 0.0
    %2480 = vmatpush2.msra.mxu0 0.0
    %2481 = vmatprep.subr.mxu0 0.0
    %2482 = vmatpush2.msra.mxu0 0.0
    %2483 = vmatprep.subr.mxu0 0.0
    %2484 = vmatpush2.msra.mxu0 0.0
    %2485 = vmatprep.subr.mxu0 0.0
    %2486 = vmatpush2.msra.mxu0 0.0
    %2487 = vmatprep.subr.mxu0 0.0
    %2488 = vmatpush2.msra.mxu0 0.0
    %2489 = vmatprep.subr.mxu0 0.0
    %2490 = vmatpush2.msra.mxu0 0.0
    %2491 = vmatprep.subr.mxu0 0.0
    %2492 = vmatpush2.msra.mxu0 0.0
    %2493 = vmatprep.subr.mxu0 0.0
    %2494 = vmatpush2.msra.mxu0 0.0
    %2495 = vmatprep.subr.mxu0 0.0
    %2496 = vmatpush2.msra.mxu0 0.0
    %2497 = vmatprep.subr.mxu0 0.0
    %2498 = vmatpush2.msra.mxu0 0.0
    %2499 = vmatprep.mubr.f32.mxu0 0.0
    %v2500 = vand.u32 %v1992, 4294901760
    %2501 = vmatmul.mubr.f32.gmra.mxu0 %v2500
    %v2502 = vpop.f32.mrf.mxu0
    %v2503 = vadd.f32 %v2396, %v2502
    %v2504 = vpop.f32.mrf.mxu0
    %2505 = vmatprep.mubr.f32.mxu0 0.0
    %v2506 = vand.u32 %v1995, 4294901760
    %2507 = vmatmul.mubr.f32.gmra.mxu0 %v2506
    %v2508 = vpop.f32.mrf.mxu0
    %v2509 = vadd.f32 %v2404, %v2508
    %v2510 = vpop.f32.mrf.mxu0
    %2511 = vmatprep.mubr.f32.mxu0 0.0
    %v2512 = vand.u32 %v1998, 4294901760
    %2513 = vmatmul.mubr.f32.gmra.mxu0 %v2512
    %v2514 = vpop.f32.mrf.mxu0
    %v2515 = vadd.f32 %v2412, %v2514
    %v2516 = vpop.f32.mrf.mxu0
    %2517 = vmatprep.mubr.f32.mxu0 0.0
    %v2518 = vand.u32 %v2001, 4294901760
    %2519 = vmatmul.mubr.f32.gmra.mxu0 %v2518
    %v2520 = vpop.f32.mrf.mxu0
    %v2521 = vadd.f32 %v2420, %v2520
    %v2522 = vpop.f32.mrf.mxu0
    %2523 = vdwg.mxu0
    %2524 = vmatprep.subr.mxu0 0.0
    %2525 = vmatpush1.msra.mxu0 0.0
    %2526 = vmatprep.subr.mxu0 0.0
    %2527 = vmatpush1.msra.mxu0 0.0
    %2528 = vmatprep.subr.mxu0 0.0
    %2529 = vmatpush1.msra.mxu0 0.0
    %2530 = vmatprep.subr.mxu0 0.0
    %2531 = vmatpush1.msra.mxu0 0.0
    %2532 = vmatprep.subr.mxu0 0.0
    %2533 = vmatpush1.msra.mxu0 0.0
    %2534 = vmatprep.subr.mxu0 0.0
    %2535 = vmatpush1.msra.mxu0 0.0
    %2536 = vmatprep.subr.mxu0 0.0
    %2537 = vmatpush1.msra.mxu0 0.0
    %2538 = vmatprep.subr.mxu0 0.0
    %2539 = vmatpush1.msra.mxu0 0.0
    %2540 = vmatprep.subr.mxu0 0.0
    %2541 = vmatpush1.msra.mxu0 0.0
    %2542 = vmatprep.subr.mxu0 0.0
    %2543 = vmatpush1.msra.mxu0 0.0
    %2544 = vmatprep.subr.mxu0 0.0
    %2545 = vmatpush1.msra.mxu0 0.0
    %2546 = vmatprep.subr.mxu0 0.0
    %2547 = vmatpush1.msra.mxu0 0.0
    %2548 = vmatprep.subr.mxu0 0.0
    %v2549 = vand.u32 %v1990, 4294901760
    %2550 = vmatpush1.msra.mxu0 %v2549
    %2551 = vmatprep.subr.mxu0 0.0
    %v2552 = vand.u32 %v1989, 4294901760
    %2553 = vmatpush1.msra.mxu0 %v2552
    %2554 = vmatprep.subr.mxu0 0.0
    %v2555 = vand.u32 %v1988, 4294901760
    %2556 = vmatpush1.msra.mxu0 %v2555
    %2557 = vmatprep.subr.mxu0 0.0
    %v2558 = vand.u32 %v1987, 4294901760
    %2559 = vmatpush1.msra.mxu0 %v2558
    %2560 = vmatprep.subr.mxu0 0.0
    %2561 = vmatpush2.msra.mxu0 0.0
    %2562 = vmatprep.subr.mxu0 0.0
    %2563 = vmatpush2.msra.mxu0 0.0
    %2564 = vmatprep.subr.mxu0 0.0
    %2565 = vmatpush2.msra.mxu0 0.0
    %2566 = vmatprep.subr.mxu0 0.0
    %2567 = vmatpush2.msra.mxu0 0.0
    %2568 = vmatprep.subr.mxu0 0.0
    %2569 = vmatpush2.msra.mxu0 0.0
    %2570 = vmatprep.subr.mxu0 0.0
    %2571 = vmatpush2.msra.mxu0 0.0
    %2572 = vmatprep.subr.mxu0 0.0
    %2573 = vmatpush2.msra.mxu0 0.0
    %2574 = vmatprep.subr.mxu0 0.0
    %2575 = vmatpush2.msra.mxu0 0.0
    %2576 = vmatprep.subr.mxu0 0.0
    %2577 = vmatpush2.msra.mxu0 0.0
    %2578 = vmatprep.subr.mxu0 0.0
    %2579 = vmatpush2.msra.mxu0 0.0
    %2580 = vmatprep.subr.mxu0 0.0
    %2581 = vmatpush2.msra.mxu0 0.0
    %2582 = vmatprep.subr.mxu0 0.0
    %2583 = vmatpush2.msra.mxu0 0.0
    %2584 = vmatprep.subr.mxu0 0.0
    %2585 = vmatpush2.msra.mxu0 0.0
    %2586 = vmatprep.subr.mxu0 0.0
    %2587 = vmatpush2.msra.mxu0 0.0
    %2588 = vmatprep.subr.mxu0 0.0
    %2589 = vmatpush2.msra.mxu0 0.0
    %2590 = vmatprep.subr.mxu0 0.0
    %2591 = vmatpush2.msra.mxu0 0.0
    %2592 = vmatprep.mubr.f32.mxu0 0.0
    %v2593 = vand.u32 %v1992, 4294901760
    %2594 = vmatmul.mubr.f32.gmra.mxu0 %v2593
    %v2595 = vpop.f32.mrf.mxu0
    %v2596 = vadd.f32 %v2503, %v2595
    %v2597 = vpop.f32.mrf.mxu0
    %2598 = vmatprep.mubr.f32.mxu0 0.0
    %v2599 = vand.u32 %v1995, 4294901760
    %2600 = vmatmul.mubr.f32.gmra.mxu0 %v2599
    %v2601 = vpop.f32.mrf.mxu0
    %v2602 = vadd.f32 %v2509, %v2601
    %v2603 = vpop.f32.mrf.mxu0
    %2604 = vmatprep.mubr.f32.mxu0 0.0
    %v2605 = vand.u32 %v1998, 4294901760
    %2606 = vmatmul.mubr.f32.gmra.mxu0 %v2605
    %v2607 = vpop.f32.mrf.mxu0
    %v2608 = vadd.f32 %v2515, %v2607
    %v2609 = vpop.f32.mrf.mxu0
    %2610 = vmatprep.mubr.f32.mxu0 0.0
    %v2611 = vand.u32 %v2001, 4294901760
    %2612 = vmatmul.mubr.f32.gmra.mxu0 %v2611
    %v2613 = vpop.f32.mrf.mxu0
    %v2614 = vadd.f32 %v2521, %v2613
    %v2615 = vpop.f32.mrf.mxu0
    %2616 = vdwg.mxu0
    %v2617 = vadd.f32 %v1978, %v2596
    %v2618 = vadd.f32 %v1979, %v2602
    %v2619 = vadd.f32 %v1980, %v2608
    %v2620 = vadd.f32 %v1981, %v2614
    %v2621 = vld [vmem:[#allocation2 + $0x7] sm:$0xff]
    %v2622 = vld [vmem:[#allocation2 + $0xf] sm:$0xff]
    %v2623 = vld [vmem:[#allocation2 + $0x27] sm:$0xff]
    %v2624 = vld [vmem:[#allocation2 + $0x2f] sm:$0xff]
    %s2625 = scalar_lea.vmem [#allocation8], 128
    %v2626 = vld [vmem:[%s2625] sm:$0xff]
    %v2627 = vld [vmem:[%s2625 + $0x8] sm:$0xff]
    %v2628 = vld [vmem:[%s2625 + $0x10] sm:$0xff]
    %v2629 = vld [vmem:[%s2625 + $0x18] sm:$0xff]
    %v2631 = vsel %vm57, %v2621, 0
    %v2634 = vsel %vm57, %v2622, 0
    %v2637 = vsel %vm57, %v2623, 0
    %v2640 = vsel %vm57, %v2624, 0
    %2642 = vmatprep.subr.mxu0 0.0
    %2643 = vmatpush1.msra.mxu0 0.0
    %2644 = vmatprep.subr.mxu0 0.0
    %2645 = vmatpush1.msra.mxu0 0.0
    %2646 = vmatprep.subr.mxu0 0.0
    %2647 = vmatpush1.msra.mxu0 0.0
    %2648 = vmatprep.subr.mxu0 0.0
    %2649 = vmatpush1.msra.mxu0 0.0
    %2650 = vmatprep.subr.mxu0 0.0
    %2651 = vmatpush1.msra.mxu0 0.0
    %2652 = vmatprep.subr.mxu0 0.0
    %2653 = vmatpush1.msra.mxu0 0.0
    %2654 = vmatprep.subr.mxu0 0.0
    %2655 = vmatpush1.msra.mxu0 0.0
    %2656 = vmatprep.subr.mxu0 0.0
    %2657 = vmatpush1.msra.mxu0 0.0
    %2658 = vmatprep.subr.mxu0 0.0
    %2659 = vmatpush1.msra.mxu0 0.0
    %2660 = vmatprep.subr.mxu0 0.0
    %2661 = vmatpush1.msra.mxu0 0.0
    %2662 = vmatprep.subr.mxu0 0.0
    %2663 = vmatpush1.msra.mxu0 0.0
    %2664 = vmatprep.subr.mxu0 0.0
    %2665 = vmatpush1.msra.mxu0 0.0
    %2666 = vmatprep.subr.mxu0 0.0
    %v2667 = vand.u32 %v2629, 4294901760
    %2668 = vmatpush1.msra.mxu0 %v2667
    %2669 = vmatprep.subr.mxu0 0.0
    %v2670 = vand.u32 %v2628, 4294901760
    %2671 = vmatpush1.msra.mxu0 %v2670
    %2672 = vmatprep.subr.mxu0 0.0
    %v2673 = vand.u32 %v2627, 4294901760
    %2674 = vmatpush1.msra.mxu0 %v2673
    %2675 = vmatprep.subr.mxu0 0.0
    %v2676 = vand.u32 %v2626, 4294901760
    %2677 = vmatpush1.msra.mxu0 %v2676
    %2678 = vmatprep.subr.mxu0 0.0
    %2679 = vmatpush2.msra.mxu0 0.0
    %2680 = vmatprep.subr.mxu0 0.0
    %2681 = vmatpush2.msra.mxu0 0.0
    %2682 = vmatprep.subr.mxu0 0.0
    %2683 = vmatpush2.msra.mxu0 0.0
    %2684 = vmatprep.subr.mxu0 0.0
    %2685 = vmatpush2.msra.mxu0 0.0
    %2686 = vmatprep.subr.mxu0 0.0
    %2687 = vmatpush2.msra.mxu0 0.0
    %2688 = vmatprep.subr.mxu0 0.0
    %2689 = vmatpush2.msra.mxu0 0.0
    %2690 = vmatprep.subr.mxu0 0.0
    %2691 = vmatpush2.msra.mxu0 0.0
    %2692 = vmatprep.subr.mxu0 0.0
    %2693 = vmatpush2.msra.mxu0 0.0
    %2694 = vmatprep.subr.mxu0 0.0
    %2695 = vmatpush2.msra.mxu0 0.0
    %2696 = vmatprep.subr.mxu0 0.0
    %2697 = vmatpush2.msra.mxu0 0.0
    %2698 = vmatprep.subr.mxu0 0.0
    %2699 = vmatpush2.msra.mxu0 0.0
    %2700 = vmatprep.subr.mxu0 0.0
    %2701 = vmatpush2.msra.mxu0 0.0
    %2702 = vmatprep.subr.mxu0 0.0
    %2703 = vmatpush2.msra.mxu0 0.0
    %2704 = vmatprep.subr.mxu0 0.0
    %2705 = vmatpush2.msra.mxu0 0.0
    %2706 = vmatprep.subr.mxu0 0.0
    %2707 = vmatpush2.msra.mxu0 0.0
    %2708 = vmatprep.subr.mxu0 0.0
    %2709 = vmatpush2.msra.mxu0 0.0
    %2710 = vmatprep.mubr.f32.mxu0 0.0
    %v2711 = vand.u32 %v2631, 4294901760
    %v2712 = vsub.f32 %v2631, %v2711
    %v2713 = vand.u32 %v2712, 4294901760
    %v2714 = vsub.f32 %v2712, %v2713
    %v2715 = vand.u32 %v2714, 4294901760
    %2716 = vmatmul.mubr.f32.gmra.mxu0 %v2715
    %v2717 = vpop.f32.mrf.mxu0
    %v2718 = vadd.f32 0.0, %v2717
    %v2719 = vpop.f32.mrf.mxu0
    %2720 = vmatprep.mubr.f32.mxu0 0.0
    %v2721 = vand.u32 %v2634, 4294901760
    %v2722 = vsub.f32 %v2634, %v2721
    %v2723 = vand.u32 %v2722, 4294901760
    %v2724 = vsub.f32 %v2722, %v2723
    %v2725 = vand.u32 %v2724, 4294901760
    %2726 = vmatmul.mubr.f32.gmra.mxu0 %v2725
    %v2727 = vpop.f32.mrf.mxu0
    %v2728 = vadd.f32 0.0, %v2727
    %v2729 = vpop.f32.mrf.mxu0
    %2730 = vmatprep.mubr.f32.mxu0 0.0
    %v2731 = vand.u32 %v2637, 4294901760
    %v2732 = vsub.f32 %v2637, %v2731
    %v2733 = vand.u32 %v2732, 4294901760
    %v2734 = vsub.f32 %v2732, %v2733
    %v2735 = vand.u32 %v2734, 4294901760
    %2736 = vmatmul.mubr.f32.gmra.mxu0 %v2735
    %v2737 = vpop.f32.mrf.mxu0
    %v2738 = vadd.f32 0.0, %v2737
    %v2739 = vpop.f32.mrf.mxu0
    %2740 = vmatprep.mubr.f32.mxu0 0.0
    %v2741 = vand.u32 %v2640, 4294901760
    %v2742 = vsub.f32 %v2640, %v2741
    %v2743 = vand.u32 %v2742, 4294901760
    %v2744 = vsub.f32 %v2742, %v2743
    %v2745 = vand.u32 %v2744, 4294901760
    %2746 = vmatmul.mubr.f32.gmra.mxu0 %v2745
    %v2747 = vpop.f32.mrf.mxu0
    %v2748 = vadd.f32 0.0, %v2747
    %v2749 = vpop.f32.mrf.mxu0
    %2750 = vdwg.mxu0
    %2751 = vmatprep.subr.mxu0 0.0
    %2752 = vmatpush1.msra.mxu0 0.0
    %2753 = vmatprep.subr.mxu0 0.0
    %2754 = vmatpush1.msra.mxu0 0.0
    %2755 = vmatprep.subr.mxu0 0.0
    %2756 = vmatpush1.msra.mxu0 0.0
    %2757 = vmatprep.subr.mxu0 0.0
    %2758 = vmatpush1.msra.mxu0 0.0
    %2759 = vmatprep.subr.mxu0 0.0
    %2760 = vmatpush1.msra.mxu0 0.0
    %2761 = vmatprep.subr.mxu0 0.0
    %2762 = vmatpush1.msra.mxu0 0.0
    %2763 = vmatprep.subr.mxu0 0.0
    %2764 = vmatpush1.msra.mxu0 0.0
    %2765 = vmatprep.subr.mxu0 0.0
    %2766 = vmatpush1.msra.mxu0 0.0
    %2767 = vmatprep.subr.mxu0 0.0
    %2768 = vmatpush1.msra.mxu0 0.0
    %2769 = vmatprep.subr.mxu0 0.0
    %2770 = vmatpush1.msra.mxu0 0.0
    %2771 = vmatprep.subr.mxu0 0.0
    %2772 = vmatpush1.msra.mxu0 0.0
    %2773 = vmatprep.subr.mxu0 0.0
    %2774 = vmatpush1.msra.mxu0 0.0
    %2775 = vmatprep.subr.mxu0 0.0
    %v2776 = vand.u32 %v2629, 4294901760
    %v2777 = vsub.f32 %v2629, %v2776
    %v2778 = vand.u32 %v2777, 4294901760
    %v2779 = vsub.f32 %v2777, %v2778
    %v2780 = vand.u32 %v2779, 4294901760
    %2781 = vmatpush1.msra.mxu0 %v2780
    %2782 = vmatprep.subr.mxu0 0.0
    %v2783 = vand.u32 %v2628, 4294901760
    %v2784 = vsub.f32 %v2628, %v2783
    %v2785 = vand.u32 %v2784, 4294901760
    %v2786 = vsub.f32 %v2784, %v2785
    %v2787 = vand.u32 %v2786, 4294901760
    %2788 = vmatpush1.msra.mxu0 %v2787
    %2789 = vmatprep.subr.mxu0 0.0
    %v2790 = vand.u32 %v2627, 4294901760
    %v2791 = vsub.f32 %v2627, %v2790
    %v2792 = vand.u32 %v2791, 4294901760
    %v2793 = vsub.f32 %v2791, %v2792
    %v2794 = vand.u32 %v2793, 4294901760
    %2795 = vmatpush1.msra.mxu0 %v2794
    %2796 = vmatprep.subr.mxu0 0.0
    %v2797 = vand.u32 %v2626, 4294901760
    %v2798 = vsub.f32 %v2626, %v2797
    %v2799 = vand.u32 %v2798, 4294901760
    %v2800 = vsub.f32 %v2798, %v2799
    %v2801 = vand.u32 %v2800, 4294901760
    %2802 = vmatpush1.msra.mxu0 %v2801
    %2803 = vmatprep.subr.mxu0 0.0
    %2804 = vmatpush2.msra.mxu0 0.0
    %2805 = vmatprep.subr.mxu0 0.0
    %2806 = vmatpush2.msra.mxu0 0.0
    %2807 = vmatprep.subr.mxu0 0.0
    %2808 = vmatpush2.msra.mxu0 0.0
    %2809 = vmatprep.subr.mxu0 0.0
    %2810 = vmatpush2.msra.mxu0 0.0
    %2811 = vmatprep.subr.mxu0 0.0
    %2812 = vmatpush2.msra.mxu0 0.0
    %2813 = vmatprep.subr.mxu0 0.0
    %2814 = vmatpush2.msra.mxu0 0.0
    %2815 = vmatprep.subr.mxu0 0.0
    %2816 = vmatpush2.msra.mxu0 0.0
    %2817 = vmatprep.subr.mxu0 0.0
    %2818 = vmatpush2.msra.mxu0 0.0
    %2819 = vmatprep.subr.mxu0 0.0
    %2820 = vmatpush2.msra.mxu0 0.0
    %2821 = vmatprep.subr.mxu0 0.0
    %2822 = vmatpush2.msra.mxu0 0.0
    %2823 = vmatprep.subr.mxu0 0.0
    %2824 = vmatpush2.msra.mxu0 0.0
    %2825 = vmatprep.subr.mxu0 0.0
    %2826 = vmatpush2.msra.mxu0 0.0
    %2827 = vmatprep.subr.mxu0 0.0
    %2828 = vmatpush2.msra.mxu0 0.0
    %2829 = vmatprep.subr.mxu0 0.0
    %2830 = vmatpush2.msra.mxu0 0.0
    %2831 = vmatprep.subr.mxu0 0.0
    %2832 = vmatpush2.msra.mxu0 0.0
    %2833 = vmatprep.subr.mxu0 0.0
    %2834 = vmatpush2.msra.mxu0 0.0
    %2835 = vmatprep.mubr.f32.mxu0 0.0
    %v2836 = vand.u32 %v2631, 4294901760
    %2837 = vmatmul.mubr.f32.gmra.mxu0 %v2836
    %v2838 = vpop.f32.mrf.mxu0
    %v2839 = vadd.f32 %v2718, %v2838
    %v2840 = vpop.f32.mrf.mxu0
    %2841 = vmatprep.mubr.f32.mxu0 0.0
    %v2842 = vand.u32 %v2634, 4294901760
    %2843 = vmatmul.mubr.f32.gmra.mxu0 %v2842
    %v2844 = vpop.f32.mrf.mxu0
    %v2845 = vadd.f32 %v2728, %v2844
    %v2846 = vpop.f32.mrf.mxu0
    %2847 = vmatprep.mubr.f32.mxu0 0.0
    %v2848 = vand.u32 %v2637, 4294901760
    %2849 = vmatmul.mubr.f32.gmra.mxu0 %v2848
    %v2850 = vpop.f32.mrf.mxu0
    %v2851 = vadd.f32 %v2738, %v2850
    %v2852 = vpop.f32.mrf.mxu0
    %2853 = vmatprep.mubr.f32.mxu0 0.0
    %v2854 = vand.u32 %v2640, 4294901760
    %2855 = vmatmul.mubr.f32.gmra.mxu0 %v2854
    %v2856 = vpop.f32.mrf.mxu0
    %v2857 = vadd.f32 %v2748, %v2856
    %v2858 = vpop.f32.mrf.mxu0
    %2859 = vdwg.mxu0
    %2860 = vmatprep.subr.mxu0 0.0
    %2861 = vmatpush1.msra.mxu0 0.0
    %2862 = vmatprep.subr.mxu0 0.0
    %2863 = vmatpush1.msra.mxu0 0.0
    %2864 = vmatprep.subr.mxu0 0.0
    %2865 = vmatpush1.msra.mxu0 0.0
    %2866 = vmatprep.subr.mxu0 0.0
    %2867 = vmatpush1.msra.mxu0 0.0
    %2868 = vmatprep.subr.mxu0 0.0
    %2869 = vmatpush1.msra.mxu0 0.0
    %2870 = vmatprep.subr.mxu0 0.0
    %2871 = vmatpush1.msra.mxu0 0.0
    %2872 = vmatprep.subr.mxu0 0.0
    %2873 = vmatpush1.msra.mxu0 0.0
    %2874 = vmatprep.subr.mxu0 0.0
    %2875 = vmatpush1.msra.mxu0 0.0
    %2876 = vmatprep.subr.mxu0 0.0
    %2877 = vmatpush1.msra.mxu0 0.0
    %2878 = vmatprep.subr.mxu0 0.0
    %2879 = vmatpush1.msra.mxu0 0.0
    %2880 = vmatprep.subr.mxu0 0.0
    %2881 = vmatpush1.msra.mxu0 0.0
    %2882 = vmatprep.subr.mxu0 0.0
    %2883 = vmatpush1.msra.mxu0 0.0
    %2884 = vmatprep.subr.mxu0 0.0
    %v2885 = vand.u32 %v2629, 4294901760
    %v2886 = vsub.f32 %v2629, %v2885
    %2887 = vmatpush1.msra.mxu0 %v2886
    %2888 = vmatprep.subr.mxu0 0.0
    %v2889 = vand.u32 %v2628, 4294901760
    %v2890 = vsub.f32 %v2628, %v2889
    %2891 = vmatpush1.msra.mxu0 %v2890
    %2892 = vmatprep.subr.mxu0 0.0
    %v2893 = vand.u32 %v2627, 4294901760
    %v2894 = vsub.f32 %v2627, %v2893
    %2895 = vmatpush1.msra.mxu0 %v2894
    %2896 = vmatprep.subr.mxu0 0.0
    %v2897 = vand.u32 %v2626, 4294901760
    %v2898 = vsub.f32 %v2626, %v2897
    %2899 = vmatpush1.msra.mxu0 %v2898
    %2900 = vmatprep.subr.mxu0 0.0
    %2901 = vmatpush2.msra.mxu0 0.0
    %2902 = vmatprep.subr.mxu0 0.0
    %2903 = vmatpush2.msra.mxu0 0.0
    %2904 = vmatprep.subr.mxu0 0.0
    %2905 = vmatpush2.msra.mxu0 0.0
    %2906 = vmatprep.subr.mxu0 0.0
    %2907 = vmatpush2.msra.mxu0 0.0
    %2908 = vmatprep.subr.mxu0 0.0
    %2909 = vmatpush2.msra.mxu0 0.0
    %2910 = vmatprep.subr.mxu0 0.0
    %2911 = vmatpush2.msra.mxu0 0.0
    %2912 = vmatprep.subr.mxu0 0.0
    %2913 = vmatpush2.msra.mxu0 0.0
    %2914 = vmatprep.subr.mxu0 0.0
    %2915 = vmatpush2.msra.mxu0 0.0
    %2916 = vmatprep.subr.mxu0 0.0
    %2917 = vmatpush2.msra.mxu0 0.0
    %2918 = vmatprep.subr.mxu0 0.0
    %2919 = vmatpush2.msra.mxu0 0.0
    %2920 = vmatprep.subr.mxu0 0.0
    %2921 = vmatpush2.msra.mxu0 0.0
    %2922 = vmatprep.subr.mxu0 0.0
    %2923 = vmatpush2.msra.mxu0 0.0
    %2924 = vmatprep.subr.mxu0 0.0
    %2925 = vmatpush2.msra.mxu0 0.0
    %2926 = vmatprep.subr.mxu0 0.0
    %2927 = vmatpush2.msra.mxu0 0.0
    %2928 = vmatprep.subr.mxu0 0.0
    %2929 = vmatpush2.msra.mxu0 0.0
    %2930 = vmatprep.subr.mxu0 0.0
    %2931 = vmatpush2.msra.mxu0 0.0
    %2932 = vmatprep.mubr.f32.mxu0 0.0
    %v2933 = vand.u32 %v2631, 4294901760
    %v2934 = vsub.f32 %v2631, %v2933
    %2935 = vmatmul.mubr.f32.gmra.mxu0 %v2934
    %v2936 = vpop.f32.mrf.mxu0
    %v2937 = vadd.f32 %v2839, %v2936
    %v2938 = vpop.f32.mrf.mxu0
    %2939 = vmatprep.mubr.f32.mxu0 0.0
    %v2940 = vand.u32 %v2634, 4294901760
    %v2941 = vsub.f32 %v2634, %v2940
    %2942 = vmatmul.mubr.f32.gmra.mxu0 %v2941
    %v2943 = vpop.f32.mrf.mxu0
    %v2944 = vadd.f32 %v2845, %v2943
    %v2945 = vpop.f32.mrf.mxu0
    %2946 = vmatprep.mubr.f32.mxu0 0.0
    %v2947 = vand.u32 %v2637, 4294901760
    %v2948 = vsub.f32 %v2637, %v2947
    %2949 = vmatmul.mubr.f32.gmra.mxu0 %v2948
    %v2950 = vpop.f32.mrf.mxu0
    %v2951 = vadd.f32 %v2851, %v2950
    %v2952 = vpop.f32.mrf.mxu0
    %2953 = vmatprep.mubr.f32.mxu0 0.0
    %v2954 = vand.u32 %v2640, 4294901760
    %v2955 = vsub.f32 %v2640, %v2954
    %2956 = vmatmul.mubr.f32.gmra.mxu0 %v2955
    %v2957 = vpop.f32.mrf.mxu0
    %v2958 = vadd.f32 %v2857, %v2957
    %v2959 = vpop.f32.mrf.mxu0
    %2960 = vdwg.mxu0
    %2961 = vmatprep.subr.mxu0 0.0
    %2962 = vmatpush1.msra.mxu0 0.0
    %2963 = vmatprep.subr.mxu0 0.0
    %2964 = vmatpush1.msra.mxu0 0.0
    %2965 = vmatprep.subr.mxu0 0.0
    %2966 = vmatpush1.msra.mxu0 0.0
    %2967 = vmatprep.subr.mxu0 0.0
    %2968 = vmatpush1.msra.mxu0 0.0
    %2969 = vmatprep.subr.mxu0 0.0
    %2970 = vmatpush1.msra.mxu0 0.0
    %2971 = vmatprep.subr.mxu0 0.0
    %2972 = vmatpush1.msra.mxu0 0.0
    %2973 = vmatprep.subr.mxu0 0.0
    %2974 = vmatpush1.msra.mxu0 0.0
    %2975 = vmatprep.subr.mxu0 0.0
    %2976 = vmatpush1.msra.mxu0 0.0
    %2977 = vmatprep.subr.mxu0 0.0
    %2978 = vmatpush1.msra.mxu0 0.0
    %2979 = vmatprep.subr.mxu0 0.0
    %2980 = vmatpush1.msra.mxu0 0.0
    %2981 = vmatprep.subr.mxu0 0.0
    %2982 = vmatpush1.msra.mxu0 0.0
    %2983 = vmatprep.subr.mxu0 0.0
    %2984 = vmatpush1.msra.mxu0 0.0
    %2985 = vmatprep.subr.mxu0 0.0
    %v2986 = vand.u32 %v2629, 4294901760
    %2987 = vmatpush1.msra.mxu0 %v2986
    %2988 = vmatprep.subr.mxu0 0.0
    %v2989 = vand.u32 %v2628, 4294901760
    %2990 = vmatpush1.msra.mxu0 %v2989
    %2991 = vmatprep.subr.mxu0 0.0
    %v2992 = vand.u32 %v2627, 4294901760
    %2993 = vmatpush1.msra.mxu0 %v2992
    %2994 = vmatprep.subr.mxu0 0.0
    %v2995 = vand.u32 %v2626, 4294901760
    %2996 = vmatpush1.msra.mxu0 %v2995
    %2997 = vmatprep.subr.mxu0 0.0
    %2998 = vmatpush2.msra.mxu0 0.0
    %2999 = vmatprep.subr.mxu0 0.0
    %3000 = vmatpush2.msra.mxu0 0.0
    %3001 = vmatprep.subr.mxu0 0.0
    %3002 = vmatpush2.msra.mxu0 0.0
    %3003 = vmatprep.subr.mxu0 0.0
    %3004 = vmatpush2.msra.mxu0 0.0
    %3005 = vmatprep.subr.mxu0 0.0
    %3006 = vmatpush2.msra.mxu0 0.0
    %3007 = vmatprep.subr.mxu0 0.0
    %3008 = vmatpush2.msra.mxu0 0.0
    %3009 = vmatprep.subr.mxu0 0.0
    %3010 = vmatpush2.msra.mxu0 0.0
    %3011 = vmatprep.subr.mxu0 0.0
    %3012 = vmatpush2.msra.mxu0 0.0
    %3013 = vmatprep.subr.mxu0 0.0
    %3014 = vmatpush2.msra.mxu0 0.0
    %3015 = vmatprep.subr.mxu0 0.0
    %3016 = vmatpush2.msra.mxu0 0.0
    %3017 = vmatprep.subr.mxu0 0.0
    %3018 = vmatpush2.msra.mxu0 0.0
    %3019 = vmatprep.subr.mxu0 0.0
    %3020 = vmatpush2.msra.mxu0 0.0
    %3021 = vmatprep.subr.mxu0 0.0
    %3022 = vmatpush2.msra.mxu0 0.0
    %3023 = vmatprep.subr.mxu0 0.0
    %3024 = vmatpush2.msra.mxu0 0.0
    %3025 = vmatprep.subr.mxu0 0.0
    %3026 = vmatpush2.msra.mxu0 0.0
    %3027 = vmatprep.subr.mxu0 0.0
    %3028 = vmatpush2.msra.mxu0 0.0
    %3029 = vmatprep.mubr.f32.mxu0 0.0
    %v3030 = vand.u32 %v2631, 4294901760
    %v3031 = vsub.f32 %v2631, %v3030
    %v3032 = vand.u32 %v3031, 4294901760
    %3033 = vmatmul.mubr.f32.gmra.mxu0 %v3032
    %v3034 = vpop.f32.mrf.mxu0
    %v3035 = vadd.f32 %v2937, %v3034
    %v3036 = vpop.f32.mrf.mxu0
    %3037 = vmatprep.mubr.f32.mxu0 0.0
    %v3038 = vand.u32 %v2634, 4294901760
    %v3039 = vsub.f32 %v2634, %v3038
    %v3040 = vand.u32 %v3039, 4294901760
    %3041 = vmatmul.mubr.f32.gmra.mxu0 %v3040
    %v3042 = vpop.f32.mrf.mxu0
    %v3043 = vadd.f32 %v2944, %v3042
    %v3044 = vpop.f32.mrf.mxu0
    %3045 = vmatprep.mubr.f32.mxu0 0.0
    %v3046 = vand.u32 %v2637, 4294901760
    %v3047 = vsub.f32 %v2637, %v3046
    %v3048 = vand.u32 %v3047, 4294901760
    %3049 = vmatmul.mubr.f32.gmra.mxu0 %v3048
    %v3050 = vpop.f32.mrf.mxu0
    %v3051 = vadd.f32 %v2951, %v3050
    %v3052 = vpop.f32.mrf.mxu0
    %3053 = vmatprep.mubr.f32.mxu0 0.0
    %v3054 = vand.u32 %v2640, 4294901760
    %v3055 = vsub.f32 %v2640, %v3054
    %v3056 = vand.u32 %v3055, 4294901760
    %3057 = vmatmul.mubr.f32.gmra.mxu0 %v3056
    %v3058 = vpop.f32.mrf.mxu0
    %v3059 = vadd.f32 %v2958, %v3058
    %v3060 = vpop.f32.mrf.mxu0
    %3061 = vdwg.mxu0
    %3062 = vmatprep.subr.mxu0 0.0
    %3063 = vmatpush1.msra.mxu0 0.0
    %3064 = vmatprep.subr.mxu0 0.0
    %3065 = vmatpush1.msra.mxu0 0.0
    %3066 = vmatprep.subr.mxu0 0.0
    %3067 = vmatpush1.msra.mxu0 0.0
    %3068 = vmatprep.subr.mxu0 0.0
    %3069 = vmatpush1.msra.mxu0 0.0
    %3070 = vmatprep.subr.mxu0 0.0
    %3071 = vmatpush1.msra.mxu0 0.0
    %3072 = vmatprep.subr.mxu0 0.0
    %3073 = vmatpush1.msra.mxu0 0.0
    %3074 = vmatprep.subr.mxu0 0.0
    %3075 = vmatpush1.msra.mxu0 0.0
    %3076 = vmatprep.subr.mxu0 0.0
    %3077 = vmatpush1.msra.mxu0 0.0
    %3078 = vmatprep.subr.mxu0 0.0
    %3079 = vmatpush1.msra.mxu0 0.0
    %3080 = vmatprep.subr.mxu0 0.0
    %3081 = vmatpush1.msra.mxu0 0.0
    %3082 = vmatprep.subr.mxu0 0.0
    %3083 = vmatpush1.msra.mxu0 0.0
    %3084 = vmatprep.subr.mxu0 0.0
    %3085 = vmatpush1.msra.mxu0 0.0
    %3086 = vmatprep.subr.mxu0 0.0
    %v3087 = vand.u32 %v2629, 4294901760
    %v3088 = vsub.f32 %v2629, %v3087
    %v3089 = vand.u32 %v3088, 4294901760
    %3090 = vmatpush1.msra.mxu0 %v3089
    %3091 = vmatprep.subr.mxu0 0.0
    %v3092 = vand.u32 %v2628, 4294901760
    %v3093 = vsub.f32 %v2628, %v3092
    %v3094 = vand.u32 %v3093, 4294901760
    %3095 = vmatpush1.msra.mxu0 %v3094
    %3096 = vmatprep.subr.mxu0 0.0
    %v3097 = vand.u32 %v2627, 4294901760
    %v3098 = vsub.f32 %v2627, %v3097
    %v3099 = vand.u32 %v3098, 4294901760
    %3100 = vmatpush1.msra.mxu0 %v3099
    %3101 = vmatprep.subr.mxu0 0.0
    %v3102 = vand.u32 %v2626, 4294901760
    %v3103 = vsub.f32 %v2626, %v3102
    %v3104 = vand.u32 %v3103, 4294901760
    %3105 = vmatpush1.msra.mxu0 %v3104
    %3106 = vmatprep.subr.mxu0 0.0
    %3107 = vmatpush2.msra.mxu0 0.0
    %3108 = vmatprep.subr.mxu0 0.0
    %3109 = vmatpush2.msra.mxu0 0.0
    %3110 = vmatprep.subr.mxu0 0.0
    %3111 = vmatpush2.msra.mxu0 0.0
    %3112 = vmatprep.subr.mxu0 0.0
    %3113 = vmatpush2.msra.mxu0 0.0
    %3114 = vmatprep.subr.mxu0 0.0
    %3115 = vmatpush2.msra.mxu0 0.0
    %3116 = vmatprep.subr.mxu0 0.0
    %3117 = vmatpush2.msra.mxu0 0.0
    %3118 = vmatprep.subr.mxu0 0.0
    %3119 = vmatpush2.msra.mxu0 0.0
    %3120 = vmatprep.subr.mxu0 0.0
    %3121 = vmatpush2.msra.mxu0 0.0
    %3122 = vmatprep.subr.mxu0 0.0
    %3123 = vmatpush2.msra.mxu0 0.0
    %3124 = vmatprep.subr.mxu0 0.0
    %3125 = vmatpush2.msra.mxu0 0.0
    %3126 = vmatprep.subr.mxu0 0.0
    %3127 = vmatpush2.msra.mxu0 0.0
    %3128 = vmatprep.subr.mxu0 0.0
    %3129 = vmatpush2.msra.mxu0 0.0
    %3130 = vmatprep.subr.mxu0 0.0
    %3131 = vmatpush2.msra.mxu0 0.0
    %3132 = vmatprep.subr.mxu0 0.0
    %3133 = vmatpush2.msra.mxu0 0.0
    %3134 = vmatprep.subr.mxu0 0.0
    %3135 = vmatpush2.msra.mxu0 0.0
    %3136 = vmatprep.subr.mxu0 0.0
    %3137 = vmatpush2.msra.mxu0 0.0
    %3138 = vmatprep.mubr.f32.mxu0 0.0
    %v3139 = vand.u32 %v2631, 4294901760
    %3140 = vmatmul.mubr.f32.gmra.mxu0 %v3139
    %v3141 = vpop.f32.mrf.mxu0
    %v3142 = vadd.f32 %v3035, %v3141
    %v3143 = vpop.f32.mrf.mxu0
    %3144 = vmatprep.mubr.f32.mxu0 0.0
    %v3145 = vand.u32 %v2634, 4294901760
    %3146 = vmatmul.mubr.f32.gmra.mxu0 %v3145
    %v3147 = vpop.f32.mrf.mxu0
    %v3148 = vadd.f32 %v3043, %v3147
    %v3149 = vpop.f32.mrf.mxu0
    %3150 = vmatprep.mubr.f32.mxu0 0.0
    %v3151 = vand.u32 %v2637, 4294901760
    %3152 = vmatmul.mubr.f32.gmra.mxu0 %v3151
    %v3153 = vpop.f32.mrf.mxu0
    %v3154 = vadd.f32 %v3051, %v3153
    %v3155 = vpop.f32.mrf.mxu0
    %3156 = vmatprep.mubr.f32.mxu0 0.0
    %v3157 = vand.u32 %v2640, 4294901760
    %3158 = vmatmul.mubr.f32.gmra.mxu0 %v3157
    %v3159 = vpop.f32.mrf.mxu0
    %v3160 = vadd.f32 %v3059, %v3159
    %v3161 = vpop.f32.mrf.mxu0
    %3162 = vdwg.mxu0
    %3163 = vmatprep.subr.mxu0 0.0
    %3164 = vmatpush1.msra.mxu0 0.0
    %3165 = vmatprep.subr.mxu0 0.0
    %3166 = vmatpush1.msra.mxu0 0.0
    %3167 = vmatprep.subr.mxu0 0.0
    %3168 = vmatpush1.msra.mxu0 0.0
    %3169 = vmatprep.subr.mxu0 0.0
    %3170 = vmatpush1.msra.mxu0 0.0
    %3171 = vmatprep.subr.mxu0 0.0
    %3172 = vmatpush1.msra.mxu0 0.0
    %3173 = vmatprep.subr.mxu0 0.0
    %3174 = vmatpush1.msra.mxu0 0.0
    %3175 = vmatprep.subr.mxu0 0.0
    %3176 = vmatpush1.msra.mxu0 0.0
    %3177 = vmatprep.subr.mxu0 0.0
    %3178 = vmatpush1.msra.mxu0 0.0
    %3179 = vmatprep.subr.mxu0 0.0
    %3180 = vmatpush1.msra.mxu0 0.0
    %3181 = vmatprep.subr.mxu0 0.0
    %3182 = vmatpush1.msra.mxu0 0.0
    %3183 = vmatprep.subr.mxu0 0.0
    %3184 = vmatpush1.msra.mxu0 0.0
    %3185 = vmatprep.subr.mxu0 0.0
    %3186 = vmatpush1.msra.mxu0 0.0
    %3187 = vmatprep.subr.mxu0 0.0
    %v3188 = vand.u32 %v2629, 4294901760
    %3189 = vmatpush1.msra.mxu0 %v3188
    %3190 = vmatprep.subr.mxu0 0.0
    %v3191 = vand.u32 %v2628, 4294901760
    %3192 = vmatpush1.msra.mxu0 %v3191
    %3193 = vmatprep.subr.mxu0 0.0
    %v3194 = vand.u32 %v2627, 4294901760
    %3195 = vmatpush1.msra.mxu0 %v3194
    %3196 = vmatprep.subr.mxu0 0.0
    %v3197 = vand.u32 %v2626, 4294901760
    %3198 = vmatpush1.msra.mxu0 %v3197
    %3199 = vmatprep.subr.mxu0 0.0
    %3200 = vmatpush2.msra.mxu0 0.0
    %3201 = vmatprep.subr.mxu0 0.0
    %3202 = vmatpush2.msra.mxu0 0.0
    %3203 = vmatprep.subr.mxu0 0.0
    %3204 = vmatpush2.msra.mxu0 0.0
    %3205 = vmatprep.subr.mxu0 0.0
    %3206 = vmatpush2.msra.mxu0 0.0
    %3207 = vmatprep.subr.mxu0 0.0
    %3208 = vmatpush2.msra.mxu0 0.0
    %3209 = vmatprep.subr.mxu0 0.0
    %3210 = vmatpush2.msra.mxu0 0.0
    %3211 = vmatprep.subr.mxu0 0.0
    %3212 = vmatpush2.msra.mxu0 0.0
    %3213 = vmatprep.subr.mxu0 0.0
    %3214 = vmatpush2.msra.mxu0 0.0
    %3215 = vmatprep.subr.mxu0 0.0
    %3216 = vmatpush2.msra.mxu0 0.0
    %3217 = vmatprep.subr.mxu0 0.0
    %3218 = vmatpush2.msra.mxu0 0.0
    %3219 = vmatprep.subr.mxu0 0.0
    %3220 = vmatpush2.msra.mxu0 0.0
    %3221 = vmatprep.subr.mxu0 0.0
    %3222 = vmatpush2.msra.mxu0 0.0
    %3223 = vmatprep.subr.mxu0 0.0
    %3224 = vmatpush2.msra.mxu0 0.0
    %3225 = vmatprep.subr.mxu0 0.0
    %3226 = vmatpush2.msra.mxu0 0.0
    %3227 = vmatprep.subr.mxu0 0.0
    %3228 = vmatpush2.msra.mxu0 0.0
    %3229 = vmatprep.subr.mxu0 0.0
    %3230 = vmatpush2.msra.mxu0 0.0
    %3231 = vmatprep.mubr.f32.mxu0 0.0
    %v3232 = vand.u32 %v2631, 4294901760
    %3233 = vmatmul.mubr.f32.gmra.mxu0 %v3232
    %v3234 = vpop.f32.mrf.mxu0
    %v3235 = vadd.f32 %v3142, %v3234
    %v3236 = vpop.f32.mrf.mxu0
    %3237 = vmatprep.mubr.f32.mxu0 0.0
    %v3238 = vand.u32 %v2634, 4294901760
    %3239 = vmatmul.mubr.f32.gmra.mxu0 %v3238
    %v3240 = vpop.f32.mrf.mxu0
    %v3241 = vadd.f32 %v3148, %v3240
    %v3242 = vpop.f32.mrf.mxu0
    %3243 = vmatprep.mubr.f32.mxu0 0.0
    %v3244 = vand.u32 %v2637, 4294901760
    %3245 = vmatmul.mubr.f32.gmra.mxu0 %v3244
    %v3246 = vpop.f32.mrf.mxu0
    %v3247 = vadd.f32 %v3154, %v3246
    %v3248 = vpop.f32.mrf.mxu0
    %3249 = vmatprep.mubr.f32.mxu0 0.0
    %v3250 = vand.u32 %v2640, 4294901760
    %3251 = vmatmul.mubr.f32.gmra.mxu0 %v3250
    %v3252 = vpop.f32.mrf.mxu0
    %v3253 = vadd.f32 %v3160, %v3252
    %v3254 = vpop.f32.mrf.mxu0
    %3255 = vdwg.mxu0
    %v3256 = vadd.f32 %v2617, %v3235
    %v3257 = vadd.f32 %v2618, %v3241
    %v3258 = vadd.f32 %v2619, %v3247
    %v3259 = vadd.f32 %v2620, %v3253
    %v3260 = vld [vmem:[#allocation2 + $0x8] sm:$0xff]
    %v3261 = vld [vmem:[#allocation2 + $0x10] sm:$0xff]
    %v3262 = vld [vmem:[#allocation2 + $0x28] sm:$0xff]
    %v3263 = vld [vmem:[#allocation2 + $0x30] sm:$0xff]
    %s3264 = scalar_lea.vmem [#allocation8], 160
    %v3265 = vld [vmem:[%s3264] sm:$0xff]
    %v3266 = vld [vmem:[%s3264 + $0x8] sm:$0xff]
    %v3267 = vld [vmem:[%s3264 + $0x10] sm:$0xff]
    %v3268 = vld [vmem:[%s3264 + $0x18] sm:$0xff]
    %v3270 = vsel %vm57, %v3260, 0
    %v3273 = vsel %vm57, %v3261, 0
    %v3276 = vsel %vm57, %v3262, 0
    %v3279 = vsel %vm57, %v3263, 0
    %3281 = vmatprep.subr.mxu0 0.0
    %3282 = vmatpush1.msra.mxu0 0.0
    %3283 = vmatprep.subr.mxu0 0.0
    %3284 = vmatpush1.msra.mxu0 0.0
    %3285 = vmatprep.subr.mxu0 0.0
    %3286 = vmatpush1.msra.mxu0 0.0
    %3287 = vmatprep.subr.mxu0 0.0
    %3288 = vmatpush1.msra.mxu0 0.0
    %3289 = vmatprep.subr.mxu0 0.0
    %3290 = vmatpush1.msra.mxu0 0.0
    %3291 = vmatprep.subr.mxu0 0.0
    %3292 = vmatpush1.msra.mxu0 0.0
    %3293 = vmatprep.subr.mxu0 0.0
    %3294 = vmatpush1.msra.mxu0 0.0
    %3295 = vmatprep.subr.mxu0 0.0
    %3296 = vmatpush1.msra.mxu0 0.0
    %3297 = vmatprep.subr.mxu0 0.0
    %3298 = vmatpush1.msra.mxu0 0.0
    %3299 = vmatprep.subr.mxu0 0.0
    %3300 = vmatpush1.msra.mxu0 0.0
    %3301 = vmatprep.subr.mxu0 0.0
    %3302 = vmatpush1.msra.mxu0 0.0
    %3303 = vmatprep.subr.mxu0 0.0
    %3304 = vmatpush1.msra.mxu0 0.0
    %3305 = vmatprep.subr.mxu0 0.0
    %v3306 = vand.u32 %v3268, 4294901760
    %3307 = vmatpush1.msra.mxu0 %v3306
    %3308 = vmatprep.subr.mxu0 0.0
    %v3309 = vand.u32 %v3267, 4294901760
    %3310 = vmatpush1.msra.mxu0 %v3309
    %3311 = vmatprep.subr.mxu0 0.0
    %v3312 = vand.u32 %v3266, 4294901760
    %3313 = vmatpush1.msra.mxu0 %v3312
    %3314 = vmatprep.subr.mxu0 0.0
    %v3315 = vand.u32 %v3265, 4294901760
    %3316 = vmatpush1.msra.mxu0 %v3315
    %3317 = vmatprep.subr.mxu0 0.0
    %3318 = vmatpush2.msra.mxu0 0.0
    %3319 = vmatprep.subr.mxu0 0.0
    %3320 = vmatpush2.msra.mxu0 0.0
    %3321 = vmatprep.subr.mxu0 0.0
    %3322 = vmatpush2.msra.mxu0 0.0
    %3323 = vmatprep.subr.mxu0 0.0
    %3324 = vmatpush2.msra.mxu0 0.0
    %3325 = vmatprep.subr.mxu0 0.0
    %3326 = vmatpush2.msra.mxu0 0.0
    %3327 = vmatprep.subr.mxu0 0.0
    %3328 = vmatpush2.msra.mxu0 0.0
    %3329 = vmatprep.subr.mxu0 0.0
    %3330 = vmatpush2.msra.mxu0 0.0
    %3331 = vmatprep.subr.mxu0 0.0
    %3332 = vmatpush2.msra.mxu0 0.0
    %3333 = vmatprep.subr.mxu0 0.0
    %3334 = vmatpush2.msra.mxu0 0.0
    %3335 = vmatprep.subr.mxu0 0.0
    %3336 = vmatpush2.msra.mxu0 0.0
    %3337 = vmatprep.subr.mxu0 0.0
    %3338 = vmatpush2.msra.mxu0 0.0
    %3339 = vmatprep.subr.mxu0 0.0
    %3340 = vmatpush2.msra.mxu0 0.0
    %3341 = vmatprep.subr.mxu0 0.0
    %3342 = vmatpush2.msra.mxu0 0.0
    %3343 = vmatprep.subr.mxu0 0.0
    %3344 = vmatpush2.msra.mxu0 0.0
    %3345 = vmatprep.subr.mxu0 0.0
    %3346 = vmatpush2.msra.mxu0 0.0
    %3347 = vmatprep.subr.mxu0 0.0
    %3348 = vmatpush2.msra.mxu0 0.0
    %3349 = vmatprep.mubr.f32.mxu0 0.0
    %v3350 = vand.u32 %v3270, 4294901760
    %v3351 = vsub.f32 %v3270, %v3350
    %v3352 = vand.u32 %v3351, 4294901760
    %v3353 = vsub.f32 %v3351, %v3352
    %v3354 = vand.u32 %v3353, 4294901760
    %3355 = vmatmul.mubr.f32.gmra.mxu0 %v3354
    %v3356 = vpop.f32.mrf.mxu0
    %v3357 = vadd.f32 0.0, %v3356
    %v3358 = vpop.f32.mrf.mxu0
    %3359 = vmatprep.mubr.f32.mxu0 0.0
    %v3360 = vand.u32 %v3273, 4294901760
    %v3361 = vsub.f32 %v3273, %v3360
    %v3362 = vand.u32 %v3361, 4294901760
    %v3363 = vsub.f32 %v3361, %v3362
    %v3364 = vand.u32 %v3363, 4294901760
    %3365 = vmatmul.mubr.f32.gmra.mxu0 %v3364
    %v3366 = vpop.f32.mrf.mxu0
    %v3367 = vadd.f32 0.0, %v3366
    %v3368 = vpop.f32.mrf.mxu0
    %3369 = vmatprep.mubr.f32.mxu0 0.0
    %v3370 = vand.u32 %v3276, 4294901760
    %v3371 = vsub.f32 %v3276, %v3370
    %v3372 = vand.u32 %v3371, 4294901760
    %v3373 = vsub.f32 %v3371, %v3372
    %v3374 = vand.u32 %v3373, 4294901760
    %3375 = vmatmul.mubr.f32.gmra.mxu0 %v3374
    %v3376 = vpop.f32.mrf.mxu0
    %v3377 = vadd.f32 0.0, %v3376
    %v3378 = vpop.f32.mrf.mxu0
    %3379 = vmatprep.mubr.f32.mxu0 0.0
    %v3380 = vand.u32 %v3279, 4294901760
    %v3381 = vsub.f32 %v3279, %v3380
    %v3382 = vand.u32 %v3381, 4294901760
    %v3383 = vsub.f32 %v3381, %v3382
    %v3384 = vand.u32 %v3383, 4294901760
    %3385 = vmatmul.mubr.f32.gmra.mxu0 %v3384
    %v3386 = vpop.f32.mrf.mxu0
    %v3387 = vadd.f32 0.0, %v3386
    %v3388 = vpop.f32.mrf.mxu0
    %3389 = vdwg.mxu0
    %3390 = vmatprep.subr.mxu0 0.0
    %3391 = vmatpush1.msra.mxu0 0.0
    %3392 = vmatprep.subr.mxu0 0.0
    %3393 = vmatpush1.msra.mxu0 0.0
    %3394 = vmatprep.subr.mxu0 0.0
    %3395 = vmatpush1.msra.mxu0 0.0
    %3396 = vmatprep.subr.mxu0 0.0
    %3397 = vmatpush1.msra.mxu0 0.0
    %3398 = vmatprep.subr.mxu0 0.0
    %3399 = vmatpush1.msra.mxu0 0.0
    %3400 = vmatprep.subr.mxu0 0.0
    %3401 = vmatpush1.msra.mxu0 0.0
    %3402 = vmatprep.subr.mxu0 0.0
    %3403 = vmatpush1.msra.mxu0 0.0
    %3404 = vmatprep.subr.mxu0 0.0
    %3405 = vmatpush1.msra.mxu0 0.0
    %3406 = vmatprep.subr.mxu0 0.0
    %3407 = vmatpush1.msra.mxu0 0.0
    %3408 = vmatprep.subr.mxu0 0.0
    %3409 = vmatpush1.msra.mxu0 0.0
    %3410 = vmatprep.subr.mxu0 0.0
    %3411 = vmatpush1.msra.mxu0 0.0
    %3412 = vmatprep.subr.mxu0 0.0
    %3413 = vmatpush1.msra.mxu0 0.0
    %3414 = vmatprep.subr.mxu0 0.0
    %v3415 = vand.u32 %v3268, 4294901760
    %v3416 = vsub.f32 %v3268, %v3415
    %v3417 = vand.u32 %v3416, 4294901760
    %v3418 = vsub.f32 %v3416, %v3417
    %v3419 = vand.u32 %v3418, 4294901760
    %3420 = vmatpush1.msra.mxu0 %v3419
    %3421 = vmatprep.subr.mxu0 0.0
    %v3422 = vand.u32 %v3267, 4294901760
    %v3423 = vsub.f32 %v3267, %v3422
    %v3424 = vand.u32 %v3423, 4294901760
    %v3425 = vsub.f32 %v3423, %v3424
    %v3426 = vand.u32 %v3425, 4294901760
    %3427 = vmatpush1.msra.mxu0 %v3426
    %3428 = vmatprep.subr.mxu0 0.0
    %v3429 = vand.u32 %v3266, 4294901760
    %v3430 = vsub.f32 %v3266, %v3429
    %v3431 = vand.u32 %v3430, 4294901760
    %v3432 = vsub.f32 %v3430, %v3431
    %v3433 = vand.u32 %v3432, 4294901760
    %3434 = vmatpush1.msra.mxu0 %v3433
    %3435 = vmatprep.subr.mxu0 0.0
    %v3436 = vand.u32 %v3265, 4294901760
    %v3437 = vsub.f32 %v3265, %v3436
    %v3438 = vand.u32 %v3437, 4294901760
    %v3439 = vsub.f32 %v3437, %v3438
    %v3440 = vand.u32 %v3439, 4294901760
    %3441 = vmatpush1.msra.mxu0 %v3440
    %3442 = vmatprep.subr.mxu0 0.0
    %3443 = vmatpush2.msra.mxu0 0.0
    %3444 = vmatprep.subr.mxu0 0.0
    %3445 = vmatpush2.msra.mxu0 0.0
    %3446 = vmatprep.subr.mxu0 0.0
    %3447 = vmatpush2.msra.mxu0 0.0
    %3448 = vmatprep.subr.mxu0 0.0
    %3449 = vmatpush2.msra.mxu0 0.0
    %3450 = vmatprep.subr.mxu0 0.0
    %3451 = vmatpush2.msra.mxu0 0.0
    %3452 = vmatprep.subr.mxu0 0.0
    %3453 = vmatpush2.msra.mxu0 0.0
    %3454 = vmatprep.subr.mxu0 0.0
    %3455 = vmatpush2.msra.mxu0 0.0
    %3456 = vmatprep.subr.mxu0 0.0
    %3457 = vmatpush2.msra.mxu0 0.0
    %3458 = vmatprep.subr.mxu0 0.0
    %3459 = vmatpush2.msra.mxu0 0.0
    %3460 = vmatprep.subr.mxu0 0.0
    %3461 = vmatpush2.msra.mxu0 0.0
    %3462 = vmatprep.subr.mxu0 0.0
    %3463 = vmatpush2.msra.mxu0 0.0
    %3464 = vmatprep.subr.mxu0 0.0
    %3465 = vmatpush2.msra.mxu0 0.0
    %3466 = vmatprep.subr.mxu0 0.0
    %3467 = vmatpush2.msra.mxu0 0.0
    %3468 = vmatprep.subr.mxu0 0.0
    %3469 = vmatpush2.msra.mxu0 0.0
    %3470 = vmatprep.subr.mxu0 0.0
    %3471 = vmatpush2.msra.mxu0 0.0
    %3472 = vmatprep.subr.mxu0 0.0
    %3473 = vmatpush2.msra.mxu0 0.0
    %3474 = vmatprep.mubr.f32.mxu0 0.0
    %v3475 = vand.u32 %v3270, 4294901760
    %3476 = vmatmul.mubr.f32.gmra.mxu0 %v3475
    %v3477 = vpop.f32.mrf.mxu0
    %v3478 = vadd.f32 %v3357, %v3477
    %v3479 = vpop.f32.mrf.mxu0
    %3480 = vmatprep.mubr.f32.mxu0 0.0
    %v3481 = vand.u32 %v3273, 4294901760
    %3482 = vmatmul.mubr.f32.gmra.mxu0 %v3481
    %v3483 = vpop.f32.mrf.mxu0
    %v3484 = vadd.f32 %v3367, %v3483
    %v3485 = vpop.f32.mrf.mxu0
    %3486 = vmatprep.mubr.f32.mxu0 0.0
    %v3487 = vand.u32 %v3276, 4294901760
    %3488 = vmatmul.mubr.f32.gmra.mxu0 %v3487
    %v3489 = vpop.f32.mrf.mxu0
    %v3490 = vadd.f32 %v3377, %v3489
    %v3491 = vpop.f32.mrf.mxu0
    %3492 = vmatprep.mubr.f32.mxu0 0.0
    %v3493 = vand.u32 %v3279, 4294901760
    %3494 = vmatmul.mubr.f32.gmra.mxu0 %v3493
    %v3495 = vpop.f32.mrf.mxu0
    %v3496 = vadd.f32 %v3387, %v3495
    %v3497 = vpop.f32.mrf.mxu0
    %3498 = vdwg.mxu0
    %3499 = vmatprep.subr.mxu0 0.0
    %3500 = vmatpush1.msra.mxu0 0.0
    %3501 = vmatprep.subr.mxu0 0.0
    %3502 = vmatpush1.msra.mxu0 0.0
    %3503 = vmatprep.subr.mxu0 0.0
    %3504 = vmatpush1.msra.mxu0 0.0
    %3505 = vmatprep.subr.mxu0 0.0
    %3506 = vmatpush1.msra.mxu0 0.0
    %3507 = vmatprep.subr.mxu0 0.0
    %3508 = vmatpush1.msra.mxu0 0.0
    %3509 = vmatprep.subr.mxu0 0.0
    %3510 = vmatpush1.msra.mxu0 0.0
    %3511 = vmatprep.subr.mxu0 0.0
    %3512 = vmatpush1.msra.mxu0 0.0
    %3513 = vmatprep.subr.mxu0 0.0
    %3514 = vmatpush1.msra.mxu0 0.0
    %3515 = vmatprep.subr.mxu0 0.0
    %3516 = vmatpush1.msra.mxu0 0.0
    %3517 = vmatprep.subr.mxu0 0.0
    %3518 = vmatpush1.msra.mxu0 0.0
    %3519 = vmatprep.subr.mxu0 0.0
    %3520 = vmatpush1.msra.mxu0 0.0
    %3521 = vmatprep.subr.mxu0 0.0
    %3522 = vmatpush1.msra.mxu0 0.0
    %3523 = vmatprep.subr.mxu0 0.0
    %v3524 = vand.u32 %v3268, 4294901760
    %v3525 = vsub.f32 %v3268, %v3524
    %3526 = vmatpush1.msra.mxu0 %v3525
    %3527 = vmatprep.subr.mxu0 0.0
    %v3528 = vand.u32 %v3267, 4294901760
    %v3529 = vsub.f32 %v3267, %v3528
    %3530 = vmatpush1.msra.mxu0 %v3529
    %3531 = vmatprep.subr.mxu0 0.0
    %v3532 = vand.u32 %v3266, 4294901760
    %v3533 = vsub.f32 %v3266, %v3532
    %3534 = vmatpush1.msra.mxu0 %v3533
    %3535 = vmatprep.subr.mxu0 0.0
    %v3536 = vand.u32 %v3265, 4294901760
    %v3537 = vsub.f32 %v3265, %v3536
    %3538 = vmatpush1.msra.mxu0 %v3537
    %3539 = vmatprep.subr.mxu0 0.0
    %3540 = vmatpush2.msra.mxu0 0.0
    %3541 = vmatprep.subr.mxu0 0.0
    %3542 = vmatpush2.msra.mxu0 0.0
    %3543 = vmatprep.subr.mxu0 0.0
    %3544 = vmatpush2.msra.mxu0 0.0
    %3545 = vmatprep.subr.mxu0 0.0
    %3546 = vmatpush2.msra.mxu0 0.0
    %3547 = vmatprep.subr.mxu0 0.0
    %3548 = vmatpush2.msra.mxu0 0.0
    %3549 = vmatprep.subr.mxu0 0.0
    %3550 = vmatpush2.msra.mxu0 0.0
    %3551 = vmatprep.subr.mxu0 0.0
    %3552 = vmatpush2.msra.mxu0 0.0
    %3553 = vmatprep.subr.mxu0 0.0
    %3554 = vmatpush2.msra.mxu0 0.0
    %3555 = vmatprep.subr.mxu0 0.0
    %3556 = vmatpush2.msra.mxu0 0.0
    %3557 = vmatprep.subr.mxu0 0.0
    %3558 = vmatpush2.msra.mxu0 0.0
    %3559 = vmatprep.subr.mxu0 0.0
    %3560 = vmatpush2.msra.mxu0 0.0
    %3561 = vmatprep.subr.mxu0 0.0
    %3562 = vmatpush2.msra.mxu0 0.0
    %3563 = vmatprep.subr.mxu0 0.0
    %3564 = vmatpush2.msra.mxu0 0.0
    %3565 = vmatprep.subr.mxu0 0.0
    %3566 = vmatpush2.msra.mxu0 0.0
    %3567 = vmatprep.subr.mxu0 0.0
    %3568 = vmatpush2.msra.mxu0 0.0
    %3569 = vmatprep.subr.mxu0 0.0
    %3570 = vmatpush2.msra.mxu0 0.0
    %3571 = vmatprep.mubr.f32.mxu0 0.0
    %v3572 = vand.u32 %v3270, 4294901760
    %v3573 = vsub.f32 %v3270, %v3572
    %3574 = vmatmul.mubr.f32.gmra.mxu0 %v3573
    %v3575 = vpop.f32.mrf.mxu0
    %v3576 = vadd.f32 %v3478, %v3575
    %v3577 = vpop.f32.mrf.mxu0
    %3578 = vmatprep.mubr.f32.mxu0 0.0
    %v3579 = vand.u32 %v3273, 4294901760
    %v3580 = vsub.f32 %v3273, %v3579
    %3581 = vmatmul.mubr.f32.gmra.mxu0 %v3580
    %v3582 = vpop.f32.mrf.mxu0
    %v3583 = vadd.f32 %v3484, %v3582
    %v3584 = vpop.f32.mrf.mxu0
    %3585 = vmatprep.mubr.f32.mxu0 0.0
    %v3586 = vand.u32 %v3276, 4294901760
    %v3587 = vsub.f32 %v3276, %v3586
    %3588 = vmatmul.mubr.f32.gmra.mxu0 %v3587
    %v3589 = vpop.f32.mrf.mxu0
    %v3590 = vadd.f32 %v3490, %v3589
    %v3591 = vpop.f32.mrf.mxu0
    %3592 = vmatprep.mubr.f32.mxu0 0.0
    %v3593 = vand.u32 %v3279, 4294901760
    %v3594 = vsub.f32 %v3279, %v3593
    %3595 = vmatmul.mubr.f32.gmra.mxu0 %v3594
    %v3596 = vpop.f32.mrf.mxu0
    %v3597 = vadd.f32 %v3496, %v3596
    %v3598 = vpop.f32.mrf.mxu0
    %3599 = vdwg.mxu0
    %3600 = vmatprep.subr.mxu0 0.0
    %3601 = vmatpush1.msra.mxu0 0.0
    %3602 = vmatprep.subr.mxu0 0.0
    %3603 = vmatpush1.msra.mxu0 0.0
    %3604 = vmatprep.subr.mxu0 0.0
    %3605 = vmatpush1.msra.mxu0 0.0
    %3606 = vmatprep.subr.mxu0 0.0
    %3607 = vmatpush1.msra.mxu0 0.0
    %3608 = vmatprep.subr.mxu0 0.0
    %3609 = vmatpush1.msra.mxu0 0.0
    %3610 = vmatprep.subr.mxu0 0.0
    %3611 = vmatpush1.msra.mxu0 0.0
    %3612 = vmatprep.subr.mxu0 0.0
    %3613 = vmatpush1.msra.mxu0 0.0
    %3614 = vmatprep.subr.mxu0 0.0
    %3615 = vmatpush1.msra.mxu0 0.0
    %3616 = vmatprep.subr.mxu0 0.0
    %3617 = vmatpush1.msra.mxu0 0.0
    %3618 = vmatprep.subr.mxu0 0.0
    %3619 = vmatpush1.msra.mxu0 0.0
    %3620 = vmatprep.subr.mxu0 0.0
    %3621 = vmatpush1.msra.mxu0 0.0
    %3622 = vmatprep.subr.mxu0 0.0
    %3623 = vmatpush1.msra.mxu0 0.0
    %3624 = vmatprep.subr.mxu0 0.0
    %v3625 = vand.u32 %v3268, 4294901760
    %3626 = vmatpush1.msra.mxu0 %v3625
    %3627 = vmatprep.subr.mxu0 0.0
    %v3628 = vand.u32 %v3267, 4294901760
    %3629 = vmatpush1.msra.mxu0 %v3628
    %3630 = vmatprep.subr.mxu0 0.0
    %v3631 = vand.u32 %v3266, 4294901760
    %3632 = vmatpush1.msra.mxu0 %v3631
    %3633 = vmatprep.subr.mxu0 0.0
    %v3634 = vand.u32 %v3265, 4294901760
    %3635 = vmatpush1.msra.mxu0 %v3634
    %3636 = vmatprep.subr.mxu0 0.0
    %3637 = vmatpush2.msra.mxu0 0.0
    %3638 = vmatprep.subr.mxu0 0.0
    %3639 = vmatpush2.msra.mxu0 0.0
    %3640 = vmatprep.subr.mxu0 0.0
    %3641 = vmatpush2.msra.mxu0 0.0
    %3642 = vmatprep.subr.mxu0 0.0
    %3643 = vmatpush2.msra.mxu0 0.0
    %3644 = vmatprep.subr.mxu0 0.0
    %3645 = vmatpush2.msra.mxu0 0.0
    %3646 = vmatprep.subr.mxu0 0.0
    %3647 = vmatpush2.msra.mxu0 0.0
    %3648 = vmatprep.subr.mxu0 0.0
    %3649 = vmatpush2.msra.mxu0 0.0
    %3650 = vmatprep.subr.mxu0 0.0
    %3651 = vmatpush2.msra.mxu0 0.0
    %3652 = vmatprep.subr.mxu0 0.0
    %3653 = vmatpush2.msra.mxu0 0.0
    %3654 = vmatprep.subr.mxu0 0.0
    %3655 = vmatpush2.msra.mxu0 0.0
    %3656 = vmatprep.subr.mxu0 0.0
    %3657 = vmatpush2.msra.mxu0 0.0
    %3658 = vmatprep.subr.mxu0 0.0
    %3659 = vmatpush2.msra.mxu0 0.0
    %3660 = vmatprep.subr.mxu0 0.0
    %3661 = vmatpush2.msra.mxu0 0.0
    %3662 = vmatprep.subr.mxu0 0.0
    %3663 = vmatpush2.msra.mxu0 0.0
    %3664 = vmatprep.subr.mxu0 0.0
    %3665 = vmatpush2.msra.mxu0 0.0
    %3666 = vmatprep.subr.mxu0 0.0
    %3667 = vmatpush2.msra.mxu0 0.0
    %3668 = vmatprep.mubr.f32.mxu0 0.0
    %v3669 = vand.u32 %v3270, 4294901760
    %v3670 = vsub.f32 %v3270, %v3669
    %v3671 = vand.u32 %v3670, 4294901760
    %3672 = vmatmul.mubr.f32.gmra.mxu0 %v3671
    %v3673 = vpop.f32.mrf.mxu0
    %v3674 = vadd.f32 %v3576, %v3673
    %v3675 = vpop.f32.mrf.mxu0
    %3676 = vmatprep.mubr.f32.mxu0 0.0
    %v3677 = vand.u32 %v3273, 4294901760
    %v3678 = vsub.f32 %v3273, %v3677
    %v3679 = vand.u32 %v3678, 4294901760
    %3680 = vmatmul.mubr.f32.gmra.mxu0 %v3679
    %v3681 = vpop.f32.mrf.mxu0
    %v3682 = vadd.f32 %v3583, %v3681
    %v3683 = vpop.f32.mrf.mxu0
    %3684 = vmatprep.mubr.f32.mxu0 0.0
    %v3685 = vand.u32 %v3276, 4294901760
    %v3686 = vsub.f32 %v3276, %v3685
    %v3687 = vand.u32 %v3686, 4294901760
    %3688 = vmatmul.mubr.f32.gmra.mxu0 %v3687
    %v3689 = vpop.f32.mrf.mxu0
    %v3690 = vadd.f32 %v3590, %v3689
    %v3691 = vpop.f32.mrf.mxu0
    %3692 = vmatprep.mubr.f32.mxu0 0.0
    %v3693 = vand.u32 %v3279, 4294901760
    %v3694 = vsub.f32 %v3279, %v3693
    %v3695 = vand.u32 %v3694, 4294901760
    %3696 = vmatmul.mubr.f32.gmra.mxu0 %v3695
    %v3697 = vpop.f32.mrf.mxu0
    %v3698 = vadd.f32 %v3597, %v3697
    %v3699 = vpop.f32.mrf.mxu0
    %3700 = vdwg.mxu0
    %3701 = vmatprep.subr.mxu0 0.0
    %3702 = vmatpush1.msra.mxu0 0.0
    %3703 = vmatprep.subr.mxu0 0.0
    %3704 = vmatpush1.msra.mxu0 0.0
    %3705 = vmatprep.subr.mxu0 0.0
    %3706 = vmatpush1.msra.mxu0 0.0
    %3707 = vmatprep.subr.mxu0 0.0
    %3708 = vmatpush1.msra.mxu0 0.0
    %3709 = vmatprep.subr.mxu0 0.0
    %3710 = vmatpush1.msra.mxu0 0.0
    %3711 = vmatprep.subr.mxu0 0.0
    %3712 = vmatpush1.msra.mxu0 0.0
    %3713 = vmatprep.subr.mxu0 0.0
    %3714 = vmatpush1.msra.mxu0 0.0
    %3715 = vmatprep.subr.mxu0 0.0
    %3716 = vmatpush1.msra.mxu0 0.0
    %3717 = vmatprep.subr.mxu0 0.0
    %3718 = vmatpush1.msra.mxu0 0.0
    %3719 = vmatprep.subr.mxu0 0.0
    %3720 = vmatpush1.msra.mxu0 0.0
    %3721 = vmatprep.subr.mxu0 0.0
    %3722 = vmatpush1.msra.mxu0 0.0
    %3723 = vmatprep.subr.mxu0 0.0
    %3724 = vmatpush1.msra.mxu0 0.0
    %3725 = vmatprep.subr.mxu0 0.0
    %v3726 = vand.u32 %v3268, 4294901760
    %v3727 = vsub.f32 %v3268, %v3726
    %v3728 = vand.u32 %v3727, 4294901760
    %3729 = vmatpush1.msra.mxu0 %v3728
    %3730 = vmatprep.subr.mxu0 0.0
    %v3731 = vand.u32 %v3267, 4294901760
    %v3732 = vsub.f32 %v3267, %v3731
    %v3733 = vand.u32 %v3732, 4294901760
    %3734 = vmatpush1.msra.mxu0 %v3733
    %3735 = vmatprep.subr.mxu0 0.0
    %v3736 = vand.u32 %v3266, 4294901760
    %v3737 = vsub.f32 %v3266, %v3736
    %v3738 = vand.u32 %v3737, 4294901760
    %3739 = vmatpush1.msra.mxu0 %v3738
    %3740 = vmatprep.subr.mxu0 0.0
    %v3741 = vand.u32 %v3265, 4294901760
    %v3742 = vsub.f32 %v3265, %v3741
    %v3743 = vand.u32 %v3742, 4294901760
    %3744 = vmatpush1.msra.mxu0 %v3743
    %3745 = vmatprep.subr.mxu0 0.0
    %3746 = vmatpush2.msra.mxu0 0.0
    %3747 = vmatprep.subr.mxu0 0.0
    %3748 = vmatpush2.msra.mxu0 0.0
    %3749 = vmatprep.subr.mxu0 0.0
    %3750 = vmatpush2.msra.mxu0 0.0
    %3751 = vmatprep.subr.mxu0 0.0
    %3752 = vmatpush2.msra.mxu0 0.0
    %3753 = vmatprep.subr.mxu0 0.0
    %3754 = vmatpush2.msra.mxu0 0.0
    %3755 = vmatprep.subr.mxu0 0.0
    %3756 = vmatpush2.msra.mxu0 0.0
    %3757 = vmatprep.subr.mxu0 0.0
    %3758 = vmatpush2.msra.mxu0 0.0
    %3759 = vmatprep.subr.mxu0 0.0
    %3760 = vmatpush2.msra.mxu0 0.0
    %3761 = vmatprep.subr.mxu0 0.0
    %3762 = vmatpush2.msra.mxu0 0.0
    %3763 = vmatprep.subr.mxu0 0.0
    %3764 = vmatpush2.msra.mxu0 0.0
    %3765 = vmatprep.subr.mxu0 0.0
    %3766 = vmatpush2.msra.mxu0 0.0
    %3767 = vmatprep.subr.mxu0 0.0
    %3768 = vmatpush2.msra.mxu0 0.0
    %3769 = vmatprep.subr.mxu0 0.0
    %3770 = vmatpush2.msra.mxu0 0.0
    %3771 = vmatprep.subr.mxu0 0.0
    %3772 = vmatpush2.msra.mxu0 0.0
    %3773 = vmatprep.subr.mxu0 0.0
    %3774 = vmatpush2.msra.mxu0 0.0
    %3775 = vmatprep.subr.mxu0 0.0
    %3776 = vmatpush2.msra.mxu0 0.0
    %3777 = vmatprep.mubr.f32.mxu0 0.0
    %v3778 = vand.u32 %v3270, 4294901760
    %3779 = vmatmul.mubr.f32.gmra.mxu0 %v3778
    %v3780 = vpop.f32.mrf.mxu0
    %v3781 = vadd.f32 %v3674, %v3780
    %v3782 = vpop.f32.mrf.mxu0
    %3783 = vmatprep.mubr.f32.mxu0 0.0
    %v3784 = vand.u32 %v3273, 4294901760
    %3785 = vmatmul.mubr.f32.gmra.mxu0 %v3784
    %v3786 = vpop.f32.mrf.mxu0
    %v3787 = vadd.f32 %v3682, %v3786
    %v3788 = vpop.f32.mrf.mxu0
    %3789 = vmatprep.mubr.f32.mxu0 0.0
    %v3790 = vand.u32 %v3276, 4294901760
    %3791 = vmatmul.mubr.f32.gmra.mxu0 %v3790
    %v3792 = vpop.f32.mrf.mxu0
    %v3793 = vadd.f32 %v3690, %v3792
    %v3794 = vpop.f32.mrf.mxu0
    %3795 = vmatprep.mubr.f32.mxu0 0.0
    %v3796 = vand.u32 %v3279, 4294901760
    %3797 = vmatmul.mubr.f32.gmra.mxu0 %v3796
    %v3798 = vpop.f32.mrf.mxu0
    %v3799 = vadd.f32 %v3698, %v3798
    %v3800 = vpop.f32.mrf.mxu0
    %3801 = vdwg.mxu0
    %3802 = vmatprep.subr.mxu0 0.0
    %3803 = vmatpush1.msra.mxu0 0.0
    %3804 = vmatprep.subr.mxu0 0.0
    %3805 = vmatpush1.msra.mxu0 0.0
    %3806 = vmatprep.subr.mxu0 0.0
    %3807 = vmatpush1.msra.mxu0 0.0
    %3808 = vmatprep.subr.mxu0 0.0
    %3809 = vmatpush1.msra.mxu0 0.0
    %3810 = vmatprep.subr.mxu0 0.0
    %3811 = vmatpush1.msra.mxu0 0.0
    %3812 = vmatprep.subr.mxu0 0.0
    %3813 = vmatpush1.msra.mxu0 0.0
    %3814 = vmatprep.subr.mxu0 0.0
    %3815 = vmatpush1.msra.mxu0 0.0
    %3816 = vmatprep.subr.mxu0 0.0
    %3817 = vmatpush1.msra.mxu0 0.0
    %3818 = vmatprep.subr.mxu0 0.0
    %3819 = vmatpush1.msra.mxu0 0.0
    %3820 = vmatprep.subr.mxu0 0.0
    %3821 = vmatpush1.msra.mxu0 0.0
    %3822 = vmatprep.subr.mxu0 0.0
    %3823 = vmatpush1.msra.mxu0 0.0
    %3824 = vmatprep.subr.mxu0 0.0
    %3825 = vmatpush1.msra.mxu0 0.0
    %3826 = vmatprep.subr.mxu0 0.0
    %v3827 = vand.u32 %v3268, 4294901760
    %3828 = vmatpush1.msra.mxu0 %v3827
    %3829 = vmatprep.subr.mxu0 0.0
    %v3830 = vand.u32 %v3267, 4294901760
    %3831 = vmatpush1.msra.mxu0 %v3830
    %3832 = vmatprep.subr.mxu0 0.0
    %v3833 = vand.u32 %v3266, 4294901760
    %3834 = vmatpush1.msra.mxu0 %v3833
    %3835 = vmatprep.subr.mxu0 0.0
    %v3836 = vand.u32 %v3265, 4294901760
    %3837 = vmatpush1.msra.mxu0 %v3836
    %3838 = vmatprep.subr.mxu0 0.0
    %3839 = vmatpush2.msra.mxu0 0.0
    %3840 = vmatprep.subr.mxu0 0.0
    %3841 = vmatpush2.msra.mxu0 0.0
    %3842 = vmatprep.subr.mxu0 0.0
    %3843 = vmatpush2.msra.mxu0 0.0
    %3844 = vmatprep.subr.mxu0 0.0
    %3845 = vmatpush2.msra.mxu0 0.0
    %3846 = vmatprep.subr.mxu0 0.0
    %3847 = vmatpush2.msra.mxu0 0.0
    %3848 = vmatprep.subr.mxu0 0.0
    %3849 = vmatpush2.msra.mxu0 0.0
    %3850 = vmatprep.subr.mxu0 0.0
    %3851 = vmatpush2.msra.mxu0 0.0
    %3852 = vmatprep.subr.mxu0 0.0
    %3853 = vmatpush2.msra.mxu0 0.0
    %3854 = vmatprep.subr.mxu0 0.0
    %3855 = vmatpush2.msra.mxu0 0.0
    %3856 = vmatprep.subr.mxu0 0.0
    %3857 = vmatpush2.msra.mxu0 0.0
    %3858 = vmatprep.subr.mxu0 0.0
    %3859 = vmatpush2.msra.mxu0 0.0
    %3860 = vmatprep.subr.mxu0 0.0
    %3861 = vmatpush2.msra.mxu0 0.0
    %3862 = vmatprep.subr.mxu0 0.0
    %3863 = vmatpush2.msra.mxu0 0.0
    %3864 = vmatprep.subr.mxu0 0.0
    %3865 = vmatpush2.msra.mxu0 0.0
    %3866 = vmatprep.subr.mxu0 0.0
    %3867 = vmatpush2.msra.mxu0 0.0
    %3868 = vmatprep.subr.mxu0 0.0
    %3869 = vmatpush2.msra.mxu0 0.0
    %3870 = vmatprep.mubr.f32.mxu0 0.0
    %v3871 = vand.u32 %v3270, 4294901760
    %3872 = vmatmul.mubr.f32.gmra.mxu0 %v3871
    %v3873 = vpop.f32.mrf.mxu0
    %v3874 = vadd.f32 %v3781, %v3873
    %v3875 = vpop.f32.mrf.mxu0
    %3876 = vmatprep.mubr.f32.mxu0 0.0
    %v3877 = vand.u32 %v3273, 4294901760
    %3878 = vmatmul.mubr.f32.gmra.mxu0 %v3877
    %v3879 = vpop.f32.mrf.mxu0
    %v3880 = vadd.f32 %v3787, %v3879
    %v3881 = vpop.f32.mrf.mxu0
    %3882 = vmatprep.mubr.f32.mxu0 0.0
    %v3883 = vand.u32 %v3276, 4294901760
    %3884 = vmatmul.mubr.f32.gmra.mxu0 %v3883
    %v3885 = vpop.f32.mrf.mxu0
    %v3886 = vadd.f32 %v3793, %v3885
    %v3887 = vpop.f32.mrf.mxu0
    %3888 = vmatprep.mubr.f32.mxu0 0.0
    %v3889 = vand.u32 %v3279, 4294901760
    %3890 = vmatmul.mubr.f32.gmra.mxu0 %v3889
    %v3891 = vpop.f32.mrf.mxu0
    %v3892 = vadd.f32 %v3799, %v3891
    %v3893 = vpop.f32.mrf.mxu0
    %3894 = vdwg.mxu0
    %v3895 = vadd.f32 %v3256, %v3874
    %v3896 = vadd.f32 %v3257, %v3880
    %v3897 = vadd.f32 %v3258, %v3886
    %v3898 = vadd.f32 %v3259, %v3892
    %v3899 = vld [vmem:[#allocation2 + $0x9] sm:$0xff]
    %v3900 = vld [vmem:[#allocation2 + $0x11] sm:$0xff]
    %v3901 = vld [vmem:[#allocation2 + $0x29] sm:$0xff]
    %v3902 = vld [vmem:[#allocation2 + $0x31] sm:$0xff]
    %s3903 = scalar_lea.vmem [#allocation8], 192
    %v3904 = vld [vmem:[%s3903] sm:$0xff]
    %v3905 = vld [vmem:[%s3903 + $0x8] sm:$0xff]
    %v3906 = vld [vmem:[%s3903 + $0x10] sm:$0xff]
    %v3907 = vld [vmem:[%s3903 + $0x18] sm:$0xff]
    %v3909 = vsel %vm57, %v3899, 0
    %v3912 = vsel %vm57, %v3900, 0
    %v3915 = vsel %vm57, %v3901, 0
    %v3918 = vsel %vm57, %v3902, 0
    %3920 = vmatprep.subr.mxu0 0.0
    %3921 = vmatpush1.msra.mxu0 0.0
    %3922 = vmatprep.subr.mxu0 0.0
    %3923 = vmatpush1.msra.mxu0 0.0
    %3924 = vmatprep.subr.mxu0 0.0
    %3925 = vmatpush1.msra.mxu0 0.0
    %3926 = vmatprep.subr.mxu0 0.0
    %3927 = vmatpush1.msra.mxu0 0.0
    %3928 = vmatprep.subr.mxu0 0.0
    %3929 = vmatpush1.msra.mxu0 0.0
    %3930 = vmatprep.subr.mxu0 0.0
    %3931 = vmatpush1.msra.mxu0 0.0
    %3932 = vmatprep.subr.mxu0 0.0
    %3933 = vmatpush1.msra.mxu0 0.0
    %3934 = vmatprep.subr.mxu0 0.0
    %3935 = vmatpush1.msra.mxu0 0.0
    %3936 = vmatprep.subr.mxu0 0.0
    %3937 = vmatpush1.msra.mxu0 0.0
    %3938 = vmatprep.subr.mxu0 0.0
    %3939 = vmatpush1.msra.mxu0 0.0
    %3940 = vmatprep.subr.mxu0 0.0
    %3941 = vmatpush1.msra.mxu0 0.0
    %3942 = vmatprep.subr.mxu0 0.0
    %3943 = vmatpush1.msra.mxu0 0.0
    %3944 = vmatprep.subr.mxu0 0.0
    %v3945 = vand.u32 %v3907, 4294901760
    %3946 = vmatpush1.msra.mxu0 %v3945
    %3947 = vmatprep.subr.mxu0 0.0
    %v3948 = vand.u32 %v3906, 4294901760
    %3949 = vmatpush1.msra.mxu0 %v3948
    %3950 = vmatprep.subr.mxu0 0.0
    %v3951 = vand.u32 %v3905, 4294901760
    %3952 = vmatpush1.msra.mxu0 %v3951
    %3953 = vmatprep.subr.mxu0 0.0
    %v3954 = vand.u32 %v3904, 4294901760
    %3955 = vmatpush1.msra.mxu0 %v3954
    %3956 = vmatprep.subr.mxu0 0.0
    %3957 = vmatpush2.msra.mxu0 0.0
    %3958 = vmatprep.subr.mxu0 0.0
    %3959 = vmatpush2.msra.mxu0 0.0
    %3960 = vmatprep.subr.mxu0 0.0
    %3961 = vmatpush2.msra.mxu0 0.0
    %3962 = vmatprep.subr.mxu0 0.0
    %3963 = vmatpush2.msra.mxu0 0.0
    %3964 = vmatprep.subr.mxu0 0.0
    %3965 = vmatpush2.msra.mxu0 0.0
    %3966 = vmatprep.subr.mxu0 0.0
    %3967 = vmatpush2.msra.mxu0 0.0
    %3968 = vmatprep.subr.mxu0 0.0
    %3969 = vmatpush2.msra.mxu0 0.0
    %3970 = vmatprep.subr.mxu0 0.0
    %3971 = vmatpush2.msra.mxu0 0.0
    %3972 = vmatprep.subr.mxu0 0.0
    %3973 = vmatpush2.msra.mxu0 0.0
    %3974 = vmatprep.subr.mxu0 0.0
    %3975 = vmatpush2.msra.mxu0 0.0
    %3976 = vmatprep.subr.mxu0 0.0
    %3977 = vmatpush2.msra.mxu0 0.0
    %3978 = vmatprep.subr.mxu0 0.0
    %3979 = vmatpush2.msra.mxu0 0.0
    %3980 = vmatprep.subr.mxu0 0.0
    %3981 = vmatpush2.msra.mxu0 0.0
    %3982 = vmatprep.subr.mxu0 0.0
    %3983 = vmatpush2.msra.mxu0 0.0
    %3984 = vmatprep.subr.mxu0 0.0
    %3985 = vmatpush2.msra.mxu0 0.0
    %3986 = vmatprep.subr.mxu0 0.0
    %3987 = vmatpush2.msra.mxu0 0.0
    %3988 = vmatprep.mubr.f32.mxu0 0.0
    %v3989 = vand.u32 %v3909, 4294901760
    %v3990 = vsub.f32 %v3909, %v3989
    %v3991 = vand.u32 %v3990, 4294901760
    %v3992 = vsub.f32 %v3990, %v3991
    %v3993 = vand.u32 %v3992, 4294901760
    %3994 = vmatmul.mubr.f32.gmra.mxu0 %v3993
    %v3995 = vpop.f32.mrf.mxu0
    %v3996 = vadd.f32 0.0, %v3995
    %v3997 = vpop.f32.mrf.mxu0
    %3998 = vmatprep.mubr.f32.mxu0 0.0
    %v3999 = vand.u32 %v3912, 4294901760
    %v4000 = vsub.f32 %v3912, %v3999
    %v4001 = vand.u32 %v4000, 4294901760
    %v4002 = vsub.f32 %v4000, %v4001
    %v4003 = vand.u32 %v4002, 4294901760
    %4004 = vmatmul.mubr.f32.gmra.mxu0 %v4003
    %v4005 = vpop.f32.mrf.mxu0
    %v4006 = vadd.f32 0.0, %v4005
    %v4007 = vpop.f32.mrf.mxu0
    %4008 = vmatprep.mubr.f32.mxu0 0.0
    %v4009 = vand.u32 %v3915, 4294901760
    %v4010 = vsub.f32 %v3915, %v4009
    %v4011 = vand.u32 %v4010, 4294901760
    %v4012 = vsub.f32 %v4010, %v4011
    %v4013 = vand.u32 %v4012, 4294901760
    %4014 = vmatmul.mubr.f32.gmra.mxu0 %v4013
    %v4015 = vpop.f32.mrf.mxu0
    %v4016 = vadd.f32 0.0, %v4015
    %v4017 = vpop.f32.mrf.mxu0
    %4018 = vmatprep.mubr.f32.mxu0 0.0
    %v4019 = vand.u32 %v3918, 4294901760
    %v4020 = vsub.f32 %v3918, %v4019
    %v4021 = vand.u32 %v4020, 4294901760
    %v4022 = vsub.f32 %v4020, %v4021
    %v4023 = vand.u32 %v4022, 4294901760
    %4024 = vmatmul.mubr.f32.gmra.mxu0 %v4023
    %v4025 = vpop.f32.mrf.mxu0
    %v4026 = vadd.f32 0.0, %v4025
    %v4027 = vpop.f32.mrf.mxu0
    %4028 = vdwg.mxu0
    %4029 = vmatprep.subr.mxu0 0.0
    %4030 = vmatpush1.msra.mxu0 0.0
    %4031 = vmatprep.subr.mxu0 0.0
    %4032 = vmatpush1.msra.mxu0 0.0
    %4033 = vmatprep.subr.mxu0 0.0
    %4034 = vmatpush1.msra.mxu0 0.0
    %4035 = vmatprep.subr.mxu0 0.0
    %4036 = vmatpush1.msra.mxu0 0.0
    %4037 = vmatprep.subr.mxu0 0.0
    %4038 = vmatpush1.msra.mxu0 0.0
    %4039 = vmatprep.subr.mxu0 0.0
    %4040 = vmatpush1.msra.mxu0 0.0
    %4041 = vmatprep.subr.mxu0 0.0
    %4042 = vmatpush1.msra.mxu0 0.0
    %4043 = vmatprep.subr.mxu0 0.0
    %4044 = vmatpush1.msra.mxu0 0.0
    %4045 = vmatprep.subr.mxu0 0.0
    %4046 = vmatpush1.msra.mxu0 0.0
    %4047 = vmatprep.subr.mxu0 0.0
    %4048 = vmatpush1.msra.mxu0 0.0
    %4049 = vmatprep.subr.mxu0 0.0
    %4050 = vmatpush1.msra.mxu0 0.0
    %4051 = vmatprep.subr.mxu0 0.0
    %4052 = vmatpush1.msra.mxu0 0.0
    %4053 = vmatprep.subr.mxu0 0.0
    %v4054 = vand.u32 %v3907, 4294901760
    %v4055 = vsub.f32 %v3907, %v4054
    %v4056 = vand.u32 %v4055, 4294901760
    %v4057 = vsub.f32 %v4055, %v4056
    %v4058 = vand.u32 %v4057, 4294901760
    %4059 = vmatpush1.msra.mxu0 %v4058
    %4060 = vmatprep.subr.mxu0 0.0
    %v4061 = vand.u32 %v3906, 4294901760
    %v4062 = vsub.f32 %v3906, %v4061
    %v4063 = vand.u32 %v4062, 4294901760
    %v4064 = vsub.f32 %v4062, %v4063
    %v4065 = vand.u32 %v4064, 4294901760
    %4066 = vmatpush1.msra.mxu0 %v4065
    %4067 = vmatprep.subr.mxu0 0.0
    %v4068 = vand.u32 %v3905, 4294901760
    %v4069 = vsub.f32 %v3905, %v4068
    %v4070 = vand.u32 %v4069, 4294901760
    %v4071 = vsub.f32 %v4069, %v4070
    %v4072 = vand.u32 %v4071, 4294901760
    %4073 = vmatpush1.msra.mxu0 %v4072
    %4074 = vmatprep.subr.mxu0 0.0
    %v4075 = vand.u32 %v3904, 4294901760
    %v4076 = vsub.f32 %v3904, %v4075
    %v4077 = vand.u32 %v4076, 4294901760
    %v4078 = vsub.f32 %v4076, %v4077
    %v4079 = vand.u32 %v4078, 4294901760
    %4080 = vmatpush1.msra.mxu0 %v4079
    %4081 = vmatprep.subr.mxu0 0.0
    %4082 = vmatpush2.msra.mxu0 0.0
    %4083 = vmatprep.subr.mxu0 0.0
    %4084 = vmatpush2.msra.mxu0 0.0
    %4085 = vmatprep.subr.mxu0 0.0
    %4086 = vmatpush2.msra.mxu0 0.0
    %4087 = vmatprep.subr.mxu0 0.0
    %4088 = vmatpush2.msra.mxu0 0.0
    %4089 = vmatprep.subr.mxu0 0.0
    %4090 = vmatpush2.msra.mxu0 0.0
    %4091 = vmatprep.subr.mxu0 0.0
    %4092 = vmatpush2.msra.mxu0 0.0
    %4093 = vmatprep.subr.mxu0 0.0
    %4094 = vmatpush2.msra.mxu0 0.0
    %4095 = vmatprep.subr.mxu0 0.0
    %4096 = vmatpush2.msra.mxu0 0.0
    %4097 = vmatprep.subr.mxu0 0.0
    %4098 = vmatpush2.msra.mxu0 0.0
    %4099 = vmatprep.subr.mxu0 0.0
    %4100 = vmatpush2.msra.mxu0 0.0
    %4101 = vmatprep.subr.mxu0 0.0
    %4102 = vmatpush2.msra.mxu0 0.0
    %4103 = vmatprep.subr.mxu0 0.0
    %4104 = vmatpush2.msra.mxu0 0.0
    %4105 = vmatprep.subr.mxu0 0.0
    %4106 = vmatpush2.msra.mxu0 0.0
    %4107 = vmatprep.subr.mxu0 0.0
    %4108 = vmatpush2.msra.mxu0 0.0
    %4109 = vmatprep.subr.mxu0 0.0
    %4110 = vmatpush2.msra.mxu0 0.0
    %4111 = vmatprep.subr.mxu0 0.0
    %4112 = vmatpush2.msra.mxu0 0.0
    %4113 = vmatprep.mubr.f32.mxu0 0.0
    %v4114 = vand.u32 %v3909, 4294901760
    %4115 = vmatmul.mubr.f32.gmra.mxu0 %v4114
    %v4116 = vpop.f32.mrf.mxu0
    %v4117 = vadd.f32 %v3996, %v4116
    %v4118 = vpop.f32.mrf.mxu0
    %4119 = vmatprep.mubr.f32.mxu0 0.0
    %v4120 = vand.u32 %v3912, 4294901760
    %4121 = vmatmul.mubr.f32.gmra.mxu0 %v4120
    %v4122 = vpop.f32.mrf.mxu0
    %v4123 = vadd.f32 %v4006, %v4122
    %v4124 = vpop.f32.mrf.mxu0
    %4125 = vmatprep.mubr.f32.mxu0 0.0
    %v4126 = vand.u32 %v3915, 4294901760
    %4127 = vmatmul.mubr.f32.gmra.mxu0 %v4126
    %v4128 = vpop.f32.mrf.mxu0
    %v4129 = vadd.f32 %v4016, %v4128
    %v4130 = vpop.f32.mrf.mxu0
    %4131 = vmatprep.mubr.f32.mxu0 0.0
    %v4132 = vand.u32 %v3918, 4294901760
    %4133 = vmatmul.mubr.f32.gmra.mxu0 %v4132
    %v4134 = vpop.f32.mrf.mxu0
    %v4135 = vadd.f32 %v4026, %v4134
    %v4136 = vpop.f32.mrf.mxu0
    %4137 = vdwg.mxu0
    %4138 = vmatprep.subr.mxu0 0.0
    %4139 = vmatpush1.msra.mxu0 0.0
    %4140 = vmatprep.subr.mxu0 0.0
    %4141 = vmatpush1.msra.mxu0 0.0
    %4142 = vmatprep.subr.mxu0 0.0
    %4143 = vmatpush1.msra.mxu0 0.0
    %4144 = vmatprep.subr.mxu0 0.0
    %4145 = vmatpush1.msra.mxu0 0.0
    %4146 = vmatprep.subr.mxu0 0.0
    %4147 = vmatpush1.msra.mxu0 0.0
    %4148 = vmatprep.subr.mxu0 0.0
    %4149 = vmatpush1.msra.mxu0 0.0
    %4150 = vmatprep.subr.mxu0 0.0
    %4151 = vmatpush1.msra.mxu0 0.0
    %4152 = vmatprep.subr.mxu0 0.0
    %4153 = vmatpush1.msra.mxu0 0.0
    %4154 = vmatprep.subr.mxu0 0.0
    %4155 = vmatpush1.msra.mxu0 0.0
    %4156 = vmatprep.subr.mxu0 0.0
    %4157 = vmatpush1.msra.mxu0 0.0
    %4158 = vmatprep.subr.mxu0 0.0
    %4159 = vmatpush1.msra.mxu0 0.0
    %4160 = vmatprep.subr.mxu0 0.0
    %4161 = vmatpush1.msra.mxu0 0.0
    %4162 = vmatprep.subr.mxu0 0.0
    %v4163 = vand.u32 %v3907, 4294901760
    %v4164 = vsub.f32 %v3907, %v4163
    %4165 = vmatpush1.msra.mxu0 %v4164
    %4166 = vmatprep.subr.mxu0 0.0
    %v4167 = vand.u32 %v3906, 4294901760
    %v4168 = vsub.f32 %v3906, %v4167
    %4169 = vmatpush1.msra.mxu0 %v4168
    %4170 = vmatprep.subr.mxu0 0.0
    %v4171 = vand.u32 %v3905, 4294901760
    %v4172 = vsub.f32 %v3905, %v4171
    %4173 = vmatpush1.msra.mxu0 %v4172
    %4174 = vmatprep.subr.mxu0 0.0
    %v4175 = vand.u32 %v3904, 4294901760
    %v4176 = vsub.f32 %v3904, %v4175
    %4177 = vmatpush1.msra.mxu0 %v4176
    %4178 = vmatprep.subr.mxu0 0.0
    %4179 = vmatpush2.msra.mxu0 0.0
    %4180 = vmatprep.subr.mxu0 0.0
    %4181 = vmatpush2.msra.mxu0 0.0
    %4182 = vmatprep.subr.mxu0 0.0
    %4183 = vmatpush2.msra.mxu0 0.0
    %4184 = vmatprep.subr.mxu0 0.0
    %4185 = vmatpush2.msra.mxu0 0.0
    %4186 = vmatprep.subr.mxu0 0.0
    %4187 = vmatpush2.msra.mxu0 0.0
    %4188 = vmatprep.subr.mxu0 0.0
    %4189 = vmatpush2.msra.mxu0 0.0
    %4190 = vmatprep.subr.mxu0 0.0
    %4191 = vmatpush2.msra.mxu0 0.0
    %4192 = vmatprep.subr.mxu0 0.0
    %4193 = vmatpush2.msra.mxu0 0.0
    %4194 = vmatprep.subr.mxu0 0.0
    %4195 = vmatpush2.msra.mxu0 0.0
    %4196 = vmatprep.subr.mxu0 0.0
    %4197 = vmatpush2.msra.mxu0 0.0
    %4198 = vmatprep.subr.mxu0 0.0
    %4199 = vmatpush2.msra.mxu0 0.0
    %4200 = vmatprep.subr.mxu0 0.0
    %4201 = vmatpush2.msra.mxu0 0.0
    %4202 = vmatprep.subr.mxu0 0.0
    %4203 = vmatpush2.msra.mxu0 0.0
    %4204 = vmatprep.subr.mxu0 0.0
    %4205 = vmatpush2.msra.mxu0 0.0
    %4206 = vmatprep.subr.mxu0 0.0
    %4207 = vmatpush2.msra.mxu0 0.0
    %4208 = vmatprep.subr.mxu0 0.0
    %4209 = vmatpush2.msra.mxu0 0.0
    %4210 = vmatprep.mubr.f32.mxu0 0.0
    %v4211 = vand.u32 %v3909, 4294901760
    %v4212 = vsub.f32 %v3909, %v4211
    %4213 = vmatmul.mubr.f32.gmra.mxu0 %v4212
    %v4214 = vpop.f32.mrf.mxu0
    %v4215 = vadd.f32 %v4117, %v4214
    %v4216 = vpop.f32.mrf.mxu0
    %4217 = vmatprep.mubr.f32.mxu0 0.0
    %v4218 = vand.u32 %v3912, 4294901760
    %v4219 = vsub.f32 %v3912, %v4218
    %4220 = vmatmul.mubr.f32.gmra.mxu0 %v4219
    %v4221 = vpop.f32.mrf.mxu0
    %v4222 = vadd.f32 %v4123, %v4221
    %v4223 = vpop.f32.mrf.mxu0
    %4224 = vmatprep.mubr.f32.mxu0 0.0
    %v4225 = vand.u32 %v3915, 4294901760
    %v4226 = vsub.f32 %v3915, %v4225
    %4227 = vmatmul.mubr.f32.gmra.mxu0 %v4226
    %v4228 = vpop.f32.mrf.mxu0
    %v4229 = vadd.f32 %v4129, %v4228
    %v4230 = vpop.f32.mrf.mxu0
    %4231 = vmatprep.mubr.f32.mxu0 0.0
    %v4232 = vand.u32 %v3918, 4294901760
    %v4233 = vsub.f32 %v3918, %v4232
    %4234 = vmatmul.mubr.f32.gmra.mxu0 %v4233
    %v4235 = vpop.f32.mrf.mxu0
    %v4236 = vadd.f32 %v4135, %v4235
    %v4237 = vpop.f32.mrf.mxu0
    %4238 = vdwg.mxu0
    %4239 = vmatprep.subr.mxu0 0.0
    %4240 = vmatpush1.msra.mxu0 0.0
    %4241 = vmatprep.subr.mxu0 0.0
    %4242 = vmatpush1.msra.mxu0 0.0
    %4243 = vmatprep.subr.mxu0 0.0
    %4244 = vmatpush1.msra.mxu0 0.0
    %4245 = vmatprep.subr.mxu0 0.0
    %4246 = vmatpush1.msra.mxu0 0.0
    %4247 = vmatprep.subr.mxu0 0.0
    %4248 = vmatpush1.msra.mxu0 0.0
    %4249 = vmatprep.subr.mxu0 0.0
    %4250 = vmatpush1.msra.mxu0 0.0
    %4251 = vmatprep.subr.mxu0 0.0
    %4252 = vmatpush1.msra.mxu0 0.0
    %4253 = vmatprep.subr.mxu0 0.0
    %4254 = vmatpush1.msra.mxu0 0.0
    %4255 = vmatprep.subr.mxu0 0.0
    %4256 = vmatpush1.msra.mxu0 0.0
    %4257 = vmatprep.subr.mxu0 0.0
    %4258 = vmatpush1.msra.mxu0 0.0
    %4259 = vmatprep.subr.mxu0 0.0
    %4260 = vmatpush1.msra.mxu0 0.0
    %4261 = vmatprep.subr.mxu0 0.0
    %4262 = vmatpush1.msra.mxu0 0.0
    %4263 = vmatprep.subr.mxu0 0.0
    %v4264 = vand.u32 %v3907, 4294901760
    %4265 = vmatpush1.msra.mxu0 %v4264
    %4266 = vmatprep.subr.mxu0 0.0
    %v4267 = vand.u32 %v3906, 4294901760
    %4268 = vmatpush1.msra.mxu0 %v4267
    %4269 = vmatprep.subr.mxu0 0.0
    %v4270 = vand.u32 %v3905, 4294901760
    %4271 = vmatpush1.msra.mxu0 %v4270
    %4272 = vmatprep.subr.mxu0 0.0
    %v4273 = vand.u32 %v3904, 4294901760
    %4274 = vmatpush1.msra.mxu0 %v4273
    %4275 = vmatprep.subr.mxu0 0.0
    %4276 = vmatpush2.msra.mxu0 0.0
    %4277 = vmatprep.subr.mxu0 0.0
    %4278 = vmatpush2.msra.mxu0 0.0
    %4279 = vmatprep.subr.mxu0 0.0
    %4280 = vmatpush2.msra.mxu0 0.0
    %4281 = vmatprep.subr.mxu0 0.0
    %4282 = vmatpush2.msra.mxu0 0.0
    %4283 = vmatprep.subr.mxu0 0.0
    %4284 = vmatpush2.msra.mxu0 0.0
    %4285 = vmatprep.subr.mxu0 0.0
    %4286 = vmatpush2.msra.mxu0 0.0
    %4287 = vmatprep.subr.mxu0 0.0
    %4288 = vmatpush2.msra.mxu0 0.0
    %4289 = vmatprep.subr.mxu0 0.0
    %4290 = vmatpush2.msra.mxu0 0.0
    %4291 = vmatprep.subr.mxu0 0.0
    %4292 = vmatpush2.msra.mxu0 0.0
    %4293 = vmatprep.subr.mxu0 0.0
    %4294 = vmatpush2.msra.mxu0 0.0
    %4295 = vmatprep.subr.mxu0 0.0
    %4296 = vmatpush2.msra.mxu0 0.0
    %4297 = vmatprep.subr.mxu0 0.0
    %4298 = vmatpush2.msra.mxu0 0.0
    %4299 = vmatprep.subr.mxu0 0.0
    %4300 = vmatpush2.msra.mxu0 0.0
    %4301 = vmatprep.subr.mxu0 0.0
    %4302 = vmatpush2.msra.mxu0 0.0
    %4303 = vmatprep.subr.mxu0 0.0
    %4304 = vmatpush2.msra.mxu0 0.0
    %4305 = vmatprep.subr.mxu0 0.0
    %4306 = vmatpush2.msra.mxu0 0.0
    %4307 = vmatprep.mubr.f32.mxu0 0.0
    %v4308 = vand.u32 %v3909, 4294901760
    %v4309 = vsub.f32 %v3909, %v4308
    %v4310 = vand.u32 %v4309, 4294901760
    %4311 = vmatmul.mubr.f32.gmra.mxu0 %v4310
    %v4312 = vpop.f32.mrf.mxu0
    %v4313 = vadd.f32 %v4215, %v4312
    %v4314 = vpop.f32.mrf.mxu0
    %4315 = vmatprep.mubr.f32.mxu0 0.0
    %v4316 = vand.u32 %v3912, 4294901760
    %v4317 = vsub.f32 %v3912, %v4316
    %v4318 = vand.u32 %v4317, 4294901760
    %4319 = vmatmul.mubr.f32.gmra.mxu0 %v4318
    %v4320 = vpop.f32.mrf.mxu0
    %v4321 = vadd.f32 %v4222, %v4320
    %v4322 = vpop.f32.mrf.mxu0
    %4323 = vmatprep.mubr.f32.mxu0 0.0
    %v4324 = vand.u32 %v3915, 4294901760
    %v4325 = vsub.f32 %v3915, %v4324
    %v4326 = vand.u32 %v4325, 4294901760
    %4327 = vmatmul.mubr.f32.gmra.mxu0 %v4326
    %v4328 = vpop.f32.mrf.mxu0
    %v4329 = vadd.f32 %v4229, %v4328
    %v4330 = vpop.f32.mrf.mxu0
    %4331 = vmatprep.mubr.f32.mxu0 0.0
    %v4332 = vand.u32 %v3918, 4294901760
    %v4333 = vsub.f32 %v3918, %v4332
    %v4334 = vand.u32 %v4333, 4294901760
    %4335 = vmatmul.mubr.f32.gmra.mxu0 %v4334
    %v4336 = vpop.f32.mrf.mxu0
    %v4337 = vadd.f32 %v4236, %v4336
    %v4338 = vpop.f32.mrf.mxu0
    %4339 = vdwg.mxu0
    %4340 = vmatprep.subr.mxu0 0.0
    %4341 = vmatpush1.msra.mxu0 0.0
    %4342 = vmatprep.subr.mxu0 0.0
    %4343 = vmatpush1.msra.mxu0 0.0
    %4344 = vmatprep.subr.mxu0 0.0
    %4345 = vmatpush1.msra.mxu0 0.0
    %4346 = vmatprep.subr.mxu0 0.0
    %4347 = vmatpush1.msra.mxu0 0.0
    %4348 = vmatprep.subr.mxu0 0.0
    %4349 = vmatpush1.msra.mxu0 0.0
    %4350 = vmatprep.subr.mxu0 0.0
    %4351 = vmatpush1.msra.mxu0 0.0
    %4352 = vmatprep.subr.mxu0 0.0
    %4353 = vmatpush1.msra.mxu0 0.0
    %4354 = vmatprep.subr.mxu0 0.0
    %4355 = vmatpush1.msra.mxu0 0.0
    %4356 = vmatprep.subr.mxu0 0.0
    %4357 = vmatpush1.msra.mxu0 0.0
    %4358 = vmatprep.subr.mxu0 0.0
    %4359 = vmatpush1.msra.mxu0 0.0
    %4360 = vmatprep.subr.mxu0 0.0
    %4361 = vmatpush1.msra.mxu0 0.0
    %4362 = vmatprep.subr.mxu0 0.0
    %4363 = vmatpush1.msra.mxu0 0.0
    %4364 = vmatprep.subr.mxu0 0.0
    %v4365 = vand.u32 %v3907, 4294901760
    %v4366 = vsub.f32 %v3907, %v4365
    %v4367 = vand.u32 %v4366, 4294901760
    %4368 = vmatpush1.msra.mxu0 %v4367
    %4369 = vmatprep.subr.mxu0 0.0
    %v4370 = vand.u32 %v3906, 4294901760
    %v4371 = vsub.f32 %v3906, %v4370
    %v4372 = vand.u32 %v4371, 4294901760
    %4373 = vmatpush1.msra.mxu0 %v4372
    %4374 = vmatprep.subr.mxu0 0.0
    %v4375 = vand.u32 %v3905, 4294901760
    %v4376 = vsub.f32 %v3905, %v4375
    %v4377 = vand.u32 %v4376, 4294901760
    %4378 = vmatpush1.msra.mxu0 %v4377
    %4379 = vmatprep.subr.mxu0 0.0
    %v4380 = vand.u32 %v3904, 4294901760
    %v4381 = vsub.f32 %v3904, %v4380
    %v4382 = vand.u32 %v4381, 4294901760
    %4383 = vmatpush1.msra.mxu0 %v4382
    %4384 = vmatprep.subr.mxu0 0.0
    %4385 = vmatpush2.msra.mxu0 0.0
    %4386 = vmatprep.subr.mxu0 0.0
    %4387 = vmatpush2.msra.mxu0 0.0
    %4388 = vmatprep.subr.mxu0 0.0
    %4389 = vmatpush2.msra.mxu0 0.0
    %4390 = vmatprep.subr.mxu0 0.0
    %4391 = vmatpush2.msra.mxu0 0.0
    %4392 = vmatprep.subr.mxu0 0.0
    %4393 = vmatpush2.msra.mxu0 0.0
    %4394 = vmatprep.subr.mxu0 0.0
    %4395 = vmatpush2.msra.mxu0 0.0
    %4396 = vmatprep.subr.mxu0 0.0
    %4397 = vmatpush2.msra.mxu0 0.0
    %4398 = vmatprep.subr.mxu0 0.0
    %4399 = vmatpush2.msra.mxu0 0.0
    %4400 = vmatprep.subr.mxu0 0.0
    %4401 = vmatpush2.msra.mxu0 0.0
    %4402 = vmatprep.subr.mxu0 0.0
    %4403 = vmatpush2.msra.mxu0 0.0
    %4404 = vmatprep.subr.mxu0 0.0
    %4405 = vmatpush2.msra.mxu0 0.0
    %4406 = vmatprep.subr.mxu0 0.0
    %4407 = vmatpush2.msra.mxu0 0.0
    %4408 = vmatprep.subr.mxu0 0.0
    %4409 = vmatpush2.msra.mxu0 0.0
    %4410 = vmatprep.subr.mxu0 0.0
    %4411 = vmatpush2.msra.mxu0 0.0
    %4412 = vmatprep.subr.mxu0 0.0
    %4413 = vmatpush2.msra.mxu0 0.0
    %4414 = vmatprep.subr.mxu0 0.0
    %4415 = vmatpush2.msra.mxu0 0.0
    %4416 = vmatprep.mubr.f32.mxu0 0.0
    %v4417 = vand.u32 %v3909, 4294901760
    %4418 = vmatmul.mubr.f32.gmra.mxu0 %v4417
    %v4419 = vpop.f32.mrf.mxu0
    %v4420 = vadd.f32 %v4313, %v4419
    %v4421 = vpop.f32.mrf.mxu0
    %4422 = vmatprep.mubr.f32.mxu0 0.0
    %v4423 = vand.u32 %v3912, 4294901760
    %4424 = vmatmul.mubr.f32.gmra.mxu0 %v4423
    %v4425 = vpop.f32.mrf.mxu0
    %v4426 = vadd.f32 %v4321, %v4425
    %v4427 = vpop.f32.mrf.mxu0
    %4428 = vmatprep.mubr.f32.mxu0 0.0
    %v4429 = vand.u32 %v3915, 4294901760
    %4430 = vmatmul.mubr.f32.gmra.mxu0 %v4429
    %v4431 = vpop.f32.mrf.mxu0
    %v4432 = vadd.f32 %v4329, %v4431
    %v4433 = vpop.f32.mrf.mxu0
    %4434 = vmatprep.mubr.f32.mxu0 0.0
    %v4435 = vand.u32 %v3918, 4294901760
    %4436 = vmatmul.mubr.f32.gmra.mxu0 %v4435
    %v4437 = vpop.f32.mrf.mxu0
    %v4438 = vadd.f32 %v4337, %v4437
    %v4439 = vpop.f32.mrf.mxu0
    %4440 = vdwg.mxu0
    %4441 = vmatprep.subr.mxu0 0.0
    %4442 = vmatpush1.msra.mxu0 0.0
    %4443 = vmatprep.subr.mxu0 0.0
    %4444 = vmatpush1.msra.mxu0 0.0
    %4445 = vmatprep.subr.mxu0 0.0
    %4446 = vmatpush1.msra.mxu0 0.0
    %4447 = vmatprep.subr.mxu0 0.0
    %4448 = vmatpush1.msra.mxu0 0.0
    %4449 = vmatprep.subr.mxu0 0.0
    %4450 = vmatpush1.msra.mxu0 0.0
    %4451 = vmatprep.subr.mxu0 0.0
    %4452 = vmatpush1.msra.mxu0 0.0
    %4453 = vmatprep.subr.mxu0 0.0
    %4454 = vmatpush1.msra.mxu0 0.0
    %4455 = vmatprep.subr.mxu0 0.0
    %4456 = vmatpush1.msra.mxu0 0.0
    %4457 = vmatprep.subr.mxu0 0.0
    %4458 = vmatpush1.msra.mxu0 0.0
    %4459 = vmatprep.subr.mxu0 0.0
    %4460 = vmatpush1.msra.mxu0 0.0
    %4461 = vmatprep.subr.mxu0 0.0
    %4462 = vmatpush1.msra.mxu0 0.0
    %4463 = vmatprep.subr.mxu0 0.0
    %4464 = vmatpush1.msra.mxu0 0.0
    %4465 = vmatprep.subr.mxu0 0.0
    %v4466 = vand.u32 %v3907, 4294901760
    %4467 = vmatpush1.msra.mxu0 %v4466
    %4468 = vmatprep.subr.mxu0 0.0
    %v4469 = vand.u32 %v3906, 4294901760
    %4470 = vmatpush1.msra.mxu0 %v4469
    %4471 = vmatprep.subr.mxu0 0.0
    %v4472 = vand.u32 %v3905, 4294901760
    %4473 = vmatpush1.msra.mxu0 %v4472
    %4474 = vmatprep.subr.mxu0 0.0
    %v4475 = vand.u32 %v3904, 4294901760
    %4476 = vmatpush1.msra.mxu0 %v4475
    %4477 = vmatprep.subr.mxu0 0.0
    %4478 = vmatpush2.msra.mxu0 0.0
    %4479 = vmatprep.subr.mxu0 0.0
    %4480 = vmatpush2.msra.mxu0 0.0
    %4481 = vmatprep.subr.mxu0 0.0
    %4482 = vmatpush2.msra.mxu0 0.0
    %4483 = vmatprep.subr.mxu0 0.0
    %4484 = vmatpush2.msra.mxu0 0.0
    %4485 = vmatprep.subr.mxu0 0.0
    %4486 = vmatpush2.msra.mxu0 0.0
    %4487 = vmatprep.subr.mxu0 0.0
    %4488 = vmatpush2.msra.mxu0 0.0
    %4489 = vmatprep.subr.mxu0 0.0
    %4490 = vmatpush2.msra.mxu0 0.0
    %4491 = vmatprep.subr.mxu0 0.0
    %4492 = vmatpush2.msra.mxu0 0.0
    %4493 = vmatprep.subr.mxu0 0.0
    %4494 = vmatpush2.msra.mxu0 0.0
    %4495 = vmatprep.subr.mxu0 0.0
    %4496 = vmatpush2.msra.mxu0 0.0
    %4497 = vmatprep.subr.mxu0 0.0
    %4498 = vmatpush2.msra.mxu0 0.0
    %4499 = vmatprep.subr.mxu0 0.0
    %4500 = vmatpush2.msra.mxu0 0.0
    %4501 = vmatprep.subr.mxu0 0.0
    %4502 = vmatpush2.msra.mxu0 0.0
    %4503 = vmatprep.subr.mxu0 0.0
    %4504 = vmatpush2.msra.mxu0 0.0
    %4505 = vmatprep.subr.mxu0 0.0
    %4506 = vmatpush2.msra.mxu0 0.0
    %4507 = vmatprep.subr.mxu0 0.0
    %4508 = vmatpush2.msra.mxu0 0.0
    %4509 = vmatprep.mubr.f32.mxu0 0.0
    %v4510 = vand.u32 %v3909, 4294901760
    %4511 = vmatmul.mubr.f32.gmra.mxu0 %v4510
    %v4512 = vpop.f32.mrf.mxu0
    %v4513 = vadd.f32 %v4420, %v4512
    %v4514 = vpop.f32.mrf.mxu0
    %4515 = vmatprep.mubr.f32.mxu0 0.0
    %v4516 = vand.u32 %v3912, 4294901760
    %4517 = vmatmul.mubr.f32.gmra.mxu0 %v4516
    %v4518 = vpop.f32.mrf.mxu0
    %v4519 = vadd.f32 %v4426, %v4518
    %v4520 = vpop.f32.mrf.mxu0
    %4521 = vmatprep.mubr.f32.mxu0 0.0
    %v4522 = vand.u32 %v3915, 4294901760
    %4523 = vmatmul.mubr.f32.gmra.mxu0 %v4522
    %v4524 = vpop.f32.mrf.mxu0
    %v4525 = vadd.f32 %v4432, %v4524
    %v4526 = vpop.f32.mrf.mxu0
    %4527 = vmatprep.mubr.f32.mxu0 0.0
    %v4528 = vand.u32 %v3918, 4294901760
    %4529 = vmatmul.mubr.f32.gmra.mxu0 %v4528
    %v4530 = vpop.f32.mrf.mxu0
    %v4531 = vadd.f32 %v4438, %v4530
    %v4532 = vpop.f32.mrf.mxu0
    %4533 = vdwg.mxu0
    %v4534 = vadd.f32 %v3895, %v4513
    %v4535 = vadd.f32 %v3896, %v4519
    %v4536 = vadd.f32 %v3897, %v4525
    %v4537 = vadd.f32 %v3898, %v4531
    %v4538 = vld [vmem:[#allocation2 + $0xa] sm:$0xff]
    %v4539 = vld [vmem:[#allocation2 + $0x12] sm:$0xff]
    %v4540 = vld [vmem:[#allocation2 + $0x2a] sm:$0xff]
    %v4541 = vld [vmem:[#allocation2 + $0x32] sm:$0xff]
    %s4542 = scalar_lea.vmem [#allocation8], 224
    %v4543 = vld [vmem:[%s4542] sm:$0xff]
    %v4544 = vld [vmem:[%s4542 + $0x8] sm:$0xff]
    %v4545 = vld [vmem:[%s4542 + $0x10] sm:$0xff]
    %v4546 = vld [vmem:[%s4542 + $0x18] sm:$0xff]
    %v4548 = vsel %vm57, %v4538, 0
    %v4551 = vsel %vm57, %v4539, 0
    %v4554 = vsel %vm57, %v4540, 0
    %v4557 = vsel %vm57, %v4541, 0
    %4559 = vmatprep.subr.mxu0 0.0
    %4560 = vmatpush1.msra.mxu0 0.0
    %4561 = vmatprep.subr.mxu0 0.0
    %4562 = vmatpush1.msra.mxu0 0.0
    %4563 = vmatprep.subr.mxu0 0.0
    %4564 = vmatpush1.msra.mxu0 0.0
    %4565 = vmatprep.subr.mxu0 0.0
    %4566 = vmatpush1.msra.mxu0 0.0
    %4567 = vmatprep.subr.mxu0 0.0
    %4568 = vmatpush1.msra.mxu0 0.0
    %4569 = vmatprep.subr.mxu0 0.0
    %4570 = vmatpush1.msra.mxu0 0.0
    %4571 = vmatprep.subr.mxu0 0.0
    %4572 = vmatpush1.msra.mxu0 0.0
    %4573 = vmatprep.subr.mxu0 0.0
    %4574 = vmatpush1.msra.mxu0 0.0
    %4575 = vmatprep.subr.mxu0 0.0
    %4576 = vmatpush1.msra.mxu0 0.0
    %4577 = vmatprep.subr.mxu0 0.0
    %4578 = vmatpush1.msra.mxu0 0.0
    %4579 = vmatprep.subr.mxu0 0.0
    %4580 = vmatpush1.msra.mxu0 0.0
    %4581 = vmatprep.subr.mxu0 0.0
    %4582 = vmatpush1.msra.mxu0 0.0
    %4583 = vmatprep.subr.mxu0 0.0
    %v4584 = vand.u32 %v4546, 4294901760
    %4585 = vmatpush1.msra.mxu0 %v4584
    %4586 = vmatprep.subr.mxu0 0.0
    %v4587 = vand.u32 %v4545, 4294901760
    %4588 = vmatpush1.msra.mxu0 %v4587
    %4589 = vmatprep.subr.mxu0 0.0
    %v4590 = vand.u32 %v4544, 4294901760
    %4591 = vmatpush1.msra.mxu0 %v4590
    %4592 = vmatprep.subr.mxu0 0.0
    %v4593 = vand.u32 %v4543, 4294901760
    %4594 = vmatpush1.msra.mxu0 %v4593
    %4595 = vmatprep.subr.mxu0 0.0
    %4596 = vmatpush2.msra.mxu0 0.0
    %4597 = vmatprep.subr.mxu0 0.0
    %4598 = vmatpush2.msra.mxu0 0.0
    %4599 = vmatprep.subr.mxu0 0.0
    %4600 = vmatpush2.msra.mxu0 0.0
    %4601 = vmatprep.subr.mxu0 0.0
    %4602 = vmatpush2.msra.mxu0 0.0
    %4603 = vmatprep.subr.mxu0 0.0
    %4604 = vmatpush2.msra.mxu0 0.0
    %4605 = vmatprep.subr.mxu0 0.0
    %4606 = vmatpush2.msra.mxu0 0.0
    %4607 = vmatprep.subr.mxu0 0.0
    %4608 = vmatpush2.msra.mxu0 0.0
    %4609 = vmatprep.subr.mxu0 0.0
    %4610 = vmatpush2.msra.mxu0 0.0
    %4611 = vmatprep.subr.mxu0 0.0
    %4612 = vmatpush2.msra.mxu0 0.0
    %4613 = vmatprep.subr.mxu0 0.0
    %4614 = vmatpush2.msra.mxu0 0.0
    %4615 = vmatprep.subr.mxu0 0.0
    %4616 = vmatpush2.msra.mxu0 0.0
    %4617 = vmatprep.subr.mxu0 0.0
    %4618 = vmatpush2.msra.mxu0 0.0
    %4619 = vmatprep.subr.mxu0 0.0
    %4620 = vmatpush2.msra.mxu0 0.0
    %4621 = vmatprep.subr.mxu0 0.0
    %4622 = vmatpush2.msra.mxu0 0.0
    %4623 = vmatprep.subr.mxu0 0.0
    %4624 = vmatpush2.msra.mxu0 0.0
    %4625 = vmatprep.subr.mxu0 0.0
    %4626 = vmatpush2.msra.mxu0 0.0
    %4627 = vmatprep.mubr.f32.mxu0 0.0
    %v4628 = vand.u32 %v4548, 4294901760
    %v4629 = vsub.f32 %v4548, %v4628
    %v4630 = vand.u32 %v4629, 4294901760
    %v4631 = vsub.f32 %v4629, %v4630
    %v4632 = vand.u32 %v4631, 4294901760
    %4633 = vmatmul.mubr.f32.gmra.mxu0 %v4632
    %v4634 = vpop.f32.mrf.mxu0
    %v4635 = vadd.f32 0.0, %v4634
    %v4636 = vpop.f32.mrf.mxu0
    %4637 = vmatprep.mubr.f32.mxu0 0.0
    %v4638 = vand.u32 %v4551, 4294901760
    %v4639 = vsub.f32 %v4551, %v4638
    %v4640 = vand.u32 %v4639, 4294901760
    %v4641 = vsub.f32 %v4639, %v4640
    %v4642 = vand.u32 %v4641, 4294901760
    %4643 = vmatmul.mubr.f32.gmra.mxu0 %v4642
    %v4644 = vpop.f32.mrf.mxu0
    %v4645 = vadd.f32 0.0, %v4644
    %v4646 = vpop.f32.mrf.mxu0
    %4647 = vmatprep.mubr.f32.mxu0 0.0
    %v4648 = vand.u32 %v4554, 4294901760
    %v4649 = vsub.f32 %v4554, %v4648
    %v4650 = vand.u32 %v4649, 4294901760
    %v4651 = vsub.f32 %v4649, %v4650
    %v4652 = vand.u32 %v4651, 4294901760
    %4653 = vmatmul.mubr.f32.gmra.mxu0 %v4652
    %v4654 = vpop.f32.mrf.mxu0
    %v4655 = vadd.f32 0.0, %v4654
    %v4656 = vpop.f32.mrf.mxu0
    %4657 = vmatprep.mubr.f32.mxu0 0.0
    %v4658 = vand.u32 %v4557, 4294901760
    %v4659 = vsub.f32 %v4557, %v4658
    %v4660 = vand.u32 %v4659, 4294901760
    %v4661 = vsub.f32 %v4659, %v4660
    %v4662 = vand.u32 %v4661, 4294901760
    %4663 = vmatmul.mubr.f32.gmra.mxu0 %v4662
    %v4664 = vpop.f32.mrf.mxu0
    %v4665 = vadd.f32 0.0, %v4664
    %v4666 = vpop.f32.mrf.mxu0
    %4667 = vdwg.mxu0
    %4668 = vmatprep.subr.mxu0 0.0
    %4669 = vmatpush1.msra.mxu0 0.0
    %4670 = vmatprep.subr.mxu0 0.0
    %4671 = vmatpush1.msra.mxu0 0.0
    %4672 = vmatprep.subr.mxu0 0.0
    %4673 = vmatpush1.msra.mxu0 0.0
    %4674 = vmatprep.subr.mxu0 0.0
    %4675 = vmatpush1.msra.mxu0 0.0
    %4676 = vmatprep.subr.mxu0 0.0
    %4677 = vmatpush1.msra.mxu0 0.0
    %4678 = vmatprep.subr.mxu0 0.0
    %4679 = vmatpush1.msra.mxu0 0.0
    %4680 = vmatprep.subr.mxu0 0.0
    %4681 = vmatpush1.msra.mxu0 0.0
    %4682 = vmatprep.subr.mxu0 0.0
    %4683 = vmatpush1.msra.mxu0 0.0
    %4684 = vmatprep.subr.mxu0 0.0
    %4685 = vmatpush1.msra.mxu0 0.0
    %4686 = vmatprep.subr.mxu0 0.0
    %4687 = vmatpush1.msra.mxu0 0.0
    %4688 = vmatprep.subr.mxu0 0.0
    %4689 = vmatpush1.msra.mxu0 0.0
    %4690 = vmatprep.subr.mxu0 0.0
    %4691 = vmatpush1.msra.mxu0 0.0
    %4692 = vmatprep.subr.mxu0 0.0
    %v4693 = vand.u32 %v4546, 4294901760
    %v4694 = vsub.f32 %v4546, %v4693
    %v4695 = vand.u32 %v4694, 4294901760
    %v4696 = vsub.f32 %v4694, %v4695
    %v4697 = vand.u32 %v4696, 4294901760
    %4698 = vmatpush1.msra.mxu0 %v4697
    %4699 = vmatprep.subr.mxu0 0.0
    %v4700 = vand.u32 %v4545, 4294901760
    %v4701 = vsub.f32 %v4545, %v4700
    %v4702 = vand.u32 %v4701, 4294901760
    %v4703 = vsub.f32 %v4701, %v4702
    %v4704 = vand.u32 %v4703, 4294901760
    %4705 = vmatpush1.msra.mxu0 %v4704
    %4706 = vmatprep.subr.mxu0 0.0
    %v4707 = vand.u32 %v4544, 4294901760
    %v4708 = vsub.f32 %v4544, %v4707
    %v4709 = vand.u32 %v4708, 4294901760
    %v4710 = vsub.f32 %v4708, %v4709
    %v4711 = vand.u32 %v4710, 4294901760
    %4712 = vmatpush1.msra.mxu0 %v4711
    %4713 = vmatprep.subr.mxu0 0.0
    %v4714 = vand.u32 %v4543, 4294901760
    %v4715 = vsub.f32 %v4543, %v4714
    %v4716 = vand.u32 %v4715, 4294901760
    %v4717 = vsub.f32 %v4715, %v4716
    %v4718 = vand.u32 %v4717, 4294901760
    %4719 = vmatpush1.msra.mxu0 %v4718
    %4720 = vmatprep.subr.mxu0 0.0
    %4721 = vmatpush2.msra.mxu0 0.0
    %4722 = vmatprep.subr.mxu0 0.0
    %4723 = vmatpush2.msra.mxu0 0.0
    %4724 = vmatprep.subr.mxu0 0.0
    %4725 = vmatpush2.msra.mxu0 0.0
    %4726 = vmatprep.subr.mxu0 0.0
    %4727 = vmatpush2.msra.mxu0 0.0
    %4728 = vmatprep.subr.mxu0 0.0
    %4729 = vmatpush2.msra.mxu0 0.0
    %4730 = vmatprep.subr.mxu0 0.0
    %4731 = vmatpush2.msra.mxu0 0.0
    %4732 = vmatprep.subr.mxu0 0.0
    %4733 = vmatpush2.msra.mxu0 0.0
    %4734 = vmatprep.subr.mxu0 0.0
    %4735 = vmatpush2.msra.mxu0 0.0
    %4736 = vmatprep.subr.mxu0 0.0
    %4737 = vmatpush2.msra.mxu0 0.0
    %4738 = vmatprep.subr.mxu0 0.0
    %4739 = vmatpush2.msra.mxu0 0.0
    %4740 = vmatprep.subr.mxu0 0.0
    %4741 = vmatpush2.msra.mxu0 0.0
    %4742 = vmatprep.subr.mxu0 0.0
    %4743 = vmatpush2.msra.mxu0 0.0
    %4744 = vmatprep.subr.mxu0 0.0
    %4745 = vmatpush2.msra.mxu0 0.0
    %4746 = vmatprep.subr.mxu0 0.0
    %4747 = vmatpush2.msra.mxu0 0.0
    %4748 = vmatprep.subr.mxu0 0.0
    %4749 = vmatpush2.msra.mxu0 0.0
    %4750 = vmatprep.subr.mxu0 0.0
    %4751 = vmatpush2.msra.mxu0 0.0
    %4752 = vmatprep.mubr.f32.mxu0 0.0
    %v4753 = vand.u32 %v4548, 4294901760
    %4754 = vmatmul.mubr.f32.gmra.mxu0 %v4753
    %v4755 = vpop.f32.mrf.mxu0
    %v4756 = vadd.f32 %v4635, %v4755
    %v4757 = vpop.f32.mrf.mxu0
    %4758 = vmatprep.mubr.f32.mxu0 0.0
    %v4759 = vand.u32 %v4551, 4294901760
    %4760 = vmatmul.mubr.f32.gmra.mxu0 %v4759
    %v4761 = vpop.f32.mrf.mxu0
    %v4762 = vadd.f32 %v4645, %v4761
    %v4763 = vpop.f32.mrf.mxu0
    %4764 = vmatprep.mubr.f32.mxu0 0.0
    %v4765 = vand.u32 %v4554, 4294901760
    %4766 = vmatmul.mubr.f32.gmra.mxu0 %v4765
    %v4767 = vpop.f32.mrf.mxu0
    %v4768 = vadd.f32 %v4655, %v4767
    %v4769 = vpop.f32.mrf.mxu0
    %4770 = vmatprep.mubr.f32.mxu0 0.0
    %v4771 = vand.u32 %v4557, 4294901760
    %4772 = vmatmul.mubr.f32.gmra.mxu0 %v4771
    %v4773 = vpop.f32.mrf.mxu0
    %v4774 = vadd.f32 %v4665, %v4773
    %v4775 = vpop.f32.mrf.mxu0
    %4776 = vdwg.mxu0
    %4777 = vmatprep.subr.mxu0 0.0
    %4778 = vmatpush1.msra.mxu0 0.0
    %4779 = vmatprep.subr.mxu0 0.0
    %4780 = vmatpush1.msra.mxu0 0.0
    %4781 = vmatprep.subr.mxu0 0.0
    %4782 = vmatpush1.msra.mxu0 0.0
    %4783 = vmatprep.subr.mxu0 0.0
    %4784 = vmatpush1.msra.mxu0 0.0
    %4785 = vmatprep.subr.mxu0 0.0
    %4786 = vmatpush1.msra.mxu0 0.0
    %4787 = vmatprep.subr.mxu0 0.0
    %4788 = vmatpush1.msra.mxu0 0.0
    %4789 = vmatprep.subr.mxu0 0.0
    %4790 = vmatpush1.msra.mxu0 0.0
    %4791 = vmatprep.subr.mxu0 0.0
    %4792 = vmatpush1.msra.mxu0 0.0
    %4793 = vmatprep.subr.mxu0 0.0
    %4794 = vmatpush1.msra.mxu0 0.0
    %4795 = vmatprep.subr.mxu0 0.0
    %4796 = vmatpush1.msra.mxu0 0.0
    %4797 = vmatprep.subr.mxu0 0.0
    %4798 = vmatpush1.msra.mxu0 0.0
    %4799 = vmatprep.subr.mxu0 0.0
    %4800 = vmatpush1.msra.mxu0 0.0
    %4801 = vmatprep.subr.mxu0 0.0
    %v4802 = vand.u32 %v4546, 4294901760
    %v4803 = vsub.f32 %v4546, %v4802
    %4804 = vmatpush1.msra.mxu0 %v4803
    %4805 = vmatprep.subr.mxu0 0.0
    %v4806 = vand.u32 %v4545, 4294901760
    %v4807 = vsub.f32 %v4545, %v4806
    %4808 = vmatpush1.msra.mxu0 %v4807
    %4809 = vmatprep.subr.mxu0 0.0
    %v4810 = vand.u32 %v4544, 4294901760
    %v4811 = vsub.f32 %v4544, %v4810
    %4812 = vmatpush1.msra.mxu0 %v4811
    %4813 = vmatprep.subr.mxu0 0.0
    %v4814 = vand.u32 %v4543, 4294901760
    %v4815 = vsub.f32 %v4543, %v4814
    %4816 = vmatpush1.msra.mxu0 %v4815
    %4817 = vmatprep.subr.mxu0 0.0
    %4818 = vmatpush2.msra.mxu0 0.0
    %4819 = vmatprep.subr.mxu0 0.0
    %4820 = vmatpush2.msra.mxu0 0.0
    %4821 = vmatprep.subr.mxu0 0.0
    %4822 = vmatpush2.msra.mxu0 0.0
    %4823 = vmatprep.subr.mxu0 0.0
    %4824 = vmatpush2.msra.mxu0 0.0
    %4825 = vmatprep.subr.mxu0 0.0
    %4826 = vmatpush2.msra.mxu0 0.0
    %4827 = vmatprep.subr.mxu0 0.0
    %4828 = vmatpush2.msra.mxu0 0.0
    %4829 = vmatprep.subr.mxu0 0.0
    %4830 = vmatpush2.msra.mxu0 0.0
    %4831 = vmatprep.subr.mxu0 0.0
    %4832 = vmatpush2.msra.mxu0 0.0
    %4833 = vmatprep.subr.mxu0 0.0
    %4834 = vmatpush2.msra.mxu0 0.0
    %4835 = vmatprep.subr.mxu0 0.0
    %4836 = vmatpush2.msra.mxu0 0.0
    %4837 = vmatprep.subr.mxu0 0.0
    %4838 = vmatpush2.msra.mxu0 0.0
    %4839 = vmatprep.subr.mxu0 0.0
    %4840 = vmatpush2.msra.mxu0 0.0
    %4841 = vmatprep.subr.mxu0 0.0
    %4842 = vmatpush2.msra.mxu0 0.0
    %4843 = vmatprep.subr.mxu0 0.0
    %4844 = vmatpush2.msra.mxu0 0.0
    %4845 = vmatprep.subr.mxu0 0.0
    %4846 = vmatpush2.msra.mxu0 0.0
    %4847 = vmatprep.subr.mxu0 0.0
    %4848 = vmatpush2.msra.mxu0 0.0
    %4849 = vmatprep.mubr.f32.mxu0 0.0
    %v4850 = vand.u32 %v4548, 4294901760
    %v4851 = vsub.f32 %v4548, %v4850
    %4852 = vmatmul.mubr.f32.gmra.mxu0 %v4851
    %v4853 = vpop.f32.mrf.mxu0
    %v4854 = vadd.f32 %v4756, %v4853
    %v4855 = vpop.f32.mrf.mxu0
    %4856 = vmatprep.mubr.f32.mxu0 0.0
    %v4857 = vand.u32 %v4551, 4294901760
    %v4858 = vsub.f32 %v4551, %v4857
    %4859 = vmatmul.mubr.f32.gmra.mxu0 %v4858
    %v4860 = vpop.f32.mrf.mxu0
    %v4861 = vadd.f32 %v4762, %v4860
    %v4862 = vpop.f32.mrf.mxu0
    %4863 = vmatprep.mubr.f32.mxu0 0.0
    %v4864 = vand.u32 %v4554, 4294901760
    %v4865 = vsub.f32 %v4554, %v4864
    %4866 = vmatmul.mubr.f32.gmra.mxu0 %v4865
    %v4867 = vpop.f32.mrf.mxu0
    %v4868 = vadd.f32 %v4768, %v4867
    %v4869 = vpop.f32.mrf.mxu0
    %4870 = vmatprep.mubr.f32.mxu0 0.0
    %v4871 = vand.u32 %v4557, 4294901760
    %v4872 = vsub.f32 %v4557, %v4871
    %4873 = vmatmul.mubr.f32.gmra.mxu0 %v4872
    %v4874 = vpop.f32.mrf.mxu0
    %v4875 = vadd.f32 %v4774, %v4874
    %v4876 = vpop.f32.mrf.mxu0
    %4877 = vdwg.mxu0
    %4878 = vmatprep.subr.mxu0 0.0
    %4879 = vmatpush1.msra.mxu0 0.0
    %4880 = vmatprep.subr.mxu0 0.0
    %4881 = vmatpush1.msra.mxu0 0.0
    %4882 = vmatprep.subr.mxu0 0.0
    %4883 = vmatpush1.msra.mxu0 0.0
    %4884 = vmatprep.subr.mxu0 0.0
    %4885 = vmatpush1.msra.mxu0 0.0
    %4886 = vmatprep.subr.mxu0 0.0
    %4887 = vmatpush1.msra.mxu0 0.0
    %4888 = vmatprep.subr.mxu0 0.0
    %4889 = vmatpush1.msra.mxu0 0.0
    %4890 = vmatprep.subr.mxu0 0.0
    %4891 = vmatpush1.msra.mxu0 0.0
    %4892 = vmatprep.subr.mxu0 0.0
    %4893 = vmatpush1.msra.mxu0 0.0
    %4894 = vmatprep.subr.mxu0 0.0
    %4895 = vmatpush1.msra.mxu0 0.0
    %4896 = vmatprep.subr.mxu0 0.0
    %4897 = vmatpush1.msra.mxu0 0.0
    %4898 = vmatprep.subr.mxu0 0.0
    %4899 = vmatpush1.msra.mxu0 0.0
    %4900 = vmatprep.subr.mxu0 0.0
    %4901 = vmatpush1.msra.mxu0 0.0
    %4902 = vmatprep.subr.mxu0 0.0
    %v4903 = vand.u32 %v4546, 4294901760
    %4904 = vmatpush1.msra.mxu0 %v4903
    %4905 = vmatprep.subr.mxu0 0.0
    %v4906 = vand.u32 %v4545, 4294901760
    %4907 = vmatpush1.msra.mxu0 %v4906
    %4908 = vmatprep.subr.mxu0 0.0
    %v4909 = vand.u32 %v4544, 4294901760
    %4910 = vmatpush1.msra.mxu0 %v4909
    %4911 = vmatprep.subr.mxu0 0.0
    %v4912 = vand.u32 %v4543, 4294901760
    %4913 = vmatpush1.msra.mxu0 %v4912
    %4914 = vmatprep.subr.mxu0 0.0
    %4915 = vmatpush2.msra.mxu0 0.0
    %4916 = vmatprep.subr.mxu0 0.0
    %4917 = vmatpush2.msra.mxu0 0.0
    %4918 = vmatprep.subr.mxu0 0.0
    %4919 = vmatpush2.msra.mxu0 0.0
    %4920 = vmatprep.subr.mxu0 0.0
    %4921 = vmatpush2.msra.mxu0 0.0
    %4922 = vmatprep.subr.mxu0 0.0
    %4923 = vmatpush2.msra.mxu0 0.0
    %4924 = vmatprep.subr.mxu0 0.0
    %4925 = vmatpush2.msra.mxu0 0.0
    %4926 = vmatprep.subr.mxu0 0.0
    %4927 = vmatpush2.msra.mxu0 0.0
    %4928 = vmatprep.subr.mxu0 0.0
    %4929 = vmatpush2.msra.mxu0 0.0
    %4930 = vmatprep.subr.mxu0 0.0
    %4931 = vmatpush2.msra.mxu0 0.0
    %4932 = vmatprep.subr.mxu0 0.0
    %4933 = vmatpush2.msra.mxu0 0.0
    %4934 = vmatprep.subr.mxu0 0.0
    %4935 = vmatpush2.msra.mxu0 0.0
    %4936 = vmatprep.subr.mxu0 0.0
    %4937 = vmatpush2.msra.mxu0 0.0
    %4938 = vmatprep.subr.mxu0 0.0
    %4939 = vmatpush2.msra.mxu0 0.0
    %4940 = vmatprep.subr.mxu0 0.0
    %4941 = vmatpush2.msra.mxu0 0.0
    %4942 = vmatprep.subr.mxu0 0.0
    %4943 = vmatpush2.msra.mxu0 0.0
    %4944 = vmatprep.subr.mxu0 0.0
    %4945 = vmatpush2.msra.mxu0 0.0
    %4946 = vmatprep.mubr.f32.mxu0 0.0
    %v4947 = vand.u32 %v4548, 4294901760
    %v4948 = vsub.f32 %v4548, %v4947
    %v4949 = vand.u32 %v4948, 4294901760
    %4950 = vmatmul.mubr.f32.gmra.mxu0 %v4949
    %v4951 = vpop.f32.mrf.mxu0
    %v4952 = vadd.f32 %v4854, %v4951
    %v4953 = vpop.f32.mrf.mxu0
    %4954 = vmatprep.mubr.f32.mxu0 0.0
    %v4955 = vand.u32 %v4551, 4294901760
    %v4956 = vsub.f32 %v4551, %v4955
    %v4957 = vand.u32 %v4956, 4294901760
    %4958 = vmatmul.mubr.f32.gmra.mxu0 %v4957
    %v4959 = vpop.f32.mrf.mxu0
    %v4960 = vadd.f32 %v4861, %v4959
    %v4961 = vpop.f32.mrf.mxu0
    %4962 = vmatprep.mubr.f32.mxu0 0.0
    %v4963 = vand.u32 %v4554, 4294901760
    %v4964 = vsub.f32 %v4554, %v4963
    %v4965 = vand.u32 %v4964, 4294901760
    %4966 = vmatmul.mubr.f32.gmra.mxu0 %v4965
    %v4967 = vpop.f32.mrf.mxu0
    %v4968 = vadd.f32 %v4868, %v4967
    %v4969 = vpop.f32.mrf.mxu0
    %4970 = vmatprep.mubr.f32.mxu0 0.0
    %v4971 = vand.u32 %v4557, 4294901760
    %v4972 = vsub.f32 %v4557, %v4971
    %v4973 = vand.u32 %v4972, 4294901760
    %4974 = vmatmul.mubr.f32.gmra.mxu0 %v4973
    %v4975 = vpop.f32.mrf.mxu0
    %v4976 = vadd.f32 %v4875, %v4975
    %v4977 = vpop.f32.mrf.mxu0
    %4978 = vdwg.mxu0
    %4979 = vmatprep.subr.mxu0 0.0
    %4980 = vmatpush1.msra.mxu0 0.0
    %4981 = vmatprep.subr.mxu0 0.0
    %4982 = vmatpush1.msra.mxu0 0.0
    %4983 = vmatprep.subr.mxu0 0.0
    %4984 = vmatpush1.msra.mxu0 0.0
    %4985 = vmatprep.subr.mxu0 0.0
    %4986 = vmatpush1.msra.mxu0 0.0
    %4987 = vmatprep.subr.mxu0 0.0
    %4988 = vmatpush1.msra.mxu0 0.0
    %4989 = vmatprep.subr.mxu0 0.0
    %4990 = vmatpush1.msra.mxu0 0.0
    %4991 = vmatprep.subr.mxu0 0.0
    %4992 = vmatpush1.msra.mxu0 0.0
    %4993 = vmatprep.subr.mxu0 0.0
    %4994 = vmatpush1.msra.mxu0 0.0
    %4995 = vmatprep.subr.mxu0 0.0
    %4996 = vmatpush1.msra.mxu0 0.0
    %4997 = vmatprep.subr.mxu0 0.0
    %4998 = vmatpush1.msra.mxu0 0.0
    %4999 = vmatprep.subr.mxu0 0.0
    %5000 = vmatpush1.msra.mxu0 0.0
    %5001 = vmatprep.subr.mxu0 0.0
    %5002 = vmatpush1.msra.mxu0 0.0
    %5003 = vmatprep.subr.mxu0 0.0
    %v5004 = vand.u32 %v4546, 4294901760
    %v5005 = vsub.f32 %v4546, %v5004
    %v5006 = vand.u32 %v5005, 4294901760
    %5007 = vmatpush1.msra.mxu0 %v5006
    %5008 = vmatprep.subr.mxu0 0.0
    %v5009 = vand.u32 %v4545, 4294901760
    %v5010 = vsub.f32 %v4545, %v5009
    %v5011 = vand.u32 %v5010, 4294901760
    %5012 = vmatpush1.msra.mxu0 %v5011
    %5013 = vmatprep.subr.mxu0 0.0
    %v5014 = vand.u32 %v4544, 4294901760
    %v5015 = vsub.f32 %v4544, %v5014
    %v5016 = vand.u32 %v5015, 4294901760
    %5017 = vmatpush1.msra.mxu0 %v5016
    %5018 = vmatprep.subr.mxu0 0.0
    %v5019 = vand.u32 %v4543, 4294901760
    %v5020 = vsub.f32 %v4543, %v5019
    %v5021 = vand.u32 %v5020, 4294901760
    %5022 = vmatpush1.msra.mxu0 %v5021
    %5023 = vmatprep.subr.mxu0 0.0
    %5024 = vmatpush2.msra.mxu0 0.0
    %5025 = vmatprep.subr.mxu0 0.0
    %5026 = vmatpush2.msra.mxu0 0.0
    %5027 = vmatprep.subr.mxu0 0.0
    %5028 = vmatpush2.msra.mxu0 0.0
    %5029 = vmatprep.subr.mxu0 0.0
    %5030 = vmatpush2.msra.mxu0 0.0
    %5031 = vmatprep.subr.mxu0 0.0
    %5032 = vmatpush2.msra.mxu0 0.0
    %5033 = vmatprep.subr.mxu0 0.0
    %5034 = vmatpush2.msra.mxu0 0.0
    %5035 = vmatprep.subr.mxu0 0.0
    %5036 = vmatpush2.msra.mxu0 0.0
    %5037 = vmatprep.subr.mxu0 0.0
    %5038 = vmatpush2.msra.mxu0 0.0
    %5039 = vmatprep.subr.mxu0 0.0
    %5040 = vmatpush2.msra.mxu0 0.0
    %5041 = vmatprep.subr.mxu0 0.0
    %5042 = vmatpush2.msra.mxu0 0.0
    %5043 = vmatprep.subr.mxu0 0.0
    %5044 = vmatpush2.msra.mxu0 0.0
    %5045 = vmatprep.subr.mxu0 0.0
    %5046 = vmatpush2.msra.mxu0 0.0
    %5047 = vmatprep.subr.mxu0 0.0
    %5048 = vmatpush2.msra.mxu0 0.0
    %5049 = vmatprep.subr.mxu0 0.0
    %5050 = vmatpush2.msra.mxu0 0.0
    %5051 = vmatprep.subr.mxu0 0.0
    %5052 = vmatpush2.msra.mxu0 0.0
    %5053 = vmatprep.subr.mxu0 0.0
    %5054 = vmatpush2.msra.mxu0 0.0
    %5055 = vmatprep.mubr.f32.mxu0 0.0
    %v5056 = vand.u32 %v4548, 4294901760
    %5057 = vmatmul.mubr.f32.gmra.mxu0 %v5056
    %v5058 = vpop.f32.mrf.mxu0
    %v5059 = vadd.f32 %v4952, %v5058
    %v5060 = vpop.f32.mrf.mxu0
    %5061 = vmatprep.mubr.f32.mxu0 0.0
    %v5062 = vand.u32 %v4551, 4294901760
    %5063 = vmatmul.mubr.f32.gmra.mxu0 %v5062
    %v5064 = vpop.f32.mrf.mxu0
    %v5065 = vadd.f32 %v4960, %v5064
    %v5066 = vpop.f32.mrf.mxu0
    %5067 = vmatprep.mubr.f32.mxu0 0.0
    %v5068 = vand.u32 %v4554, 4294901760
    %5069 = vmatmul.mubr.f32.gmra.mxu0 %v5068
    %v5070 = vpop.f32.mrf.mxu0
    %v5071 = vadd.f32 %v4968, %v5070
    %v5072 = vpop.f32.mrf.mxu0
    %5073 = vmatprep.mubr.f32.mxu0 0.0
    %v5074 = vand.u32 %v4557, 4294901760
    %5075 = vmatmul.mubr.f32.gmra.mxu0 %v5074
    %v5076 = vpop.f32.mrf.mxu0
    %v5077 = vadd.f32 %v4976, %v5076
    %v5078 = vpop.f32.mrf.mxu0
    %5079 = vdwg.mxu0
    %5080 = vmatprep.subr.mxu0 0.0
    %5081 = vmatpush1.msra.mxu0 0.0
    %5082 = vmatprep.subr.mxu0 0.0
    %5083 = vmatpush1.msra.mxu0 0.0
    %5084 = vmatprep.subr.mxu0 0.0
    %5085 = vmatpush1.msra.mxu0 0.0
    %5086 = vmatprep.subr.mxu0 0.0
    %5087 = vmatpush1.msra.mxu0 0.0
    %5088 = vmatprep.subr.mxu0 0.0
    %5089 = vmatpush1.msra.mxu0 0.0
    %5090 = vmatprep.subr.mxu0 0.0
    %5091 = vmatpush1.msra.mxu0 0.0
    %5092 = vmatprep.subr.mxu0 0.0
    %5093 = vmatpush1.msra.mxu0 0.0
    %5094 = vmatprep.subr.mxu0 0.0
    %5095 = vmatpush1.msra.mxu0 0.0
    %5096 = vmatprep.subr.mxu0 0.0
    %5097 = vmatpush1.msra.mxu0 0.0
    %5098 = vmatprep.subr.mxu0 0.0
    %5099 = vmatpush1.msra.mxu0 0.0
    %5100 = vmatprep.subr.mxu0 0.0
    %5101 = vmatpush1.msra.mxu0 0.0
    %5102 = vmatprep.subr.mxu0 0.0
    %5103 = vmatpush1.msra.mxu0 0.0
    %5104 = vmatprep.subr.mxu0 0.0
    %v5105 = vand.u32 %v4546, 4294901760
    %5106 = vmatpush1.msra.mxu0 %v5105
    %5107 = vmatprep.subr.mxu0 0.0
    %v5108 = vand.u32 %v4545, 4294901760
    %5109 = vmatpush1.msra.mxu0 %v5108
    %5110 = vmatprep.subr.mxu0 0.0
    %v5111 = vand.u32 %v4544, 4294901760
    %5112 = vmatpush1.msra.mxu0 %v5111
    %5113 = vmatprep.subr.mxu0 0.0
    %v5114 = vand.u32 %v4543, 4294901760
    %5115 = vmatpush1.msra.mxu0 %v5114
    %5116 = vmatprep.subr.mxu0 0.0
    %5117 = vmatpush2.msra.mxu0 0.0
    %5118 = vmatprep.subr.mxu0 0.0
    %5119 = vmatpush2.msra.mxu0 0.0
    %5120 = vmatprep.subr.mxu0 0.0
    %5121 = vmatpush2.msra.mxu0 0.0
    %5122 = vmatprep.subr.mxu0 0.0
    %5123 = vmatpush2.msra.mxu0 0.0
    %5124 = vmatprep.subr.mxu0 0.0
    %5125 = vmatpush2.msra.mxu0 0.0
    %5126 = vmatprep.subr.mxu0 0.0
    %5127 = vmatpush2.msra.mxu0 0.0
    %5128 = vmatprep.subr.mxu0 0.0
    %5129 = vmatpush2.msra.mxu0 0.0
    %5130 = vmatprep.subr.mxu0 0.0
    %5131 = vmatpush2.msra.mxu0 0.0
    %5132 = vmatprep.subr.mxu0 0.0
    %5133 = vmatpush2.msra.mxu0 0.0
    %5134 = vmatprep.subr.mxu0 0.0
    %5135 = vmatpush2.msra.mxu0 0.0
    %5136 = vmatprep.subr.mxu0 0.0
    %5137 = vmatpush2.msra.mxu0 0.0
    %5138 = vmatprep.subr.mxu0 0.0
    %5139 = vmatpush2.msra.mxu0 0.0
    %5140 = vmatprep.subr.mxu0 0.0
    %5141 = vmatpush2.msra.mxu0 0.0
    %5142 = vmatprep.subr.mxu0 0.0
    %5143 = vmatpush2.msra.mxu0 0.0
    %5144 = vmatprep.subr.mxu0 0.0
    %5145 = vmatpush2.msra.mxu0 0.0
    %5146 = vmatprep.subr.mxu0 0.0
    %5147 = vmatpush2.msra.mxu0 0.0
    %5148 = vmatprep.mubr.f32.mxu0 0.0
    %v5149 = vand.u32 %v4548, 4294901760
    %5150 = vmatmul.mubr.f32.gmra.mxu0 %v5149
    %v5151 = vpop.f32.mrf.mxu0
    %v5152 = vadd.f32 %v5059, %v5151
    %v5153 = vpop.f32.mrf.mxu0
    %5154 = vmatprep.mubr.f32.mxu0 0.0
    %v5155 = vand.u32 %v4551, 4294901760
    %5156 = vmatmul.mubr.f32.gmra.mxu0 %v5155
    %v5157 = vpop.f32.mrf.mxu0
    %v5158 = vadd.f32 %v5065, %v5157
    %v5159 = vpop.f32.mrf.mxu0
    %5160 = vmatprep.mubr.f32.mxu0 0.0
    %v5161 = vand.u32 %v4554, 4294901760
    %5162 = vmatmul.mubr.f32.gmra.mxu0 %v5161
    %v5163 = vpop.f32.mrf.mxu0
    %v5164 = vadd.f32 %v5071, %v5163
    %v5165 = vpop.f32.mrf.mxu0
    %5166 = vmatprep.mubr.f32.mxu0 0.0
    %v5167 = vand.u32 %v4557, 4294901760
    %5168 = vmatmul.mubr.f32.gmra.mxu0 %v5167
    %v5169 = vpop.f32.mrf.mxu0
    %v5170 = vadd.f32 %v5077, %v5169
    %v5171 = vpop.f32.mrf.mxu0
    %5172 = vdwg.mxu0
    %v5173 = vadd.f32 %v4534, %v5152
    %v5174 = vadd.f32 %v4535, %v5158
    %v5175 = vadd.f32 %v4536, %v5164
    %v5176 = vadd.f32 %v4537, %v5170
    %v5177 = vld [vmem:[#allocation2 + $0xc] sm:$0xff]
    %v5178 = vld [vmem:[#allocation2 + $0x14] sm:$0xff]
    %v5179 = vld [vmem:[#allocation2 + $0x2c] sm:$0xff]
    %v5180 = vld [vmem:[#allocation2 + $0x34] sm:$0xff]
    %s5181 = scalar_lea.vmem [#allocation8], 256
    %v5182 = vld [vmem:[%s5181] sm:$0xff]
    %v5183 = vld [vmem:[%s5181 + $0x8] sm:$0xff]
    %v5184 = vld [vmem:[%s5181 + $0x10] sm:$0xff]
    %v5185 = vld [vmem:[%s5181 + $0x18] sm:$0xff]
    %v5187 = vsel %vm57, %v5177, 0
    %v5190 = vsel %vm57, %v5178, 0
    %v5193 = vsel %vm57, %v5179, 0
    %v5196 = vsel %vm57, %v5180, 0
    %5198 = vmatprep.subr.mxu0 0.0
    %5199 = vmatpush1.msra.mxu0 0.0
    %5200 = vmatprep.subr.mxu0 0.0
    %5201 = vmatpush1.msra.mxu0 0.0
    %5202 = vmatprep.subr.mxu0 0.0
    %5203 = vmatpush1.msra.mxu0 0.0
    %5204 = vmatprep.subr.mxu0 0.0
    %5205 = vmatpush1.msra.mxu0 0.0
    %5206 = vmatprep.subr.mxu0 0.0
    %5207 = vmatpush1.msra.mxu0 0.0
    %5208 = vmatprep.subr.mxu0 0.0
    %5209 = vmatpush1.msra.mxu0 0.0
    %5210 = vmatprep.subr.mxu0 0.0
    %5211 = vmatpush1.msra.mxu0 0.0
    %5212 = vmatprep.subr.mxu0 0.0
    %5213 = vmatpush1.msra.mxu0 0.0
    %5214 = vmatprep.subr.mxu0 0.0
    %5215 = vmatpush1.msra.mxu0 0.0
    %5216 = vmatprep.subr.mxu0 0.0
    %5217 = vmatpush1.msra.mxu0 0.0
    %5218 = vmatprep.subr.mxu0 0.0
    %5219 = vmatpush1.msra.mxu0 0.0
    %5220 = vmatprep.subr.mxu0 0.0
    %5221 = vmatpush1.msra.mxu0 0.0
    %5222 = vmatprep.subr.mxu0 0.0
    %v5223 = vand.u32 %v5185, 4294901760
    %5224 = vmatpush1.msra.mxu0 %v5223
    %5225 = vmatprep.subr.mxu0 0.0
    %v5226 = vand.u32 %v5184, 4294901760
    %5227 = vmatpush1.msra.mxu0 %v5226
    %5228 = vmatprep.subr.mxu0 0.0
    %v5229 = vand.u32 %v5183, 4294901760
    %5230 = vmatpush1.msra.mxu0 %v5229
    %5231 = vmatprep.subr.mxu0 0.0
    %v5232 = vand.u32 %v5182, 4294901760
    %5233 = vmatpush1.msra.mxu0 %v5232
    %5234 = vmatprep.subr.mxu0 0.0
    %5235 = vmatpush2.msra.mxu0 0.0
    %5236 = vmatprep.subr.mxu0 0.0
    %5237 = vmatpush2.msra.mxu0 0.0
    %5238 = vmatprep.subr.mxu0 0.0
    %5239 = vmatpush2.msra.mxu0 0.0
    %5240 = vmatprep.subr.mxu0 0.0
    %5241 = vmatpush2.msra.mxu0 0.0
    %5242 = vmatprep.subr.mxu0 0.0
    %5243 = vmatpush2.msra.mxu0 0.0
    %5244 = vmatprep.subr.mxu0 0.0
    %5245 = vmatpush2.msra.mxu0 0.0
    %5246 = vmatprep.subr.mxu0 0.0
    %5247 = vmatpush2.msra.mxu0 0.0
    %5248 = vmatprep.subr.mxu0 0.0
    %5249 = vmatpush2.msra.mxu0 0.0
    %5250 = vmatprep.subr.mxu0 0.0
    %5251 = vmatpush2.msra.mxu0 0.0
    %5252 = vmatprep.subr.mxu0 0.0
    %5253 = vmatpush2.msra.mxu0 0.0
    %5254 = vmatprep.subr.mxu0 0.0
    %5255 = vmatpush2.msra.mxu0 0.0
    %5256 = vmatprep.subr.mxu0 0.0
    %5257 = vmatpush2.msra.mxu0 0.0
    %5258 = vmatprep.subr.mxu0 0.0
    %5259 = vmatpush2.msra.mxu0 0.0
    %5260 = vmatprep.subr.mxu0 0.0
    %5261 = vmatpush2.msra.mxu0 0.0
    %5262 = vmatprep.subr.mxu0 0.0
    %5263 = vmatpush2.msra.mxu0 0.0
    %5264 = vmatprep.subr.mxu0 0.0
    %5265 = vmatpush2.msra.mxu0 0.0
    %5266 = vmatprep.mubr.f32.mxu0 0.0
    %v5267 = vand.u32 %v5187, 4294901760
    %v5268 = vsub.f32 %v5187, %v5267
    %v5269 = vand.u32 %v5268, 4294901760
    %v5270 = vsub.f32 %v5268, %v5269
    %v5271 = vand.u32 %v5270, 4294901760
    %5272 = vmatmul.mubr.f32.gmra.mxu0 %v5271
    %v5273 = vpop.f32.mrf.mxu0
    %v5274 = vadd.f32 0.0, %v5273
    %v5275 = vpop.f32.mrf.mxu0
    %5276 = vmatprep.mubr.f32.mxu0 0.0
    %v5277 = vand.u32 %v5190, 4294901760
    %v5278 = vsub.f32 %v5190, %v5277
    %v5279 = vand.u32 %v5278, 4294901760
    %v5280 = vsub.f32 %v5278, %v5279
    %v5281 = vand.u32 %v5280, 4294901760
    %5282 = vmatmul.mubr.f32.gmra.mxu0 %v5281
    %v5283 = vpop.f32.mrf.mxu0
    %v5284 = vadd.f32 0.0, %v5283
    %v5285 = vpop.f32.mrf.mxu0
    %5286 = vmatprep.mubr.f32.mxu0 0.0
    %v5287 = vand.u32 %v5193, 4294901760
    %v5288 = vsub.f32 %v5193, %v5287
    %v5289 = vand.u32 %v5288, 4294901760
    %v5290 = vsub.f32 %v5288, %v5289
    %v5291 = vand.u32 %v5290, 4294901760
    %5292 = vmatmul.mubr.f32.gmra.mxu0 %v5291
    %v5293 = vpop.f32.mrf.mxu0
    %v5294 = vadd.f32 0.0, %v5293
    %v5295 = vpop.f32.mrf.mxu0
    %5296 = vmatprep.mubr.f32.mxu0 0.0
    %v5297 = vand.u32 %v5196, 4294901760
    %v5298 = vsub.f32 %v5196, %v5297
    %v5299 = vand.u32 %v5298, 4294901760
    %v5300 = vsub.f32 %v5298, %v5299
    %v5301 = vand.u32 %v5300, 4294901760
    %5302 = vmatmul.mubr.f32.gmra.mxu0 %v5301
    %v5303 = vpop.f32.mrf.mxu0
    %v5304 = vadd.f32 0.0, %v5303
    %v5305 = vpop.f32.mrf.mxu0
    %5306 = vdwg.mxu0
    %5307 = vmatprep.subr.mxu0 0.0
    %5308 = vmatpush1.msra.mxu0 0.0
    %5309 = vmatprep.subr.mxu0 0.0
    %5310 = vmatpush1.msra.mxu0 0.0
    %5311 = vmatprep.subr.mxu0 0.0
    %5312 = vmatpush1.msra.mxu0 0.0
    %5313 = vmatprep.subr.mxu0 0.0
    %5314 = vmatpush1.msra.mxu0 0.0
    %5315 = vmatprep.subr.mxu0 0.0
    %5316 = vmatpush1.msra.mxu0 0.0
    %5317 = vmatprep.subr.mxu0 0.0
    %5318 = vmatpush1.msra.mxu0 0.0
    %5319 = vmatprep.subr.mxu0 0.0
    %5320 = vmatpush1.msra.mxu0 0.0
    %5321 = vmatprep.subr.mxu0 0.0
    %5322 = vmatpush1.msra.mxu0 0.0
    %5323 = vmatprep.subr.mxu0 0.0
    %5324 = vmatpush1.msra.mxu0 0.0
    %5325 = vmatprep.subr.mxu0 0.0
    %5326 = vmatpush1.msra.mxu0 0.0
    %5327 = vmatprep.subr.mxu0 0.0
    %5328 = vmatpush1.msra.mxu0 0.0
    %5329 = vmatprep.subr.mxu0 0.0
    %5330 = vmatpush1.msra.mxu0 0.0
    %5331 = vmatprep.subr.mxu0 0.0
    %v5332 = vand.u32 %v5185, 4294901760
    %v5333 = vsub.f32 %v5185, %v5332
    %v5334 = vand.u32 %v5333, 4294901760
    %v5335 = vsub.f32 %v5333, %v5334
    %v5336 = vand.u32 %v5335, 4294901760
    %5337 = vmatpush1.msra.mxu0 %v5336
    %5338 = vmatprep.subr.mxu0 0.0
    %v5339 = vand.u32 %v5184, 4294901760
    %v5340 = vsub.f32 %v5184, %v5339
    %v5341 = vand.u32 %v5340, 4294901760
    %v5342 = vsub.f32 %v5340, %v5341
    %v5343 = vand.u32 %v5342, 4294901760
    %5344 = vmatpush1.msra.mxu0 %v5343
    %5345 = vmatprep.subr.mxu0 0.0
    %v5346 = vand.u32 %v5183, 4294901760
    %v5347 = vsub.f32 %v5183, %v5346
    %v5348 = vand.u32 %v5347, 4294901760
    %v5349 = vsub.f32 %v5347, %v5348
    %v5350 = vand.u32 %v5349, 4294901760
    %5351 = vmatpush1.msra.mxu0 %v5350
    %5352 = vmatprep.subr.mxu0 0.0
    %v5353 = vand.u32 %v5182, 4294901760
    %v5354 = vsub.f32 %v5182, %v5353
    %v5355 = vand.u32 %v5354, 4294901760
    %v5356 = vsub.f32 %v5354, %v5355
    %v5357 = vand.u32 %v5356, 4294901760
    %5358 = vmatpush1.msra.mxu0 %v5357
    %5359 = vmatprep.subr.mxu0 0.0
    %5360 = vmatpush2.msra.mxu0 0.0
    %5361 = vmatprep.subr.mxu0 0.0
    %5362 = vmatpush2.msra.mxu0 0.0
    %5363 = vmatprep.subr.mxu0 0.0
    %5364 = vmatpush2.msra.mxu0 0.0
    %5365 = vmatprep.subr.mxu0 0.0
    %5366 = vmatpush2.msra.mxu0 0.0
    %5367 = vmatprep.subr.mxu0 0.0
    %5368 = vmatpush2.msra.mxu0 0.0
    %5369 = vmatprep.subr.mxu0 0.0
    %5370 = vmatpush2.msra.mxu0 0.0
    %5371 = vmatprep.subr.mxu0 0.0
    %5372 = vmatpush2.msra.mxu0 0.0
    %5373 = vmatprep.subr.mxu0 0.0
    %5374 = vmatpush2.msra.mxu0 0.0
    %5375 = vmatprep.subr.mxu0 0.0
    %5376 = vmatpush2.msra.mxu0 0.0
    %5377 = vmatprep.subr.mxu0 0.0
    %5378 = vmatpush2.msra.mxu0 0.0
    %5379 = vmatprep.subr.mxu0 0.0
    %5380 = vmatpush2.msra.mxu0 0.0
    %5381 = vmatprep.subr.mxu0 0.0
    %5382 = vmatpush2.msra.mxu0 0.0
    %5383 = vmatprep.subr.mxu0 0.0
    %5384 = vmatpush2.msra.mxu0 0.0
    %5385 = vmatprep.subr.mxu0 0.0
    %5386 = vmatpush2.msra.mxu0 0.0
    %5387 = vmatprep.subr.mxu0 0.0
    %5388 = vmatpush2.msra.mxu0 0.0
    %5389 = vmatprep.subr.mxu0 0.0
    %5390 = vmatpush2.msra.mxu0 0.0
    %5391 = vmatprep.mubr.f32.mxu0 0.0
    %v5392 = vand.u32 %v5187, 4294901760
    %5393 = vmatmul.mubr.f32.gmra.mxu0 %v5392
    %v5394 = vpop.f32.mrf.mxu0
    %v5395 = vadd.f32 %v5274, %v5394
    %v5396 = vpop.f32.mrf.mxu0
    %5397 = vmatprep.mubr.f32.mxu0 0.0
    %v5398 = vand.u32 %v5190, 4294901760
    %5399 = vmatmul.mubr.f32.gmra.mxu0 %v5398
    %v5400 = vpop.f32.mrf.mxu0
    %v5401 = vadd.f32 %v5284, %v5400
    %v5402 = vpop.f32.mrf.mxu0
    %5403 = vmatprep.mubr.f32.mxu0 0.0
    %v5404 = vand.u32 %v5193, 4294901760
    %5405 = vmatmul.mubr.f32.gmra.mxu0 %v5404
    %v5406 = vpop.f32.mrf.mxu0
    %v5407 = vadd.f32 %v5294, %v5406
    %v5408 = vpop.f32.mrf.mxu0
    %5409 = vmatprep.mubr.f32.mxu0 0.0
    %v5410 = vand.u32 %v5196, 4294901760
    %5411 = vmatmul.mubr.f32.gmra.mxu0 %v5410
    %v5412 = vpop.f32.mrf.mxu0
    %v5413 = vadd.f32 %v5304, %v5412
    %v5414 = vpop.f32.mrf.mxu0
    %5415 = vdwg.mxu0
    %5416 = vmatprep.subr.mxu0 0.0
    %5417 = vmatpush1.msra.mxu0 0.0
    %5418 = vmatprep.subr.mxu0 0.0
    %5419 = vmatpush1.msra.mxu0 0.0
    %5420 = vmatprep.subr.mxu0 0.0
    %5421 = vmatpush1.msra.mxu0 0.0
    %5422 = vmatprep.subr.mxu0 0.0
    %5423 = vmatpush1.msra.mxu0 0.0
    %5424 = vmatprep.subr.mxu0 0.0
    %5425 = vmatpush1.msra.mxu0 0.0
    %5426 = vmatprep.subr.mxu0 0.0
    %5427 = vmatpush1.msra.mxu0 0.0
    %5428 = vmatprep.subr.mxu0 0.0
    %5429 = vmatpush1.msra.mxu0 0.0
    %5430 = vmatprep.subr.mxu0 0.0
    %5431 = vmatpush1.msra.mxu0 0.0
    %5432 = vmatprep.subr.mxu0 0.0
    %5433 = vmatpush1.msra.mxu0 0.0
    %5434 = vmatprep.subr.mxu0 0.0
    %5435 = vmatpush1.msra.mxu0 0.0
    %5436 = vmatprep.subr.mxu0 0.0
    %5437 = vmatpush1.msra.mxu0 0.0
    %5438 = vmatprep.subr.mxu0 0.0
    %5439 = vmatpush1.msra.mxu0 0.0
    %5440 = vmatprep.subr.mxu0 0.0
    %v5441 = vand.u32 %v5185, 4294901760
    %v5442 = vsub.f32 %v5185, %v5441
    %5443 = vmatpush1.msra.mxu0 %v5442
    %5444 = vmatprep.subr.mxu0 0.0
    %v5445 = vand.u32 %v5184, 4294901760
    %v5446 = vsub.f32 %v5184, %v5445
    %5447 = vmatpush1.msra.mxu0 %v5446
    %5448 = vmatprep.subr.mxu0 0.0
    %v5449 = vand.u32 %v5183, 4294901760
    %v5450 = vsub.f32 %v5183, %v5449
    %5451 = vmatpush1.msra.mxu0 %v5450
    %5452 = vmatprep.subr.mxu0 0.0
    %v5453 = vand.u32 %v5182, 4294901760
    %v5454 = vsub.f32 %v5182, %v5453
    %5455 = vmatpush1.msra.mxu0 %v5454
    %5456 = vmatprep.subr.mxu0 0.0
    %5457 = vmatpush2.msra.mxu0 0.0
    %5458 = vmatprep.subr.mxu0 0.0
    %5459 = vmatpush2.msra.mxu0 0.0
    %5460 = vmatprep.subr.mxu0 0.0
    %5461 = vmatpush2.msra.mxu0 0.0
    %5462 = vmatprep.subr.mxu0 0.0
    %5463 = vmatpush2.msra.mxu0 0.0
    %5464 = vmatprep.subr.mxu0 0.0
    %5465 = vmatpush2.msra.mxu0 0.0
    %5466 = vmatprep.subr.mxu0 0.0
    %5467 = vmatpush2.msra.mxu0 0.0
    %5468 = vmatprep.subr.mxu0 0.0
    %5469 = vmatpush2.msra.mxu0 0.0
    %5470 = vmatprep.subr.mxu0 0.0
    %5471 = vmatpush2.msra.mxu0 0.0
    %5472 = vmatprep.subr.mxu0 0.0
    %5473 = vmatpush2.msra.mxu0 0.0
    %5474 = vmatprep.subr.mxu0 0.0
    %5475 = vmatpush2.msra.mxu0 0.0
    %5476 = vmatprep.subr.mxu0 0.0
    %5477 = vmatpush2.msra.mxu0 0.0
    %5478 = vmatprep.subr.mxu0 0.0
    %5479 = vmatpush2.msra.mxu0 0.0
    %5480 = vmatprep.subr.mxu0 0.0
    %5481 = vmatpush2.msra.mxu0 0.0
    %5482 = vmatprep.subr.mxu0 0.0
    %5483 = vmatpush2.msra.mxu0 0.0
    %5484 = vmatprep.subr.mxu0 0.0
    %5485 = vmatpush2.msra.mxu0 0.0
    %5486 = vmatprep.subr.mxu0 0.0
    %5487 = vmatpush2.msra.mxu0 0.0
    %5488 = vmatprep.mubr.f32.mxu0 0.0
    %v5489 = vand.u32 %v5187, 4294901760
    %v5490 = vsub.f32 %v5187, %v5489
    %5491 = vmatmul.mubr.f32.gmra.mxu0 %v5490
    %v5492 = vpop.f32.mrf.mxu0
    %v5493 = vadd.f32 %v5395, %v5492
    %v5494 = vpop.f32.mrf.mxu0
    %5495 = vmatprep.mubr.f32.mxu0 0.0
    %v5496 = vand.u32 %v5190, 4294901760
    %v5497 = vsub.f32 %v5190, %v5496
    %5498 = vmatmul.mubr.f32.gmra.mxu0 %v5497
    %v5499 = vpop.f32.mrf.mxu0
    %v5500 = vadd.f32 %v5401, %v5499
    %v5501 = vpop.f32.mrf.mxu0
    %5502 = vmatprep.mubr.f32.mxu0 0.0
    %v5503 = vand.u32 %v5193, 4294901760
    %v5504 = vsub.f32 %v5193, %v5503
    %5505 = vmatmul.mubr.f32.gmra.mxu0 %v5504
    %v5506 = vpop.f32.mrf.mxu0
    %v5507 = vadd.f32 %v5407, %v5506
    %v5508 = vpop.f32.mrf.mxu0
    %5509 = vmatprep.mubr.f32.mxu0 0.0
    %v5510 = vand.u32 %v5196, 4294901760
    %v5511 = vsub.f32 %v5196, %v5510
    %5512 = vmatmul.mubr.f32.gmra.mxu0 %v5511
    %v5513 = vpop.f32.mrf.mxu0
    %v5514 = vadd.f32 %v5413, %v5513
    %v5515 = vpop.f32.mrf.mxu0
    %5516 = vdwg.mxu0
    %5517 = vmatprep.subr.mxu0 0.0
    %5518 = vmatpush1.msra.mxu0 0.0
    %5519 = vmatprep.subr.mxu0 0.0
    %5520 = vmatpush1.msra.mxu0 0.0
    %5521 = vmatprep.subr.mxu0 0.0
    %5522 = vmatpush1.msra.mxu0 0.0
    %5523 = vmatprep.subr.mxu0 0.0
    %5524 = vmatpush1.msra.mxu0 0.0
    %5525 = vmatprep.subr.mxu0 0.0
    %5526 = vmatpush1.msra.mxu0 0.0
    %5527 = vmatprep.subr.mxu0 0.0
    %5528 = vmatpush1.msra.mxu0 0.0
    %5529 = vmatprep.subr.mxu0 0.0
    %5530 = vmatpush1.msra.mxu0 0.0
    %5531 = vmatprep.subr.mxu0 0.0
    %5532 = vmatpush1.msra.mxu0 0.0
    %5533 = vmatprep.subr.mxu0 0.0
    %5534 = vmatpush1.msra.mxu0 0.0
    %5535 = vmatprep.subr.mxu0 0.0
    %5536 = vmatpush1.msra.mxu0 0.0
    %5537 = vmatprep.subr.mxu0 0.0
    %5538 = vmatpush1.msra.mxu0 0.0
    %5539 = vmatprep.subr.mxu0 0.0
    %5540 = vmatpush1.msra.mxu0 0.0
    %5541 = vmatprep.subr.mxu0 0.0
    %v5542 = vand.u32 %v5185, 4294901760
    %5543 = vmatpush1.msra.mxu0 %v5542
    %5544 = vmatprep.subr.mxu0 0.0
    %v5545 = vand.u32 %v5184, 4294901760
    %5546 = vmatpush1.msra.mxu0 %v5545
    %5547 = vmatprep.subr.mxu0 0.0
    %v5548 = vand.u32 %v5183, 4294901760
    %5549 = vmatpush1.msra.mxu0 %v5548
    %5550 = vmatprep.subr.mxu0 0.0
    %v5551 = vand.u32 %v5182, 4294901760
    %5552 = vmatpush1.msra.mxu0 %v5551
    %5553 = vmatprep.subr.mxu0 0.0
    %5554 = vmatpush2.msra.mxu0 0.0
    %5555 = vmatprep.subr.mxu0 0.0
    %5556 = vmatpush2.msra.mxu0 0.0
    %5557 = vmatprep.subr.mxu0 0.0
    %5558 = vmatpush2.msra.mxu0 0.0
    %5559 = vmatprep.subr.mxu0 0.0
    %5560 = vmatpush2.msra.mxu0 0.0
    %5561 = vmatprep.subr.mxu0 0.0
    %5562 = vmatpush2.msra.mxu0 0.0
    %5563 = vmatprep.subr.mxu0 0.0
    %5564 = vmatpush2.msra.mxu0 0.0
    %5565 = vmatprep.subr.mxu0 0.0
    %5566 = vmatpush2.msra.mxu0 0.0
    %5567 = vmatprep.subr.mxu0 0.0
    %5568 = vmatpush2.msra.mxu0 0.0
    %5569 = vmatprep.subr.mxu0 0.0
    %5570 = vmatpush2.msra.mxu0 0.0
    %5571 = vmatprep.subr.mxu0 0.0
    %5572 = vmatpush2.msra.mxu0 0.0
    %5573 = vmatprep.subr.mxu0 0.0
    %5574 = vmatpush2.msra.mxu0 0.0
    %5575 = vmatprep.subr.mxu0 0.0
    %5576 = vmatpush2.msra.mxu0 0.0
    %5577 = vmatprep.subr.mxu0 0.0
    %5578 = vmatpush2.msra.mxu0 0.0
    %5579 = vmatprep.subr.mxu0 0.0
    %5580 = vmatpush2.msra.mxu0 0.0
    %5581 = vmatprep.subr.mxu0 0.0
    %5582 = vmatpush2.msra.mxu0 0.0
    %5583 = vmatprep.subr.mxu0 0.0
    %5584 = vmatpush2.msra.mxu0 0.0
    %5585 = vmatprep.mubr.f32.mxu0 0.0
    %v5586 = vand.u32 %v5187, 4294901760
    %v5587 = vsub.f32 %v5187, %v5586
    %v5588 = vand.u32 %v5587, 4294901760
    %5589 = vmatmul.mubr.f32.gmra.mxu0 %v5588
    %v5590 = vpop.f32.mrf.mxu0
    %v5591 = vadd.f32 %v5493, %v5590
    %v5592 = vpop.f32.mrf.mxu0
    %5593 = vmatprep.mubr.f32.mxu0 0.0
    %v5594 = vand.u32 %v5190, 4294901760
    %v5595 = vsub.f32 %v5190, %v5594
    %v5596 = vand.u32 %v5595, 4294901760
    %5597 = vmatmul.mubr.f32.gmra.mxu0 %v5596
    %v5598 = vpop.f32.mrf.mxu0
    %v5599 = vadd.f32 %v5500, %v5598
    %v5600 = vpop.f32.mrf.mxu0
    %5601 = vmatprep.mubr.f32.mxu0 0.0
    %v5602 = vand.u32 %v5193, 4294901760
    %v5603 = vsub.f32 %v5193, %v5602
    %v5604 = vand.u32 %v5603, 4294901760
    %5605 = vmatmul.mubr.f32.gmra.mxu0 %v5604
    %v5606 = vpop.f32.mrf.mxu0
    %v5607 = vadd.f32 %v5507, %v5606
    %v5608 = vpop.f32.mrf.mxu0
    %5609 = vmatprep.mubr.f32.mxu0 0.0
    %v5610 = vand.u32 %v5196, 4294901760
    %v5611 = vsub.f32 %v5196, %v5610
    %v5612 = vand.u32 %v5611, 4294901760
    %5613 = vmatmul.mubr.f32.gmra.mxu0 %v5612
    %v5614 = vpop.f32.mrf.mxu0
    %v5615 = vadd.f32 %v5514, %v5614
    %v5616 = vpop.f32.mrf.mxu0
    %5617 = vdwg.mxu0
    %5618 = vmatprep.subr.mxu0 0.0
    %5619 = vmatpush1.msra.mxu0 0.0
    %5620 = vmatprep.subr.mxu0 0.0
    %5621 = vmatpush1.msra.mxu0 0.0
    %5622 = vmatprep.subr.mxu0 0.0
    %5623 = vmatpush1.msra.mxu0 0.0
    %5624 = vmatprep.subr.mxu0 0.0
    %5625 = vmatpush1.msra.mxu0 0.0
    %5626 = vmatprep.subr.mxu0 0.0
    %5627 = vmatpush1.msra.mxu0 0.0
    %5628 = vmatprep.subr.mxu0 0.0
    %5629 = vmatpush1.msra.mxu0 0.0
    %5630 = vmatprep.subr.mxu0 0.0
    %5631 = vmatpush1.msra.mxu0 0.0
    %5632 = vmatprep.subr.mxu0 0.0
    %5633 = vmatpush1.msra.mxu0 0.0
    %5634 = vmatprep.subr.mxu0 0.0
    %5635 = vmatpush1.msra.mxu0 0.0
    %5636 = vmatprep.subr.mxu0 0.0
    %5637 = vmatpush1.msra.mxu0 0.0
    %5638 = vmatprep.subr.mxu0 0.0
    %5639 = vmatpush1.msra.mxu0 0.0
    %5640 = vmatprep.subr.mxu0 0.0
    %5641 = vmatpush1.msra.mxu0 0.0
    %5642 = vmatprep.subr.mxu0 0.0
    %v5643 = vand.u32 %v5185, 4294901760
    %v5644 = vsub.f32 %v5185, %v5643
    %v5645 = vand.u32 %v5644, 4294901760
    %5646 = vmatpush1.msra.mxu0 %v5645
    %5647 = vmatprep.subr.mxu0 0.0
    %v5648 = vand.u32 %v5184, 4294901760
    %v5649 = vsub.f32 %v5184, %v5648
    %v5650 = vand.u32 %v5649, 4294901760
    %5651 = vmatpush1.msra.mxu0 %v5650
    %5652 = vmatprep.subr.mxu0 0.0
    %v5653 = vand.u32 %v5183, 4294901760
    %v5654 = vsub.f32 %v5183, %v5653
    %v5655 = vand.u32 %v5654, 4294901760
    %5656 = vmatpush1.msra.mxu0 %v5655
    %5657 = vmatprep.subr.mxu0 0.0
    %v5658 = vand.u32 %v5182, 4294901760
    %v5659 = vsub.f32 %v5182, %v5658
    %v5660 = vand.u32 %v5659, 4294901760
    %5661 = vmatpush1.msra.mxu0 %v5660
    %5662 = vmatprep.subr.mxu0 0.0
    %5663 = vmatpush2.msra.mxu0 0.0
    %5664 = vmatprep.subr.mxu0 0.0
    %5665 = vmatpush2.msra.mxu0 0.0
    %5666 = vmatprep.subr.mxu0 0.0
    %5667 = vmatpush2.msra.mxu0 0.0
    %5668 = vmatprep.subr.mxu0 0.0
    %5669 = vmatpush2.msra.mxu0 0.0
    %5670 = vmatprep.subr.mxu0 0.0
    %5671 = vmatpush2.msra.mxu0 0.0
    %5672 = vmatprep.subr.mxu0 0.0
    %5673 = vmatpush2.msra.mxu0 0.0
    %5674 = vmatprep.subr.mxu0 0.0
    %5675 = vmatpush2.msra.mxu0 0.0
    %5676 = vmatprep.subr.mxu0 0.0
    %5677 = vmatpush2.msra.mxu0 0.0
    %5678 = vmatprep.subr.mxu0 0.0
    %5679 = vmatpush2.msra.mxu0 0.0
    %5680 = vmatprep.subr.mxu0 0.0
    %5681 = vmatpush2.msra.mxu0 0.0
    %5682 = vmatprep.subr.mxu0 0.0
    %5683 = vmatpush2.msra.mxu0 0.0
    %5684 = vmatprep.subr.mxu0 0.0
    %5685 = vmatpush2.msra.mxu0 0.0
    %5686 = vmatprep.subr.mxu0 0.0
    %5687 = vmatpush2.msra.mxu0 0.0
    %5688 = vmatprep.subr.mxu0 0.0
    %5689 = vmatpush2.msra.mxu0 0.0
    %5690 = vmatprep.subr.mxu0 0.0
    %5691 = vmatpush2.msra.mxu0 0.0
    %5692 = vmatprep.subr.mxu0 0.0
    %5693 = vmatpush2.msra.mxu0 0.0
    %5694 = vmatprep.mubr.f32.mxu0 0.0
    %v5695 = vand.u32 %v5187, 4294901760
    %5696 = vmatmul.mubr.f32.gmra.mxu0 %v5695
    %v5697 = vpop.f32.mrf.mxu0
    %v5698 = vadd.f32 %v5591, %v5697
    %v5699 = vpop.f32.mrf.mxu0
    %5700 = vmatprep.mubr.f32.mxu0 0.0
    %v5701 = vand.u32 %v5190, 4294901760
    %5702 = vmatmul.mubr.f32.gmra.mxu0 %v5701
    %v5703 = vpop.f32.mrf.mxu0
    %v5704 = vadd.f32 %v5599, %v5703
    %v5705 = vpop.f32.mrf.mxu0
    %5706 = vmatprep.mubr.f32.mxu0 0.0
    %v5707 = vand.u32 %v5193, 4294901760
    %5708 = vmatmul.mubr.f32.gmra.mxu0 %v5707
    %v5709 = vpop.f32.mrf.mxu0
    %v5710 = vadd.f32 %v5607, %v5709
    %v5711 = vpop.f32.mrf.mxu0
    %5712 = vmatprep.mubr.f32.mxu0 0.0
    %v5713 = vand.u32 %v5196, 4294901760
    %5714 = vmatmul.mubr.f32.gmra.mxu0 %v5713
    %v5715 = vpop.f32.mrf.mxu0
    %v5716 = vadd.f32 %v5615, %v5715
    %v5717 = vpop.f32.mrf.mxu0
    %5718 = vdwg.mxu0
    %5719 = vmatprep.subr.mxu0 0.0
    %5720 = vmatpush1.msra.mxu0 0.0
    %5721 = vmatprep.subr.mxu0 0.0
    %5722 = vmatpush1.msra.mxu0 0.0
    %5723 = vmatprep.subr.mxu0 0.0
    %5724 = vmatpush1.msra.mxu0 0.0
    %5725 = vmatprep.subr.mxu0 0.0
    %5726 = vmatpush1.msra.mxu0 0.0
    %5727 = vmatprep.subr.mxu0 0.0
    %5728 = vmatpush1.msra.mxu0 0.0
    %5729 = vmatprep.subr.mxu0 0.0
    %5730 = vmatpush1.msra.mxu0 0.0
    %5731 = vmatprep.subr.mxu0 0.0
    %5732 = vmatpush1.msra.mxu0 0.0
    %5733 = vmatprep.subr.mxu0 0.0
    %5734 = vmatpush1.msra.mxu0 0.0
    %5735 = vmatprep.subr.mxu0 0.0
    %5736 = vmatpush1.msra.mxu0 0.0
    %5737 = vmatprep.subr.mxu0 0.0
    %5738 = vmatpush1.msra.mxu0 0.0
    %5739 = vmatprep.subr.mxu0 0.0
    %5740 = vmatpush1.msra.mxu0 0.0
    %5741 = vmatprep.subr.mxu0 0.0
    %5742 = vmatpush1.msra.mxu0 0.0
    %5743 = vmatprep.subr.mxu0 0.0
    %v5744 = vand.u32 %v5185, 4294901760
    %5745 = vmatpush1.msra.mxu0 %v5744
    %5746 = vmatprep.subr.mxu0 0.0
    %v5747 = vand.u32 %v5184, 4294901760
    %5748 = vmatpush1.msra.mxu0 %v5747
    %5749 = vmatprep.subr.mxu0 0.0
    %v5750 = vand.u32 %v5183, 4294901760
    %5751 = vmatpush1.msra.mxu0 %v5750
    %5752 = vmatprep.subr.mxu0 0.0
    %v5753 = vand.u32 %v5182, 4294901760
    %5754 = vmatpush1.msra.mxu0 %v5753
    %5755 = vmatprep.subr.mxu0 0.0
    %5756 = vmatpush2.msra.mxu0 0.0
    %5757 = vmatprep.subr.mxu0 0.0
    %5758 = vmatpush2.msra.mxu0 0.0
    %5759 = vmatprep.subr.mxu0 0.0
    %5760 = vmatpush2.msra.mxu0 0.0
    %5761 = vmatprep.subr.mxu0 0.0
    %5762 = vmatpush2.msra.mxu0 0.0
    %5763 = vmatprep.subr.mxu0 0.0
    %5764 = vmatpush2.msra.mxu0 0.0
    %5765 = vmatprep.subr.mxu0 0.0
    %5766 = vmatpush2.msra.mxu0 0.0
    %5767 = vmatprep.subr.mxu0 0.0
    %5768 = vmatpush2.msra.mxu0 0.0
    %5769 = vmatprep.subr.mxu0 0.0
    %5770 = vmatpush2.msra.mxu0 0.0
    %5771 = vmatprep.subr.mxu0 0.0
    %5772 = vmatpush2.msra.mxu0 0.0
    %5773 = vmatprep.subr.mxu0 0.0
    %5774 = vmatpush2.msra.mxu0 0.0
    %5775 = vmatprep.subr.mxu0 0.0
    %5776 = vmatpush2.msra.mxu0 0.0
    %5777 = vmatprep.subr.mxu0 0.0
    %5778 = vmatpush2.msra.mxu0 0.0
    %5779 = vmatprep.subr.mxu0 0.0
    %5780 = vmatpush2.msra.mxu0 0.0
    %5781 = vmatprep.subr.mxu0 0.0
    %5782 = vmatpush2.msra.mxu0 0.0
    %5783 = vmatprep.subr.mxu0 0.0
    %5784 = vmatpush2.msra.mxu0 0.0
    %5785 = vmatprep.subr.mxu0 0.0
    %5786 = vmatpush2.msra.mxu0 0.0
    %5787 = vmatprep.mubr.f32.mxu0 0.0
    %v5788 = vand.u32 %v5187, 4294901760
    %5789 = vmatmul.mubr.f32.gmra.mxu0 %v5788
    %v5790 = vpop.f32.mrf.mxu0
    %v5791 = vadd.f32 %v5698, %v5790
    %v5792 = vpop.f32.mrf.mxu0
    %5793 = vmatprep.mubr.f32.mxu0 0.0
    %v5794 = vand.u32 %v5190, 4294901760
    %5795 = vmatmul.mubr.f32.gmra.mxu0 %v5794
    %v5796 = vpop.f32.mrf.mxu0
    %v5797 = vadd.f32 %v5704, %v5796
    %v5798 = vpop.f32.mrf.mxu0
    %5799 = vmatprep.mubr.f32.mxu0 0.0
    %v5800 = vand.u32 %v5193, 4294901760
    %5801 = vmatmul.mubr.f32.gmra.mxu0 %v5800
    %v5802 = vpop.f32.mrf.mxu0
    %v5803 = vadd.f32 %v5710, %v5802
    %v5804 = vpop.f32.mrf.mxu0
    %5805 = vmatprep.mubr.f32.mxu0 0.0
    %v5806 = vand.u32 %v5196, 4294901760
    %5807 = vmatmul.mubr.f32.gmra.mxu0 %v5806
    %v5808 = vpop.f32.mrf.mxu0
    %v5809 = vadd.f32 %v5716, %v5808
    %v5810 = vpop.f32.mrf.mxu0
    %5811 = vdwg.mxu0
    %v5812 = vadd.f32 %v5173, %v5791
    %v5813 = vadd.f32 %v5174, %v5797
    %v5814 = vadd.f32 %v5175, %v5803
    %v5815 = vadd.f32 %v5176, %v5809
    %v5816 = vadd.f32 %v5812, 0.0
    %v5817 = vadd.f32 %v5813, 0.0
    %v5818 = vadd.f32 %v5814, 0.0
    %v5819 = vadd.f32 %v5815, 0.0
    %v5820 = vld [vmem:[%s3] sm:$0x1]
    %v5822 = vlaneseq
    %v5823 = vshrl.u32 %v5822, 7
    %v5824 = vsub.s32 0, %v5823
    %v5825 = vrot.slane %v5820, %v5824
    %v5827 = vadd.f32 %v5816, %v5825
    %v5828 = vadd.f32 %v5817, %v5825
    %v5829 = vadd.f32 %v5818, %v5825
    %v5830 = vadd.f32 %v5819, %v5825
    %s5831 = sld [smem:[#allocation3 + $0x6]]
    %s5832 = sld [smem:[#allocation3 + $0x7]]
    %s5833 = sld [smem:[#allocation3 + $0x8]]
    %v5834 = vmax.f32 %v2621, %v66
    %v5835 = vmax.f32 %v2622, %v67
    %v5836 = vmax.f32 %v2623, %v68
    %v5837 = vmax.f32 %v2624, %v69
    %v5838 = vmax.f32 %v5834, %v3899
    %v5839 = vmax.f32 %v5835, %v3900
    %v5840 = vmax.f32 %v5836, %v3901
    %v5841 = vmax.f32 %v5837, %v3902
    %v5842 = vstv %s5831
    %v5843 = vmul.f32 %v5842, %v5838
    %v5844 = vmul.f32 %v5842, %v5839
    %v5845 = vmul.f32 %v5842, %v5840
    %v5846 = vmul.f32 %v5842, %v5841
    %v5847 = vadd.f32 %v5827, %v5843
    %v5848 = vadd.f32 %v5828, %v5844
    %v5849 = vadd.f32 %v5829, %v5845
    %v5850 = vadd.f32 %v5830, %v5846
    %s5851 = smul.f32 %s5832, 0.33333334
    %v5852 = vadd.f32 %v2621, %v66
    %v5853 = vadd.f32 %v2622, %v67
    %v5854 = vadd.f32 %v2623, %v68
    %v5855 = vadd.f32 %v2624, %v69
    %v5856 = vadd.f32 %v5852, %v3899
    %v5857 = vadd.f32 %v5853, %v3900
    %v5858 = vadd.f32 %v5854, %v3901
    %v5859 = vadd.f32 %v5855, %v3902
    %v5860 = vstv %s5851
    %v5861 = vmul.f32 %v5860, %v5856
    %v5862 = vmul.f32 %v5860, %v5857
    %v5863 = vmul.f32 %v5860, %v5858
    %v5864 = vmul.f32 %v5860, %v5859
    %v5865 = vadd.f32 %v5847, %v5861
    %v5866 = vadd.f32 %v5848, %v5862
    %v5867 = vadd.f32 %v5849, %v5863
    %v5868 = vadd.f32 %v5850, %v5864
    %v5869 = vstv %s5833
    %v5870 = vmul.f32 %v5869, %v66
    %v5871 = vmul.f32 %v5869, %v67
    %v5872 = vmul.f32 %v5869, %v68
    %v5873 = vmul.f32 %v5869, %v69
    %v5874 = vadd.f32 %v5865, %v5870
    %v5875 = vadd.f32 %v5866, %v5871
    %v5876 = vadd.f32 %v5867, %v5872
    %v5877 = vadd.f32 %v5868, %v5873
    %s5878 = scalar_lea.vmem [#allocation7], 32
    %v5879 = vld [vmem:[%s5878] sm:$0xff]
    %v5880 = vld [vmem:[%s5878 + $0x8] sm:$0xff]
    %v5881 = vld [vmem:[%s5878 + $0x10] sm:$0xff]
    %v5882 = vld [vmem:[%s5878 + $0x18] sm:$0xff]
    %v5883 = vmax.f32 %v5879, 0.0
    %v5884 = vmax.f32 %v5880, 0.0
    %v5885 = vmax.f32 %v5881, 0.0
    %v5886 = vmax.f32 %v5882, 0.0
    %5887 = vst.msk [vmem:[#allocation2 + $0x8] sm:$0xff] %vm57, %v5883
    %5888 = vst.msk [vmem:[#allocation2 + $0x10] sm:$0xff] %vm57, %v5884
    %5889 = vst.msk [vmem:[#allocation2 + $0x28] sm:$0xff] %vm57, %v5885
    %5890 = vst.msk [vmem:[#allocation2 + $0x30] sm:$0xff] %vm57, %v5886
    %v5891 = vld [vmem:[#allocation2] sm:$0xff]
    %v5892 = vld [vmem:[#allocation2 + $0x8] sm:$0xff]
    %v5893 = vld [vmem:[#allocation2 + $0x20] sm:$0xff]
    %v5894 = vld [vmem:[#allocation2 + $0x28] sm:$0xff]
    %s5895 = scalar_lea.vmem [#allocation8], 288
    %v5896 = vld [vmem:[%s5895] sm:$0xff]
    %v5897 = vld [vmem:[%s5895 + $0x8] sm:$0xff]
    %v5898 = vld [vmem:[%s5895 + $0x10] sm:$0xff]
    %v5899 = vld [vmem:[%s5895 + $0x18] sm:$0xff]
    %v5900 = vld [vmem:[#allocation2 + $0x2] sm:$0xff]
    %v5901 = vld [vmem:[#allocation2 + $0xa] sm:$0xff]
    %v5902 = vld [vmem:[#allocation2 + $0x22] sm:$0xff]
    %v5903 = vld [vmem:[#allocation2 + $0x2a] sm:$0xff]
    %s5904 = scalar_lea.vmem [#allocation8], 320
    %v5905 = vld [vmem:[%s5904] sm:$0xff]
    %v5906 = vld [vmem:[%s5904 + $0x8] sm:$0xff]
    %v5907 = vld [vmem:[%s5904 + $0x10] sm:$0xff]
    %v5908 = vld [vmem:[%s5904 + $0x18] sm:$0xff]
    %v5910 = vsel %vm57, %v5900, 0
    %v5913 = vsel %vm57, %v5901, 0
    %v5916 = vsel %vm57, %v5902, 0
    %v5919 = vsel %vm57, %v5903, 0
    %5921 = vmatprep.subr.mxu0 0.0
    %5922 = vmatpush1.msra.mxu0 0.0
    %5923 = vmatprep.subr.mxu0 0.0
    %5924 = vmatpush1.msra.mxu0 0.0
    %5925 = vmatprep.subr.mxu0 0.0
    %5926 = vmatpush1.msra.mxu0 0.0
    %5927 = vmatprep.subr.mxu0 0.0
    %5928 = vmatpush1.msra.mxu0 0.0
    %5929 = vmatprep.subr.mxu0 0.0
    %5930 = vmatpush1.msra.mxu0 0.0
    %5931 = vmatprep.subr.mxu0 0.0
    %5932 = vmatpush1.msra.mxu0 0.0
    %5933 = vmatprep.subr.mxu0 0.0
    %5934 = vmatpush1.msra.mxu0 0.0
    %5935 = vmatprep.subr.mxu0 0.0
    %5936 = vmatpush1.msra.mxu0 0.0
    %5937 = vmatprep.subr.mxu0 0.0
    %5938 = vmatpush1.msra.mxu0 0.0
    %5939 = vmatprep.subr.mxu0 0.0
    %5940 = vmatpush1.msra.mxu0 0.0
    %5941 = vmatprep.subr.mxu0 0.0
    %5942 = vmatpush1.msra.mxu0 0.0
    %5943 = vmatprep.subr.mxu0 0.0
    %5944 = vmatpush1.msra.mxu0 0.0
    %5945 = vmatprep.subr.mxu0 0.0
    %v5946 = vand.u32 %v5908, 4294901760
    %5947 = vmatpush1.msra.mxu0 %v5946
    %5948 = vmatprep.subr.mxu0 0.0
    %v5949 = vand.u32 %v5907, 4294901760
    %5950 = vmatpush1.msra.mxu0 %v5949
    %5951 = vmatprep.subr.mxu0 0.0
    %v5952 = vand.u32 %v5906, 4294901760
    %5953 = vmatpush1.msra.mxu0 %v5952
    %5954 = vmatprep.subr.mxu0 0.0
    %v5955 = vand.u32 %v5905, 4294901760
    %5956 = vmatpush1.msra.mxu0 %v5955
    %5957 = vmatprep.subr.mxu0 0.0
    %5958 = vmatpush2.msra.mxu0 0.0
    %5959 = vmatprep.subr.mxu0 0.0
    %5960 = vmatpush2.msra.mxu0 0.0
    %5961 = vmatprep.subr.mxu0 0.0
    %5962 = vmatpush2.msra.mxu0 0.0
    %5963 = vmatprep.subr.mxu0 0.0
    %5964 = vmatpush2.msra.mxu0 0.0
    %5965 = vmatprep.subr.mxu0 0.0
    %5966 = vmatpush2.msra.mxu0 0.0
    %5967 = vmatprep.subr.mxu0 0.0
    %5968 = vmatpush2.msra.mxu0 0.0
    %5969 = vmatprep.subr.mxu0 0.0
    %5970 = vmatpush2.msra.mxu0 0.0
    %5971 = vmatprep.subr.mxu0 0.0
    %5972 = vmatpush2.msra.mxu0 0.0
    %5973 = vmatprep.subr.mxu0 0.0
    %5974 = vmatpush2.msra.mxu0 0.0
    %5975 = vmatprep.subr.mxu0 0.0
    %5976 = vmatpush2.msra.mxu0 0.0
    %5977 = vmatprep.subr.mxu0 0.0
    %5978 = vmatpush2.msra.mxu0 0.0
    %5979 = vmatprep.subr.mxu0 0.0
    %5980 = vmatpush2.msra.mxu0 0.0
    %5981 = vmatprep.subr.mxu0 0.0
    %5982 = vmatpush2.msra.mxu0 0.0
    %5983 = vmatprep.subr.mxu0 0.0
    %5984 = vmatpush2.msra.mxu0 0.0
    %5985 = vmatprep.subr.mxu0 0.0
    %5986 = vmatpush2.msra.mxu0 0.0
    %5987 = vmatprep.subr.mxu0 0.0
    %5988 = vmatpush2.msra.mxu0 0.0
    %5989 = vmatprep.mubr.f32.mxu0 0.0
    %v5990 = vand.u32 %v5910, 4294901760
    %v5991 = vsub.f32 %v5910, %v5990
    %v5992 = vand.u32 %v5991, 4294901760
    %v5993 = vsub.f32 %v5991, %v5992
    %v5994 = vand.u32 %v5993, 4294901760
    %5995 = vmatmul.mubr.f32.gmra.mxu0 %v5994
    %v5996 = vpop.f32.mrf.mxu0
    %v5997 = vadd.f32 0.0, %v5996
    %v5998 = vpop.f32.mrf.mxu0
    %5999 = vmatprep.mubr.f32.mxu0 0.0
    %v6000 = vand.u32 %v5913, 4294901760
    %v6001 = vsub.f32 %v5913, %v6000
    %v6002 = vand.u32 %v6001, 4294901760
    %v6003 = vsub.f32 %v6001, %v6002
    %v6004 = vand.u32 %v6003, 4294901760
    %6005 = vmatmul.mubr.f32.gmra.mxu0 %v6004
    %v6006 = vpop.f32.mrf.mxu0
    %v6007 = vadd.f32 0.0, %v6006
    %v6008 = vpop.f32.mrf.mxu0
    %6009 = vmatprep.mubr.f32.mxu0 0.0
    %v6010 = vand.u32 %v5916, 4294901760
    %v6011 = vsub.f32 %v5916, %v6010
    %v6012 = vand.u32 %v6011, 4294901760
    %v6013 = vsub.f32 %v6011, %v6012
    %v6014 = vand.u32 %v6013, 4294901760
    %6015 = vmatmul.mubr.f32.gmra.mxu0 %v6014
    %v6016 = vpop.f32.mrf.mxu0
    %v6017 = vadd.f32 0.0, %v6016
    %v6018 = vpop.f32.mrf.mxu0
    %6019 = vmatprep.mubr.f32.mxu0 0.0
    %v6020 = vand.u32 %v5919, 4294901760
    %v6021 = vsub.f32 %v5919, %v6020
    %v6022 = vand.u32 %v6021, 4294901760
    %v6023 = vsub.f32 %v6021, %v6022
    %v6024 = vand.u32 %v6023, 4294901760
    %6025 = vmatmul.mubr.f32.gmra.mxu0 %v6024
    %v6026 = vpop.f32.mrf.mxu0
    %v6027 = vadd.f32 0.0, %v6026
    %v6028 = vpop.f32.mrf.mxu0
    %6029 = vdwg.mxu0
    %6030 = vmatprep.subr.mxu0 0.0
    %6031 = vmatpush1.msra.mxu0 0.0
    %6032 = vmatprep.subr.mxu0 0.0
    %6033 = vmatpush1.msra.mxu0 0.0
    %6034 = vmatprep.subr.mxu0 0.0
    %6035 = vmatpush1.msra.mxu0 0.0
    %6036 = vmatprep.subr.mxu0 0.0
    %6037 = vmatpush1.msra.mxu0 0.0
    %6038 = vmatprep.subr.mxu0 0.0
    %6039 = vmatpush1.msra.mxu0 0.0
    %6040 = vmatprep.subr.mxu0 0.0
    %6041 = vmatpush1.msra.mxu0 0.0
    %6042 = vmatprep.subr.mxu0 0.0
    %6043 = vmatpush1.msra.mxu0 0.0
    %6044 = vmatprep.subr.mxu0 0.0
    %6045 = vmatpush1.msra.mxu0 0.0
    %6046 = vmatprep.subr.mxu0 0.0
    %6047 = vmatpush1.msra.mxu0 0.0
    %6048 = vmatprep.subr.mxu0 0.0
    %6049 = vmatpush1.msra.mxu0 0.0
    %6050 = vmatprep.subr.mxu0 0.0
    %6051 = vmatpush1.msra.mxu0 0.0
    %6052 = vmatprep.subr.mxu0 0.0
    %6053 = vmatpush1.msra.mxu0 0.0
    %6054 = vmatprep.subr.mxu0 0.0
    %v6055 = vand.u32 %v5908, 4294901760
    %v6056 = vsub.f32 %v5908, %v6055
    %v6057 = vand.u32 %v6056, 4294901760
    %v6058 = vsub.f32 %v6056, %v6057
    %v6059 = vand.u32 %v6058, 4294901760
    %6060 = vmatpush1.msra.mxu0 %v6059
    %6061 = vmatprep.subr.mxu0 0.0
    %v6062 = vand.u32 %v5907, 4294901760
    %v6063 = vsub.f32 %v5907, %v6062
    %v6064 = vand.u32 %v6063, 4294901760
    %v6065 = vsub.f32 %v6063, %v6064
    %v6066 = vand.u32 %v6065, 4294901760
    %6067 = vmatpush1.msra.mxu0 %v6066
    %6068 = vmatprep.subr.mxu0 0.0
    %v6069 = vand.u32 %v5906, 4294901760
    %v6070 = vsub.f32 %v5906, %v6069
    %v6071 = vand.u32 %v6070, 4294901760
    %v6072 = vsub.f32 %v6070, %v6071
    %v6073 = vand.u32 %v6072, 4294901760
    %6074 = vmatpush1.msra.mxu0 %v6073
    %6075 = vmatprep.subr.mxu0 0.0
    %v6076 = vand.u32 %v5905, 4294901760
    %v6077 = vsub.f32 %v5905, %v6076
    %v6078 = vand.u32 %v6077, 4294901760
    %v6079 = vsub.f32 %v6077, %v6078
    %v6080 = vand.u32 %v6079, 4294901760
    %6081 = vmatpush1.msra.mxu0 %v6080
    %6082 = vmatprep.subr.mxu0 0.0
    %6083 = vmatpush2.msra.mxu0 0.0
    %6084 = vmatprep.subr.mxu0 0.0
    %6085 = vmatpush2.msra.mxu0 0.0
    %6086 = vmatprep.subr.mxu0 0.0
    %6087 = vmatpush2.msra.mxu0 0.0
    %6088 = vmatprep.subr.mxu0 0.0
    %6089 = vmatpush2.msra.mxu0 0.0
    %6090 = vmatprep.subr.mxu0 0.0
    %6091 = vmatpush2.msra.mxu0 0.0
    %6092 = vmatprep.subr.mxu0 0.0
    %6093 = vmatpush2.msra.mxu0 0.0
    %6094 = vmatprep.subr.mxu0 0.0
    %6095 = vmatpush2.msra.mxu0 0.0
    %6096 = vmatprep.subr.mxu0 0.0
    %6097 = vmatpush2.msra.mxu0 0.0
    %6098 = vmatprep.subr.mxu0 0.0
    %6099 = vmatpush2.msra.mxu0 0.0
    %6100 = vmatprep.subr.mxu0 0.0
    %6101 = vmatpush2.msra.mxu0 0.0
    %6102 = vmatprep.subr.mxu0 0.0
    %6103 = vmatpush2.msra.mxu0 0.0
    %6104 = vmatprep.subr.mxu0 0.0
    %6105 = vmatpush2.msra.mxu0 0.0
    %6106 = vmatprep.subr.mxu0 0.0
    %6107 = vmatpush2.msra.mxu0 0.0
    %6108 = vmatprep.subr.mxu0 0.0
    %6109 = vmatpush2.msra.mxu0 0.0
    %6110 = vmatprep.subr.mxu0 0.0
    %6111 = vmatpush2.msra.mxu0 0.0
    %6112 = vmatprep.subr.mxu0 0.0
    %6113 = vmatpush2.msra.mxu0 0.0
    %6114 = vmatprep.mubr.f32.mxu0 0.0
    %v6115 = vand.u32 %v5910, 4294901760
    %6116 = vmatmul.mubr.f32.gmra.mxu0 %v6115
    %v6117 = vpop.f32.mrf.mxu0
    %v6118 = vadd.f32 %v5997, %v6117
    %v6119 = vpop.f32.mrf.mxu0
    %6120 = vmatprep.mubr.f32.mxu0 0.0
    %v6121 = vand.u32 %v5913, 4294901760
    %6122 = vmatmul.mubr.f32.gmra.mxu0 %v6121
    %v6123 = vpop.f32.mrf.mxu0
    %v6124 = vadd.f32 %v6007, %v6123
    %v6125 = vpop.f32.mrf.mxu0
    %6126 = vmatprep.mubr.f32.mxu0 0.0
    %v6127 = vand.u32 %v5916, 4294901760
    %6128 = vmatmul.mubr.f32.gmra.mxu0 %v6127
    %v6129 = vpop.f32.mrf.mxu0
    %v6130 = vadd.f32 %v6017, %v6129
    %v6131 = vpop.f32.mrf.mxu0
    %6132 = vmatprep.mubr.f32.mxu0 0.0
    %v6133 = vand.u32 %v5919, 4294901760
    %6134 = vmatmul.mubr.f32.gmra.mxu0 %v6133
    %v6135 = vpop.f32.mrf.mxu0
    %v6136 = vadd.f32 %v6027, %v6135
    %v6137 = vpop.f32.mrf.mxu0
    %6138 = vdwg.mxu0
    %6139 = vmatprep.subr.mxu0 0.0
    %6140 = vmatpush1.msra.mxu0 0.0
    %6141 = vmatprep.subr.mxu0 0.0
    %6142 = vmatpush1.msra.mxu0 0.0
    %6143 = vmatprep.subr.mxu0 0.0
    %6144 = vmatpush1.msra.mxu0 0.0
    %6145 = vmatprep.subr.mxu0 0.0
    %6146 = vmatpush1.msra.mxu0 0.0
    %6147 = vmatprep.subr.mxu0 0.0
    %6148 = vmatpush1.msra.mxu0 0.0
    %6149 = vmatprep.subr.mxu0 0.0
    %6150 = vmatpush1.msra.mxu0 0.0
    %6151 = vmatprep.subr.mxu0 0.0
    %6152 = vmatpush1.msra.mxu0 0.0
    %6153 = vmatprep.subr.mxu0 0.0
    %6154 = vmatpush1.msra.mxu0 0.0
    %6155 = vmatprep.subr.mxu0 0.0
    %6156 = vmatpush1.msra.mxu0 0.0
    %6157 = vmatprep.subr.mxu0 0.0
    %6158 = vmatpush1.msra.mxu0 0.0
    %6159 = vmatprep.subr.mxu0 0.0
    %6160 = vmatpush1.msra.mxu0 0.0
    %6161 = vmatprep.subr.mxu0 0.0
    %6162 = vmatpush1.msra.mxu0 0.0
    %6163 = vmatprep.subr.mxu0 0.0
    %v6164 = vand.u32 %v5908, 4294901760
    %v6165 = vsub.f32 %v5908, %v6164
    %6166 = vmatpush1.msra.mxu0 %v6165
    %6167 = vmatprep.subr.mxu0 0.0
    %v6168 = vand.u32 %v5907, 4294901760
    %v6169 = vsub.f32 %v5907, %v6168
    %6170 = vmatpush1.msra.mxu0 %v6169
    %6171 = vmatprep.subr.mxu0 0.0
    %v6172 = vand.u32 %v5906, 4294901760
    %v6173 = vsub.f32 %v5906, %v6172
    %6174 = vmatpush1.msra.mxu0 %v6173
    %6175 = vmatprep.subr.mxu0 0.0
    %v6176 = vand.u32 %v5905, 4294901760
    %v6177 = vsub.f32 %v5905, %v6176
    %6178 = vmatpush1.msra.mxu0 %v6177
    %6179 = vmatprep.subr.mxu0 0.0
    %6180 = vmatpush2.msra.mxu0 0.0
    %6181 = vmatprep.subr.mxu0 0.0
    %6182 = vmatpush2.msra.mxu0 0.0
    %6183 = vmatprep.subr.mxu0 0.0
    %6184 = vmatpush2.msra.mxu0 0.0
    %6185 = vmatprep.subr.mxu0 0.0
    %6186 = vmatpush2.msra.mxu0 0.0
    %6187 = vmatprep.subr.mxu0 0.0
    %6188 = vmatpush2.msra.mxu0 0.0
    %6189 = vmatprep.subr.mxu0 0.0
    %6190 = vmatpush2.msra.mxu0 0.0
    %6191 = vmatprep.subr.mxu0 0.0
    %6192 = vmatpush2.msra.mxu0 0.0
    %6193 = vmatprep.subr.mxu0 0.0
    %6194 = vmatpush2.msra.mxu0 0.0
    %6195 = vmatprep.subr.mxu0 0.0
    %6196 = vmatpush2.msra.mxu0 0.0
    %6197 = vmatprep.subr.mxu0 0.0
    %6198 = vmatpush2.msra.mxu0 0.0
    %6199 = vmatprep.subr.mxu0 0.0
    %6200 = vmatpush2.msra.mxu0 0.0
    %6201 = vmatprep.subr.mxu0 0.0
    %6202 = vmatpush2.msra.mxu0 0.0
    %6203 = vmatprep.subr.mxu0 0.0
    %6204 = vmatpush2.msra.mxu0 0.0
    %6205 = vmatprep.subr.mxu0 0.0
    %6206 = vmatpush2.msra.mxu0 0.0
    %6207 = vmatprep.subr.mxu0 0.0
    %6208 = vmatpush2.msra.mxu0 0.0
    %6209 = vmatprep.subr.mxu0 0.0
    %6210 = vmatpush2.msra.mxu0 0.0
    %6211 = vmatprep.mubr.f32.mxu0 0.0
    %v6212 = vand.u32 %v5910, 4294901760
    %v6213 = vsub.f32 %v5910, %v6212
    %6214 = vmatmul.mubr.f32.gmra.mxu0 %v6213
    %v6215 = vpop.f32.mrf.mxu0
    %v6216 = vadd.f32 %v6118, %v6215
    %v6217 = vpop.f32.mrf.mxu0
    %6218 = vmatprep.mubr.f32.mxu0 0.0
    %v6219 = vand.u32 %v5913, 4294901760
    %v6220 = vsub.f32 %v5913, %v6219
    %6221 = vmatmul.mubr.f32.gmra.mxu0 %v6220
    %v6222 = vpop.f32.mrf.mxu0
    %v6223 = vadd.f32 %v6124, %v6222
    %v6224 = vpop.f32.mrf.mxu0
    %6225 = vmatprep.mubr.f32.mxu0 0.0
    %v6226 = vand.u32 %v5916, 4294901760
    %v6227 = vsub.f32 %v5916, %v6226
    %6228 = vmatmul.mubr.f32.gmra.mxu0 %v6227
    %v6229 = vpop.f32.mrf.mxu0
    %v6230 = vadd.f32 %v6130, %v6229
    %v6231 = vpop.f32.mrf.mxu0
    %6232 = vmatprep.mubr.f32.mxu0 0.0
    %v6233 = vand.u32 %v5919, 4294901760
    %v6234 = vsub.f32 %v5919, %v6233
    %6235 = vmatmul.mubr.f32.gmra.mxu0 %v6234
    %v6236 = vpop.f32.mrf.mxu0
    %v6237 = vadd.f32 %v6136, %v6236
    %v6238 = vpop.f32.mrf.mxu0
    %6239 = vdwg.mxu0
    %6240 = vmatprep.subr.mxu0 0.0
    %6241 = vmatpush1.msra.mxu0 0.0
    %6242 = vmatprep.subr.mxu0 0.0
    %6243 = vmatpush1.msra.mxu0 0.0
    %6244 = vmatprep.subr.mxu0 0.0
    %6245 = vmatpush1.msra.mxu0 0.0
    %6246 = vmatprep.subr.mxu0 0.0
    %6247 = vmatpush1.msra.mxu0 0.0
    %6248 = vmatprep.subr.mxu0 0.0
    %6249 = vmatpush1.msra.mxu0 0.0
    %6250 = vmatprep.subr.mxu0 0.0
    %6251 = vmatpush1.msra.mxu0 0.0
    %6252 = vmatprep.subr.mxu0 0.0
    %6253 = vmatpush1.msra.mxu0 0.0
    %6254 = vmatprep.subr.mxu0 0.0
    %6255 = vmatpush1.msra.mxu0 0.0
    %6256 = vmatprep.subr.mxu0 0.0
    %6257 = vmatpush1.msra.mxu0 0.0
    %6258 = vmatprep.subr.mxu0 0.0
    %6259 = vmatpush1.msra.mxu0 0.0
    %6260 = vmatprep.subr.mxu0 0.0
    %6261 = vmatpush1.msra.mxu0 0.0
    %6262 = vmatprep.subr.mxu0 0.0
    %6263 = vmatpush1.msra.mxu0 0.0
    %6264 = vmatprep.subr.mxu0 0.0
    %v6265 = vand.u32 %v5908, 4294901760
    %6266 = vmatpush1.msra.mxu0 %v6265
    %6267 = vmatprep.subr.mxu0 0.0
    %v6268 = vand.u32 %v5907, 4294901760
    %6269 = vmatpush1.msra.mxu0 %v6268
    %6270 = vmatprep.subr.mxu0 0.0
    %v6271 = vand.u32 %v5906, 4294901760
    %6272 = vmatpush1.msra.mxu0 %v6271
    %6273 = vmatprep.subr.mxu0 0.0
    %v6274 = vand.u32 %v5905, 4294901760
    %6275 = vmatpush1.msra.mxu0 %v6274
    %6276 = vmatprep.subr.mxu0 0.0
    %6277 = vmatpush2.msra.mxu0 0.0
    %6278 = vmatprep.subr.mxu0 0.0
    %6279 = vmatpush2.msra.mxu0 0.0
    %6280 = vmatprep.subr.mxu0 0.0
    %6281 = vmatpush2.msra.mxu0 0.0
    %6282 = vmatprep.subr.mxu0 0.0
    %6283 = vmatpush2.msra.mxu0 0.0
    %6284 = vmatprep.subr.mxu0 0.0
    %6285 = vmatpush2.msra.mxu0 0.0
    %6286 = vmatprep.subr.mxu0 0.0
    %6287 = vmatpush2.msra.mxu0 0.0
    %6288 = vmatprep.subr.mxu0 0.0
    %6289 = vmatpush2.msra.mxu0 0.0
    %6290 = vmatprep.subr.mxu0 0.0
    %6291 = vmatpush2.msra.mxu0 0.0
    %6292 = vmatprep.subr.mxu0 0.0
    %6293 = vmatpush2.msra.mxu0 0.0
    %6294 = vmatprep.subr.mxu0 0.0
    %6295 = vmatpush2.msra.mxu0 0.0
    %6296 = vmatprep.subr.mxu0 0.0
    %6297 = vmatpush2.msra.mxu0 0.0
    %6298 = vmatprep.subr.mxu0 0.0
    %6299 = vmatpush2.msra.mxu0 0.0
    %6300 = vmatprep.subr.mxu0 0.0
    %6301 = vmatpush2.msra.mxu0 0.0
    %6302 = vmatprep.subr.mxu0 0.0
    %6303 = vmatpush2.msra.mxu0 0.0
    %6304 = vmatprep.subr.mxu0 0.0
    %6305 = vmatpush2.msra.mxu0 0.0
    %6306 = vmatprep.subr.mxu0 0.0
    %6307 = vmatpush2.msra.mxu0 0.0
    %6308 = vmatprep.mubr.f32.mxu0 0.0
    %v6309 = vand.u32 %v5910, 4294901760
    %v6310 = vsub.f32 %v5910, %v6309
    %v6311 = vand.u32 %v6310, 4294901760
    %6312 = vmatmul.mubr.f32.gmra.mxu0 %v6311
    %v6313 = vpop.f32.mrf.mxu0
    %v6314 = vadd.f32 %v6216, %v6313
    %v6315 = vpop.f32.mrf.mxu0
    %6316 = vmatprep.mubr.f32.mxu0 0.0
    %v6317 = vand.u32 %v5913, 4294901760
    %v6318 = vsub.f32 %v5913, %v6317
    %v6319 = vand.u32 %v6318, 4294901760
    %6320 = vmatmul.mubr.f32.gmra.mxu0 %v6319
    %v6321 = vpop.f32.mrf.mxu0
    %v6322 = vadd.f32 %v6223, %v6321
    %v6323 = vpop.f32.mrf.mxu0
    %6324 = vmatprep.mubr.f32.mxu0 0.0
    %v6325 = vand.u32 %v5916, 4294901760
    %v6326 = vsub.f32 %v5916, %v6325
    %v6327 = vand.u32 %v6326, 4294901760
    %6328 = vmatmul.mubr.f32.gmra.mxu0 %v6327
    %v6329 = vpop.f32.mrf.mxu0
    %v6330 = vadd.f32 %v6230, %v6329
    %v6331 = vpop.f32.mrf.mxu0
    %6332 = vmatprep.mubr.f32.mxu0 0.0
    %v6333 = vand.u32 %v5919, 4294901760
    %v6334 = vsub.f32 %v5919, %v6333
    %v6335 = vand.u32 %v6334, 4294901760
    %6336 = vmatmul.mubr.f32.gmra.mxu0 %v6335
    %v6337 = vpop.f32.mrf.mxu0
    %v6338 = vadd.f32 %v6237, %v6337
    %v6339 = vpop.f32.mrf.mxu0
    %6340 = vdwg.mxu0
    %6341 = vmatprep.subr.mxu0 0.0
    %6342 = vmatpush1.msra.mxu0 0.0
    %6343 = vmatprep.subr.mxu0 0.0
    %6344 = vmatpush1.msra.mxu0 0.0
    %6345 = vmatprep.subr.mxu0 0.0
    %6346 = vmatpush1.msra.mxu0 0.0
    %6347 = vmatprep.subr.mxu0 0.0
    %6348 = vmatpush1.msra.mxu0 0.0
    %6349 = vmatprep.subr.mxu0 0.0
    %6350 = vmatpush1.msra.mxu0 0.0
    %6351 = vmatprep.subr.mxu0 0.0
    %6352 = vmatpush1.msra.mxu0 0.0
    %6353 = vmatprep.subr.mxu0 0.0
    %6354 = vmatpush1.msra.mxu0 0.0
    %6355 = vmatprep.subr.mxu0 0.0
    %6356 = vmatpush1.msra.mxu0 0.0
    %6357 = vmatprep.subr.mxu0 0.0
    %6358 = vmatpush1.msra.mxu0 0.0
    %6359 = vmatprep.subr.mxu0 0.0
    %6360 = vmatpush1.msra.mxu0 0.0
    %6361 = vmatprep.subr.mxu0 0.0
    %6362 = vmatpush1.msra.mxu0 0.0
    %6363 = vmatprep.subr.mxu0 0.0
    %6364 = vmatpush1.msra.mxu0 0.0
    %6365 = vmatprep.subr.mxu0 0.0
    %v6366 = vand.u32 %v5908, 4294901760
    %v6367 = vsub.f32 %v5908, %v6366
    %v6368 = vand.u32 %v6367, 4294901760
    %6369 = vmatpush1.msra.mxu0 %v6368
    %6370 = vmatprep.subr.mxu0 0.0
    %v6371 = vand.u32 %v5907, 4294901760
    %v6372 = vsub.f32 %v5907, %v6371
    %v6373 = vand.u32 %v6372, 4294901760
    %6374 = vmatpush1.msra.mxu0 %v6373
    %6375 = vmatprep.subr.mxu0 0.0
    %v6376 = vand.u32 %v5906, 4294901760
    %v6377 = vsub.f32 %v5906, %v6376
    %v6378 = vand.u32 %v6377, 4294901760
    %6379 = vmatpush1.msra.mxu0 %v6378
    %6380 = vmatprep.subr.mxu0 0.0
    %v6381 = vand.u32 %v5905, 4294901760
    %v6382 = vsub.f32 %v5905, %v6381
    %v6383 = vand.u32 %v6382, 4294901760
    %6384 = vmatpush1.msra.mxu0 %v6383
    %6385 = vmatprep.subr.mxu0 0.0
    %6386 = vmatpush2.msra.mxu0 0.0
    %6387 = vmatprep.subr.mxu0 0.0
    %6388 = vmatpush2.msra.mxu0 0.0
    %6389 = vmatprep.subr.mxu0 0.0
    %6390 = vmatpush2.msra.mxu0 0.0
    %6391 = vmatprep.subr.mxu0 0.0
    %6392 = vmatpush2.msra.mxu0 0.0
    %6393 = vmatprep.subr.mxu0 0.0
    %6394 = vmatpush2.msra.mxu0 0.0
    %6395 = vmatprep.subr.mxu0 0.0
    %6396 = vmatpush2.msra.mxu0 0.0
    %6397 = vmatprep.subr.mxu0 0.0
    %6398 = vmatpush2.msra.mxu0 0.0
    %6399 = vmatprep.subr.mxu0 0.0
    %6400 = vmatpush2.msra.mxu0 0.0
    %6401 = vmatprep.subr.mxu0 0.0
    %6402 = vmatpush2.msra.mxu0 0.0
    %6403 = vmatprep.subr.mxu0 0.0
    %6404 = vmatpush2.msra.mxu0 0.0
    %6405 = vmatprep.subr.mxu0 0.0
    %6406 = vmatpush2.msra.mxu0 0.0
    %6407 = vmatprep.subr.mxu0 0.0
    %6408 = vmatpush2.msra.mxu0 0.0
    %6409 = vmatprep.subr.mxu0 0.0
    %6410 = vmatpush2.msra.mxu0 0.0
    %6411 = vmatprep.subr.mxu0 0.0
    %6412 = vmatpush2.msra.mxu0 0.0
    %6413 = vmatprep.subr.mxu0 0.0
    %6414 = vmatpush2.msra.mxu0 0.0
    %6415 = vmatprep.subr.mxu0 0.0
    %6416 = vmatpush2.msra.mxu0 0.0
    %6417 = vmatprep.mubr.f32.mxu0 0.0
    %v6418 = vand.u32 %v5910, 4294901760
    %6419 = vmatmul.mubr.f32.gmra.mxu0 %v6418
    %v6420 = vpop.f32.mrf.mxu0
    %v6421 = vadd.f32 %v6314, %v6420
    %v6422 = vpop.f32.mrf.mxu0
    %6423 = vmatprep.mubr.f32.mxu0 0.0
    %v6424 = vand.u32 %v5913, 4294901760
    %6425 = vmatmul.mubr.f32.gmra.mxu0 %v6424
    %v6426 = vpop.f32.mrf.mxu0
    %v6427 = vadd.f32 %v6322, %v6426
    %v6428 = vpop.f32.mrf.mxu0
    %6429 = vmatprep.mubr.f32.mxu0 0.0
    %v6430 = vand.u32 %v5916, 4294901760
    %6431 = vmatmul.mubr.f32.gmra.mxu0 %v6430
    %v6432 = vpop.f32.mrf.mxu0
    %v6433 = vadd.f32 %v6330, %v6432
    %v6434 = vpop.f32.mrf.mxu0
    %6435 = vmatprep.mubr.f32.mxu0 0.0
    %v6436 = vand.u32 %v5919, 4294901760
    %6437 = vmatmul.mubr.f32.gmra.mxu0 %v6436
    %v6438 = vpop.f32.mrf.mxu0
    %v6439 = vadd.f32 %v6338, %v6438
    %v6440 = vpop.f32.mrf.mxu0
    %6441 = vdwg.mxu0
    %6442 = vmatprep.subr.mxu0 0.0
    %6443 = vmatpush1.msra.mxu0 0.0
    %6444 = vmatprep.subr.mxu0 0.0
    %6445 = vmatpush1.msra.mxu0 0.0
    %6446 = vmatprep.subr.mxu0 0.0
    %6447 = vmatpush1.msra.mxu0 0.0
    %6448 = vmatprep.subr.mxu0 0.0
    %6449 = vmatpush1.msra.mxu0 0.0
    %6450 = vmatprep.subr.mxu0 0.0
    %6451 = vmatpush1.msra.mxu0 0.0
    %6452 = vmatprep.subr.mxu0 0.0
    %6453 = vmatpush1.msra.mxu0 0.0
    %6454 = vmatprep.subr.mxu0 0.0
    %6455 = vmatpush1.msra.mxu0 0.0
    %6456 = vmatprep.subr.mxu0 0.0
    %6457 = vmatpush1.msra.mxu0 0.0
    %6458 = vmatprep.subr.mxu0 0.0
    %6459 = vmatpush1.msra.mxu0 0.0
    %6460 = vmatprep.subr.mxu0 0.0
    %6461 = vmatpush1.msra.mxu0 0.0
    %6462 = vmatprep.subr.mxu0 0.0
    %6463 = vmatpush1.msra.mxu0 0.0
    %6464 = vmatprep.subr.mxu0 0.0
    %6465 = vmatpush1.msra.mxu0 0.0
    %6466 = vmatprep.subr.mxu0 0.0
    %v6467 = vand.u32 %v5908, 4294901760
    %6468 = vmatpush1.msra.mxu0 %v6467
    %6469 = vmatprep.subr.mxu0 0.0
    %v6470 = vand.u32 %v5907, 4294901760
    %6471 = vmatpush1.msra.mxu0 %v6470
    %6472 = vmatprep.subr.mxu0 0.0
    %v6473 = vand.u32 %v5906, 4294901760
    %6474 = vmatpush1.msra.mxu0 %v6473
    %6475 = vmatprep.subr.mxu0 0.0
    %v6476 = vand.u32 %v5905, 4294901760
    %6477 = vmatpush1.msra.mxu0 %v6476
    %6478 = vmatprep.subr.mxu0 0.0
    %6479 = vmatpush2.msra.mxu0 0.0
    %6480 = vmatprep.subr.mxu0 0.0
    %6481 = vmatpush2.msra.mxu0 0.0
    %6482 = vmatprep.subr.mxu0 0.0
    %6483 = vmatpush2.msra.mxu0 0.0
    %6484 = vmatprep.subr.mxu0 0.0
    %6485 = vmatpush2.msra.mxu0 0.0
    %6486 = vmatprep.subr.mxu0 0.0
    %6487 = vmatpush2.msra.mxu0 0.0
    %6488 = vmatprep.subr.mxu0 0.0
    %6489 = vmatpush2.msra.mxu0 0.0
    %6490 = vmatprep.subr.mxu0 0.0
    %6491 = vmatpush2.msra.mxu0 0.0
    %6492 = vmatprep.subr.mxu0 0.0
    %6493 = vmatpush2.msra.mxu0 0.0
    %6494 = vmatprep.subr.mxu0 0.0
    %6495 = vmatpush2.msra.mxu0 0.0
    %6496 = vmatprep.subr.mxu0 0.0
    %6497 = vmatpush2.msra.mxu0 0.0
    %6498 = vmatprep.subr.mxu0 0.0
    %6499 = vmatpush2.msra.mxu0 0.0
    %6500 = vmatprep.subr.mxu0 0.0
    %6501 = vmatpush2.msra.mxu0 0.0
    %6502 = vmatprep.subr.mxu0 0.0
    %6503 = vmatpush2.msra.mxu0 0.0
    %6504 = vmatprep.subr.mxu0 0.0
    %6505 = vmatpush2.msra.mxu0 0.0
    %6506 = vmatprep.subr.mxu0 0.0
    %6507 = vmatpush2.msra.mxu0 0.0
    %6508 = vmatprep.subr.mxu0 0.0
    %6509 = vmatpush2.msra.mxu0 0.0
    %6510 = vmatprep.mubr.f32.mxu0 0.0
    %v6511 = vand.u32 %v5910, 4294901760
    %6512 = vmatmul.mubr.f32.gmra.mxu0 %v6511
    %v6513 = vpop.f32.mrf.mxu0
    %v6514 = vadd.f32 %v6421, %v6513
    %v6515 = vpop.f32.mrf.mxu0
    %6516 = vmatprep.mubr.f32.mxu0 0.0
    %v6517 = vand.u32 %v5913, 4294901760
    %6518 = vmatmul.mubr.f32.gmra.mxu0 %v6517
    %v6519 = vpop.f32.mrf.mxu0
    %v6520 = vadd.f32 %v6427, %v6519
    %v6521 = vpop.f32.mrf.mxu0
    %6522 = vmatprep.mubr.f32.mxu0 0.0
    %v6523 = vand.u32 %v5916, 4294901760
    %6524 = vmatmul.mubr.f32.gmra.mxu0 %v6523
    %v6525 = vpop.f32.mrf.mxu0
    %v6526 = vadd.f32 %v6433, %v6525
    %v6527 = vpop.f32.mrf.mxu0
    %6528 = vmatprep.mubr.f32.mxu0 0.0
    %v6529 = vand.u32 %v5919, 4294901760
    %6530 = vmatmul.mubr.f32.gmra.mxu0 %v6529
    %v6531 = vpop.f32.mrf.mxu0
    %v6532 = vadd.f32 %v6439, %v6531
    %v6533 = vpop.f32.mrf.mxu0
    %6534 = vdwg.mxu0
    %v6536 = vsel %vm57, %v5891, 0
    %v6539 = vsel %vm57, %v5892, 0
    %v6542 = vsel %vm57, %v5893, 0
    %v6545 = vsel %vm57, %v5894, 0
    %6547 = vmatprep.subr.mxu0 0.0
    %6548 = vmatpush1.msra.mxu0 0.0
    %6549 = vmatprep.subr.mxu0 0.0
    %6550 = vmatpush1.msra.mxu0 0.0
    %6551 = vmatprep.subr.mxu0 0.0
    %6552 = vmatpush1.msra.mxu0 0.0
    %6553 = vmatprep.subr.mxu0 0.0
    %6554 = vmatpush1.msra.mxu0 0.0
    %6555 = vmatprep.subr.mxu0 0.0
    %6556 = vmatpush1.msra.mxu0 0.0
    %6557 = vmatprep.subr.mxu0 0.0
    %6558 = vmatpush1.msra.mxu0 0.0
    %6559 = vmatprep.subr.mxu0 0.0
    %6560 = vmatpush1.msra.mxu0 0.0
    %6561 = vmatprep.subr.mxu0 0.0
    %6562 = vmatpush1.msra.mxu0 0.0
    %6563 = vmatprep.subr.mxu0 0.0
    %6564 = vmatpush1.msra.mxu0 0.0
    %6565 = vmatprep.subr.mxu0 0.0
    %6566 = vmatpush1.msra.mxu0 0.0
    %6567 = vmatprep.subr.mxu0 0.0
    %6568 = vmatpush1.msra.mxu0 0.0
    %6569 = vmatprep.subr.mxu0 0.0
    %6570 = vmatpush1.msra.mxu0 0.0
    %6571 = vmatprep.subr.mxu0 0.0
    %v6572 = vand.u32 %v5899, 4294901760
    %6573 = vmatpush1.msra.mxu0 %v6572
    %6574 = vmatprep.subr.mxu0 0.0
    %v6575 = vand.u32 %v5898, 4294901760
    %6576 = vmatpush1.msra.mxu0 %v6575
    %6577 = vmatprep.subr.mxu0 0.0
    %v6578 = vand.u32 %v5897, 4294901760
    %6579 = vmatpush1.msra.mxu0 %v6578
    %6580 = vmatprep.subr.mxu0 0.0
    %v6581 = vand.u32 %v5896, 4294901760
    %6582 = vmatpush1.msra.mxu0 %v6581
    %6583 = vmatprep.subr.mxu0 0.0
    %6584 = vmatpush2.msra.mxu0 0.0
    %6585 = vmatprep.subr.mxu0 0.0
    %6586 = vmatpush2.msra.mxu0 0.0
    %6587 = vmatprep.subr.mxu0 0.0
    %6588 = vmatpush2.msra.mxu0 0.0
    %6589 = vmatprep.subr.mxu0 0.0
    %6590 = vmatpush2.msra.mxu0 0.0
    %6591 = vmatprep.subr.mxu0 0.0
    %6592 = vmatpush2.msra.mxu0 0.0
    %6593 = vmatprep.subr.mxu0 0.0
    %6594 = vmatpush2.msra.mxu0 0.0
    %6595 = vmatprep.subr.mxu0 0.0
    %6596 = vmatpush2.msra.mxu0 0.0
    %6597 = vmatprep.subr.mxu0 0.0
    %6598 = vmatpush2.msra.mxu0 0.0
    %6599 = vmatprep.subr.mxu0 0.0
    %6600 = vmatpush2.msra.mxu0 0.0
    %6601 = vmatprep.subr.mxu0 0.0
    %6602 = vmatpush2.msra.mxu0 0.0
    %6603 = vmatprep.subr.mxu0 0.0
    %6604 = vmatpush2.msra.mxu0 0.0
    %6605 = vmatprep.subr.mxu0 0.0
    %6606 = vmatpush2.msra.mxu0 0.0
    %6607 = vmatprep.subr.mxu0 0.0
    %6608 = vmatpush2.msra.mxu0 0.0
    %6609 = vmatprep.subr.mxu0 0.0
    %6610 = vmatpush2.msra.mxu0 0.0
    %6611 = vmatprep.subr.mxu0 0.0
    %6612 = vmatpush2.msra.mxu0 0.0
    %6613 = vmatprep.subr.mxu0 0.0
    %6614 = vmatpush2.msra.mxu0 0.0
    %6615 = vmatprep.mubr.f32.mxu0 0.0
    %v6616 = vand.u32 %v6536, 4294901760
    %v6617 = vsub.f32 %v6536, %v6616
    %v6618 = vand.u32 %v6617, 4294901760
    %v6619 = vsub.f32 %v6617, %v6618
    %v6620 = vand.u32 %v6619, 4294901760
    %6621 = vmatmul.mubr.f32.gmra.mxu0 %v6620
    %v6622 = vpop.f32.mrf.mxu0
    %v6623 = vadd.f32 %v6514, %v6622
    %v6624 = vpop.f32.mrf.mxu0
    %6625 = vmatprep.mubr.f32.mxu0 0.0
    %v6626 = vand.u32 %v6539, 4294901760
    %v6627 = vsub.f32 %v6539, %v6626
    %v6628 = vand.u32 %v6627, 4294901760
    %v6629 = vsub.f32 %v6627, %v6628
    %v6630 = vand.u32 %v6629, 4294901760
    %6631 = vmatmul.mubr.f32.gmra.mxu0 %v6630
    %v6632 = vpop.f32.mrf.mxu0
    %v6633 = vadd.f32 %v6520, %v6632
    %v6634 = vpop.f32.mrf.mxu0
    %6635 = vmatprep.mubr.f32.mxu0 0.0
    %v6636 = vand.u32 %v6542, 4294901760
    %v6637 = vsub.f32 %v6542, %v6636
    %v6638 = vand.u32 %v6637, 4294901760
    %v6639 = vsub.f32 %v6637, %v6638
    %v6640 = vand.u32 %v6639, 4294901760
    %6641 = vmatmul.mubr.f32.gmra.mxu0 %v6640
    %v6642 = vpop.f32.mrf.mxu0
    %v6643 = vadd.f32 %v6526, %v6642
    %v6644 = vpop.f32.mrf.mxu0
    %6645 = vmatprep.mubr.f32.mxu0 0.0
    %v6646 = vand.u32 %v6545, 4294901760
    %v6647 = vsub.f32 %v6545, %v6646
    %v6648 = vand.u32 %v6647, 4294901760
    %v6649 = vsub.f32 %v6647, %v6648
    %v6650 = vand.u32 %v6649, 4294901760
    %6651 = vmatmul.mubr.f32.gmra.mxu0 %v6650
    %v6652 = vpop.f32.mrf.mxu0
    %v6653 = vadd.f32 %v6532, %v6652
    %v6654 = vpop.f32.mrf.mxu0
    %6655 = vdwg.mxu0
    %6656 = vmatprep.subr.mxu0 0.0
    %6657 = vmatpush1.msra.mxu0 0.0
    %6658 = vmatprep.subr.mxu0 0.0
    %6659 = vmatpush1.msra.mxu0 0.0
    %6660 = vmatprep.subr.mxu0 0.0
    %6661 = vmatpush1.msra.mxu0 0.0
    %6662 = vmatprep.subr.mxu0 0.0
    %6663 = vmatpush1.msra.mxu0 0.0
    %6664 = vmatprep.subr.mxu0 0.0
    %6665 = vmatpush1.msra.mxu0 0.0
    %6666 = vmatprep.subr.mxu0 0.0
    %6667 = vmatpush1.msra.mxu0 0.0
    %6668 = vmatprep.subr.mxu0 0.0
    %6669 = vmatpush1.msra.mxu0 0.0
    %6670 = vmatprep.subr.mxu0 0.0
    %6671 = vmatpush1.msra.mxu0 0.0
    %6672 = vmatprep.subr.mxu0 0.0
    %6673 = vmatpush1.msra.mxu0 0.0
    %6674 = vmatprep.subr.mxu0 0.0
    %6675 = vmatpush1.msra.mxu0 0.0
    %6676 = vmatprep.subr.mxu0 0.0
    %6677 = vmatpush1.msra.mxu0 0.0
    %6678 = vmatprep.subr.mxu0 0.0
    %6679 = vmatpush1.msra.mxu0 0.0
    %6680 = vmatprep.subr.mxu0 0.0
    %v6681 = vand.u32 %v5899, 4294901760
    %v6682 = vsub.f32 %v5899, %v6681
    %v6683 = vand.u32 %v6682, 4294901760
    %v6684 = vsub.f32 %v6682, %v6683
    %v6685 = vand.u32 %v6684, 4294901760
    %6686 = vmatpush1.msra.mxu0 %v6685
    %6687 = vmatprep.subr.mxu0 0.0
    %v6688 = vand.u32 %v5898, 4294901760
    %v6689 = vsub.f32 %v5898, %v6688
    %v6690 = vand.u32 %v6689, 4294901760
    %v6691 = vsub.f32 %v6689, %v6690
    %v6692 = vand.u32 %v6691, 4294901760
    %6693 = vmatpush1.msra.mxu0 %v6692
    %6694 = vmatprep.subr.mxu0 0.0
    %v6695 = vand.u32 %v5897, 4294901760
    %v6696 = vsub.f32 %v5897, %v6695
    %v6697 = vand.u32 %v6696, 4294901760
    %v6698 = vsub.f32 %v6696, %v6697
    %v6699 = vand.u32 %v6698, 4294901760
    %6700 = vmatpush1.msra.mxu0 %v6699
    %6701 = vmatprep.subr.mxu0 0.0
    %v6702 = vand.u32 %v5896, 4294901760
    %v6703 = vsub.f32 %v5896, %v6702
    %v6704 = vand.u32 %v6703, 4294901760
    %v6705 = vsub.f32 %v6703, %v6704
    %v6706 = vand.u32 %v6705, 4294901760
    %6707 = vmatpush1.msra.mxu0 %v6706
    %6708 = vmatprep.subr.mxu0 0.0
    %6709 = vmatpush2.msra.mxu0 0.0
    %6710 = vmatprep.subr.mxu0 0.0
    %6711 = vmatpush2.msra.mxu0 0.0
    %6712 = vmatprep.subr.mxu0 0.0
    %6713 = vmatpush2.msra.mxu0 0.0
    %6714 = vmatprep.subr.mxu0 0.0
    %6715 = vmatpush2.msra.mxu0 0.0
    %6716 = vmatprep.subr.mxu0 0.0
    %6717 = vmatpush2.msra.mxu0 0.0
    %6718 = vmatprep.subr.mxu0 0.0
    %6719 = vmatpush2.msra.mxu0 0.0
    %6720 = vmatprep.subr.mxu0 0.0
    %6721 = vmatpush2.msra.mxu0 0.0
    %6722 = vmatprep.subr.mxu0 0.0
    %6723 = vmatpush2.msra.mxu0 0.0
    %6724 = vmatprep.subr.mxu0 0.0
    %6725 = vmatpush2.msra.mxu0 0.0
    %6726 = vmatprep.subr.mxu0 0.0
    %6727 = vmatpush2.msra.mxu0 0.0
    %6728 = vmatprep.subr.mxu0 0.0
    %6729 = vmatpush2.msra.mxu0 0.0
    %6730 = vmatprep.subr.mxu0 0.0
    %6731 = vmatpush2.msra.mxu0 0.0
    %6732 = vmatprep.subr.mxu0 0.0
    %6733 = vmatpush2.msra.mxu0 0.0
    %6734 = vmatprep.subr.mxu0 0.0
    %6735 = vmatpush2.msra.mxu0 0.0
    %6736 = vmatprep.subr.mxu0 0.0
    %6737 = vmatpush2.msra.mxu0 0.0
    %6738 = vmatprep.subr.mxu0 0.0
    %6739 = vmatpush2.msra.mxu0 0.0
    %6740 = vmatprep.mubr.f32.mxu0 0.0
    %v6741 = vand.u32 %v6536, 4294901760
    %6742 = vmatmul.mubr.f32.gmra.mxu0 %v6741
    %v6743 = vpop.f32.mrf.mxu0
    %v6744 = vadd.f32 %v6623, %v6743
    %v6745 = vpop.f32.mrf.mxu0
    %6746 = vmatprep.mubr.f32.mxu0 0.0
    %v6747 = vand.u32 %v6539, 4294901760
    %6748 = vmatmul.mubr.f32.gmra.mxu0 %v6747
    %v6749 = vpop.f32.mrf.mxu0
    %v6750 = vadd.f32 %v6633, %v6749
    %v6751 = vpop.f32.mrf.mxu0
    %6752 = vmatprep.mubr.f32.mxu0 0.0
    %v6753 = vand.u32 %v6542, 4294901760
    %6754 = vmatmul.mubr.f32.gmra.mxu0 %v6753
    %v6755 = vpop.f32.mrf.mxu0
    %v6756 = vadd.f32 %v6643, %v6755
    %v6757 = vpop.f32.mrf.mxu0
    %6758 = vmatprep.mubr.f32.mxu0 0.0
    %v6759 = vand.u32 %v6545, 4294901760
    %6760 = vmatmul.mubr.f32.gmra.mxu0 %v6759
    %v6761 = vpop.f32.mrf.mxu0
    %v6762 = vadd.f32 %v6653, %v6761
    %v6763 = vpop.f32.mrf.mxu0
    %6764 = vdwg.mxu0
    %6765 = vmatprep.subr.mxu0 0.0
    %6766 = vmatpush1.msra.mxu0 0.0
    %6767 = vmatprep.subr.mxu0 0.0
    %6768 = vmatpush1.msra.mxu0 0.0
    %6769 = vmatprep.subr.mxu0 0.0
    %6770 = vmatpush1.msra.mxu0 0.0
    %6771 = vmatprep.subr.mxu0 0.0
    %6772 = vmatpush1.msra.mxu0 0.0
    %6773 = vmatprep.subr.mxu0 0.0
    %6774 = vmatpush1.msra.mxu0 0.0
    %6775 = vmatprep.subr.mxu0 0.0
    %6776 = vmatpush1.msra.mxu0 0.0
    %6777 = vmatprep.subr.mxu0 0.0
    %6778 = vmatpush1.msra.mxu0 0.0
    %6779 = vmatprep.subr.mxu0 0.0
    %6780 = vmatpush1.msra.mxu0 0.0
    %6781 = vmatprep.subr.mxu0 0.0
    %6782 = vmatpush1.msra.mxu0 0.0
    %6783 = vmatprep.subr.mxu0 0.0
    %6784 = vmatpush1.msra.mxu0 0.0
    %6785 = vmatprep.subr.mxu0 0.0
    %6786 = vmatpush1.msra.mxu0 0.0
    %6787 = vmatprep.subr.mxu0 0.0
    %6788 = vmatpush1.msra.mxu0 0.0
    %6789 = vmatprep.subr.mxu0 0.0
    %v6790 = vand.u32 %v5899, 4294901760
    %v6791 = vsub.f32 %v5899, %v6790
    %6792 = vmatpush1.msra.mxu0 %v6791
    %6793 = vmatprep.subr.mxu0 0.0
    %v6794 = vand.u32 %v5898, 4294901760
    %v6795 = vsub.f32 %v5898, %v6794
    %6796 = vmatpush1.msra.mxu0 %v6795
    %6797 = vmatprep.subr.mxu0 0.0
    %v6798 = vand.u32 %v5897, 4294901760
    %v6799 = vsub.f32 %v5897, %v6798
    %6800 = vmatpush1.msra.mxu0 %v6799
    %6801 = vmatprep.subr.mxu0 0.0
    %v6802 = vand.u32 %v5896, 4294901760
    %v6803 = vsub.f32 %v5896, %v6802
    %6804 = vmatpush1.msra.mxu0 %v6803
    %6805 = vmatprep.subr.mxu0 0.0
    %6806 = vmatpush2.msra.mxu0 0.0
    %6807 = vmatprep.subr.mxu0 0.0
    %6808 = vmatpush2.msra.mxu0 0.0
    %6809 = vmatprep.subr.mxu0 0.0
    %6810 = vmatpush2.msra.mxu0 0.0
    %6811 = vmatprep.subr.mxu0 0.0
    %6812 = vmatpush2.msra.mxu0 0.0
    %6813 = vmatprep.subr.mxu0 0.0
    %6814 = vmatpush2.msra.mxu0 0.0
    %6815 = vmatprep.subr.mxu0 0.0
    %6816 = vmatpush2.msra.mxu0 0.0
    %6817 = vmatprep.subr.mxu0 0.0
    %6818 = vmatpush2.msra.mxu0 0.0
    %6819 = vmatprep.subr.mxu0 0.0
    %6820 = vmatpush2.msra.mxu0 0.0
    %6821 = vmatprep.subr.mxu0 0.0
    %6822 = vmatpush2.msra.mxu0 0.0
    %6823 = vmatprep.subr.mxu0 0.0
    %6824 = vmatpush2.msra.mxu0 0.0
    %6825 = vmatprep.subr.mxu0 0.0
    %6826 = vmatpush2.msra.mxu0 0.0
    %6827 = vmatprep.subr.mxu0 0.0
    %6828 = vmatpush2.msra.mxu0 0.0
    %6829 = vmatprep.subr.mxu0 0.0
    %6830 = vmatpush2.msra.mxu0 0.0
    %6831 = vmatprep.subr.mxu0 0.0
    %6832 = vmatpush2.msra.mxu0 0.0
    %6833 = vmatprep.subr.mxu0 0.0
    %6834 = vmatpush2.msra.mxu0 0.0
    %6835 = vmatprep.subr.mxu0 0.0
    %6836 = vmatpush2.msra.mxu0 0.0
    %6837 = vmatprep.mubr.f32.mxu0 0.0
    %v6838 = vand.u32 %v6536, 4294901760
    %v6839 = vsub.f32 %v6536, %v6838
    %6840 = vmatmul.mubr.f32.gmra.mxu0 %v6839
    %v6841 = vpop.f32.mrf.mxu0
    %v6842 = vadd.f32 %v6744, %v6841
    %v6843 = vpop.f32.mrf.mxu0
    %6844 = vmatprep.mubr.f32.mxu0 0.0
    %v6845 = vand.u32 %v6539, 4294901760
    %v6846 = vsub.f32 %v6539, %v6845
    %6847 = vmatmul.mubr.f32.gmra.mxu0 %v6846
    %v6848 = vpop.f32.mrf.mxu0
    %v6849 = vadd.f32 %v6750, %v6848
    %v6850 = vpop.f32.mrf.mxu0
    %6851 = vmatprep.mubr.f32.mxu0 0.0
    %v6852 = vand.u32 %v6542, 4294901760
    %v6853 = vsub.f32 %v6542, %v6852
    %6854 = vmatmul.mubr.f32.gmra.mxu0 %v6853
    %v6855 = vpop.f32.mrf.mxu0
    %v6856 = vadd.f32 %v6756, %v6855
    %v6857 = vpop.f32.mrf.mxu0
    %6858 = vmatprep.mubr.f32.mxu0 0.0
    %v6859 = vand.u32 %v6545, 4294901760
    %v6860 = vsub.f32 %v6545, %v6859
    %6861 = vmatmul.mubr.f32.gmra.mxu0 %v6860
    %v6862 = vpop.f32.mrf.mxu0
    %v6863 = vadd.f32 %v6762, %v6862
    %v6864 = vpop.f32.mrf.mxu0
    %6865 = vdwg.mxu0
    %6866 = vmatprep.subr.mxu0 0.0
    %6867 = vmatpush1.msra.mxu0 0.0
    %6868 = vmatprep.subr.mxu0 0.0
    %6869 = vmatpush1.msra.mxu0 0.0
    %6870 = vmatprep.subr.mxu0 0.0
    %6871 = vmatpush1.msra.mxu0 0.0
    %6872 = vmatprep.subr.mxu0 0.0
    %6873 = vmatpush1.msra.mxu0 0.0
    %6874 = vmatprep.subr.mxu0 0.0
    %6875 = vmatpush1.msra.mxu0 0.0
    %6876 = vmatprep.subr.mxu0 0.0
    %6877 = vmatpush1.msra.mxu0 0.0
    %6878 = vmatprep.subr.mxu0 0.0
    %6879 = vmatpush1.msra.mxu0 0.0
    %6880 = vmatprep.subr.mxu0 0.0
    %6881 = vmatpush1.msra.mxu0 0.0
    %6882 = vmatprep.subr.mxu0 0.0
    %6883 = vmatpush1.msra.mxu0 0.0
    %6884 = vmatprep.subr.mxu0 0.0
    %6885 = vmatpush1.msra.mxu0 0.0
    %6886 = vmatprep.subr.mxu0 0.0
    %6887 = vmatpush1.msra.mxu0 0.0
    %6888 = vmatprep.subr.mxu0 0.0
    %6889 = vmatpush1.msra.mxu0 0.0
    %6890 = vmatprep.subr.mxu0 0.0
    %v6891 = vand.u32 %v5899, 4294901760
    %6892 = vmatpush1.msra.mxu0 %v6891
    %6893 = vmatprep.subr.mxu0 0.0
    %v6894 = vand.u32 %v5898, 4294901760
    %6895 = vmatpush1.msra.mxu0 %v6894
    %6896 = vmatprep.subr.mxu0 0.0
    %v6897 = vand.u32 %v5897, 4294901760
    %6898 = vmatpush1.msra.mxu0 %v6897
    %6899 = vmatprep.subr.mxu0 0.0
    %v6900 = vand.u32 %v5896, 4294901760
    %6901 = vmatpush1.msra.mxu0 %v6900
    %6902 = vmatprep.subr.mxu0 0.0
    %6903 = vmatpush2.msra.mxu0 0.0
    %6904 = vmatprep.subr.mxu0 0.0
    %6905 = vmatpush2.msra.mxu0 0.0
    %6906 = vmatprep.subr.mxu0 0.0
    %6907 = vmatpush2.msra.mxu0 0.0
    %6908 = vmatprep.subr.mxu0 0.0
    %6909 = vmatpush2.msra.mxu0 0.0
    %6910 = vmatprep.subr.mxu0 0.0
    %6911 = vmatpush2.msra.mxu0 0.0
    %6912 = vmatprep.subr.mxu0 0.0
    %6913 = vmatpush2.msra.mxu0 0.0
    %6914 = vmatprep.subr.mxu0 0.0
    %6915 = vmatpush2.msra.mxu0 0.0
    %6916 = vmatprep.subr.mxu0 0.0
    %6917 = vmatpush2.msra.mxu0 0.0
    %6918 = vmatprep.subr.mxu0 0.0
    %6919 = vmatpush2.msra.mxu0 0.0
    %6920 = vmatprep.subr.mxu0 0.0
    %6921 = vmatpush2.msra.mxu0 0.0
    %6922 = vmatprep.subr.mxu0 0.0
    %6923 = vmatpush2.msra.mxu0 0.0
    %6924 = vmatprep.subr.mxu0 0.0
    %6925 = vmatpush2.msra.mxu0 0.0
    %6926 = vmatprep.subr.mxu0 0.0
    %6927 = vmatpush2.msra.mxu0 0.0
    %6928 = vmatprep.subr.mxu0 0.0
    %6929 = vmatpush2.msra.mxu0 0.0
    %6930 = vmatprep.subr.mxu0 0.0
    %6931 = vmatpush2.msra.mxu0 0.0
    %6932 = vmatprep.subr.mxu0 0.0
    %6933 = vmatpush2.msra.mxu0 0.0
    %6934 = vmatprep.mubr.f32.mxu0 0.0
    %v6935 = vand.u32 %v6536, 4294901760
    %v6936 = vsub.f32 %v6536, %v6935
    %v6937 = vand.u32 %v6936, 4294901760
    %6938 = vmatmul.mubr.f32.gmra.mxu0 %v6937
    %v6939 = vpop.f32.mrf.mxu0
    %v6940 = vadd.f32 %v6842, %v6939
    %v6941 = vpop.f32.mrf.mxu0
    %6942 = vmatprep.mubr.f32.mxu0 0.0
    %v6943 = vand.u32 %v6539, 4294901760
    %v6944 = vsub.f32 %v6539, %v6943
    %v6945 = vand.u32 %v6944, 4294901760
    %6946 = vmatmul.mubr.f32.gmra.mxu0 %v6945
    %v6947 = vpop.f32.mrf.mxu0
    %v6948 = vadd.f32 %v6849, %v6947
    %v6949 = vpop.f32.mrf.mxu0
    %6950 = vmatprep.mubr.f32.mxu0 0.0
    %v6951 = vand.u32 %v6542, 4294901760
    %v6952 = vsub.f32 %v6542, %v6951
    %v6953 = vand.u32 %v6952, 4294901760
    %6954 = vmatmul.mubr.f32.gmra.mxu0 %v6953
    %v6955 = vpop.f32.mrf.mxu0
    %v6956 = vadd.f32 %v6856, %v6955
    %v6957 = vpop.f32.mrf.mxu0
    %6958 = vmatprep.mubr.f32.mxu0 0.0
    %v6959 = vand.u32 %v6545, 4294901760
    %v6960 = vsub.f32 %v6545, %v6959
    %v6961 = vand.u32 %v6960, 4294901760
    %6962 = vmatmul.mubr.f32.gmra.mxu0 %v6961
    %v6963 = vpop.f32.mrf.mxu0
    %v6964 = vadd.f32 %v6863, %v6963
    %v6965 = vpop.f32.mrf.mxu0
    %6966 = vdwg.mxu0
    %6967 = vmatprep.subr.mxu0 0.0
    %6968 = vmatpush1.msra.mxu0 0.0
    %6969 = vmatprep.subr.mxu0 0.0
    %6970 = vmatpush1.msra.mxu0 0.0
    %6971 = vmatprep.subr.mxu0 0.0
    %6972 = vmatpush1.msra.mxu0 0.0
    %6973 = vmatprep.subr.mxu0 0.0
    %6974 = vmatpush1.msra.mxu0 0.0
    %6975 = vmatprep.subr.mxu0 0.0
    %6976 = vmatpush1.msra.mxu0 0.0
    %6977 = vmatprep.subr.mxu0 0.0
    %6978 = vmatpush1.msra.mxu0 0.0
    %6979 = vmatprep.subr.mxu0 0.0
    %6980 = vmatpush1.msra.mxu0 0.0
    %6981 = vmatprep.subr.mxu0 0.0
    %6982 = vmatpush1.msra.mxu0 0.0
    %6983 = vmatprep.subr.mxu0 0.0
    %6984 = vmatpush1.msra.mxu0 0.0
    %6985 = vmatprep.subr.mxu0 0.0
    %6986 = vmatpush1.msra.mxu0 0.0
    %6987 = vmatprep.subr.mxu0 0.0
    %6988 = vmatpush1.msra.mxu0 0.0
    %6989 = vmatprep.subr.mxu0 0.0
    %6990 = vmatpush1.msra.mxu0 0.0
    %6991 = vmatprep.subr.mxu0 0.0
    %v6992 = vand.u32 %v5899, 4294901760
    %v6993 = vsub.f32 %v5899, %v6992
    %v6994 = vand.u32 %v6993, 4294901760
    %6995 = vmatpush1.msra.mxu0 %v6994
    %6996 = vmatprep.subr.mxu0 0.0
    %v6997 = vand.u32 %v5898, 4294901760
    %v6998 = vsub.f32 %v5898, %v6997
    %v6999 = vand.u32 %v6998, 4294901760
    %7000 = vmatpush1.msra.mxu0 %v6999
    %7001 = vmatprep.subr.mxu0 0.0
    %v7002 = vand.u32 %v5897, 4294901760
    %v7003 = vsub.f32 %v5897, %v7002
    %v7004 = vand.u32 %v7003, 4294901760
    %7005 = vmatpush1.msra.mxu0 %v7004
    %7006 = vmatprep.subr.mxu0 0.0
    %v7007 = vand.u32 %v5896, 4294901760
    %v7008 = vsub.f32 %v5896, %v7007
    %v7009 = vand.u32 %v7008, 4294901760
    %7010 = vmatpush1.msra.mxu0 %v7009
    %7011 = vmatprep.subr.mxu0 0.0
    %7012 = vmatpush2.msra.mxu0 0.0
    %7013 = vmatprep.subr.mxu0 0.0
    %7014 = vmatpush2.msra.mxu0 0.0
    %7015 = vmatprep.subr.mxu0 0.0
    %7016 = vmatpush2.msra.mxu0 0.0
    %7017 = vmatprep.subr.mxu0 0.0
    %7018 = vmatpush2.msra.mxu0 0.0
    %7019 = vmatprep.subr.mxu0 0.0
    %7020 = vmatpush2.msra.mxu0 0.0
    %7021 = vmatprep.subr.mxu0 0.0
    %7022 = vmatpush2.msra.mxu0 0.0
    %7023 = vmatprep.subr.mxu0 0.0
    %7024 = vmatpush2.msra.mxu0 0.0
    %7025 = vmatprep.subr.mxu0 0.0
    %7026 = vmatpush2.msra.mxu0 0.0
    %7027 = vmatprep.subr.mxu0 0.0
    %7028 = vmatpush2.msra.mxu0 0.0
    %7029 = vmatprep.subr.mxu0 0.0
    %7030 = vmatpush2.msra.mxu0 0.0
    %7031 = vmatprep.subr.mxu0 0.0
    %7032 = vmatpush2.msra.mxu0 0.0
    %7033 = vmatprep.subr.mxu0 0.0
    %7034 = vmatpush2.msra.mxu0 0.0
    %7035 = vmatprep.subr.mxu0 0.0
    %7036 = vmatpush2.msra.mxu0 0.0
    %7037 = vmatprep.subr.mxu0 0.0
    %7038 = vmatpush2.msra.mxu0 0.0
    %7039 = vmatprep.subr.mxu0 0.0
    %7040 = vmatpush2.msra.mxu0 0.0
    %7041 = vmatprep.subr.mxu0 0.0
    %7042 = vmatpush2.msra.mxu0 0.0
    %7043 = vmatprep.mubr.f32.mxu0 0.0
    %v7044 = vand.u32 %v6536, 4294901760
    %7045 = vmatmul.mubr.f32.gmra.mxu0 %v7044
    %v7046 = vpop.f32.mrf.mxu0
    %v7047 = vadd.f32 %v6940, %v7046
    %v7048 = vpop.f32.mrf.mxu0
    %7049 = vmatprep.mubr.f32.mxu0 0.0
    %v7050 = vand.u32 %v6539, 4294901760
    %7051 = vmatmul.mubr.f32.gmra.mxu0 %v7050
    %v7052 = vpop.f32.mrf.mxu0
    %v7053 = vadd.f32 %v6948, %v7052
    %v7054 = vpop.f32.mrf.mxu0
    %7055 = vmatprep.mubr.f32.mxu0 0.0
    %v7056 = vand.u32 %v6542, 4294901760
    %7057 = vmatmul.mubr.f32.gmra.mxu0 %v7056
    %v7058 = vpop.f32.mrf.mxu0
    %v7059 = vadd.f32 %v6956, %v7058
    %v7060 = vpop.f32.mrf.mxu0
    %7061 = vmatprep.mubr.f32.mxu0 0.0
    %v7062 = vand.u32 %v6545, 4294901760
    %7063 = vmatmul.mubr.f32.gmra.mxu0 %v7062
    %v7064 = vpop.f32.mrf.mxu0
    %v7065 = vadd.f32 %v6964, %v7064
    %v7066 = vpop.f32.mrf.mxu0
    %7067 = vdwg.mxu0
    %7068 = vmatprep.subr.mxu0 0.0
    %7069 = vmatpush1.msra.mxu0 0.0
    %7070 = vmatprep.subr.mxu0 0.0
    %7071 = vmatpush1.msra.mxu0 0.0
    %7072 = vmatprep.subr.mxu0 0.0
    %7073 = vmatpush1.msra.mxu0 0.0
    %7074 = vmatprep.subr.mxu0 0.0
    %7075 = vmatpush1.msra.mxu0 0.0
    %7076 = vmatprep.subr.mxu0 0.0
    %7077 = vmatpush1.msra.mxu0 0.0
    %7078 = vmatprep.subr.mxu0 0.0
    %7079 = vmatpush1.msra.mxu0 0.0
    %7080 = vmatprep.subr.mxu0 0.0
    %7081 = vmatpush1.msra.mxu0 0.0
    %7082 = vmatprep.subr.mxu0 0.0
    %7083 = vmatpush1.msra.mxu0 0.0
    %7084 = vmatprep.subr.mxu0 0.0
    %7085 = vmatpush1.msra.mxu0 0.0
    %7086 = vmatprep.subr.mxu0 0.0
    %7087 = vmatpush1.msra.mxu0 0.0
    %7088 = vmatprep.subr.mxu0 0.0
    %7089 = vmatpush1.msra.mxu0 0.0
    %7090 = vmatprep.subr.mxu0 0.0
    %7091 = vmatpush1.msra.mxu0 0.0
    %7092 = vmatprep.subr.mxu0 0.0
    %v7093 = vand.u32 %v5899, 4294901760
    %7094 = vmatpush1.msra.mxu0 %v7093
    %7095 = vmatprep.subr.mxu0 0.0
    %v7096 = vand.u32 %v5898, 4294901760
    %7097 = vmatpush1.msra.mxu0 %v7096
    %7098 = vmatprep.subr.mxu0 0.0
    %v7099 = vand.u32 %v5897, 4294901760
    %7100 = vmatpush1.msra.mxu0 %v7099
    %7101 = vmatprep.subr.mxu0 0.0
    %v7102 = vand.u32 %v5896, 4294901760
    %7103 = vmatpush1.msra.mxu0 %v7102
    %7104 = vmatprep.subr.mxu0 0.0
    %7105 = vmatpush2.msra.mxu0 0.0
    %7106 = vmatprep.subr.mxu0 0.0
    %7107 = vmatpush2.msra.mxu0 0.0
    %7108 = vmatprep.subr.mxu0 0.0
    %7109 = vmatpush2.msra.mxu0 0.0
    %7110 = vmatprep.subr.mxu0 0.0
    %7111 = vmatpush2.msra.mxu0 0.0
    %7112 = vmatprep.subr.mxu0 0.0
    %7113 = vmatpush2.msra.mxu0 0.0
    %7114 = vmatprep.subr.mxu0 0.0
    %7115 = vmatpush2.msra.mxu0 0.0
    %7116 = vmatprep.subr.mxu0 0.0
    %7117 = vmatpush2.msra.mxu0 0.0
    %7118 = vmatprep.subr.mxu0 0.0
    %7119 = vmatpush2.msra.mxu0 0.0
    %7120 = vmatprep.subr.mxu0 0.0
    %7121 = vmatpush2.msra.mxu0 0.0
    %7122 = vmatprep.subr.mxu0 0.0
    %7123 = vmatpush2.msra.mxu0 0.0
    %7124 = vmatprep.subr.mxu0 0.0
    %7125 = vmatpush2.msra.mxu0 0.0
    %7126 = vmatprep.subr.mxu0 0.0
    %7127 = vmatpush2.msra.mxu0 0.0
    %7128 = vmatprep.subr.mxu0 0.0
    %7129 = vmatpush2.msra.mxu0 0.0
    %7130 = vmatprep.subr.mxu0 0.0
    %7131 = vmatpush2.msra.mxu0 0.0
    %7132 = vmatprep.subr.mxu0 0.0
    %7133 = vmatpush2.msra.mxu0 0.0
    %7134 = vmatprep.subr.mxu0 0.0
    %7135 = vmatpush2.msra.mxu0 0.0
    %7136 = vmatprep.mubr.f32.mxu0 0.0
    %v7137 = vand.u32 %v6536, 4294901760
    %7138 = vmatmul.mubr.f32.gmra.mxu0 %v7137
    %v7139 = vpop.f32.mrf.mxu0
    %v7140 = vadd.f32 %v7047, %v7139
    %v7141 = vpop.f32.mrf.mxu0
    %7142 = vmatprep.mubr.f32.mxu0 0.0
    %v7143 = vand.u32 %v6539, 4294901760
    %7144 = vmatmul.mubr.f32.gmra.mxu0 %v7143
    %v7145 = vpop.f32.mrf.mxu0
    %v7146 = vadd.f32 %v7053, %v7145
    %v7147 = vpop.f32.mrf.mxu0
    %7148 = vmatprep.mubr.f32.mxu0 0.0
    %v7149 = vand.u32 %v6542, 4294901760
    %7150 = vmatmul.mubr.f32.gmra.mxu0 %v7149
    %v7151 = vpop.f32.mrf.mxu0
    %v7152 = vadd.f32 %v7059, %v7151
    %v7153 = vpop.f32.mrf.mxu0
    %7154 = vmatprep.mubr.f32.mxu0 0.0
    %v7155 = vand.u32 %v6545, 4294901760
    %7156 = vmatmul.mubr.f32.gmra.mxu0 %v7155
    %v7157 = vpop.f32.mrf.mxu0
    %v7158 = vadd.f32 %v7065, %v7157
    %v7159 = vpop.f32.mrf.mxu0
    %7160 = vdwg.mxu0
    %v7161 = vld [vmem:[#allocation2 + $0x4] sm:$0xff]
    %v7162 = vld [vmem:[#allocation2 + $0xc] sm:$0xff]
    %v7163 = vld [vmem:[#allocation2 + $0x24] sm:$0xff]
    %v7164 = vld [vmem:[#allocation2 + $0x2c] sm:$0xff]
    %s7165 = scalar_lea.vmem [#allocation8], 352
    %v7166 = vld [vmem:[%s7165] sm:$0xff]
    %v7167 = vld [vmem:[%s7165 + $0x8] sm:$0xff]
    %v7168 = vld [vmem:[%s7165 + $0x10] sm:$0xff]
    %v7169 = vld [vmem:[%s7165 + $0x18] sm:$0xff]
    %v7171 = vsel %vm57, %v7161, 0
    %v7174 = vsel %vm57, %v7162, 0
    %v7177 = vsel %vm57, %v7163, 0
    %v7180 = vsel %vm57, %v7164, 0
    %7182 = vmatprep.subr.mxu0 0.0
    %7183 = vmatpush1.msra.mxu0 0.0
    %7184 = vmatprep.subr.mxu0 0.0
    %7185 = vmatpush1.msra.mxu0 0.0
    %7186 = vmatprep.subr.mxu0 0.0
    %7187 = vmatpush1.msra.mxu0 0.0
    %7188 = vmatprep.subr.mxu0 0.0
    %7189 = vmatpush1.msra.mxu0 0.0
    %7190 = vmatprep.subr.mxu0 0.0
    %7191 = vmatpush1.msra.mxu0 0.0
    %7192 = vmatprep.subr.mxu0 0.0
    %7193 = vmatpush1.msra.mxu0 0.0
    %7194 = vmatprep.subr.mxu0 0.0
    %7195 = vmatpush1.msra.mxu0 0.0
    %7196 = vmatprep.subr.mxu0 0.0
    %7197 = vmatpush1.msra.mxu0 0.0
    %7198 = vmatprep.subr.mxu0 0.0
    %7199 = vmatpush1.msra.mxu0 0.0
    %7200 = vmatprep.subr.mxu0 0.0
    %7201 = vmatpush1.msra.mxu0 0.0
    %7202 = vmatprep.subr.mxu0 0.0
    %7203 = vmatpush1.msra.mxu0 0.0
    %7204 = vmatprep.subr.mxu0 0.0
    %7205 = vmatpush1.msra.mxu0 0.0
    %7206 = vmatprep.subr.mxu0 0.0
    %v7207 = vand.u32 %v7169, 4294901760
    %7208 = vmatpush1.msra.mxu0 %v7207
    %7209 = vmatprep.subr.mxu0 0.0
    %v7210 = vand.u32 %v7168, 4294901760
    %7211 = vmatpush1.msra.mxu0 %v7210
    %7212 = vmatprep.subr.mxu0 0.0
    %v7213 = vand.u32 %v7167, 4294901760
    %7214 = vmatpush1.msra.mxu0 %v7213
    %7215 = vmatprep.subr.mxu0 0.0
    %v7216 = vand.u32 %v7166, 4294901760
    %7217 = vmatpush1.msra.mxu0 %v7216
    %7218 = vmatprep.subr.mxu0 0.0
    %7219 = vmatpush2.msra.mxu0 0.0
    %7220 = vmatprep.subr.mxu0 0.0
    %7221 = vmatpush2.msra.mxu0 0.0
    %7222 = vmatprep.subr.mxu0 0.0
    %7223 = vmatpush2.msra.mxu0 0.0
    %7224 = vmatprep.subr.mxu0 0.0
    %7225 = vmatpush2.msra.mxu0 0.0
    %7226 = vmatprep.subr.mxu0 0.0
    %7227 = vmatpush2.msra.mxu0 0.0
    %7228 = vmatprep.subr.mxu0 0.0
    %7229 = vmatpush2.msra.mxu0 0.0
    %7230 = vmatprep.subr.mxu0 0.0
    %7231 = vmatpush2.msra.mxu0 0.0
    %7232 = vmatprep.subr.mxu0 0.0
    %7233 = vmatpush2.msra.mxu0 0.0
    %7234 = vmatprep.subr.mxu0 0.0
    %7235 = vmatpush2.msra.mxu0 0.0
    %7236 = vmatprep.subr.mxu0 0.0
    %7237 = vmatpush2.msra.mxu0 0.0
    %7238 = vmatprep.subr.mxu0 0.0
    %7239 = vmatpush2.msra.mxu0 0.0
    %7240 = vmatprep.subr.mxu0 0.0
    %7241 = vmatpush2.msra.mxu0 0.0
    %7242 = vmatprep.subr.mxu0 0.0
    %7243 = vmatpush2.msra.mxu0 0.0
    %7244 = vmatprep.subr.mxu0 0.0
    %7245 = vmatpush2.msra.mxu0 0.0
    %7246 = vmatprep.subr.mxu0 0.0
    %7247 = vmatpush2.msra.mxu0 0.0
    %7248 = vmatprep.subr.mxu0 0.0
    %7249 = vmatpush2.msra.mxu0 0.0
    %7250 = vmatprep.mubr.f32.mxu0 0.0
    %v7251 = vand.u32 %v7171, 4294901760
    %v7252 = vsub.f32 %v7171, %v7251
    %v7253 = vand.u32 %v7252, 4294901760
    %v7254 = vsub.f32 %v7252, %v7253
    %v7255 = vand.u32 %v7254, 4294901760
    %7256 = vmatmul.mubr.f32.gmra.mxu0 %v7255
    %v7257 = vpop.f32.mrf.mxu0
    %v7258 = vadd.f32 0.0, %v7257
    %v7259 = vpop.f32.mrf.mxu0
    %7260 = vmatprep.mubr.f32.mxu0 0.0
    %v7261 = vand.u32 %v7174, 4294901760
    %v7262 = vsub.f32 %v7174, %v7261
    %v7263 = vand.u32 %v7262, 4294901760
    %v7264 = vsub.f32 %v7262, %v7263
    %v7265 = vand.u32 %v7264, 4294901760
    %7266 = vmatmul.mubr.f32.gmra.mxu0 %v7265
    %v7267 = vpop.f32.mrf.mxu0
    %v7268 = vadd.f32 0.0, %v7267
    %v7269 = vpop.f32.mrf.mxu0
    %7270 = vmatprep.mubr.f32.mxu0 0.0
    %v7271 = vand.u32 %v7177, 4294901760
    %v7272 = vsub.f32 %v7177, %v7271
    %v7273 = vand.u32 %v7272, 4294901760
    %v7274 = vsub.f32 %v7272, %v7273
    %v7275 = vand.u32 %v7274, 4294901760
    %7276 = vmatmul.mubr.f32.gmra.mxu0 %v7275
    %v7277 = vpop.f32.mrf.mxu0
    %v7278 = vadd.f32 0.0, %v7277
    %v7279 = vpop.f32.mrf.mxu0
    %7280 = vmatprep.mubr.f32.mxu0 0.0
    %v7281 = vand.u32 %v7180, 4294901760
    %v7282 = vsub.f32 %v7180, %v7281
    %v7283 = vand.u32 %v7282, 4294901760
    %v7284 = vsub.f32 %v7282, %v7283
    %v7285 = vand.u32 %v7284, 4294901760
    %7286 = vmatmul.mubr.f32.gmra.mxu0 %v7285
    %v7287 = vpop.f32.mrf.mxu0
    %v7288 = vadd.f32 0.0, %v7287
    %v7289 = vpop.f32.mrf.mxu0
    %7290 = vdwg.mxu0
    %7291 = vmatprep.subr.mxu0 0.0
    %7292 = vmatpush1.msra.mxu0 0.0
    %7293 = vmatprep.subr.mxu0 0.0
    %7294 = vmatpush1.msra.mxu0 0.0
    %7295 = vmatprep.subr.mxu0 0.0
    %7296 = vmatpush1.msra.mxu0 0.0
    %7297 = vmatprep.subr.mxu0 0.0
    %7298 = vmatpush1.msra.mxu0 0.0
    %7299 = vmatprep.subr.mxu0 0.0
    %7300 = vmatpush1.msra.mxu0 0.0
    %7301 = vmatprep.subr.mxu0 0.0
    %7302 = vmatpush1.msra.mxu0 0.0
    %7303 = vmatprep.subr.mxu0 0.0
    %7304 = vmatpush1.msra.mxu0 0.0
    %7305 = vmatprep.subr.mxu0 0.0
    %7306 = vmatpush1.msra.mxu0 0.0
    %7307 = vmatprep.subr.mxu0 0.0
    %7308 = vmatpush1.msra.mxu0 0.0
    %7309 = vmatprep.subr.mxu0 0.0
    %7310 = vmatpush1.msra.mxu0 0.0
    %7311 = vmatprep.subr.mxu0 0.0
    %7312 = vmatpush1.msra.mxu0 0.0
    %7313 = vmatprep.subr.mxu0 0.0
    %7314 = vmatpush1.msra.mxu0 0.0
    %7315 = vmatprep.subr.mxu0 0.0
    %v7316 = vand.u32 %v7169, 4294901760
    %v7317 = vsub.f32 %v7169, %v7316
    %v7318 = vand.u32 %v7317, 4294901760
    %v7319 = vsub.f32 %v7317, %v7318
    %v7320 = vand.u32 %v7319, 4294901760
    %7321 = vmatpush1.msra.mxu0 %v7320
    %7322 = vmatprep.subr.mxu0 0.0
    %v7323 = vand.u32 %v7168, 4294901760
    %v7324 = vsub.f32 %v7168, %v7323
    %v7325 = vand.u32 %v7324, 4294901760
    %v7326 = vsub.f32 %v7324, %v7325
    %v7327 = vand.u32 %v7326, 4294901760
    %7328 = vmatpush1.msra.mxu0 %v7327
    %7329 = vmatprep.subr.mxu0 0.0
    %v7330 = vand.u32 %v7167, 4294901760
    %v7331 = vsub.f32 %v7167, %v7330
    %v7332 = vand.u32 %v7331, 4294901760
    %v7333 = vsub.f32 %v7331, %v7332
    %v7334 = vand.u32 %v7333, 4294901760
    %7335 = vmatpush1.msra.mxu0 %v7334
    %7336 = vmatprep.subr.mxu0 0.0
    %v7337 = vand.u32 %v7166, 4294901760
    %v7338 = vsub.f32 %v7166, %v7337
    %v7339 = vand.u32 %v7338, 4294901760
    %v7340 = vsub.f32 %v7338, %v7339
    %v7341 = vand.u32 %v7340, 4294901760
    %7342 = vmatpush1.msra.mxu0 %v7341
    %7343 = vmatprep.subr.mxu0 0.0
    %7344 = vmatpush2.msra.mxu0 0.0
    %7345 = vmatprep.subr.mxu0 0.0
    %7346 = vmatpush2.msra.mxu0 0.0
    %7347 = vmatprep.subr.mxu0 0.0
    %7348 = vmatpush2.msra.mxu0 0.0
    %7349 = vmatprep.subr.mxu0 0.0
    %7350 = vmatpush2.msra.mxu0 0.0
    %7351 = vmatprep.subr.mxu0 0.0
    %7352 = vmatpush2.msra.mxu0 0.0
    %7353 = vmatprep.subr.mxu0 0.0
    %7354 = vmatpush2.msra.mxu0 0.0
    %7355 = vmatprep.subr.mxu0 0.0
    %7356 = vmatpush2.msra.mxu0 0.0
    %7357 = vmatprep.subr.mxu0 0.0
    %7358 = vmatpush2.msra.mxu0 0.0
    %7359 = vmatprep.subr.mxu0 0.0
    %7360 = vmatpush2.msra.mxu0 0.0
    %7361 = vmatprep.subr.mxu0 0.0
    %7362 = vmatpush2.msra.mxu0 0.0
    %7363 = vmatprep.subr.mxu0 0.0
    %7364 = vmatpush2.msra.mxu0 0.0
    %7365 = vmatprep.subr.mxu0 0.0
    %7366 = vmatpush2.msra.mxu0 0.0
    %7367 = vmatprep.subr.mxu0 0.0
    %7368 = vmatpush2.msra.mxu0 0.0
    %7369 = vmatprep.subr.mxu0 0.0
    %7370 = vmatpush2.msra.mxu0 0.0
    %7371 = vmatprep.subr.mxu0 0.0
    %7372 = vmatpush2.msra.mxu0 0.0
    %7373 = vmatprep.subr.mxu0 0.0
    %7374 = vmatpush2.msra.mxu0 0.0
    %7375 = vmatprep.mubr.f32.mxu0 0.0
    %v7376 = vand.u32 %v7171, 4294901760
    %7377 = vmatmul.mubr.f32.gmra.mxu0 %v7376
    %v7378 = vpop.f32.mrf.mxu0
    %v7379 = vadd.f32 %v7258, %v7378
    %v7380 = vpop.f32.mrf.mxu0
    %7381 = vmatprep.mubr.f32.mxu0 0.0
    %v7382 = vand.u32 %v7174, 4294901760
    %7383 = vmatmul.mubr.f32.gmra.mxu0 %v7382
    %v7384 = vpop.f32.mrf.mxu0
    %v7385 = vadd.f32 %v7268, %v7384
    %v7386 = vpop.f32.mrf.mxu0
    %7387 = vmatprep.mubr.f32.mxu0 0.0
    %v7388 = vand.u32 %v7177, 4294901760
    %7389 = vmatmul.mubr.f32.gmra.mxu0 %v7388
    %v7390 = vpop.f32.mrf.mxu0
    %v7391 = vadd.f32 %v7278, %v7390
    %v7392 = vpop.f32.mrf.mxu0
    %7393 = vmatprep.mubr.f32.mxu0 0.0
    %v7394 = vand.u32 %v7180, 4294901760
    %7395 = vmatmul.mubr.f32.gmra.mxu0 %v7394
    %v7396 = vpop.f32.mrf.mxu0
    %v7397 = vadd.f32 %v7288, %v7396
    %v7398 = vpop.f32.mrf.mxu0
    %7399 = vdwg.mxu0
    %7400 = vmatprep.subr.mxu0 0.0
    %7401 = vmatpush1.msra.mxu0 0.0
    %7402 = vmatprep.subr.mxu0 0.0
    %7403 = vmatpush1.msra.mxu0 0.0
    %7404 = vmatprep.subr.mxu0 0.0
    %7405 = vmatpush1.msra.mxu0 0.0
    %7406 = vmatprep.subr.mxu0 0.0
    %7407 = vmatpush1.msra.mxu0 0.0
    %7408 = vmatprep.subr.mxu0 0.0
    %7409 = vmatpush1.msra.mxu0 0.0
    %7410 = vmatprep.subr.mxu0 0.0
    %7411 = vmatpush1.msra.mxu0 0.0
    %7412 = vmatprep.subr.mxu0 0.0
    %7413 = vmatpush1.msra.mxu0 0.0
    %7414 = vmatprep.subr.mxu0 0.0
    %7415 = vmatpush1.msra.mxu0 0.0
    %7416 = vmatprep.subr.mxu0 0.0
    %7417 = vmatpush1.msra.mxu0 0.0
    %7418 = vmatprep.subr.mxu0 0.0
    %7419 = vmatpush1.msra.mxu0 0.0
    %7420 = vmatprep.subr.mxu0 0.0
    %7421 = vmatpush1.msra.mxu0 0.0
    %7422 = vmatprep.subr.mxu0 0.0
    %7423 = vmatpush1.msra.mxu0 0.0
    %7424 = vmatprep.subr.mxu0 0.0
    %v7425 = vand.u32 %v7169, 4294901760
    %v7426 = vsub.f32 %v7169, %v7425
    %7427 = vmatpush1.msra.mxu0 %v7426
    %7428 = vmatprep.subr.mxu0 0.0
    %v7429 = vand.u32 %v7168, 4294901760
    %v7430 = vsub.f32 %v7168, %v7429
    %7431 = vmatpush1.msra.mxu0 %v7430
    %7432 = vmatprep.subr.mxu0 0.0
    %v7433 = vand.u32 %v7167, 4294901760
    %v7434 = vsub.f32 %v7167, %v7433
    %7435 = vmatpush1.msra.mxu0 %v7434
    %7436 = vmatprep.subr.mxu0 0.0
    %v7437 = vand.u32 %v7166, 4294901760
    %v7438 = vsub.f32 %v7166, %v7437
    %7439 = vmatpush1.msra.mxu0 %v7438
    %7440 = vmatprep.subr.mxu0 0.0
    %7441 = vmatpush2.msra.mxu0 0.0
    %7442 = vmatprep.subr.mxu0 0.0
    %7443 = vmatpush2.msra.mxu0 0.0
    %7444 = vmatprep.subr.mxu0 0.0
    %7445 = vmatpush2.msra.mxu0 0.0
    %7446 = vmatprep.subr.mxu0 0.0
    %7447 = vmatpush2.msra.mxu0 0.0
    %7448 = vmatprep.subr.mxu0 0.0
    %7449 = vmatpush2.msra.mxu0 0.0
    %7450 = vmatprep.subr.mxu0 0.0
    %7451 = vmatpush2.msra.mxu0 0.0
    %7452 = vmatprep.subr.mxu0 0.0
    %7453 = vmatpush2.msra.mxu0 0.0
    %7454 = vmatprep.subr.mxu0 0.0
    %7455 = vmatpush2.msra.mxu0 0.0
    %7456 = vmatprep.subr.mxu0 0.0
    %7457 = vmatpush2.msra.mxu0 0.0
    %7458 = vmatprep.subr.mxu0 0.0
    %7459 = vmatpush2.msra.mxu0 0.0
    %7460 = vmatprep.subr.mxu0 0.0
    %7461 = vmatpush2.msra.mxu0 0.0
    %7462 = vmatprep.subr.mxu0 0.0
    %7463 = vmatpush2.msra.mxu0 0.0
    %7464 = vmatprep.subr.mxu0 0.0
    %7465 = vmatpush2.msra.mxu0 0.0
    %7466 = vmatprep.subr.mxu0 0.0
    %7467 = vmatpush2.msra.mxu0 0.0
    %7468 = vmatprep.subr.mxu0 0.0
    %7469 = vmatpush2.msra.mxu0 0.0
    %7470 = vmatprep.subr.mxu0 0.0
    %7471 = vmatpush2.msra.mxu0 0.0
    %7472 = vmatprep.mubr.f32.mxu0 0.0
    %v7473 = vand.u32 %v7171, 4294901760
    %v7474 = vsub.f32 %v7171, %v7473
    %7475 = vmatmul.mubr.f32.gmra.mxu0 %v7474
    %v7476 = vpop.f32.mrf.mxu0
    %v7477 = vadd.f32 %v7379, %v7476
    %v7478 = vpop.f32.mrf.mxu0
    %7479 = vmatprep.mubr.f32.mxu0 0.0
    %v7480 = vand.u32 %v7174, 4294901760
    %v7481 = vsub.f32 %v7174, %v7480
    %7482 = vmatmul.mubr.f32.gmra.mxu0 %v7481
    %v7483 = vpop.f32.mrf.mxu0
    %v7484 = vadd.f32 %v7385, %v7483
    %v7485 = vpop.f32.mrf.mxu0
    %7486 = vmatprep.mubr.f32.mxu0 0.0
    %v7487 = vand.u32 %v7177, 4294901760
    %v7488 = vsub.f32 %v7177, %v7487
    %7489 = vmatmul.mubr.f32.gmra.mxu0 %v7488
    %v7490 = vpop.f32.mrf.mxu0
    %v7491 = vadd.f32 %v7391, %v7490
    %v7492 = vpop.f32.mrf.mxu0
    %7493 = vmatprep.mubr.f32.mxu0 0.0
    %v7494 = vand.u32 %v7180, 4294901760
    %v7495 = vsub.f32 %v7180, %v7494
    %7496 = vmatmul.mubr.f32.gmra.mxu0 %v7495
    %v7497 = vpop.f32.mrf.mxu0
    %v7498 = vadd.f32 %v7397, %v7497
    %v7499 = vpop.f32.mrf.mxu0
    %7500 = vdwg.mxu0
    %7501 = vmatprep.subr.mxu0 0.0
    %7502 = vmatpush1.msra.mxu0 0.0
    %7503 = vmatprep.subr.mxu0 0.0
    %7504 = vmatpush1.msra.mxu0 0.0
    %7505 = vmatprep.subr.mxu0 0.0
    %7506 = vmatpush1.msra.mxu0 0.0
    %7507 = vmatprep.subr.mxu0 0.0
    %7508 = vmatpush1.msra.mxu0 0.0
    %7509 = vmatprep.subr.mxu0 0.0
    %7510 = vmatpush1.msra.mxu0 0.0
    %7511 = vmatprep.subr.mxu0 0.0
    %7512 = vmatpush1.msra.mxu0 0.0
    %7513 = vmatprep.subr.mxu0 0.0
    %7514 = vmatpush1.msra.mxu0 0.0
    %7515 = vmatprep.subr.mxu0 0.0
    %7516 = vmatpush1.msra.mxu0 0.0
    %7517 = vmatprep.subr.mxu0 0.0
    %7518 = vmatpush1.msra.mxu0 0.0
    %7519 = vmatprep.subr.mxu0 0.0
    %7520 = vmatpush1.msra.mxu0 0.0
    %7521 = vmatprep.subr.mxu0 0.0
    %7522 = vmatpush1.msra.mxu0 0.0
    %7523 = vmatprep.subr.mxu0 0.0
    %7524 = vmatpush1.msra.mxu0 0.0
    %7525 = vmatprep.subr.mxu0 0.0
    %v7526 = vand.u32 %v7169, 4294901760
    %7527 = vmatpush1.msra.mxu0 %v7526
    %7528 = vmatprep.subr.mxu0 0.0
    %v7529 = vand.u32 %v7168, 4294901760
    %7530 = vmatpush1.msra.mxu0 %v7529
    %7531 = vmatprep.subr.mxu0 0.0
    %v7532 = vand.u32 %v7167, 4294901760
    %7533 = vmatpush1.msra.mxu0 %v7532
    %7534 = vmatprep.subr.mxu0 0.0
    %v7535 = vand.u32 %v7166, 4294901760
    %7536 = vmatpush1.msra.mxu0 %v7535
    %7537 = vmatprep.subr.mxu0 0.0
    %7538 = vmatpush2.msra.mxu0 0.0
    %7539 = vmatprep.subr.mxu0 0.0
    %7540 = vmatpush2.msra.mxu0 0.0
    %7541 = vmatprep.subr.mxu0 0.0
    %7542 = vmatpush2.msra.mxu0 0.0
    %7543 = vmatprep.subr.mxu0 0.0
    %7544 = vmatpush2.msra.mxu0 0.0
    %7545 = vmatprep.subr.mxu0 0.0
    %7546 = vmatpush2.msra.mxu0 0.0
    %7547 = vmatprep.subr.mxu0 0.0
    %7548 = vmatpush2.msra.mxu0 0.0
    %7549 = vmatprep.subr.mxu0 0.0
    %7550 = vmatpush2.msra.mxu0 0.0
    %7551 = vmatprep.subr.mxu0 0.0
    %7552 = vmatpush2.msra.mxu0 0.0
    %7553 = vmatprep.subr.mxu0 0.0
    %7554 = vmatpush2.msra.mxu0 0.0
    %7555 = vmatprep.subr.mxu0 0.0
    %7556 = vmatpush2.msra.mxu0 0.0
    %7557 = vmatprep.subr.mxu0 0.0
    %7558 = vmatpush2.msra.mxu0 0.0
    %7559 = vmatprep.subr.mxu0 0.0
    %7560 = vmatpush2.msra.mxu0 0.0
    %7561 = vmatprep.subr.mxu0 0.0
    %7562 = vmatpush2.msra.mxu0 0.0
    %7563 = vmatprep.subr.mxu0 0.0
    %7564 = vmatpush2.msra.mxu0 0.0
    %7565 = vmatprep.subr.mxu0 0.0
    %7566 = vmatpush2.msra.mxu0 0.0
    %7567 = vmatprep.subr.mxu0 0.0
    %7568 = vmatpush2.msra.mxu0 0.0
    %7569 = vmatprep.mubr.f32.mxu0 0.0
    %v7570 = vand.u32 %v7171, 4294901760
    %v7571 = vsub.f32 %v7171, %v7570
    %v7572 = vand.u32 %v7571, 4294901760
    %7573 = vmatmul.mubr.f32.gmra.mxu0 %v7572
    %v7574 = vpop.f32.mrf.mxu0
    %v7575 = vadd.f32 %v7477, %v7574
    %v7576 = vpop.f32.mrf.mxu0
    %7577 = vmatprep.mubr.f32.mxu0 0.0
    %v7578 = vand.u32 %v7174, 4294901760
    %v7579 = vsub.f32 %v7174, %v7578
    %v7580 = vand.u32 %v7579, 4294901760
    %7581 = vmatmul.mubr.f32.gmra.mxu0 %v7580
    %v7582 = vpop.f32.mrf.mxu0
    %v7583 = vadd.f32 %v7484, %v7582
    %v7584 = vpop.f32.mrf.mxu0
    %7585 = vmatprep.mubr.f32.mxu0 0.0
    %v7586 = vand.u32 %v7177, 4294901760
    %v7587 = vsub.f32 %v7177, %v7586
    %v7588 = vand.u32 %v7587, 4294901760
    %7589 = vmatmul.mubr.f32.gmra.mxu0 %v7588
    %v7590 = vpop.f32.mrf.mxu0
    %v7591 = vadd.f32 %v7491, %v7590
    %v7592 = vpop.f32.mrf.mxu0
    %7593 = vmatprep.mubr.f32.mxu0 0.0
    %v7594 = vand.u32 %v7180, 4294901760
    %v7595 = vsub.f32 %v7180, %v7594
    %v7596 = vand.u32 %v7595, 4294901760
    %7597 = vmatmul.mubr.f32.gmra.mxu0 %v7596
    %v7598 = vpop.f32.mrf.mxu0
    %v7599 = vadd.f32 %v7498, %v7598
    %v7600 = vpop.f32.mrf.mxu0
    %7601 = vdwg.mxu0
    %7602 = vmatprep.subr.mxu0 0.0
    %7603 = vmatpush1.msra.mxu0 0.0
    %7604 = vmatprep.subr.mxu0 0.0
    %7605 = vmatpush1.msra.mxu0 0.0
    %7606 = vmatprep.subr.mxu0 0.0
    %7607 = vmatpush1.msra.mxu0 0.0
    %7608 = vmatprep.subr.mxu0 0.0
    %7609 = vmatpush1.msra.mxu0 0.0
    %7610 = vmatprep.subr.mxu0 0.0
    %7611 = vmatpush1.msra.mxu0 0.0
    %7612 = vmatprep.subr.mxu0 0.0
    %7613 = vmatpush1.msra.mxu0 0.0
    %7614 = vmatprep.subr.mxu0 0.0
    %7615 = vmatpush1.msra.mxu0 0.0
    %7616 = vmatprep.subr.mxu0 0.0
    %7617 = vmatpush1.msra.mxu0 0.0
    %7618 = vmatprep.subr.mxu0 0.0
    %7619 = vmatpush1.msra.mxu0 0.0
    %7620 = vmatprep.subr.mxu0 0.0
    %7621 = vmatpush1.msra.mxu0 0.0
    %7622 = vmatprep.subr.mxu0 0.0
    %7623 = vmatpush1.msra.mxu0 0.0
    %7624 = vmatprep.subr.mxu0 0.0
    %7625 = vmatpush1.msra.mxu0 0.0
    %7626 = vmatprep.subr.mxu0 0.0
    %v7627 = vand.u32 %v7169, 4294901760
    %v7628 = vsub.f32 %v7169, %v7627
    %v7629 = vand.u32 %v7628, 4294901760
    %7630 = vmatpush1.msra.mxu0 %v7629
    %7631 = vmatprep.subr.mxu0 0.0
    %v7632 = vand.u32 %v7168, 4294901760
    %v7633 = vsub.f32 %v7168, %v7632
    %v7634 = vand.u32 %v7633, 4294901760
    %7635 = vmatpush1.msra.mxu0 %v7634
    %7636 = vmatprep.subr.mxu0 0.0
    %v7637 = vand.u32 %v7167, 4294901760
    %v7638 = vsub.f32 %v7167, %v7637
    %v7639 = vand.u32 %v7638, 4294901760
    %7640 = vmatpush1.msra.mxu0 %v7639
    %7641 = vmatprep.subr.mxu0 0.0
    %v7642 = vand.u32 %v7166, 4294901760
    %v7643 = vsub.f32 %v7166, %v7642
    %v7644 = vand.u32 %v7643, 4294901760
    %7645 = vmatpush1.msra.mxu0 %v7644
    %7646 = vmatprep.subr.mxu0 0.0
    %7647 = vmatpush2.msra.mxu0 0.0
    %7648 = vmatprep.subr.mxu0 0.0
    %7649 = vmatpush2.msra.mxu0 0.0
    %7650 = vmatprep.subr.mxu0 0.0
    %7651 = vmatpush2.msra.mxu0 0.0
    %7652 = vmatprep.subr.mxu0 0.0
    %7653 = vmatpush2.msra.mxu0 0.0
    %7654 = vmatprep.subr.mxu0 0.0
    %7655 = vmatpush2.msra.mxu0 0.0
    %7656 = vmatprep.subr.mxu0 0.0
    %7657 = vmatpush2.msra.mxu0 0.0
    %7658 = vmatprep.subr.mxu0 0.0
    %7659 = vmatpush2.msra.mxu0 0.0
    %7660 = vmatprep.subr.mxu0 0.0
    %7661 = vmatpush2.msra.mxu0 0.0
    %7662 = vmatprep.subr.mxu0 0.0
    %7663 = vmatpush2.msra.mxu0 0.0
    %7664 = vmatprep.subr.mxu0 0.0
    %7665 = vmatpush2.msra.mxu0 0.0
    %7666 = vmatprep.subr.mxu0 0.0
    %7667 = vmatpush2.msra.mxu0 0.0
    %7668 = vmatprep.subr.mxu0 0.0
    %7669 = vmatpush2.msra.mxu0 0.0
    %7670 = vmatprep.subr.mxu0 0.0
    %7671 = vmatpush2.msra.mxu0 0.0
    %7672 = vmatprep.subr.mxu0 0.0
    %7673 = vmatpush2.msra.mxu0 0.0
    %7674 = vmatprep.subr.mxu0 0.0
    %7675 = vmatpush2.msra.mxu0 0.0
    %7676 = vmatprep.subr.mxu0 0.0
    %7677 = vmatpush2.msra.mxu0 0.0
    %7678 = vmatprep.mubr.f32.mxu0 0.0
    %v7679 = vand.u32 %v7171, 4294901760
    %7680 = vmatmul.mubr.f32.gmra.mxu0 %v7679
    %v7681 = vpop.f32.mrf.mxu0
    %v7682 = vadd.f32 %v7575, %v7681
    %v7683 = vpop.f32.mrf.mxu0
    %7684 = vmatprep.mubr.f32.mxu0 0.0
    %v7685 = vand.u32 %v7174, 4294901760
    %7686 = vmatmul.mubr.f32.gmra.mxu0 %v7685
    %v7687 = vpop.f32.mrf.mxu0
    %v7688 = vadd.f32 %v7583, %v7687
    %v7689 = vpop.f32.mrf.mxu0
    %7690 = vmatprep.mubr.f32.mxu0 0.0
    %v7691 = vand.u32 %v7177, 4294901760
    %7692 = vmatmul.mubr.f32.gmra.mxu0 %v7691
    %v7693 = vpop.f32.mrf.mxu0
    %v7694 = vadd.f32 %v7591, %v7693
    %v7695 = vpop.f32.mrf.mxu0
    %7696 = vmatprep.mubr.f32.mxu0 0.0
    %v7697 = vand.u32 %v7180, 4294901760
    %7698 = vmatmul.mubr.f32.gmra.mxu0 %v7697
    %v7699 = vpop.f32.mrf.mxu0
    %v7700 = vadd.f32 %v7599, %v7699
    %v7701 = vpop.f32.mrf.mxu0
    %7702 = vdwg.mxu0
    %7703 = vmatprep.subr.mxu0 0.0
    %7704 = vmatpush1.msra.mxu0 0.0
    %7705 = vmatprep.subr.mxu0 0.0
    %7706 = vmatpush1.msra.mxu0 0.0
    %7707 = vmatprep.subr.mxu0 0.0
    %7708 = vmatpush1.msra.mxu0 0.0
    %7709 = vmatprep.subr.mxu0 0.0
    %7710 = vmatpush1.msra.mxu0 0.0
    %7711 = vmatprep.subr.mxu0 0.0
    %7712 = vmatpush1.msra.mxu0 0.0
    %7713 = vmatprep.subr.mxu0 0.0
    %7714 = vmatpush1.msra.mxu0 0.0
    %7715 = vmatprep.subr.mxu0 0.0
    %7716 = vmatpush1.msra.mxu0 0.0
    %7717 = vmatprep.subr.mxu0 0.0
    %7718 = vmatpush1.msra.mxu0 0.0
    %7719 = vmatprep.subr.mxu0 0.0
    %7720 = vmatpush1.msra.mxu0 0.0
    %7721 = vmatprep.subr.mxu0 0.0
    %7722 = vmatpush1.msra.mxu0 0.0
    %7723 = vmatprep.subr.mxu0 0.0
    %7724 = vmatpush1.msra.mxu0 0.0
    %7725 = vmatprep.subr.mxu0 0.0
    %7726 = vmatpush1.msra.mxu0 0.0
    %7727 = vmatprep.subr.mxu0 0.0
    %v7728 = vand.u32 %v7169, 4294901760
    %7729 = vmatpush1.msra.mxu0 %v7728
    %7730 = vmatprep.subr.mxu0 0.0
    %v7731 = vand.u32 %v7168, 4294901760
    %7732 = vmatpush1.msra.mxu0 %v7731
    %7733 = vmatprep.subr.mxu0 0.0
    %v7734 = vand.u32 %v7167, 4294901760
    %7735 = vmatpush1.msra.mxu0 %v7734
    %7736 = vmatprep.subr.mxu0 0.0
    %v7737 = vand.u32 %v7166, 4294901760
    %7738 = vmatpush1.msra.mxu0 %v7737
    %7739 = vmatprep.subr.mxu0 0.0
    %7740 = vmatpush2.msra.mxu0 0.0
    %7741 = vmatprep.subr.mxu0 0.0
    %7742 = vmatpush2.msra.mxu0 0.0
    %7743 = vmatprep.subr.mxu0 0.0
    %7744 = vmatpush2.msra.mxu0 0.0
    %7745 = vmatprep.subr.mxu0 0.0
    %7746 = vmatpush2.msra.mxu0 0.0
    %7747 = vmatprep.subr.mxu0 0.0
    %7748 = vmatpush2.msra.mxu0 0.0
    %7749 = vmatprep.subr.mxu0 0.0
    %7750 = vmatpush2.msra.mxu0 0.0
    %7751 = vmatprep.subr.mxu0 0.0
    %7752 = vmatpush2.msra.mxu0 0.0
    %7753 = vmatprep.subr.mxu0 0.0
    %7754 = vmatpush2.msra.mxu0 0.0
    %7755 = vmatprep.subr.mxu0 0.0
    %7756 = vmatpush2.msra.mxu0 0.0
    %7757 = vmatprep.subr.mxu0 0.0
    %7758 = vmatpush2.msra.mxu0 0.0
    %7759 = vmatprep.subr.mxu0 0.0
    %7760 = vmatpush2.msra.mxu0 0.0
    %7761 = vmatprep.subr.mxu0 0.0
    %7762 = vmatpush2.msra.mxu0 0.0
    %7763 = vmatprep.subr.mxu0 0.0
    %7764 = vmatpush2.msra.mxu0 0.0
    %7765 = vmatprep.subr.mxu0 0.0
    %7766 = vmatpush2.msra.mxu0 0.0
    %7767 = vmatprep.subr.mxu0 0.0
    %7768 = vmatpush2.msra.mxu0 0.0
    %7769 = vmatprep.subr.mxu0 0.0
    %7770 = vmatpush2.msra.mxu0 0.0
    %7771 = vmatprep.mubr.f32.mxu0 0.0
    %v7772 = vand.u32 %v7171, 4294901760
    %7773 = vmatmul.mubr.f32.gmra.mxu0 %v7772
    %v7774 = vpop.f32.mrf.mxu0
    %v7775 = vadd.f32 %v7682, %v7774
    %v7776 = vpop.f32.mrf.mxu0
    %7777 = vmatprep.mubr.f32.mxu0 0.0
    %v7778 = vand.u32 %v7174, 4294901760
    %7779 = vmatmul.mubr.f32.gmra.mxu0 %v7778
    %v7780 = vpop.f32.mrf.mxu0
    %v7781 = vadd.f32 %v7688, %v7780
    %v7782 = vpop.f32.mrf.mxu0
    %7783 = vmatprep.mubr.f32.mxu0 0.0
    %v7784 = vand.u32 %v7177, 4294901760
    %7785 = vmatmul.mubr.f32.gmra.mxu0 %v7784
    %v7786 = vpop.f32.mrf.mxu0
    %v7787 = vadd.f32 %v7694, %v7786
    %v7788 = vpop.f32.mrf.mxu0
    %7789 = vmatprep.mubr.f32.mxu0 0.0
    %v7790 = vand.u32 %v7180, 4294901760
    %7791 = vmatmul.mubr.f32.gmra.mxu0 %v7790
    %v7792 = vpop.f32.mrf.mxu0
    %v7793 = vadd.f32 %v7700, %v7792
    %v7794 = vpop.f32.mrf.mxu0
    %7795 = vdwg.mxu0
    %v7796 = vadd.f32 %v7140, %v7775
    %v7797 = vadd.f32 %v7146, %v7781
    %v7798 = vadd.f32 %v7152, %v7787
    %v7799 = vadd.f32 %v7158, %v7793
    %v7800 = vld [vmem:[#allocation2 + $0x6] sm:$0xff]
    %v7801 = vld [vmem:[#allocation2 + $0xe] sm:$0xff]
    %v7802 = vld [vmem:[#allocation2 + $0x26] sm:$0xff]
    %v7803 = vld [vmem:[#allocation2 + $0x2e] sm:$0xff]
    %s7804 = scalar_lea.vmem [#allocation8], 384
    %v7805 = vld [vmem:[%s7804] sm:$0xff]
    %v7806 = vld [vmem:[%s7804 + $0x8] sm:$0xff]
    %v7807 = vld [vmem:[%s7804 + $0x10] sm:$0xff]
    %v7808 = vld [vmem:[%s7804 + $0x18] sm:$0xff]
    %v7810 = vsel %vm57, %v7800, 0
    %v7813 = vsel %vm57, %v7801, 0
    %v7816 = vsel %vm57, %v7802, 0
    %v7819 = vsel %vm57, %v7803, 0
    %7821 = vmatprep.subr.mxu0 0.0
    %7822 = vmatpush1.msra.mxu0 0.0
    %7823 = vmatprep.subr.mxu0 0.0
    %7824 = vmatpush1.msra.mxu0 0.0
    %7825 = vmatprep.subr.mxu0 0.0
    %7826 = vmatpush1.msra.mxu0 0.0
    %7827 = vmatprep.subr.mxu0 0.0
    %7828 = vmatpush1.msra.mxu0 0.0
    %7829 = vmatprep.subr.mxu0 0.0
    %7830 = vmatpush1.msra.mxu0 0.0
    %7831 = vmatprep.subr.mxu0 0.0
    %7832 = vmatpush1.msra.mxu0 0.0
    %7833 = vmatprep.subr.mxu0 0.0
    %7834 = vmatpush1.msra.mxu0 0.0
    %7835 = vmatprep.subr.mxu0 0.0
    %7836 = vmatpush1.msra.mxu0 0.0
    %7837 = vmatprep.subr.mxu0 0.0
    %7838 = vmatpush1.msra.mxu0 0.0
    %7839 = vmatprep.subr.mxu0 0.0
    %7840 = vmatpush1.msra.mxu0 0.0
    %7841 = vmatprep.subr.mxu0 0.0
    %7842 = vmatpush1.msra.mxu0 0.0
    %7843 = vmatprep.subr.mxu0 0.0
    %7844 = vmatpush1.msra.mxu0 0.0
    %7845 = vmatprep.subr.mxu0 0.0
    %v7846 = vand.u32 %v7808, 4294901760
    %7847 = vmatpush1.msra.mxu0 %v7846
    %7848 = vmatprep.subr.mxu0 0.0
    %v7849 = vand.u32 %v7807, 4294901760
    %7850 = vmatpush1.msra.mxu0 %v7849
    %7851 = vmatprep.subr.mxu0 0.0
    %v7852 = vand.u32 %v7806, 4294901760
    %7853 = vmatpush1.msra.mxu0 %v7852
    %7854 = vmatprep.subr.mxu0 0.0
    %v7855 = vand.u32 %v7805, 4294901760
    %7856 = vmatpush1.msra.mxu0 %v7855
    %7857 = vmatprep.subr.mxu0 0.0
    %7858 = vmatpush2.msra.mxu0 0.0
    %7859 = vmatprep.subr.mxu0 0.0
    %7860 = vmatpush2.msra.mxu0 0.0
    %7861 = vmatprep.subr.mxu0 0.0
    %7862 = vmatpush2.msra.mxu0 0.0
    %7863 = vmatprep.subr.mxu0 0.0
    %7864 = vmatpush2.msra.mxu0 0.0
    %7865 = vmatprep.subr.mxu0 0.0
    %7866 = vmatpush2.msra.mxu0 0.0
    %7867 = vmatprep.subr.mxu0 0.0
    %7868 = vmatpush2.msra.mxu0 0.0
    %7869 = vmatprep.subr.mxu0 0.0
    %7870 = vmatpush2.msra.mxu0 0.0
    %7871 = vmatprep.subr.mxu0 0.0
    %7872 = vmatpush2.msra.mxu0 0.0
    %7873 = vmatprep.subr.mxu0 0.0
    %7874 = vmatpush2.msra.mxu0 0.0
    %7875 = vmatprep.subr.mxu0 0.0
    %7876 = vmatpush2.msra.mxu0 0.0
    %7877 = vmatprep.subr.mxu0 0.0
    %7878 = vmatpush2.msra.mxu0 0.0
    %7879 = vmatprep.subr.mxu0 0.0
    %7880 = vmatpush2.msra.mxu0 0.0
    %7881 = vmatprep.subr.mxu0 0.0
    %7882 = vmatpush2.msra.mxu0 0.0
    %7883 = vmatprep.subr.mxu0 0.0
    %7884 = vmatpush2.msra.mxu0 0.0
    %7885 = vmatprep.subr.mxu0 0.0
    %7886 = vmatpush2.msra.mxu0 0.0
    %7887 = vmatprep.subr.mxu0 0.0
    %7888 = vmatpush2.msra.mxu0 0.0
    %7889 = vmatprep.mubr.f32.mxu0 0.0
    %v7890 = vand.u32 %v7810, 4294901760
    %v7891 = vsub.f32 %v7810, %v7890
    %v7892 = vand.u32 %v7891, 4294901760
    %v7893 = vsub.f32 %v7891, %v7892
    %v7894 = vand.u32 %v7893, 4294901760
    %7895 = vmatmul.mubr.f32.gmra.mxu0 %v7894
    %v7896 = vpop.f32.mrf.mxu0
    %v7897 = vadd.f32 0.0, %v7896
    %v7898 = vpop.f32.mrf.mxu0
    %7899 = vmatprep.mubr.f32.mxu0 0.0
    %v7900 = vand.u32 %v7813, 4294901760
    %v7901 = vsub.f32 %v7813, %v7900
    %v7902 = vand.u32 %v7901, 4294901760
    %v7903 = vsub.f32 %v7901, %v7902
    %v7904 = vand.u32 %v7903, 4294901760
    %7905 = vmatmul.mubr.f32.gmra.mxu0 %v7904
    %v7906 = vpop.f32.mrf.mxu0
    %v7907 = vadd.f32 0.0, %v7906
    %v7908 = vpop.f32.mrf.mxu0
    %7909 = vmatprep.mubr.f32.mxu0 0.0
    %v7910 = vand.u32 %v7816, 4294901760
    %v7911 = vsub.f32 %v7816, %v7910
    %v7912 = vand.u32 %v7911, 4294901760
    %v7913 = vsub.f32 %v7911, %v7912
    %v7914 = vand.u32 %v7913, 4294901760
    %7915 = vmatmul.mubr.f32.gmra.mxu0 %v7914
    %v7916 = vpop.f32.mrf.mxu0
    %v7917 = vadd.f32 0.0, %v7916
    %v7918 = vpop.f32.mrf.mxu0
    %7919 = vmatprep.mubr.f32.mxu0 0.0
    %v7920 = vand.u32 %v7819, 4294901760
    %v7921 = vsub.f32 %v7819, %v7920
    %v7922 = vand.u32 %v7921, 4294901760
    %v7923 = vsub.f32 %v7921, %v7922
    %v7924 = vand.u32 %v7923, 4294901760
    %7925 = vmatmul.mubr.f32.gmra.mxu0 %v7924
    %v7926 = vpop.f32.mrf.mxu0
    %v7927 = vadd.f32 0.0, %v7926
    %v7928 = vpop.f32.mrf.mxu0
    %7929 = vdwg.mxu0
    %7930 = vmatprep.subr.mxu0 0.0
    %7931 = vmatpush1.msra.mxu0 0.0
    %7932 = vmatprep.subr.mxu0 0.0
    %7933 = vmatpush1.msra.mxu0 0.0
    %7934 = vmatprep.subr.mxu0 0.0
    %7935 = vmatpush1.msra.mxu0 0.0
    %7936 = vmatprep.subr.mxu0 0.0
    %7937 = vmatpush1.msra.mxu0 0.0
    %7938 = vmatprep.subr.mxu0 0.0
    %7939 = vmatpush1.msra.mxu0 0.0
    %7940 = vmatprep.subr.mxu0 0.0
    %7941 = vmatpush1.msra.mxu0 0.0
    %7942 = vmatprep.subr.mxu0 0.0
    %7943 = vmatpush1.msra.mxu0 0.0
    %7944 = vmatprep.subr.mxu0 0.0
    %7945 = vmatpush1.msra.mxu0 0.0
    %7946 = vmatprep.subr.mxu0 0.0
    %7947 = vmatpush1.msra.mxu0 0.0
    %7948 = vmatprep.subr.mxu0 0.0
    %7949 = vmatpush1.msra.mxu0 0.0
    %7950 = vmatprep.subr.mxu0 0.0
    %7951 = vmatpush1.msra.mxu0 0.0
    %7952 = vmatprep.subr.mxu0 0.0
    %7953 = vmatpush1.msra.mxu0 0.0
    %7954 = vmatprep.subr.mxu0 0.0
    %v7955 = vand.u32 %v7808, 4294901760
    %v7956 = vsub.f32 %v7808, %v7955
    %v7957 = vand.u32 %v7956, 4294901760
    %v7958 = vsub.f32 %v7956, %v7957
    %v7959 = vand.u32 %v7958, 4294901760
    %7960 = vmatpush1.msra.mxu0 %v7959
    %7961 = vmatprep.subr.mxu0 0.0
    %v7962 = vand.u32 %v7807, 4294901760
    %v7963 = vsub.f32 %v7807, %v7962
    %v7964 = vand.u32 %v7963, 4294901760
    %v7965 = vsub.f32 %v7963, %v7964
    %v7966 = vand.u32 %v7965, 4294901760
    %7967 = vmatpush1.msra.mxu0 %v7966
    %7968 = vmatprep.subr.mxu0 0.0
    %v7969 = vand.u32 %v7806, 4294901760
    %v7970 = vsub.f32 %v7806, %v7969
    %v7971 = vand.u32 %v7970, 4294901760
    %v7972 = vsub.f32 %v7970, %v7971
    %v7973 = vand.u32 %v7972, 4294901760
    %7974 = vmatpush1.msra.mxu0 %v7973
    %7975 = vmatprep.subr.mxu0 0.0
    %v7976 = vand.u32 %v7805, 4294901760
    %v7977 = vsub.f32 %v7805, %v7976
    %v7978 = vand.u32 %v7977, 4294901760
    %v7979 = vsub.f32 %v7977, %v7978
    %v7980 = vand.u32 %v7979, 4294901760
    %7981 = vmatpush1.msra.mxu0 %v7980
    %7982 = vmatprep.subr.mxu0 0.0
    %7983 = vmatpush2.msra.mxu0 0.0
    %7984 = vmatprep.subr.mxu0 0.0
    %7985 = vmatpush2.msra.mxu0 0.0
    %7986 = vmatprep.subr.mxu0 0.0
    %7987 = vmatpush2.msra.mxu0 0.0
    %7988 = vmatprep.subr.mxu0 0.0
    %7989 = vmatpush2.msra.mxu0 0.0
    %7990 = vmatprep.subr.mxu0 0.0
    %7991 = vmatpush2.msra.mxu0 0.0
    %7992 = vmatprep.subr.mxu0 0.0
    %7993 = vmatpush2.msra.mxu0 0.0
    %7994 = vmatprep.subr.mxu0 0.0
    %7995 = vmatpush2.msra.mxu0 0.0
    %7996 = vmatprep.subr.mxu0 0.0
    %7997 = vmatpush2.msra.mxu0 0.0
    %7998 = vmatprep.subr.mxu0 0.0
    %7999 = vmatpush2.msra.mxu0 0.0
    %8000 = vmatprep.subr.mxu0 0.0
    %8001 = vmatpush2.msra.mxu0 0.0
    %8002 = vmatprep.subr.mxu0 0.0
    %8003 = vmatpush2.msra.mxu0 0.0
    %8004 = vmatprep.subr.mxu0 0.0
    %8005 = vmatpush2.msra.mxu0 0.0
    %8006 = vmatprep.subr.mxu0 0.0
    %8007 = vmatpush2.msra.mxu0 0.0
    %8008 = vmatprep.subr.mxu0 0.0
    %8009 = vmatpush2.msra.mxu0 0.0
    %8010 = vmatprep.subr.mxu0 0.0
    %8011 = vmatpush2.msra.mxu0 0.0
    %8012 = vmatprep.subr.mxu0 0.0
    %8013 = vmatpush2.msra.mxu0 0.0
    %8014 = vmatprep.mubr.f32.mxu0 0.0
    %v8015 = vand.u32 %v7810, 4294901760
    %8016 = vmatmul.mubr.f32.gmra.mxu0 %v8015
    %v8017 = vpop.f32.mrf.mxu0
    %v8018 = vadd.f32 %v7897, %v8017
    %v8019 = vpop.f32.mrf.mxu0
    %8020 = vmatprep.mubr.f32.mxu0 0.0
    %v8021 = vand.u32 %v7813, 4294901760
    %8022 = vmatmul.mubr.f32.gmra.mxu0 %v8021
    %v8023 = vpop.f32.mrf.mxu0
    %v8024 = vadd.f32 %v7907, %v8023
    %v8025 = vpop.f32.mrf.mxu0
    %8026 = vmatprep.mubr.f32.mxu0 0.0
    %v8027 = vand.u32 %v7816, 4294901760
    %8028 = vmatmul.mubr.f32.gmra.mxu0 %v8027
    %v8029 = vpop.f32.mrf.mxu0
    %v8030 = vadd.f32 %v7917, %v8029
    %v8031 = vpop.f32.mrf.mxu0
    %8032 = vmatprep.mubr.f32.mxu0 0.0
    %v8033 = vand.u32 %v7819, 4294901760
    %8034 = vmatmul.mubr.f32.gmra.mxu0 %v8033
    %v8035 = vpop.f32.mrf.mxu0
    %v8036 = vadd.f32 %v7927, %v8035
    %v8037 = vpop.f32.mrf.mxu0
    %8038 = vdwg.mxu0
    %8039 = vmatprep.subr.mxu0 0.0
    %8040 = vmatpush1.msra.mxu0 0.0
    %8041 = vmatprep.subr.mxu0 0.0
    %8042 = vmatpush1.msra.mxu0 0.0
    %8043 = vmatprep.subr.mxu0 0.0
    %8044 = vmatpush1.msra.mxu0 0.0
    %8045 = vmatprep.subr.mxu0 0.0
    %8046 = vmatpush1.msra.mxu0 0.0
    %8047 = vmatprep.subr.mxu0 0.0
    %8048 = vmatpush1.msra.mxu0 0.0
    %8049 = vmatprep.subr.mxu0 0.0
    %8050 = vmatpush1.msra.mxu0 0.0
    %8051 = vmatprep.subr.mxu0 0.0
    %8052 = vmatpush1.msra.mxu0 0.0
    %8053 = vmatprep.subr.mxu0 0.0
    %8054 = vmatpush1.msra.mxu0 0.0
    %8055 = vmatprep.subr.mxu0 0.0
    %8056 = vmatpush1.msra.mxu0 0.0
    %8057 = vmatprep.subr.mxu0 0.0
    %8058 = vmatpush1.msra.mxu0 0.0
    %8059 = vmatprep.subr.mxu0 0.0
    %8060 = vmatpush1.msra.mxu0 0.0
    %8061 = vmatprep.subr.mxu0 0.0
    %8062 = vmatpush1.msra.mxu0 0.0
    %8063 = vmatprep.subr.mxu0 0.0
    %v8064 = vand.u32 %v7808, 4294901760
    %v8065 = vsub.f32 %v7808, %v8064
    %8066 = vmatpush1.msra.mxu0 %v8065
    %8067 = vmatprep.subr.mxu0 0.0
    %v8068 = vand.u32 %v7807, 4294901760
    %v8069 = vsub.f32 %v7807, %v8068
    %8070 = vmatpush1.msra.mxu0 %v8069
    %8071 = vmatprep.subr.mxu0 0.0
    %v8072 = vand.u32 %v7806, 4294901760
    %v8073 = vsub.f32 %v7806, %v8072
    %8074 = vmatpush1.msra.mxu0 %v8073
    %8075 = vmatprep.subr.mxu0 0.0
    %v8076 = vand.u32 %v7805, 4294901760
    %v8077 = vsub.f32 %v7805, %v8076
    %8078 = vmatpush1.msra.mxu0 %v8077
    %8079 = vmatprep.subr.mxu0 0.0
    %8080 = vmatpush2.msra.mxu0 0.0
    %8081 = vmatprep.subr.mxu0 0.0
    %8082 = vmatpush2.msra.mxu0 0.0
    %8083 = vmatprep.subr.mxu0 0.0
    %8084 = vmatpush2.msra.mxu0 0.0
    %8085 = vmatprep.subr.mxu0 0.0
    %8086 = vmatpush2.msra.mxu0 0.0
    %8087 = vmatprep.subr.mxu0 0.0
    %8088 = vmatpush2.msra.mxu0 0.0
    %8089 = vmatprep.subr.mxu0 0.0
    %8090 = vmatpush2.msra.mxu0 0.0
    %8091 = vmatprep.subr.mxu0 0.0
    %8092 = vmatpush2.msra.mxu0 0.0
    %8093 = vmatprep.subr.mxu0 0.0
    %8094 = vmatpush2.msra.mxu0 0.0
    %8095 = vmatprep.subr.mxu0 0.0
    %8096 = vmatpush2.msra.mxu0 0.0
    %8097 = vmatprep.subr.mxu0 0.0
    %8098 = vmatpush2.msra.mxu0 0.0
    %8099 = vmatprep.subr.mxu0 0.0
    %8100 = vmatpush2.msra.mxu0 0.0
    %8101 = vmatprep.subr.mxu0 0.0
    %8102 = vmatpush2.msra.mxu0 0.0
    %8103 = vmatprep.subr.mxu0 0.0
    %8104 = vmatpush2.msra.mxu0 0.0
    %8105 = vmatprep.subr.mxu0 0.0
    %8106 = vmatpush2.msra.mxu0 0.0
    %8107 = vmatprep.subr.mxu0 0.0
    %8108 = vmatpush2.msra.mxu0 0.0
    %8109 = vmatprep.subr.mxu0 0.0
    %8110 = vmatpush2.msra.mxu0 0.0
    %8111 = vmatprep.mubr.f32.mxu0 0.0
    %v8112 = vand.u32 %v7810, 4294901760
    %v8113 = vsub.f32 %v7810, %v8112
    %8114 = vmatmul.mubr.f32.gmra.mxu0 %v8113
    %v8115 = vpop.f32.mrf.mxu0
    %v8116 = vadd.f32 %v8018, %v8115
    %v8117 = vpop.f32.mrf.mxu0
    %8118 = vmatprep.mubr.f32.mxu0 0.0
    %v8119 = vand.u32 %v7813, 4294901760
    %v8120 = vsub.f32 %v7813, %v8119
    %8121 = vmatmul.mubr.f32.gmra.mxu0 %v8120
    %v8122 = vpop.f32.mrf.mxu0
    %v8123 = vadd.f32 %v8024, %v8122
    %v8124 = vpop.f32.mrf.mxu0
    %8125 = vmatprep.mubr.f32.mxu0 0.0
    %v8126 = vand.u32 %v7816, 4294901760
    %v8127 = vsub.f32 %v7816, %v8126
    %8128 = vmatmul.mubr.f32.gmra.mxu0 %v8127
    %v8129 = vpop.f32.mrf.mxu0
    %v8130 = vadd.f32 %v8030, %v8129
    %v8131 = vpop.f32.mrf.mxu0
    %8132 = vmatprep.mubr.f32.mxu0 0.0
    %v8133 = vand.u32 %v7819, 4294901760
    %v8134 = vsub.f32 %v7819, %v8133
    %8135 = vmatmul.mubr.f32.gmra.mxu0 %v8134
    %v8136 = vpop.f32.mrf.mxu0
    %v8137 = vadd.f32 %v8036, %v8136
    %v8138 = vpop.f32.mrf.mxu0
    %8139 = vdwg.mxu0
    %8140 = vmatprep.subr.mxu0 0.0
    %8141 = vmatpush1.msra.mxu0 0.0
    %8142 = vmatprep.subr.mxu0 0.0
    %8143 = vmatpush1.msra.mxu0 0.0
    %8144 = vmatprep.subr.mxu0 0.0
    %8145 = vmatpush1.msra.mxu0 0.0
    %8146 = vmatprep.subr.mxu0 0.0
    %8147 = vmatpush1.msra.mxu0 0.0
    %8148 = vmatprep.subr.mxu0 0.0
    %8149 = vmatpush1.msra.mxu0 0.0
    %8150 = vmatprep.subr.mxu0 0.0
    %8151 = vmatpush1.msra.mxu0 0.0
    %8152 = vmatprep.subr.mxu0 0.0
    %8153 = vmatpush1.msra.mxu0 0.0
    %8154 = vmatprep.subr.mxu0 0.0
    %8155 = vmatpush1.msra.mxu0 0.0
    %8156 = vmatprep.subr.mxu0 0.0
    %8157 = vmatpush1.msra.mxu0 0.0
    %8158 = vmatprep.subr.mxu0 0.0
    %8159 = vmatpush1.msra.mxu0 0.0
    %8160 = vmatprep.subr.mxu0 0.0
    %8161 = vmatpush1.msra.mxu0 0.0
    %8162 = vmatprep.subr.mxu0 0.0
    %8163 = vmatpush1.msra.mxu0 0.0
    %8164 = vmatprep.subr.mxu0 0.0
    %v8165 = vand.u32 %v7808, 4294901760
    %8166 = vmatpush1.msra.mxu0 %v8165
    %8167 = vmatprep.subr.mxu0 0.0
    %v8168 = vand.u32 %v7807, 4294901760
    %8169 = vmatpush1.msra.mxu0 %v8168
    %8170 = vmatprep.subr.mxu0 0.0
    %v8171 = vand.u32 %v7806, 4294901760
    %8172 = vmatpush1.msra.mxu0 %v8171
    %8173 = vmatprep.subr.mxu0 0.0
    %v8174 = vand.u32 %v7805, 4294901760
    %8175 = vmatpush1.msra.mxu0 %v8174
    %8176 = vmatprep.subr.mxu0 0.0
    %8177 = vmatpush2.msra.mxu0 0.0
    %8178 = vmatprep.subr.mxu0 0.0
    %8179 = vmatpush2.msra.mxu0 0.0
    %8180 = vmatprep.subr.mxu0 0.0
    %8181 = vmatpush2.msra.mxu0 0.0
    %8182 = vmatprep.subr.mxu0 0.0
    %8183 = vmatpush2.msra.mxu0 0.0
    %8184 = vmatprep.subr.mxu0 0.0
    %8185 = vmatpush2.msra.mxu0 0.0
    %8186 = vmatprep.subr.mxu0 0.0
    %8187 = vmatpush2.msra.mxu0 0.0
    %8188 = vmatprep.subr.mxu0 0.0
    %8189 = vmatpush2.msra.mxu0 0.0
    %8190 = vmatprep.subr.mxu0 0.0
    %8191 = vmatpush2.msra.mxu0 0.0
    %8192 = vmatprep.subr.mxu0 0.0
    %8193 = vmatpush2.msra.mxu0 0.0
    %8194 = vmatprep.subr.mxu0 0.0
    %8195 = vmatpush2.msra.mxu0 0.0
    %8196 = vmatprep.subr.mxu0 0.0
    %8197 = vmatpush2.msra.mxu0 0.0
    %8198 = vmatprep.subr.mxu0 0.0
    %8199 = vmatpush2.msra.mxu0 0.0
    %8200 = vmatprep.subr.mxu0 0.0
    %8201 = vmatpush2.msra.mxu0 0.0
    %8202 = vmatprep.subr.mxu0 0.0
    %8203 = vmatpush2.msra.mxu0 0.0
    %8204 = vmatprep.subr.mxu0 0.0
    %8205 = vmatpush2.msra.mxu0 0.0
    %8206 = vmatprep.subr.mxu0 0.0
    %8207 = vmatpush2.msra.mxu0 0.0
    %8208 = vmatprep.mubr.f32.mxu0 0.0
    %v8209 = vand.u32 %v7810, 4294901760
    %v8210 = vsub.f32 %v7810, %v8209
    %v8211 = vand.u32 %v8210, 4294901760
    %8212 = vmatmul.mubr.f32.gmra.mxu0 %v8211
    %v8213 = vpop.f32.mrf.mxu0
    %v8214 = vadd.f32 %v8116, %v8213
    %v8215 = vpop.f32.mrf.mxu0
    %8216 = vmatprep.mubr.f32.mxu0 0.0
    %v8217 = vand.u32 %v7813, 4294901760
    %v8218 = vsub.f32 %v7813, %v8217
    %v8219 = vand.u32 %v8218, 4294901760
    %8220 = vmatmul.mubr.f32.gmra.mxu0 %v8219
    %v8221 = vpop.f32.mrf.mxu0
    %v8222 = vadd.f32 %v8123, %v8221
    %v8223 = vpop.f32.mrf.mxu0
    %8224 = vmatprep.mubr.f32.mxu0 0.0
    %v8225 = vand.u32 %v7816, 4294901760
    %v8226 = vsub.f32 %v7816, %v8225
    %v8227 = vand.u32 %v8226, 4294901760
    %8228 = vmatmul.mubr.f32.gmra.mxu0 %v8227
    %v8229 = vpop.f32.mrf.mxu0
    %v8230 = vadd.f32 %v8130, %v8229
    %v8231 = vpop.f32.mrf.mxu0
    %8232 = vmatprep.mubr.f32.mxu0 0.0
    %v8233 = vand.u32 %v7819, 4294901760
    %v8234 = vsub.f32 %v7819, %v8233
    %v8235 = vand.u32 %v8234, 4294901760
    %8236 = vmatmul.mubr.f32.gmra.mxu0 %v8235
    %v8237 = vpop.f32.mrf.mxu0
    %v8238 = vadd.f32 %v8137, %v8237
    %v8239 = vpop.f32.mrf.mxu0
    %8240 = vdwg.mxu0
    %8241 = vmatprep.subr.mxu0 0.0
    %8242 = vmatpush1.msra.mxu0 0.0
    %8243 = vmatprep.subr.mxu0 0.0
    %8244 = vmatpush1.msra.mxu0 0.0
    %8245 = vmatprep.subr.mxu0 0.0
    %8246 = vmatpush1.msra.mxu0 0.0
    %8247 = vmatprep.subr.mxu0 0.0
    %8248 = vmatpush1.msra.mxu0 0.0
    %8249 = vmatprep.subr.mxu0 0.0
    %8250 = vmatpush1.msra.mxu0 0.0
    %8251 = vmatprep.subr.mxu0 0.0
    %8252 = vmatpush1.msra.mxu0 0.0
    %8253 = vmatprep.subr.mxu0 0.0
    %8254 = vmatpush1.msra.mxu0 0.0
    %8255 = vmatprep.subr.mxu0 0.0
    %8256 = vmatpush1.msra.mxu0 0.0
    %8257 = vmatprep.subr.mxu0 0.0
    %8258 = vmatpush1.msra.mxu0 0.0
    %8259 = vmatprep.subr.mxu0 0.0
    %8260 = vmatpush1.msra.mxu0 0.0
    %8261 = vmatprep.subr.mxu0 0.0
    %8262 = vmatpush1.msra.mxu0 0.0
    %8263 = vmatprep.subr.mxu0 0.0
    %8264 = vmatpush1.msra.mxu0 0.0
    %8265 = vmatprep.subr.mxu0 0.0
    %v8266 = vand.u32 %v7808, 4294901760
    %v8267 = vsub.f32 %v7808, %v8266
    %v8268 = vand.u32 %v8267, 4294901760
    %8269 = vmatpush1.msra.mxu0 %v8268
    %8270 = vmatprep.subr.mxu0 0.0
    %v8271 = vand.u32 %v7807, 4294901760
    %v8272 = vsub.f32 %v7807, %v8271
    %v8273 = vand.u32 %v8272, 4294901760
    %8274 = vmatpush1.msra.mxu0 %v8273
    %8275 = vmatprep.subr.mxu0 0.0
    %v8276 = vand.u32 %v7806, 4294901760
    %v8277 = vsub.f32 %v7806, %v8276
    %v8278 = vand.u32 %v8277, 4294901760
    %8279 = vmatpush1.msra.mxu0 %v8278
    %8280 = vmatprep.subr.mxu0 0.0
    %v8281 = vand.u32 %v7805, 4294901760
    %v8282 = vsub.f32 %v7805, %v8281
    %v8283 = vand.u32 %v8282, 4294901760
    %8284 = vmatpush1.msra.mxu0 %v8283
    %8285 = vmatprep.subr.mxu0 0.0
    %8286 = vmatpush2.msra.mxu0 0.0
    %8287 = vmatprep.subr.mxu0 0.0
    %8288 = vmatpush2.msra.mxu0 0.0
    %8289 = vmatprep.subr.mxu0 0.0
    %8290 = vmatpush2.msra.mxu0 0.0
    %8291 = vmatprep.subr.mxu0 0.0
    %8292 = vmatpush2.msra.mxu0 0.0
    %8293 = vmatprep.subr.mxu0 0.0
    %8294 = vmatpush2.msra.mxu0 0.0
    %8295 = vmatprep.subr.mxu0 0.0
    %8296 = vmatpush2.msra.mxu0 0.0
    %8297 = vmatprep.subr.mxu0 0.0
    %8298 = vmatpush2.msra.mxu0 0.0
    %8299 = vmatprep.subr.mxu0 0.0
    %8300 = vmatpush2.msra.mxu0 0.0
    %8301 = vmatprep.subr.mxu0 0.0
    %8302 = vmatpush2.msra.mxu0 0.0
    %8303 = vmatprep.subr.mxu0 0.0
    %8304 = vmatpush2.msra.mxu0 0.0
    %8305 = vmatprep.subr.mxu0 0.0
    %8306 = vmatpush2.msra.mxu0 0.0
    %8307 = vmatprep.subr.mxu0 0.0
    %8308 = vmatpush2.msra.mxu0 0.0
    %8309 = vmatprep.subr.mxu0 0.0
    %8310 = vmatpush2.msra.mxu0 0.0
    %8311 = vmatprep.subr.mxu0 0.0
    %8312 = vmatpush2.msra.mxu0 0.0
    %8313 = vmatprep.subr.mxu0 0.0
    %8314 = vmatpush2.msra.mxu0 0.0
    %8315 = vmatprep.subr.mxu0 0.0
    %8316 = vmatpush2.msra.mxu0 0.0
    %8317 = vmatprep.mubr.f32.mxu0 0.0
    %v8318 = vand.u32 %v7810, 4294901760
    %8319 = vmatmul.mubr.f32.gmra.mxu0 %v8318
    %v8320 = vpop.f32.mrf.mxu0
    %v8321 = vadd.f32 %v8214, %v8320
    %v8322 = vpop.f32.mrf.mxu0
    %8323 = vmatprep.mubr.f32.mxu0 0.0
    %v8324 = vand.u32 %v7813, 4294901760
    %8325 = vmatmul.mubr.f32.gmra.mxu0 %v8324
    %v8326 = vpop.f32.mrf.mxu0
    %v8327 = vadd.f32 %v8222, %v8326
    %v8328 = vpop.f32.mrf.mxu0
    %8329 = vmatprep.mubr.f32.mxu0 0.0
    %v8330 = vand.u32 %v7816, 4294901760
    %8331 = vmatmul.mubr.f32.gmra.mxu0 %v8330
    %v8332 = vpop.f32.mrf.mxu0
    %v8333 = vadd.f32 %v8230, %v8332
    %v8334 = vpop.f32.mrf.mxu0
    %8335 = vmatprep.mubr.f32.mxu0 0.0
    %v8336 = vand.u32 %v7819, 4294901760
    %8337 = vmatmul.mubr.f32.gmra.mxu0 %v8336
    %v8338 = vpop.f32.mrf.mxu0
    %v8339 = vadd.f32 %v8238, %v8338
    %v8340 = vpop.f32.mrf.mxu0
    %8341 = vdwg.mxu0
    %8342 = vmatprep.subr.mxu0 0.0
    %8343 = vmatpush1.msra.mxu0 0.0
    %8344 = vmatprep.subr.mxu0 0.0
    %8345 = vmatpush1.msra.mxu0 0.0
    %8346 = vmatprep.subr.mxu0 0.0
    %8347 = vmatpush1.msra.mxu0 0.0
    %8348 = vmatprep.subr.mxu0 0.0
    %8349 = vmatpush1.msra.mxu0 0.0
    %8350 = vmatprep.subr.mxu0 0.0
    %8351 = vmatpush1.msra.mxu0 0.0
    %8352 = vmatprep.subr.mxu0 0.0
    %8353 = vmatpush1.msra.mxu0 0.0
    %8354 = vmatprep.subr.mxu0 0.0
    %8355 = vmatpush1.msra.mxu0 0.0
    %8356 = vmatprep.subr.mxu0 0.0
    %8357 = vmatpush1.msra.mxu0 0.0
    %8358 = vmatprep.subr.mxu0 0.0
    %8359 = vmatpush1.msra.mxu0 0.0
    %8360 = vmatprep.subr.mxu0 0.0
    %8361 = vmatpush1.msra.mxu0 0.0
    %8362 = vmatprep.subr.mxu0 0.0
    %8363 = vmatpush1.msra.mxu0 0.0
    %8364 = vmatprep.subr.mxu0 0.0
    %8365 = vmatpush1.msra.mxu0 0.0
    %8366 = vmatprep.subr.mxu0 0.0
    %v8367 = vand.u32 %v7808, 4294901760
    %8368 = vmatpush1.msra.mxu0 %v8367
    %8369 = vmatprep.subr.mxu0 0.0
    %v8370 = vand.u32 %v7807, 4294901760
    %8371 = vmatpush1.msra.mxu0 %v8370
    %8372 = vmatprep.subr.mxu0 0.0
    %v8373 = vand.u32 %v7806, 4294901760
    %8374 = vmatpush1.msra.mxu0 %v8373
    %8375 = vmatprep.subr.mxu0 0.0
    %v8376 = vand.u32 %v7805, 4294901760
    %8377 = vmatpush1.msra.mxu0 %v8376
    %8378 = vmatprep.subr.mxu0 0.0
    %8379 = vmatpush2.msra.mxu0 0.0
    %8380 = vmatprep.subr.mxu0 0.0
    %8381 = vmatpush2.msra.mxu0 0.0
    %8382 = vmatprep.subr.mxu0 0.0
    %8383 = vmatpush2.msra.mxu0 0.0
    %8384 = vmatprep.subr.mxu0 0.0
    %8385 = vmatpush2.msra.mxu0 0.0
    %8386 = vmatprep.subr.mxu0 0.0
    %8387 = vmatpush2.msra.mxu0 0.0
    %8388 = vmatprep.subr.mxu0 0.0
    %8389 = vmatpush2.msra.mxu0 0.0
    %8390 = vmatprep.subr.mxu0 0.0
    %8391 = vmatpush2.msra.mxu0 0.0
    %8392 = vmatprep.subr.mxu0 0.0
    %8393 = vmatpush2.msra.mxu0 0.0
    %8394 = vmatprep.subr.mxu0 0.0
    %8395 = vmatpush2.msra.mxu0 0.0
    %8396 = vmatprep.subr.mxu0 0.0
    %8397 = vmatpush2.msra.mxu0 0.0
    %8398 = vmatprep.subr.mxu0 0.0
    %8399 = vmatpush2.msra.mxu0 0.0
    %8400 = vmatprep.subr.mxu0 0.0
    %8401 = vmatpush2.msra.mxu0 0.0
    %8402 = vmatprep.subr.mxu0 0.0
    %8403 = vmatpush2.msra.mxu0 0.0
    %8404 = vmatprep.subr.mxu0 0.0
    %8405 = vmatpush2.msra.mxu0 0.0
    %8406 = vmatprep.subr.mxu0 0.0
    %8407 = vmatpush2.msra.mxu0 0.0
    %8408 = vmatprep.subr.mxu0 0.0
    %8409 = vmatpush2.msra.mxu0 0.0
    %8410 = vmatprep.mubr.f32.mxu0 0.0
    %v8411 = vand.u32 %v7810, 4294901760
    %8412 = vmatmul.mubr.f32.gmra.mxu0 %v8411
    %v8413 = vpop.f32.mrf.mxu0
    %v8414 = vadd.f32 %v8321, %v8413
    %v8415 = vpop.f32.mrf.mxu0
    %8416 = vmatprep.mubr.f32.mxu0 0.0
    %v8417 = vand.u32 %v7813, 4294901760
    %8418 = vmatmul.mubr.f32.gmra.mxu0 %v8417
    %v8419 = vpop.f32.mrf.mxu0
    %v8420 = vadd.f32 %v8327, %v8419
    %v8421 = vpop.f32.mrf.mxu0
    %8422 = vmatprep.mubr.f32.mxu0 0.0
    %v8423 = vand.u32 %v7816, 4294901760
    %8424 = vmatmul.mubr.f32.gmra.mxu0 %v8423
    %v8425 = vpop.f32.mrf.mxu0
    %v8426 = vadd.f32 %v8333, %v8425
    %v8427 = vpop.f32.mrf.mxu0
    %8428 = vmatprep.mubr.f32.mxu0 0.0
    %v8429 = vand.u32 %v7819, 4294901760
    %8430 = vmatmul.mubr.f32.gmra.mxu0 %v8429
    %v8431 = vpop.f32.mrf.mxu0
    %v8432 = vadd.f32 %v8339, %v8431
    %v8433 = vpop.f32.mrf.mxu0
    %8434 = vdwg.mxu0
    %v8435 = vadd.f32 %v7796, %v8414
    %v8436 = vadd.f32 %v7797, %v8420
    %v8437 = vadd.f32 %v7798, %v8426
    %v8438 = vadd.f32 %v7799, %v8432
    %v8439 = vld [vmem:[#allocation2 + $0x7] sm:$0xff]
    %v8440 = vld [vmem:[#allocation2 + $0xf] sm:$0xff]
    %v8441 = vld [vmem:[#allocation2 + $0x27] sm:$0xff]
    %v8442 = vld [vmem:[#allocation2 + $0x2f] sm:$0xff]
    %s8443 = scalar_lea.vmem [#allocation8], 416
    %v8444 = vld [vmem:[%s8443] sm:$0xff]
    %v8445 = vld [vmem:[%s8443 + $0x8] sm:$0xff]
    %v8446 = vld [vmem:[%s8443 + $0x10] sm:$0xff]
    %v8447 = vld [vmem:[%s8443 + $0x18] sm:$0xff]
    %v8449 = vsel %vm57, %v8439, 0
    %v8452 = vsel %vm57, %v8440, 0
    %v8455 = vsel %vm57, %v8441, 0
    %v8458 = vsel %vm57, %v8442, 0
    %8460 = vmatprep.subr.mxu0 0.0
    %8461 = vmatpush1.msra.mxu0 0.0
    %8462 = vmatprep.subr.mxu0 0.0
    %8463 = vmatpush1.msra.mxu0 0.0
    %8464 = vmatprep.subr.mxu0 0.0
    %8465 = vmatpush1.msra.mxu0 0.0
    %8466 = vmatprep.subr.mxu0 0.0
    %8467 = vmatpush1.msra.mxu0 0.0
    %8468 = vmatprep.subr.mxu0 0.0
    %8469 = vmatpush1.msra.mxu0 0.0
    %8470 = vmatprep.subr.mxu0 0.0
    %8471 = vmatpush1.msra.mxu0 0.0
    %8472 = vmatprep.subr.mxu0 0.0
    %8473 = vmatpush1.msra.mxu0 0.0
    %8474 = vmatprep.subr.mxu0 0.0
    %8475 = vmatpush1.msra.mxu0 0.0
    %8476 = vmatprep.subr.mxu0 0.0
    %8477 = vmatpush1.msra.mxu0 0.0
    %8478 = vmatprep.subr.mxu0 0.0
    %8479 = vmatpush1.msra.mxu0 0.0
    %8480 = vmatprep.subr.mxu0 0.0
    %8481 = vmatpush1.msra.mxu0 0.0
    %8482 = vmatprep.subr.mxu0 0.0
    %8483 = vmatpush1.msra.mxu0 0.0
    %8484 = vmatprep.subr.mxu0 0.0
    %v8485 = vand.u32 %v8447, 4294901760
    %8486 = vmatpush1.msra.mxu0 %v8485
    %8487 = vmatprep.subr.mxu0 0.0
    %v8488 = vand.u32 %v8446, 4294901760
    %8489 = vmatpush1.msra.mxu0 %v8488
    %8490 = vmatprep.subr.mxu0 0.0
    %v8491 = vand.u32 %v8445, 4294901760
    %8492 = vmatpush1.msra.mxu0 %v8491
    %8493 = vmatprep.subr.mxu0 0.0
    %v8494 = vand.u32 %v8444, 4294901760
    %8495 = vmatpush1.msra.mxu0 %v8494
    %8496 = vmatprep.subr.mxu0 0.0
    %8497 = vmatpush2.msra.mxu0 0.0
    %8498 = vmatprep.subr.mxu0 0.0
    %8499 = vmatpush2.msra.mxu0 0.0
    %8500 = vmatprep.subr.mxu0 0.0
    %8501 = vmatpush2.msra.mxu0 0.0
    %8502 = vmatprep.subr.mxu0 0.0
    %8503 = vmatpush2.msra.mxu0 0.0
    %8504 = vmatprep.subr.mxu0 0.0
    %8505 = vmatpush2.msra.mxu0 0.0
    %8506 = vmatprep.subr.mxu0 0.0
    %8507 = vmatpush2.msra.mxu0 0.0
    %8508 = vmatprep.subr.mxu0 0.0
    %8509 = vmatpush2.msra.mxu0 0.0
    %8510 = vmatprep.subr.mxu0 0.0
    %8511 = vmatpush2.msra.mxu0 0.0
    %8512 = vmatprep.subr.mxu0 0.0
    %8513 = vmatpush2.msra.mxu0 0.0
    %8514 = vmatprep.subr.mxu0 0.0
    %8515 = vmatpush2.msra.mxu0 0.0
    %8516 = vmatprep.subr.mxu0 0.0
    %8517 = vmatpush2.msra.mxu0 0.0
    %8518 = vmatprep.subr.mxu0 0.0
    %8519 = vmatpush2.msra.mxu0 0.0
    %8520 = vmatprep.subr.mxu0 0.0
    %8521 = vmatpush2.msra.mxu0 0.0
    %8522 = vmatprep.subr.mxu0 0.0
    %8523 = vmatpush2.msra.mxu0 0.0
    %8524 = vmatprep.subr.mxu0 0.0
    %8525 = vmatpush2.msra.mxu0 0.0
    %8526 = vmatprep.subr.mxu0 0.0
    %8527 = vmatpush2.msra.mxu0 0.0
    %8528 = vmatprep.mubr.f32.mxu0 0.0
    %v8529 = vand.u32 %v8449, 4294901760
    %v8530 = vsub.f32 %v8449, %v8529
    %v8531 = vand.u32 %v8530, 4294901760
    %v8532 = vsub.f32 %v8530, %v8531
    %v8533 = vand.u32 %v8532, 4294901760
    %8534 = vmatmul.mubr.f32.gmra.mxu0 %v8533
    %v8535 = vpop.f32.mrf.mxu0
    %v8536 = vadd.f32 0.0, %v8535
    %v8537 = vpop.f32.mrf.mxu0
    %8538 = vmatprep.mubr.f32.mxu0 0.0
    %v8539 = vand.u32 %v8452, 4294901760
    %v8540 = vsub.f32 %v8452, %v8539
    %v8541 = vand.u32 %v8540, 4294901760
    %v8542 = vsub.f32 %v8540, %v8541
    %v8543 = vand.u32 %v8542, 4294901760
    %8544 = vmatmul.mubr.f32.gmra.mxu0 %v8543
    %v8545 = vpop.f32.mrf.mxu0
    %v8546 = vadd.f32 0.0, %v8545
    %v8547 = vpop.f32.mrf.mxu0
    %8548 = vmatprep.mubr.f32.mxu0 0.0
    %v8549 = vand.u32 %v8455, 4294901760
    %v8550 = vsub.f32 %v8455, %v8549
    %v8551 = vand.u32 %v8550, 4294901760
    %v8552 = vsub.f32 %v8550, %v8551
    %v8553 = vand.u32 %v8552, 4294901760
    %8554 = vmatmul.mubr.f32.gmra.mxu0 %v8553
    %v8555 = vpop.f32.mrf.mxu0
    %v8556 = vadd.f32 0.0, %v8555
    %v8557 = vpop.f32.mrf.mxu0
    %8558 = vmatprep.mubr.f32.mxu0 0.0
    %v8559 = vand.u32 %v8458, 4294901760
    %v8560 = vsub.f32 %v8458, %v8559
    %v8561 = vand.u32 %v8560, 4294901760
    %v8562 = vsub.f32 %v8560, %v8561
    %v8563 = vand.u32 %v8562, 4294901760
    %8564 = vmatmul.mubr.f32.gmra.mxu0 %v8563
    %v8565 = vpop.f32.mrf.mxu0
    %v8566 = vadd.f32 0.0, %v8565
    %v8567 = vpop.f32.mrf.mxu0
    %8568 = vdwg.mxu0
    %8569 = vmatprep.subr.mxu0 0.0
    %8570 = vmatpush1.msra.mxu0 0.0
    %8571 = vmatprep.subr.mxu0 0.0
    %8572 = vmatpush1.msra.mxu0 0.0
    %8573 = vmatprep.subr.mxu0 0.0
    %8574 = vmatpush1.msra.mxu0 0.0
    %8575 = vmatprep.subr.mxu0 0.0
    %8576 = vmatpush1.msra.mxu0 0.0
    %8577 = vmatprep.subr.mxu0 0.0
    %8578 = vmatpush1.msra.mxu0 0.0
    %8579 = vmatprep.subr.mxu0 0.0
    %8580 = vmatpush1.msra.mxu0 0.0
    %8581 = vmatprep.subr.mxu0 0.0
    %8582 = vmatpush1.msra.mxu0 0.0
    %8583 = vmatprep.subr.mxu0 0.0
    %8584 = vmatpush1.msra.mxu0 0.0
    %8585 = vmatprep.subr.mxu0 0.0
    %8586 = vmatpush1.msra.mxu0 0.0
    %8587 = vmatprep.subr.mxu0 0.0
    %8588 = vmatpush1.msra.mxu0 0.0
    %8589 = vmatprep.subr.mxu0 0.0
    %8590 = vmatpush1.msra.mxu0 0.0
    %8591 = vmatprep.subr.mxu0 0.0
    %8592 = vmatpush1.msra.mxu0 0.0
    %8593 = vmatprep.subr.mxu0 0.0
    %v8594 = vand.u32 %v8447, 4294901760
    %v8595 = vsub.f32 %v8447, %v8594
    %v8596 = vand.u32 %v8595, 4294901760
    %v8597 = vsub.f32 %v8595, %v8596
    %v8598 = vand.u32 %v8597, 4294901760
    %8599 = vmatpush1.msra.mxu0 %v8598
    %8600 = vmatprep.subr.mxu0 0.0
    %v8601 = vand.u32 %v8446, 4294901760
    %v8602 = vsub.f32 %v8446, %v8601
    %v8603 = vand.u32 %v8602, 4294901760
    %v8604 = vsub.f32 %v8602, %v8603
    %v8605 = vand.u32 %v8604, 4294901760
    %8606 = vmatpush1.msra.mxu0 %v8605
    %8607 = vmatprep.subr.mxu0 0.0
    %v8608 = vand.u32 %v8445, 4294901760
    %v8609 = vsub.f32 %v8445, %v8608
    %v8610 = vand.u32 %v8609, 4294901760
    %v8611 = vsub.f32 %v8609, %v8610
    %v8612 = vand.u32 %v8611, 4294901760
    %8613 = vmatpush1.msra.mxu0 %v8612
    %8614 = vmatprep.subr.mxu0 0.0
    %v8615 = vand.u32 %v8444, 4294901760
    %v8616 = vsub.f32 %v8444, %v8615
    %v8617 = vand.u32 %v8616, 4294901760
    %v8618 = vsub.f32 %v8616, %v8617
    %v8619 = vand.u32 %v8618, 4294901760
    %8620 = vmatpush1.msra.mxu0 %v8619
    %8621 = vmatprep.subr.mxu0 0.0
    %8622 = vmatpush2.msra.mxu0 0.0
    %8623 = vmatprep.subr.mxu0 0.0
    %8624 = vmatpush2.msra.mxu0 0.0
    %8625 = vmatprep.subr.mxu0 0.0
    %8626 = vmatpush2.msra.mxu0 0.0
    %8627 = vmatprep.subr.mxu0 0.0
    %8628 = vmatpush2.msra.mxu0 0.0
    %8629 = vmatprep.subr.mxu0 0.0
    %8630 = vmatpush2.msra.mxu0 0.0
    %8631 = vmatprep.subr.mxu0 0.0
    %8632 = vmatpush2.msra.mxu0 0.0
    %8633 = vmatprep.subr.mxu0 0.0
    %8634 = vmatpush2.msra.mxu0 0.0
    %8635 = vmatprep.subr.mxu0 0.0
    %8636 = vmatpush2.msra.mxu0 0.0
    %8637 = vmatprep.subr.mxu0 0.0
    %8638 = vmatpush2.msra.mxu0 0.0
    %8639 = vmatprep.subr.mxu0 0.0
    %8640 = vmatpush2.msra.mxu0 0.0
    %8641 = vmatprep.subr.mxu0 0.0
    %8642 = vmatpush2.msra.mxu0 0.0
    %8643 = vmatprep.subr.mxu0 0.0
    %8644 = vmatpush2.msra.mxu0 0.0
    %8645 = vmatprep.subr.mxu0 0.0
    %8646 = vmatpush2.msra.mxu0 0.0
    %8647 = vmatprep.subr.mxu0 0.0
    %8648 = vmatpush2.msra.mxu0 0.0
    %8649 = vmatprep.subr.mxu0 0.0
    %8650 = vmatpush2.msra.mxu0 0.0
    %8651 = vmatprep.subr.mxu0 0.0
    %8652 = vmatpush2.msra.mxu0 0.0
    %8653 = vmatprep.mubr.f32.mxu0 0.0
    %v8654 = vand.u32 %v8449, 4294901760
    %8655 = vmatmul.mubr.f32.gmra.mxu0 %v8654
    %v8656 = vpop.f32.mrf.mxu0
    %v8657 = vadd.f32 %v8536, %v8656
    %v8658 = vpop.f32.mrf.mxu0
    %8659 = vmatprep.mubr.f32.mxu0 0.0
    %v8660 = vand.u32 %v8452, 4294901760
    %8661 = vmatmul.mubr.f32.gmra.mxu0 %v8660
    %v8662 = vpop.f32.mrf.mxu0
    %v8663 = vadd.f32 %v8546, %v8662
    %v8664 = vpop.f32.mrf.mxu0
    %8665 = vmatprep.mubr.f32.mxu0 0.0
    %v8666 = vand.u32 %v8455, 4294901760
    %8667 = vmatmul.mubr.f32.gmra.mxu0 %v8666
    %v8668 = vpop.f32.mrf.mxu0
    %v8669 = vadd.f32 %v8556, %v8668
    %v8670 = vpop.f32.mrf.mxu0
    %8671 = vmatprep.mubr.f32.mxu0 0.0
    %v8672 = vand.u32 %v8458, 4294901760
    %8673 = vmatmul.mubr.f32.gmra.mxu0 %v8672
    %v8674 = vpop.f32.mrf.mxu0
    %v8675 = vadd.f32 %v8566, %v8674
    %v8676 = vpop.f32.mrf.mxu0
    %8677 = vdwg.mxu0
    %8678 = vmatprep.subr.mxu0 0.0
    %8679 = vmatpush1.msra.mxu0 0.0
    %8680 = vmatprep.subr.mxu0 0.0
    %8681 = vmatpush1.msra.mxu0 0.0
    %8682 = vmatprep.subr.mxu0 0.0
    %8683 = vmatpush1.msra.mxu0 0.0
    %8684 = vmatprep.subr.mxu0 0.0
    %8685 = vmatpush1.msra.mxu0 0.0
    %8686 = vmatprep.subr.mxu0 0.0
    %8687 = vmatpush1.msra.mxu0 0.0
    %8688 = vmatprep.subr.mxu0 0.0
    %8689 = vmatpush1.msra.mxu0 0.0
    %8690 = vmatprep.subr.mxu0 0.0
    %8691 = vmatpush1.msra.mxu0 0.0
    %8692 = vmatprep.subr.mxu0 0.0
    %8693 = vmatpush1.msra.mxu0 0.0
    %8694 = vmatprep.subr.mxu0 0.0
    %8695 = vmatpush1.msra.mxu0 0.0
    %8696 = vmatprep.subr.mxu0 0.0
    %8697 = vmatpush1.msra.mxu0 0.0
    %8698 = vmatprep.subr.mxu0 0.0
    %8699 = vmatpush1.msra.mxu0 0.0
    %8700 = vmatprep.subr.mxu0 0.0
    %8701 = vmatpush1.msra.mxu0 0.0
    %8702 = vmatprep.subr.mxu0 0.0
    %v8703 = vand.u32 %v8447, 4294901760
    %v8704 = vsub.f32 %v8447, %v8703
    %8705 = vmatpush1.msra.mxu0 %v8704
    %8706 = vmatprep.subr.mxu0 0.0
    %v8707 = vand.u32 %v8446, 4294901760
    %v8708 = vsub.f32 %v8446, %v8707
    %8709 = vmatpush1.msra.mxu0 %v8708
    %8710 = vmatprep.subr.mxu0 0.0
    %v8711 = vand.u32 %v8445, 4294901760
    %v8712 = vsub.f32 %v8445, %v8711
    %8713 = vmatpush1.msra.mxu0 %v8712
    %8714 = vmatprep.subr.mxu0 0.0
    %v8715 = vand.u32 %v8444, 4294901760
    %v8716 = vsub.f32 %v8444, %v8715
    %8717 = vmatpush1.msra.mxu0 %v8716
    %8718 = vmatprep.subr.mxu0 0.0
    %8719 = vmatpush2.msra.mxu0 0.0
    %8720 = vmatprep.subr.mxu0 0.0
    %8721 = vmatpush2.msra.mxu0 0.0
    %8722 = vmatprep.subr.mxu0 0.0
    %8723 = vmatpush2.msra.mxu0 0.0
    %8724 = vmatprep.subr.mxu0 0.0
    %8725 = vmatpush2.msra.mxu0 0.0
    %8726 = vmatprep.subr.mxu0 0.0
    %8727 = vmatpush2.msra.mxu0 0.0
    %8728 = vmatprep.subr.mxu0 0.0
    %8729 = vmatpush2.msra.mxu0 0.0
    %8730 = vmatprep.subr.mxu0 0.0
    %8731 = vmatpush2.msra.mxu0 0.0
    %8732 = vmatprep.subr.mxu0 0.0
    %8733 = vmatpush2.msra.mxu0 0.0
    %8734 = vmatprep.subr.mxu0 0.0
    %8735 = vmatpush2.msra.mxu0 0.0
    %8736 = vmatprep.subr.mxu0 0.0
    %8737 = vmatpush2.msra.mxu0 0.0
    %8738 = vmatprep.subr.mxu0 0.0
    %8739 = vmatpush2.msra.mxu0 0.0
    %8740 = vmatprep.subr.mxu0 0.0
    %8741 = vmatpush2.msra.mxu0 0.0
    %8742 = vmatprep.subr.mxu0 0.0
    %8743 = vmatpush2.msra.mxu0 0.0
    %8744 = vmatprep.subr.mxu0 0.0
    %8745 = vmatpush2.msra.mxu0 0.0
    %8746 = vmatprep.subr.mxu0 0.0
    %8747 = vmatpush2.msra.mxu0 0.0
    %8748 = vmatprep.subr.mxu0 0.0
    %8749 = vmatpush2.msra.mxu0 0.0
    %8750 = vmatprep.mubr.f32.mxu0 0.0
    %v8751 = vand.u32 %v8449, 4294901760
    %v8752 = vsub.f32 %v8449, %v8751
    %8753 = vmatmul.mubr.f32.gmra.mxu0 %v8752
    %v8754 = vpop.f32.mrf.mxu0
    %v8755 = vadd.f32 %v8657, %v8754
    %v8756 = vpop.f32.mrf.mxu0
    %8757 = vmatprep.mubr.f32.mxu0 0.0
    %v8758 = vand.u32 %v8452, 4294901760
    %v8759 = vsub.f32 %v8452, %v8758
    %8760 = vmatmul.mubr.f32.gmra.mxu0 %v8759
    %v8761 = vpop.f32.mrf.mxu0
    %v8762 = vadd.f32 %v8663, %v8761
    %v8763 = vpop.f32.mrf.mxu0
    %8764 = vmatprep.mubr.f32.mxu0 0.0
    %v8765 = vand.u32 %v8455, 4294901760
    %v8766 = vsub.f32 %v8455, %v8765
    %8767 = vmatmul.mubr.f32.gmra.mxu0 %v8766
    %v8768 = vpop.f32.mrf.mxu0
    %v8769 = vadd.f32 %v8669, %v8768
    %v8770 = vpop.f32.mrf.mxu0
    %8771 = vmatprep.mubr.f32.mxu0 0.0
    %v8772 = vand.u32 %v8458, 4294901760
    %v8773 = vsub.f32 %v8458, %v8772
    %8774 = vmatmul.mubr.f32.gmra.mxu0 %v8773
    %v8775 = vpop.f32.mrf.mxu0
    %v8776 = vadd.f32 %v8675, %v8775
    %v8777 = vpop.f32.mrf.mxu0
    %8778 = vdwg.mxu0
    %8779 = vmatprep.subr.mxu0 0.0
    %8780 = vmatpush1.msra.mxu0 0.0
    %8781 = vmatprep.subr.mxu0 0.0
    %8782 = vmatpush1.msra.mxu0 0.0
    %8783 = vmatprep.subr.mxu0 0.0
    %8784 = vmatpush1.msra.mxu0 0.0
    %8785 = vmatprep.subr.mxu0 0.0
    %8786 = vmatpush1.msra.mxu0 0.0
    %8787 = vmatprep.subr.mxu0 0.0
    %8788 = vmatpush1.msra.mxu0 0.0
    %8789 = vmatprep.subr.mxu0 0.0
    %8790 = vmatpush1.msra.mxu0 0.0
    %8791 = vmatprep.subr.mxu0 0.0
    %8792 = vmatpush1.msra.mxu0 0.0
    %8793 = vmatprep.subr.mxu0 0.0
    %8794 = vmatpush1.msra.mxu0 0.0
    %8795 = vmatprep.subr.mxu0 0.0
    %8796 = vmatpush1.msra.mxu0 0.0
    %8797 = vmatprep.subr.mxu0 0.0
    %8798 = vmatpush1.msra.mxu0 0.0
    %8799 = vmatprep.subr.mxu0 0.0
    %8800 = vmatpush1.msra.mxu0 0.0
    %8801 = vmatprep.subr.mxu0 0.0
    %8802 = vmatpush1.msra.mxu0 0.0
    %8803 = vmatprep.subr.mxu0 0.0
    %v8804 = vand.u32 %v8447, 4294901760
    %8805 = vmatpush1.msra.mxu0 %v8804
    %8806 = vmatprep.subr.mxu0 0.0
    %v8807 = vand.u32 %v8446, 4294901760
    %8808 = vmatpush1.msra.mxu0 %v8807
    %8809 = vmatprep.subr.mxu0 0.0
    %v8810 = vand.u32 %v8445, 4294901760
    %8811 = vmatpush1.msra.mxu0 %v8810
    %8812 = vmatprep.subr.mxu0 0.0
    %v8813 = vand.u32 %v8444, 4294901760
    %8814 = vmatpush1.msra.mxu0 %v8813
    %8815 = vmatprep.subr.mxu0 0.0
    %8816 = vmatpush2.msra.mxu0 0.0
    %8817 = vmatprep.subr.mxu0 0.0
    %8818 = vmatpush2.msra.mxu0 0.0
    %8819 = vmatprep.subr.mxu0 0.0
    %8820 = vmatpush2.msra.mxu0 0.0
    %8821 = vmatprep.subr.mxu0 0.0
    %8822 = vmatpush2.msra.mxu0 0.0
    %8823 = vmatprep.subr.mxu0 0.0
    %8824 = vmatpush2.msra.mxu0 0.0
    %8825 = vmatprep.subr.mxu0 0.0
    %8826 = vmatpush2.msra.mxu0 0.0
    %8827 = vmatprep.subr.mxu0 0.0
    %8828 = vmatpush2.msra.mxu0 0.0
    %8829 = vmatprep.subr.mxu0 0.0
    %8830 = vmatpush2.msra.mxu0 0.0
    %8831 = vmatprep.subr.mxu0 0.0
    %8832 = vmatpush2.msra.mxu0 0.0
    %8833 = vmatprep.subr.mxu0 0.0
    %8834 = vmatpush2.msra.mxu0 0.0
    %8835 = vmatprep.subr.mxu0 0.0
    %8836 = vmatpush2.msra.mxu0 0.0
    %8837 = vmatprep.subr.mxu0 0.0
    %8838 = vmatpush2.msra.mxu0 0.0
    %8839 = vmatprep.subr.mxu0 0.0
    %8840 = vmatpush2.msra.mxu0 0.0
    %8841 = vmatprep.subr.mxu0 0.0
    %8842 = vmatpush2.msra.mxu0 0.0
    %8843 = vmatprep.subr.mxu0 0.0
    %8844 = vmatpush2.msra.mxu0 0.0
    %8845 = vmatprep.subr.mxu0 0.0
    %8846 = vmatpush2.msra.mxu0 0.0
    %8847 = vmatprep.mubr.f32.mxu0 0.0
    %v8848 = vand.u32 %v8449, 4294901760
    %v8849 = vsub.f32 %v8449, %v8848
    %v8850 = vand.u32 %v8849, 4294901760
    %8851 = vmatmul.mubr.f32.gmra.mxu0 %v8850
    %v8852 = vpop.f32.mrf.mxu0
    %v8853 = vadd.f32 %v8755, %v8852
    %v8854 = vpop.f32.mrf.mxu0
    %8855 = vmatprep.mubr.f32.mxu0 0.0
    %v8856 = vand.u32 %v8452, 4294901760
    %v8857 = vsub.f32 %v8452, %v8856
    %v8858 = vand.u32 %v8857, 4294901760
    %8859 = vmatmul.mubr.f32.gmra.mxu0 %v8858
    %v8860 = vpop.f32.mrf.mxu0
    %v8861 = vadd.f32 %v8762, %v8860
    %v8862 = vpop.f32.mrf.mxu0
    %8863 = vmatprep.mubr.f32.mxu0 0.0
    %v8864 = vand.u32 %v8455, 4294901760
    %v8865 = vsub.f32 %v8455, %v8864
    %v8866 = vand.u32 %v8865, 4294901760
    %8867 = vmatmul.mubr.f32.gmra.mxu0 %v8866
    %v8868 = vpop.f32.mrf.mxu0
    %v8869 = vadd.f32 %v8769, %v8868
    %v8870 = vpop.f32.mrf.mxu0
    %8871 = vmatprep.mubr.f32.mxu0 0.0
    %v8872 = vand.u32 %v8458, 4294901760
    %v8873 = vsub.f32 %v8458, %v8872
    %v8874 = vand.u32 %v8873, 4294901760
    %8875 = vmatmul.mubr.f32.gmra.mxu0 %v8874
    %v8876 = vpop.f32.mrf.mxu0
    %v8877 = vadd.f32 %v8776, %v8876
    %v8878 = vpop.f32.mrf.mxu0
    %8879 = vdwg.mxu0
    %8880 = vmatprep.subr.mxu0 0.0
    %8881 = vmatpush1.msra.mxu0 0.0
    %8882 = vmatprep.subr.mxu0 0.0
    %8883 = vmatpush1.msra.mxu0 0.0
    %8884 = vmatprep.subr.mxu0 0.0
    %8885 = vmatpush1.msra.mxu0 0.0
    %8886 = vmatprep.subr.mxu0 0.0
    %8887 = vmatpush1.msra.mxu0 0.0
    %8888 = vmatprep.subr.mxu0 0.0
    %8889 = vmatpush1.msra.mxu0 0.0
    %8890 = vmatprep.subr.mxu0 0.0
    %8891 = vmatpush1.msra.mxu0 0.0
    %8892 = vmatprep.subr.mxu0 0.0
    %8893 = vmatpush1.msra.mxu0 0.0
    %8894 = vmatprep.subr.mxu0 0.0
    %8895 = vmatpush1.msra.mxu0 0.0
    %8896 = vmatprep.subr.mxu0 0.0
    %8897 = vmatpush1.msra.mxu0 0.0
    %8898 = vmatprep.subr.mxu0 0.0
    %8899 = vmatpush1.msra.mxu0 0.0
    %8900 = vmatprep.subr.mxu0 0.0
    %8901 = vmatpush1.msra.mxu0 0.0
    %8902 = vmatprep.subr.mxu0 0.0
    %8903 = vmatpush1.msra.mxu0 0.0
    %8904 = vmatprep.subr.mxu0 0.0
    %v8905 = vand.u32 %v8447, 4294901760
    %v8906 = vsub.f32 %v8447, %v8905
    %v8907 = vand.u32 %v8906, 4294901760
    %8908 = vmatpush1.msra.mxu0 %v8907
    %8909 = vmatprep.subr.mxu0 0.0
    %v8910 = vand.u32 %v8446, 4294901760
    %v8911 = vsub.f32 %v8446, %v8910
    %v8912 = vand.u32 %v8911, 4294901760
    %8913 = vmatpush1.msra.mxu0 %v8912
    %8914 = vmatprep.subr.mxu0 0.0
    %v8915 = vand.u32 %v8445, 4294901760
    %v8916 = vsub.f32 %v8445, %v8915
    %v8917 = vand.u32 %v8916, 4294901760
    %8918 = vmatpush1.msra.mxu0 %v8917
    %8919 = vmatprep.subr.mxu0 0.0
    %v8920 = vand.u32 %v8444, 4294901760
    %v8921 = vsub.f32 %v8444, %v8920
    %v8922 = vand.u32 %v8921, 4294901760
    %8923 = vmatpush1.msra.mxu0 %v8922
    %8924 = vmatprep.subr.mxu0 0.0
    %8925 = vmatpush2.msra.mxu0 0.0
    %8926 = vmatprep.subr.mxu0 0.0
    %8927 = vmatpush2.msra.mxu0 0.0
    %8928 = vmatprep.subr.mxu0 0.0
    %8929 = vmatpush2.msra.mxu0 0.0
    %8930 = vmatprep.subr.mxu0 0.0
    %8931 = vmatpush2.msra.mxu0 0.0
    %8932 = vmatprep.subr.mxu0 0.0
    %8933 = vmatpush2.msra.mxu0 0.0
    %8934 = vmatprep.subr.mxu0 0.0
    %8935 = vmatpush2.msra.mxu0 0.0
    %8936 = vmatprep.subr.mxu0 0.0
    %8937 = vmatpush2.msra.mxu0 0.0
    %8938 = vmatprep.subr.mxu0 0.0
    %8939 = vmatpush2.msra.mxu0 0.0
    %8940 = vmatprep.subr.mxu0 0.0
    %8941 = vmatpush2.msra.mxu0 0.0
    %8942 = vmatprep.subr.mxu0 0.0
    %8943 = vmatpush2.msra.mxu0 0.0
    %8944 = vmatprep.subr.mxu0 0.0
    %8945 = vmatpush2.msra.mxu0 0.0
    %8946 = vmatprep.subr.mxu0 0.0
    %8947 = vmatpush2.msra.mxu0 0.0
    %8948 = vmatprep.subr.mxu0 0.0
    %8949 = vmatpush2.msra.mxu0 0.0
    %8950 = vmatprep.subr.mxu0 0.0
    %8951 = vmatpush2.msra.mxu0 0.0
    %8952 = vmatprep.subr.mxu0 0.0
    %8953 = vmatpush2.msra.mxu0 0.0
    %8954 = vmatprep.subr.mxu0 0.0
    %8955 = vmatpush2.msra.mxu0 0.0
    %8956 = vmatprep.mubr.f32.mxu0 0.0
    %v8957 = vand.u32 %v8449, 4294901760
    %8958 = vmatmul.mubr.f32.gmra.mxu0 %v8957
    %v8959 = vpop.f32.mrf.mxu0
    %v8960 = vadd.f32 %v8853, %v8959
    %v8961 = vpop.f32.mrf.mxu0
    %8962 = vmatprep.mubr.f32.mxu0 0.0
    %v8963 = vand.u32 %v8452, 4294901760
    %8964 = vmatmul.mubr.f32.gmra.mxu0 %v8963
    %v8965 = vpop.f32.mrf.mxu0
    %v8966 = vadd.f32 %v8861, %v8965
    %v8967 = vpop.f32.mrf.mxu0
    %8968 = vmatprep.mubr.f32.mxu0 0.0
    %v8969 = vand.u32 %v8455, 4294901760
    %8970 = vmatmul.mubr.f32.gmra.mxu0 %v8969
    %v8971 = vpop.f32.mrf.mxu0
    %v8972 = vadd.f32 %v8869, %v8971
    %v8973 = vpop.f32.mrf.mxu0
    %8974 = vmatprep.mubr.f32.mxu0 0.0
    %v8975 = vand.u32 %v8458, 4294901760
    %8976 = vmatmul.mubr.f32.gmra.mxu0 %v8975
    %v8977 = vpop.f32.mrf.mxu0
    %v8978 = vadd.f32 %v8877, %v8977
    %v8979 = vpop.f32.mrf.mxu0
    %8980 = vdwg.mxu0
    %8981 = vmatprep.subr.mxu0 0.0
    %8982 = vmatpush1.msra.mxu0 0.0
    %8983 = vmatprep.subr.mxu0 0.0
    %8984 = vmatpush1.msra.mxu0 0.0
    %8985 = vmatprep.subr.mxu0 0.0
    %8986 = vmatpush1.msra.mxu0 0.0
    %8987 = vmatprep.subr.mxu0 0.0
    %8988 = vmatpush1.msra.mxu0 0.0
    %8989 = vmatprep.subr.mxu0 0.0
    %8990 = vmatpush1.msra.mxu0 0.0
    %8991 = vmatprep.subr.mxu0 0.0
    %8992 = vmatpush1.msra.mxu0 0.0
    %8993 = vmatprep.subr.mxu0 0.0
    %8994 = vmatpush1.msra.mxu0 0.0
    %8995 = vmatprep.subr.mxu0 0.0
    %8996 = vmatpush1.msra.mxu0 0.0
    %8997 = vmatprep.subr.mxu0 0.0
    %8998 = vmatpush1.msra.mxu0 0.0
    %8999 = vmatprep.subr.mxu0 0.0
    %9000 = vmatpush1.msra.mxu0 0.0
    %9001 = vmatprep.subr.mxu0 0.0
    %9002 = vmatpush1.msra.mxu0 0.0
    %9003 = vmatprep.subr.mxu0 0.0
    %9004 = vmatpush1.msra.mxu0 0.0
    %9005 = vmatprep.subr.mxu0 0.0
    %v9006 = vand.u32 %v8447, 4294901760
    %9007 = vmatpush1.msra.mxu0 %v9006
    %9008 = vmatprep.subr.mxu0 0.0
    %v9009 = vand.u32 %v8446, 4294901760
    %9010 = vmatpush1.msra.mxu0 %v9009
    %9011 = vmatprep.subr.mxu0 0.0
    %v9012 = vand.u32 %v8445, 4294901760
    %9013 = vmatpush1.msra.mxu0 %v9012
    %9014 = vmatprep.subr.mxu0 0.0
    %v9015 = vand.u32 %v8444, 4294901760
    %9016 = vmatpush1.msra.mxu0 %v9015
    %9017 = vmatprep.subr.mxu0 0.0
    %9018 = vmatpush2.msra.mxu0 0.0
    %9019 = vmatprep.subr.mxu0 0.0
    %9020 = vmatpush2.msra.mxu0 0.0
    %9021 = vmatprep.subr.mxu0 0.0
    %9022 = vmatpush2.msra.mxu0 0.0
    %9023 = vmatprep.subr.mxu0 0.0
    %9024 = vmatpush2.msra.mxu0 0.0
    %9025 = vmatprep.subr.mxu0 0.0
    %9026 = vmatpush2.msra.mxu0 0.0
    %9027 = vmatprep.subr.mxu0 0.0
    %9028 = vmatpush2.msra.mxu0 0.0
    %9029 = vmatprep.subr.mxu0 0.0
    %9030 = vmatpush2.msra.mxu0 0.0
    %9031 = vmatprep.subr.mxu0 0.0
    %9032 = vmatpush2.msra.mxu0 0.0
    %9033 = vmatprep.subr.mxu0 0.0
    %9034 = vmatpush2.msra.mxu0 0.0
    %9035 = vmatprep.subr.mxu0 0.0
    %9036 = vmatpush2.msra.mxu0 0.0
    %9037 = vmatprep.subr.mxu0 0.0
    %9038 = vmatpush2.msra.mxu0 0.0
    %9039 = vmatprep.subr.mxu0 0.0
    %9040 = vmatpush2.msra.mxu0 0.0
    %9041 = vmatprep.subr.mxu0 0.0
    %9042 = vmatpush2.msra.mxu0 0.0
    %9043 = vmatprep.subr.mxu0 0.0
    %9044 = vmatpush2.msra.mxu0 0.0
    %9045 = vmatprep.subr.mxu0 0.0
    %9046 = vmatpush2.msra.mxu0 0.0
    %9047 = vmatprep.subr.mxu0 0.0
    %9048 = vmatpush2.msra.mxu0 0.0
    %9049 = vmatprep.mubr.f32.mxu0 0.0
    %v9050 = vand.u32 %v8449, 4294901760
    %9051 = vmatmul.mubr.f32.gmra.mxu0 %v9050
    %v9052 = vpop.f32.mrf.mxu0
    %v9053 = vadd.f32 %v8960, %v9052
    %v9054 = vpop.f32.mrf.mxu0
    %9055 = vmatprep.mubr.f32.mxu0 0.0
    %v9056 = vand.u32 %v8452, 4294901760
    %9057 = vmatmul.mubr.f32.gmra.mxu0 %v9056
    %v9058 = vpop.f32.mrf.mxu0
    %v9059 = vadd.f32 %v8966, %v9058
    %v9060 = vpop.f32.mrf.mxu0
    %9061 = vmatprep.mubr.f32.mxu0 0.0
    %v9062 = vand.u32 %v8455, 4294901760
    %9063 = vmatmul.mubr.f32.gmra.mxu0 %v9062
    %v9064 = vpop.f32.mrf.mxu0
    %v9065 = vadd.f32 %v8972, %v9064
    %v9066 = vpop.f32.mrf.mxu0
    %9067 = vmatprep.mubr.f32.mxu0 0.0
    %v9068 = vand.u32 %v8458, 4294901760
    %9069 = vmatmul.mubr.f32.gmra.mxu0 %v9068
    %v9070 = vpop.f32.mrf.mxu0
    %v9071 = vadd.f32 %v8978, %v9070
    %v9072 = vpop.f32.mrf.mxu0
    %9073 = vdwg.mxu0
    %v9074 = vadd.f32 %v8435, %v9053
    %v9075 = vadd.f32 %v8436, %v9059
    %v9076 = vadd.f32 %v8437, %v9065
    %v9077 = vadd.f32 %v8438, %v9071
    %v9078 = vld [vmem:[#allocation2 + $0x8] sm:$0xff]
    %v9079 = vld [vmem:[#allocation2 + $0x10] sm:$0xff]
    %v9080 = vld [vmem:[#allocation2 + $0x28] sm:$0xff]
    %v9081 = vld [vmem:[#allocation2 + $0x30] sm:$0xff]
    %s9082 = scalar_lea.vmem [#allocation8], 448
    %v9083 = vld [vmem:[%s9082] sm:$0xff]
    %v9084 = vld [vmem:[%s9082 + $0x8] sm:$0xff]
    %v9085 = vld [vmem:[%s9082 + $0x10] sm:$0xff]
    %v9086 = vld [vmem:[%s9082 + $0x18] sm:$0xff]
    %v9088 = vsel %vm57, %v9078, 0
    %v9091 = vsel %vm57, %v9079, 0
    %v9094 = vsel %vm57, %v9080, 0
    %v9097 = vsel %vm57, %v9081, 0
    %9099 = vmatprep.subr.mxu0 0.0
    %9100 = vmatpush1.msra.mxu0 0.0
    %9101 = vmatprep.subr.mxu0 0.0
    %9102 = vmatpush1.msra.mxu0 0.0
    %9103 = vmatprep.subr.mxu0 0.0
    %9104 = vmatpush1.msra.mxu0 0.0
    %9105 = vmatprep.subr.mxu0 0.0
    %9106 = vmatpush1.msra.mxu0 0.0
    %9107 = vmatprep.subr.mxu0 0.0
    %9108 = vmatpush1.msra.mxu0 0.0
    %9109 = vmatprep.subr.mxu0 0.0
    %9110 = vmatpush1.msra.mxu0 0.0
    %9111 = vmatprep.subr.mxu0 0.0
    %9112 = vmatpush1.msra.mxu0 0.0
    %9113 = vmatprep.subr.mxu0 0.0
    %9114 = vmatpush1.msra.mxu0 0.0
    %9115 = vmatprep.subr.mxu0 0.0
    %9116 = vmatpush1.msra.mxu0 0.0
    %9117 = vmatprep.subr.mxu0 0.0
    %9118 = vmatpush1.msra.mxu0 0.0
    %9119 = vmatprep.subr.mxu0 0.0
    %9120 = vmatpush1.msra.mxu0 0.0
    %9121 = vmatprep.subr.mxu0 0.0
    %9122 = vmatpush1.msra.mxu0 0.0
    %9123 = vmatprep.subr.mxu0 0.0
    %v9124 = vand.u32 %v9086, 4294901760
    %9125 = vmatpush1.msra.mxu0 %v9124
    %9126 = vmatprep.subr.mxu0 0.0
    %v9127 = vand.u32 %v9085, 4294901760
    %9128 = vmatpush1.msra.mxu0 %v9127
    %9129 = vmatprep.subr.mxu0 0.0
    %v9130 = vand.u32 %v9084, 4294901760
    %9131 = vmatpush1.msra.mxu0 %v9130
    %9132 = vmatprep.subr.mxu0 0.0
    %v9133 = vand.u32 %v9083, 4294901760
    %9134 = vmatpush1.msra.mxu0 %v9133
    %9135 = vmatprep.subr.mxu0 0.0
    %9136 = vmatpush2.msra.mxu0 0.0
    %9137 = vmatprep.subr.mxu0 0.0
    %9138 = vmatpush2.msra.mxu0 0.0
    %9139 = vmatprep.subr.mxu0 0.0
    %9140 = vmatpush2.msra.mxu0 0.0
    %9141 = vmatprep.subr.mxu0 0.0
    %9142 = vmatpush2.msra.mxu0 0.0
    %9143 = vmatprep.subr.mxu0 0.0
    %9144 = vmatpush2.msra.mxu0 0.0
    %9145 = vmatprep.subr.mxu0 0.0
    %9146 = vmatpush2.msra.mxu0 0.0
    %9147 = vmatprep.subr.mxu0 0.0
    %9148 = vmatpush2.msra.mxu0 0.0
    %9149 = vmatprep.subr.mxu0 0.0
    %9150 = vmatpush2.msra.mxu0 0.0
    %9151 = vmatprep.subr.mxu0 0.0
    %9152 = vmatpush2.msra.mxu0 0.0
    %9153 = vmatprep.subr.mxu0 0.0
    %9154 = vmatpush2.msra.mxu0 0.0
    %9155 = vmatprep.subr.mxu0 0.0
    %9156 = vmatpush2.msra.mxu0 0.0
    %9157 = vmatprep.subr.mxu0 0.0
    %9158 = vmatpush2.msra.mxu0 0.0
    %9159 = vmatprep.subr.mxu0 0.0
    %9160 = vmatpush2.msra.mxu0 0.0
    %9161 = vmatprep.subr.mxu0 0.0
    %9162 = vmatpush2.msra.mxu0 0.0
    %9163 = vmatprep.subr.mxu0 0.0
    %9164 = vmatpush2.msra.mxu0 0.0
    %9165 = vmatprep.subr.mxu0 0.0
    %9166 = vmatpush2.msra.mxu0 0.0
    %9167 = vmatprep.mubr.f32.mxu0 0.0
    %v9168 = vand.u32 %v9088, 4294901760
    %v9169 = vsub.f32 %v9088, %v9168
    %v9170 = vand.u32 %v9169, 4294901760
    %v9171 = vsub.f32 %v9169, %v9170
    %v9172 = vand.u32 %v9171, 4294901760
    %9173 = vmatmul.mubr.f32.gmra.mxu0 %v9172
    %v9174 = vpop.f32.mrf.mxu0
    %v9175 = vadd.f32 0.0, %v9174
    %v9176 = vpop.f32.mrf.mxu0
    %9177 = vmatprep.mubr.f32.mxu0 0.0
    %v9178 = vand.u32 %v9091, 4294901760
    %v9179 = vsub.f32 %v9091, %v9178
    %v9180 = vand.u32 %v9179, 4294901760
    %v9181 = vsub.f32 %v9179, %v9180
    %v9182 = vand.u32 %v9181, 4294901760
    %9183 = vmatmul.mubr.f32.gmra.mxu0 %v9182
    %v9184 = vpop.f32.mrf.mxu0
    %v9185 = vadd.f32 0.0, %v9184
    %v9186 = vpop.f32.mrf.mxu0
    %9187 = vmatprep.mubr.f32.mxu0 0.0
    %v9188 = vand.u32 %v9094, 4294901760
    %v9189 = vsub.f32 %v9094, %v9188
    %v9190 = vand.u32 %v9189, 4294901760
    %v9191 = vsub.f32 %v9189, %v9190
    %v9192 = vand.u32 %v9191, 4294901760
    %9193 = vmatmul.mubr.f32.gmra.mxu0 %v9192
    %v9194 = vpop.f32.mrf.mxu0
    %v9195 = vadd.f32 0.0, %v9194
    %v9196 = vpop.f32.mrf.mxu0
    %9197 = vmatprep.mubr.f32.mxu0 0.0
    %v9198 = vand.u32 %v9097, 4294901760
    %v9199 = vsub.f32 %v9097, %v9198
    %v9200 = vand.u32 %v9199, 4294901760
    %v9201 = vsub.f32 %v9199, %v9200
    %v9202 = vand.u32 %v9201, 4294901760
    %9203 = vmatmul.mubr.f32.gmra.mxu0 %v9202
    %v9204 = vpop.f32.mrf.mxu0
    %v9205 = vadd.f32 0.0, %v9204
    %v9206 = vpop.f32.mrf.mxu0
    %9207 = vdwg.mxu0
    %9208 = vmatprep.subr.mxu0 0.0
    %9209 = vmatpush1.msra.mxu0 0.0
    %9210 = vmatprep.subr.mxu0 0.0
    %9211 = vmatpush1.msra.mxu0 0.0
    %9212 = vmatprep.subr.mxu0 0.0
    %9213 = vmatpush1.msra.mxu0 0.0
    %9214 = vmatprep.subr.mxu0 0.0
    %9215 = vmatpush1.msra.mxu0 0.0
    %9216 = vmatprep.subr.mxu0 0.0
    %9217 = vmatpush1.msra.mxu0 0.0
    %9218 = vmatprep.subr.mxu0 0.0
    %9219 = vmatpush1.msra.mxu0 0.0
    %9220 = vmatprep.subr.mxu0 0.0
    %9221 = vmatpush1.msra.mxu0 0.0
    %9222 = vmatprep.subr.mxu0 0.0
    %9223 = vmatpush1.msra.mxu0 0.0
    %9224 = vmatprep.subr.mxu0 0.0
    %9225 = vmatpush1.msra.mxu0 0.0
    %9226 = vmatprep.subr.mxu0 0.0
    %9227 = vmatpush1.msra.mxu0 0.0
    %9228 = vmatprep.subr.mxu0 0.0
    %9229 = vmatpush1.msra.mxu0 0.0
    %9230 = vmatprep.subr.mxu0 0.0
    %9231 = vmatpush1.msra.mxu0 0.0
    %9232 = vmatprep.subr.mxu0 0.0
    %v9233 = vand.u32 %v9086, 4294901760
    %v9234 = vsub.f32 %v9086, %v9233
    %v9235 = vand.u32 %v9234, 4294901760
    %v9236 = vsub.f32 %v9234, %v9235
    %v9237 = vand.u32 %v9236, 4294901760
    %9238 = vmatpush1.msra.mxu0 %v9237
    %9239 = vmatprep.subr.mxu0 0.0
    %v9240 = vand.u32 %v9085, 4294901760
    %v9241 = vsub.f32 %v9085, %v9240
    %v9242 = vand.u32 %v9241, 4294901760
    %v9243 = vsub.f32 %v9241, %v9242
    %v9244 = vand.u32 %v9243, 4294901760
    %9245 = vmatpush1.msra.mxu0 %v9244
    %9246 = vmatprep.subr.mxu0 0.0
    %v9247 = vand.u32 %v9084, 4294901760
    %v9248 = vsub.f32 %v9084, %v9247
    %v9249 = vand.u32 %v9248, 4294901760
    %v9250 = vsub.f32 %v9248, %v9249
    %v9251 = vand.u32 %v9250, 4294901760
    %9252 = vmatpush1.msra.mxu0 %v9251
    %9253 = vmatprep.subr.mxu0 0.0
    %v9254 = vand.u32 %v9083, 4294901760
    %v9255 = vsub.f32 %v9083, %v9254
    %v9256 = vand.u32 %v9255, 4294901760
    %v9257 = vsub.f32 %v9255, %v9256
    %v9258 = vand.u32 %v9257, 4294901760
    %9259 = vmatpush1.msra.mxu0 %v9258
    %9260 = vmatprep.subr.mxu0 0.0
    %9261 = vmatpush2.msra.mxu0 0.0
    %9262 = vmatprep.subr.mxu0 0.0
    %9263 = vmatpush2.msra.mxu0 0.0
    %9264 = vmatprep.subr.mxu0 0.0
    %9265 = vmatpush2.msra.mxu0 0.0
    %9266 = vmatprep.subr.mxu0 0.0
    %9267 = vmatpush2.msra.mxu0 0.0
    %9268 = vmatprep.subr.mxu0 0.0
    %9269 = vmatpush2.msra.mxu0 0.0
    %9270 = vmatprep.subr.mxu0 0.0
    %9271 = vmatpush2.msra.mxu0 0.0
    %9272 = vmatprep.subr.mxu0 0.0
    %9273 = vmatpush2.msra.mxu0 0.0
    %9274 = vmatprep.subr.mxu0 0.0
    %9275 = vmatpush2.msra.mxu0 0.0
    %9276 = vmatprep.subr.mxu0 0.0
    %9277 = vmatpush2.msra.mxu0 0.0
    %9278 = vmatprep.subr.mxu0 0.0
    %9279 = vmatpush2.msra.mxu0 0.0
    %9280 = vmatprep.subr.mxu0 0.0
    %9281 = vmatpush2.msra.mxu0 0.0
    %9282 = vmatprep.subr.mxu0 0.0
    %9283 = vmatpush2.msra.mxu0 0.0
    %9284 = vmatprep.subr.mxu0 0.0
    %9285 = vmatpush2.msra.mxu0 0.0
    %9286 = vmatprep.subr.mxu0 0.0
    %9287 = vmatpush2.msra.mxu0 0.0
    %9288 = vmatprep.subr.mxu0 0.0
    %9289 = vmatpush2.msra.mxu0 0.0
    %9290 = vmatprep.subr.mxu0 0.0
    %9291 = vmatpush2.msra.mxu0 0.0
    %9292 = vmatprep.mubr.f32.mxu0 0.0
    %v9293 = vand.u32 %v9088, 4294901760
    %9294 = vmatmul.mubr.f32.gmra.mxu0 %v9293
    %v9295 = vpop.f32.mrf.mxu0
    %v9296 = vadd.f32 %v9175, %v9295
    %v9297 = vpop.f32.mrf.mxu0
    %9298 = vmatprep.mubr.f32.mxu0 0.0
    %v9299 = vand.u32 %v9091, 4294901760
    %9300 = vmatmul.mubr.f32.gmra.mxu0 %v9299
    %v9301 = vpop.f32.mrf.mxu0
    %v9302 = vadd.f32 %v9185, %v9301
    %v9303 = vpop.f32.mrf.mxu0
    %9304 = vmatprep.mubr.f32.mxu0 0.0
    %v9305 = vand.u32 %v9094, 4294901760
    %9306 = vmatmul.mubr.f32.gmra.mxu0 %v9305
    %v9307 = vpop.f32.mrf.mxu0
    %v9308 = vadd.f32 %v9195, %v9307
    %v9309 = vpop.f32.mrf.mxu0
    %9310 = vmatprep.mubr.f32.mxu0 0.0
    %v9311 = vand.u32 %v9097, 4294901760
    %9312 = vmatmul.mubr.f32.gmra.mxu0 %v9311
    %v9313 = vpop.f32.mrf.mxu0
    %v9314 = vadd.f32 %v9205, %v9313
    %v9315 = vpop.f32.mrf.mxu0
    %9316 = vdwg.mxu0
    %9317 = vmatprep.subr.mxu0 0.0
    %9318 = vmatpush1.msra.mxu0 0.0
    %9319 = vmatprep.subr.mxu0 0.0
    %9320 = vmatpush1.msra.mxu0 0.0
    %9321 = vmatprep.subr.mxu0 0.0
    %9322 = vmatpush1.msra.mxu0 0.0
    %9323 = vmatprep.subr.mxu0 0.0
    %9324 = vmatpush1.msra.mxu0 0.0
    %9325 = vmatprep.subr.mxu0 0.0
    %9326 = vmatpush1.msra.mxu0 0.0
    %9327 = vmatprep.subr.mxu0 0.0
    %9328 = vmatpush1.msra.mxu0 0.0
    %9329 = vmatprep.subr.mxu0 0.0
    %9330 = vmatpush1.msra.mxu0 0.0
    %9331 = vmatprep.subr.mxu0 0.0
    %9332 = vmatpush1.msra.mxu0 0.0
    %9333 = vmatprep.subr.mxu0 0.0
    %9334 = vmatpush1.msra.mxu0 0.0
    %9335 = vmatprep.subr.mxu0 0.0
    %9336 = vmatpush1.msra.mxu0 0.0
    %9337 = vmatprep.subr.mxu0 0.0
    %9338 = vmatpush1.msra.mxu0 0.0
    %9339 = vmatprep.subr.mxu0 0.0
    %9340 = vmatpush1.msra.mxu0 0.0
    %9341 = vmatprep.subr.mxu0 0.0
    %v9342 = vand.u32 %v9086, 4294901760
    %v9343 = vsub.f32 %v9086, %v9342
    %9344 = vmatpush1.msra.mxu0 %v9343
    %9345 = vmatprep.subr.mxu0 0.0
    %v9346 = vand.u32 %v9085, 4294901760
    %v9347 = vsub.f32 %v9085, %v9346
    %9348 = vmatpush1.msra.mxu0 %v9347
    %9349 = vmatprep.subr.mxu0 0.0
    %v9350 = vand.u32 %v9084, 4294901760
    %v9351 = vsub.f32 %v9084, %v9350
    %9352 = vmatpush1.msra.mxu0 %v9351
    %9353 = vmatprep.subr.mxu0 0.0
    %v9354 = vand.u32 %v9083, 4294901760
    %v9355 = vsub.f32 %v9083, %v9354
    %9356 = vmatpush1.msra.mxu0 %v9355
    %9357 = vmatprep.subr.mxu0 0.0
    %9358 = vmatpush2.msra.mxu0 0.0
    %9359 = vmatprep.subr.mxu0 0.0
    %9360 = vmatpush2.msra.mxu0 0.0
    %9361 = vmatprep.subr.mxu0 0.0
    %9362 = vmatpush2.msra.mxu0 0.0
    %9363 = vmatprep.subr.mxu0 0.0
    %9364 = vmatpush2.msra.mxu0 0.0
    %9365 = vmatprep.subr.mxu0 0.0
    %9366 = vmatpush2.msra.mxu0 0.0
    %9367 = vmatprep.subr.mxu0 0.0
    %9368 = vmatpush2.msra.mxu0 0.0
    %9369 = vmatprep.subr.mxu0 0.0
    %9370 = vmatpush2.msra.mxu0 0.0
    %9371 = vmatprep.subr.mxu0 0.0
    %9372 = vmatpush2.msra.mxu0 0.0
    %9373 = vmatprep.subr.mxu0 0.0
    %9374 = vmatpush2.msra.mxu0 0.0
    %9375 = vmatprep.subr.mxu0 0.0
    %9376 = vmatpush2.msra.mxu0 0.0
    %9377 = vmatprep.subr.mxu0 0.0
    %9378 = vmatpush2.msra.mxu0 0.0
    %9379 = vmatprep.subr.mxu0 0.0
    %9380 = vmatpush2.msra.mxu0 0.0
    %9381 = vmatprep.subr.mxu0 0.0
    %9382 = vmatpush2.msra.mxu0 0.0
    %9383 = vmatprep.subr.mxu0 0.0
    %9384 = vmatpush2.msra.mxu0 0.0
    %9385 = vmatprep.subr.mxu0 0.0
    %9386 = vmatpush2.msra.mxu0 0.0
    %9387 = vmatprep.subr.mxu0 0.0
    %9388 = vmatpush2.msra.mxu0 0.0
    %9389 = vmatprep.mubr.f32.mxu0 0.0
    %v9390 = vand.u32 %v9088, 4294901760
    %v9391 = vsub.f32 %v9088, %v9390
    %9392 = vmatmul.mubr.f32.gmra.mxu0 %v9391
    %v9393 = vpop.f32.mrf.mxu0
    %v9394 = vadd.f32 %v9296, %v9393
    %v9395 = vpop.f32.mrf.mxu0
    %9396 = vmatprep.mubr.f32.mxu0 0.0
    %v9397 = vand.u32 %v9091, 4294901760
    %v9398 = vsub.f32 %v9091, %v9397
    %9399 = vmatmul.mubr.f32.gmra.mxu0 %v9398
    %v9400 = vpop.f32.mrf.mxu0
    %v9401 = vadd.f32 %v9302, %v9400
    %v9402 = vpop.f32.mrf.mxu0
    %9403 = vmatprep.mubr.f32.mxu0 0.0
    %v9404 = vand.u32 %v9094, 4294901760
    %v9405 = vsub.f32 %v9094, %v9404
    %9406 = vmatmul.mubr.f32.gmra.mxu0 %v9405
    %v9407 = vpop.f32.mrf.mxu0
    %v9408 = vadd.f32 %v9308, %v9407
    %v9409 = vpop.f32.mrf.mxu0
    %9410 = vmatprep.mubr.f32.mxu0 0.0
    %v9411 = vand.u32 %v9097, 4294901760
    %v9412 = vsub.f32 %v9097, %v9411
    %9413 = vmatmul.mubr.f32.gmra.mxu0 %v9412
    %v9414 = vpop.f32.mrf.mxu0
    %v9415 = vadd.f32 %v9314, %v9414
    %v9416 = vpop.f32.mrf.mxu0
    %9417 = vdwg.mxu0
    %9418 = vmatprep.subr.mxu0 0.0
    %9419 = vmatpush1.msra.mxu0 0.0
    %9420 = vmatprep.subr.mxu0 0.0
    %9421 = vmatpush1.msra.mxu0 0.0
    %9422 = vmatprep.subr.mxu0 0.0
    %9423 = vmatpush1.msra.mxu0 0.0
    %9424 = vmatprep.subr.mxu0 0.0
    %9425 = vmatpush1.msra.mxu0 0.0
    %9426 = vmatprep.subr.mxu0 0.0
    %9427 = vmatpush1.msra.mxu0 0.0
    %9428 = vmatprep.subr.mxu0 0.0
    %9429 = vmatpush1.msra.mxu0 0.0
    %9430 = vmatprep.subr.mxu0 0.0
    %9431 = vmatpush1.msra.mxu0 0.0
    %9432 = vmatprep.subr.mxu0 0.0
    %9433 = vmatpush1.msra.mxu0 0.0
    %9434 = vmatprep.subr.mxu0 0.0
    %9435 = vmatpush1.msra.mxu0 0.0
    %9436 = vmatprep.subr.mxu0 0.0
    %9437 = vmatpush1.msra.mxu0 0.0
    %9438 = vmatprep.subr.mxu0 0.0
    %9439 = vmatpush1.msra.mxu0 0.0
    %9440 = vmatprep.subr.mxu0 0.0
    %9441 = vmatpush1.msra.mxu0 0.0
    %9442 = vmatprep.subr.mxu0 0.0
    %v9443 = vand.u32 %v9086, 4294901760
    %9444 = vmatpush1.msra.mxu0 %v9443
    %9445 = vmatprep.subr.mxu0 0.0
    %v9446 = vand.u32 %v9085, 4294901760
    %9447 = vmatpush1.msra.mxu0 %v9446
    %9448 = vmatprep.subr.mxu0 0.0
    %v9449 = vand.u32 %v9084, 4294901760
    %9450 = vmatpush1.msra.mxu0 %v9449
    %9451 = vmatprep.subr.mxu0 0.0
    %v9452 = vand.u32 %v9083, 4294901760
    %9453 = vmatpush1.msra.mxu0 %v9452
    %9454 = vmatprep.subr.mxu0 0.0
    %9455 = vmatpush2.msra.mxu0 0.0
    %9456 = vmatprep.subr.mxu0 0.0
    %9457 = vmatpush2.msra.mxu0 0.0
    %9458 = vmatprep.subr.mxu0 0.0
    %9459 = vmatpush2.msra.mxu0 0.0
    %9460 = vmatprep.subr.mxu0 0.0
    %9461 = vmatpush2.msra.mxu0 0.0
    %9462 = vmatprep.subr.mxu0 0.0
    %9463 = vmatpush2.msra.mxu0 0.0
    %9464 = vmatprep.subr.mxu0 0.0
    %9465 = vmatpush2.msra.mxu0 0.0
    %9466 = vmatprep.subr.mxu0 0.0
    %9467 = vmatpush2.msra.mxu0 0.0
    %9468 = vmatprep.subr.mxu0 0.0
    %9469 = vmatpush2.msra.mxu0 0.0
    %9470 = vmatprep.subr.mxu0 0.0
    %9471 = vmatpush2.msra.mxu0 0.0
    %9472 = vmatprep.subr.mxu0 0.0
    %9473 = vmatpush2.msra.mxu0 0.0
    %9474 = vmatprep.subr.mxu0 0.0
    %9475 = vmatpush2.msra.mxu0 0.0
    %9476 = vmatprep.subr.mxu0 0.0
    %9477 = vmatpush2.msra.mxu0 0.0
    %9478 = vmatprep.subr.mxu0 0.0
    %9479 = vmatpush2.msra.mxu0 0.0
    %9480 = vmatprep.subr.mxu0 0.0
    %9481 = vmatpush2.msra.mxu0 0.0
    %9482 = vmatprep.subr.mxu0 0.0
    %9483 = vmatpush2.msra.mxu0 0.0
    %9484 = vmatprep.subr.mxu0 0.0
    %9485 = vmatpush2.msra.mxu0 0.0
    %9486 = vmatprep.mubr.f32.mxu0 0.0
    %v9487 = vand.u32 %v9088, 4294901760
    %v9488 = vsub.f32 %v9088, %v9487
    %v9489 = vand.u32 %v9488, 4294901760
    %9490 = vmatmul.mubr.f32.gmra.mxu0 %v9489
    %v9491 = vpop.f32.mrf.mxu0
    %v9492 = vadd.f32 %v9394, %v9491
    %v9493 = vpop.f32.mrf.mxu0
    %9494 = vmatprep.mubr.f32.mxu0 0.0
    %v9495 = vand.u32 %v9091, 4294901760
    %v9496 = vsub.f32 %v9091, %v9495
    %v9497 = vand.u32 %v9496, 4294901760
    %9498 = vmatmul.mubr.f32.gmra.mxu0 %v9497
    %v9499 = vpop.f32.mrf.mxu0
    %v9500 = vadd.f32 %v9401, %v9499
    %v9501 = vpop.f32.mrf.mxu0
    %9502 = vmatprep.mubr.f32.mxu0 0.0
    %v9503 = vand.u32 %v9094, 4294901760
    %v9504 = vsub.f32 %v9094, %v9503
    %v9505 = vand.u32 %v9504, 4294901760
    %9506 = vmatmul.mubr.f32.gmra.mxu0 %v9505
    %v9507 = vpop.f32.mrf.mxu0
    %v9508 = vadd.f32 %v9408, %v9507
    %v9509 = vpop.f32.mrf.mxu0
    %9510 = vmatprep.mubr.f32.mxu0 0.0
    %v9511 = vand.u32 %v9097, 4294901760
    %v9512 = vsub.f32 %v9097, %v9511
    %v9513 = vand.u32 %v9512, 4294901760
    %9514 = vmatmul.mubr.f32.gmra.mxu0 %v9513
    %v9515 = vpop.f32.mrf.mxu0
    %v9516 = vadd.f32 %v9415, %v9515
    %v9517 = vpop.f32.mrf.mxu0
    %9518 = vdwg.mxu0
    %9519 = vmatprep.subr.mxu0 0.0
    %9520 = vmatpush1.msra.mxu0 0.0
    %9521 = vmatprep.subr.mxu0 0.0
    %9522 = vmatpush1.msra.mxu0 0.0
    %9523 = vmatprep.subr.mxu0 0.0
    %9524 = vmatpush1.msra.mxu0 0.0
    %9525 = vmatprep.subr.mxu0 0.0
    %9526 = vmatpush1.msra.mxu0 0.0
    %9527 = vmatprep.subr.mxu0 0.0
    %9528 = vmatpush1.msra.mxu0 0.0
    %9529 = vmatprep.subr.mxu0 0.0
    %9530 = vmatpush1.msra.mxu0 0.0
    %9531 = vmatprep.subr.mxu0 0.0
    %9532 = vmatpush1.msra.mxu0 0.0
    %9533 = vmatprep.subr.mxu0 0.0
    %9534 = vmatpush1.msra.mxu0 0.0
    %9535 = vmatprep.subr.mxu0 0.0
    %9536 = vmatpush1.msra.mxu0 0.0
    %9537 = vmatprep.subr.mxu0 0.0
    %9538 = vmatpush1.msra.mxu0 0.0
    %9539 = vmatprep.subr.mxu0 0.0
    %9540 = vmatpush1.msra.mxu0 0.0
    %9541 = vmatprep.subr.mxu0 0.0
    %9542 = vmatpush1.msra.mxu0 0.0
    %9543 = vmatprep.subr.mxu0 0.0
    %v9544 = vand.u32 %v9086, 4294901760
    %v9545 = vsub.f32 %v9086, %v9544
    %v9546 = vand.u32 %v9545, 4294901760
    %9547 = vmatpush1.msra.mxu0 %v9546
    %9548 = vmatprep.subr.mxu0 0.0
    %v9549 = vand.u32 %v9085, 4294901760
    %v9550 = vsub.f32 %v9085, %v9549
    %v9551 = vand.u32 %v9550, 4294901760
    %9552 = vmatpush1.msra.mxu0 %v9551
    %9553 = vmatprep.subr.mxu0 0.0
    %v9554 = vand.u32 %v9084, 4294901760
    %v9555 = vsub.f32 %v9084, %v9554
    %v9556 = vand.u32 %v9555, 4294901760
    %9557 = vmatpush1.msra.mxu0 %v9556
    %9558 = vmatprep.subr.mxu0 0.0
    %v9559 = vand.u32 %v9083, 4294901760
    %v9560 = vsub.f32 %v9083, %v9559
    %v9561 = vand.u32 %v9560, 4294901760
    %9562 = vmatpush1.msra.mxu0 %v9561
    %9563 = vmatprep.subr.mxu0 0.0
    %9564 = vmatpush2.msra.mxu0 0.0
    %9565 = vmatprep.subr.mxu0 0.0
    %9566 = vmatpush2.msra.mxu0 0.0
    %9567 = vmatprep.subr.mxu0 0.0
    %9568 = vmatpush2.msra.mxu0 0.0
    %9569 = vmatprep.subr.mxu0 0.0
    %9570 = vmatpush2.msra.mxu0 0.0
    %9571 = vmatprep.subr.mxu0 0.0
    %9572 = vmatpush2.msra.mxu0 0.0
    %9573 = vmatprep.subr.mxu0 0.0
    %9574 = vmatpush2.msra.mxu0 0.0
    %9575 = vmatprep.subr.mxu0 0.0
    %9576 = vmatpush2.msra.mxu0 0.0
    %9577 = vmatprep.subr.mxu0 0.0
    %9578 = vmatpush2.msra.mxu0 0.0
    %9579 = vmatprep.subr.mxu0 0.0
    %9580 = vmatpush2.msra.mxu0 0.0
    %9581 = vmatprep.subr.mxu0 0.0
    %9582 = vmatpush2.msra.mxu0 0.0
    %9583 = vmatprep.subr.mxu0 0.0
    %9584 = vmatpush2.msra.mxu0 0.0
    %9585 = vmatprep.subr.mxu0 0.0
    %9586 = vmatpush2.msra.mxu0 0.0
    %9587 = vmatprep.subr.mxu0 0.0
    %9588 = vmatpush2.msra.mxu0 0.0
    %9589 = vmatprep.subr.mxu0 0.0
    %9590 = vmatpush2.msra.mxu0 0.0
    %9591 = vmatprep.subr.mxu0 0.0
    %9592 = vmatpush2.msra.mxu0 0.0
    %9593 = vmatprep.subr.mxu0 0.0
    %9594 = vmatpush2.msra.mxu0 0.0
    %9595 = vmatprep.mubr.f32.mxu0 0.0
    %v9596 = vand.u32 %v9088, 4294901760
    %9597 = vmatmul.mubr.f32.gmra.mxu0 %v9596
    %v9598 = vpop.f32.mrf.mxu0
    %v9599 = vadd.f32 %v9492, %v9598
    %v9600 = vpop.f32.mrf.mxu0
    %9601 = vmatprep.mubr.f32.mxu0 0.0
    %v9602 = vand.u32 %v9091, 4294901760
    %9603 = vmatmul.mubr.f32.gmra.mxu0 %v9602
    %v9604 = vpop.f32.mrf.mxu0
    %v9605 = vadd.f32 %v9500, %v9604
    %v9606 = vpop.f32.mrf.mxu0
    %9607 = vmatprep.mubr.f32.mxu0 0.0
    %v9608 = vand.u32 %v9094, 4294901760
    %9609 = vmatmul.mubr.f32.gmra.mxu0 %v9608
    %v9610 = vpop.f32.mrf.mxu0
    %v9611 = vadd.f32 %v9508, %v9610
    %v9612 = vpop.f32.mrf.mxu0
    %9613 = vmatprep.mubr.f32.mxu0 0.0
    %v9614 = vand.u32 %v9097, 4294901760
    %9615 = vmatmul.mubr.f32.gmra.mxu0 %v9614
    %v9616 = vpop.f32.mrf.mxu0
    %v9617 = vadd.f32 %v9516, %v9616
    %v9618 = vpop.f32.mrf.mxu0
    %9619 = vdwg.mxu0
    %9620 = vmatprep.subr.mxu0 0.0
    %9621 = vmatpush1.msra.mxu0 0.0
    %9622 = vmatprep.subr.mxu0 0.0
    %9623 = vmatpush1.msra.mxu0 0.0
    %9624 = vmatprep.subr.mxu0 0.0
    %9625 = vmatpush1.msra.mxu0 0.0
    %9626 = vmatprep.subr.mxu0 0.0
    %9627 = vmatpush1.msra.mxu0 0.0
    %9628 = vmatprep.subr.mxu0 0.0
    %9629 = vmatpush1.msra.mxu0 0.0
    %9630 = vmatprep.subr.mxu0 0.0
    %9631 = vmatpush1.msra.mxu0 0.0
    %9632 = vmatprep.subr.mxu0 0.0
    %9633 = vmatpush1.msra.mxu0 0.0
    %9634 = vmatprep.subr.mxu0 0.0
    %9635 = vmatpush1.msra.mxu0 0.0
    %9636 = vmatprep.subr.mxu0 0.0
    %9637 = vmatpush1.msra.mxu0 0.0
    %9638 = vmatprep.subr.mxu0 0.0
    %9639 = vmatpush1.msra.mxu0 0.0
    %9640 = vmatprep.subr.mxu0 0.0
    %9641 = vmatpush1.msra.mxu0 0.0
    %9642 = vmatprep.subr.mxu0 0.0
    %9643 = vmatpush1.msra.mxu0 0.0
    %9644 = vmatprep.subr.mxu0 0.0
    %v9645 = vand.u32 %v9086, 4294901760
    %9646 = vmatpush1.msra.mxu0 %v9645
    %9647 = vmatprep.subr.mxu0 0.0
    %v9648 = vand.u32 %v9085, 4294901760
    %9649 = vmatpush1.msra.mxu0 %v9648
    %9650 = vmatprep.subr.mxu0 0.0
    %v9651 = vand.u32 %v9084, 4294901760
    %9652 = vmatpush1.msra.mxu0 %v9651
    %9653 = vmatprep.subr.mxu0 0.0
    %v9654 = vand.u32 %v9083, 4294901760
    %9655 = vmatpush1.msra.mxu0 %v9654
    %9656 = vmatprep.subr.mxu0 0.0
    %9657 = vmatpush2.msra.mxu0 0.0
    %9658 = vmatprep.subr.mxu0 0.0
    %9659 = vmatpush2.msra.mxu0 0.0
    %9660 = vmatprep.subr.mxu0 0.0
    %9661 = vmatpush2.msra.mxu0 0.0
    %9662 = vmatprep.subr.mxu0 0.0
    %9663 = vmatpush2.msra.mxu0 0.0
    %9664 = vmatprep.subr.mxu0 0.0
    %9665 = vmatpush2.msra.mxu0 0.0
    %9666 = vmatprep.subr.mxu0 0.0
    %9667 = vmatpush2.msra.mxu0 0.0
    %9668 = vmatprep.subr.mxu0 0.0
    %9669 = vmatpush2.msra.mxu0 0.0
    %9670 = vmatprep.subr.mxu0 0.0
    %9671 = vmatpush2.msra.mxu0 0.0
    %9672 = vmatprep.subr.mxu0 0.0
    %9673 = vmatpush2.msra.mxu0 0.0
    %9674 = vmatprep.subr.mxu0 0.0
    %9675 = vmatpush2.msra.mxu0 0.0
    %9676 = vmatprep.subr.mxu0 0.0
    %9677 = vmatpush2.msra.mxu0 0.0
    %9678 = vmatprep.subr.mxu0 0.0
    %9679 = vmatpush2.msra.mxu0 0.0
    %9680 = vmatprep.subr.mxu0 0.0
    %9681 = vmatpush2.msra.mxu0 0.0
    %9682 = vmatprep.subr.mxu0 0.0
    %9683 = vmatpush2.msra.mxu0 0.0
    %9684 = vmatprep.subr.mxu0 0.0
    %9685 = vmatpush2.msra.mxu0 0.0
    %9686 = vmatprep.subr.mxu0 0.0
    %9687 = vmatpush2.msra.mxu0 0.0
    %9688 = vmatprep.mubr.f32.mxu0 0.0
    %v9689 = vand.u32 %v9088, 4294901760
    %9690 = vmatmul.mubr.f32.gmra.mxu0 %v9689
    %v9691 = vpop.f32.mrf.mxu0
    %v9692 = vadd.f32 %v9599, %v9691
    %v9693 = vpop.f32.mrf.mxu0
    %9694 = vmatprep.mubr.f32.mxu0 0.0
    %v9695 = vand.u32 %v9091, 4294901760
    %9696 = vmatmul.mubr.f32.gmra.mxu0 %v9695
    %v9697 = vpop.f32.mrf.mxu0
    %v9698 = vadd.f32 %v9605, %v9697
    %v9699 = vpop.f32.mrf.mxu0
    %9700 = vmatprep.mubr.f32.mxu0 0.0
    %v9701 = vand.u32 %v9094, 4294901760
    %9702 = vmatmul.mubr.f32.gmra.mxu0 %v9701
    %v9703 = vpop.f32.mrf.mxu0
    %v9704 = vadd.f32 %v9611, %v9703
    %v9705 = vpop.f32.mrf.mxu0
    %9706 = vmatprep.mubr.f32.mxu0 0.0
    %v9707 = vand.u32 %v9097, 4294901760
    %9708 = vmatmul.mubr.f32.gmra.mxu0 %v9707
    %v9709 = vpop.f32.mrf.mxu0
    %v9710 = vadd.f32 %v9617, %v9709
    %v9711 = vpop.f32.mrf.mxu0
    %9712 = vdwg.mxu0
    %v9713 = vadd.f32 %v9074, %v9692
    %v9714 = vadd.f32 %v9075, %v9698
    %v9715 = vadd.f32 %v9076, %v9704
    %v9716 = vadd.f32 %v9077, %v9710
    %v9717 = vld [vmem:[#allocation2 + $0x9] sm:$0xff]
    %v9718 = vld [vmem:[#allocation2 + $0x11] sm:$0xff]
    %v9719 = vld [vmem:[#allocation2 + $0x29] sm:$0xff]
    %v9720 = vld [vmem:[#allocation2 + $0x31] sm:$0xff]
    %s9721 = scalar_lea.vmem [#allocation8], 480
    %v9722 = vld [vmem:[%s9721] sm:$0xff]
    %v9723 = vld [vmem:[%s9721 + $0x8] sm:$0xff]
    %v9724 = vld [vmem:[%s9721 + $0x10] sm:$0xff]
    %v9725 = vld [vmem:[%s9721 + $0x18] sm:$0xff]
    %v9727 = vsel %vm57, %v9717, 0
    %v9730 = vsel %vm57, %v9718, 0
    %v9733 = vsel %vm57, %v9719, 0
    %v9736 = vsel %vm57, %v9720, 0
    %9738 = vmatprep.subr.mxu0 0.0
    %9739 = vmatpush1.msra.mxu0 0.0
    %9740 = vmatprep.subr.mxu0 0.0
    %9741 = vmatpush1.msra.mxu0 0.0
    %9742 = vmatprep.subr.mxu0 0.0
    %9743 = vmatpush1.msra.mxu0 0.0
    %9744 = vmatprep.subr.mxu0 0.0
    %9745 = vmatpush1.msra.mxu0 0.0
    %9746 = vmatprep.subr.mxu0 0.0
    %9747 = vmatpush1.msra.mxu0 0.0
    %9748 = vmatprep.subr.mxu0 0.0
    %9749 = vmatpush1.msra.mxu0 0.0
    %9750 = vmatprep.subr.mxu0 0.0
    %9751 = vmatpush1.msra.mxu0 0.0
    %9752 = vmatprep.subr.mxu0 0.0
    %9753 = vmatpush1.msra.mxu0 0.0
    %9754 = vmatprep.subr.mxu0 0.0
    %9755 = vmatpush1.msra.mxu0 0.0
    %9756 = vmatprep.subr.mxu0 0.0
    %9757 = vmatpush1.msra.mxu0 0.0
    %9758 = vmatprep.subr.mxu0 0.0
    %9759 = vmatpush1.msra.mxu0 0.0
    %9760 = vmatprep.subr.mxu0 0.0
    %9761 = vmatpush1.msra.mxu0 0.0
    %9762 = vmatprep.subr.mxu0 0.0
    %v9763 = vand.u32 %v9725, 4294901760
    %9764 = vmatpush1.msra.mxu0 %v9763
    %9765 = vmatprep.subr.mxu0 0.0
    %v9766 = vand.u32 %v9724, 4294901760
    %9767 = vmatpush1.msra.mxu0 %v9766
    %9768 = vmatprep.subr.mxu0 0.0
    %v9769 = vand.u32 %v9723, 4294901760
    %9770 = vmatpush1.msra.mxu0 %v9769
    %9771 = vmatprep.subr.mxu0 0.0
    %v9772 = vand.u32 %v9722, 4294901760
    %9773 = vmatpush1.msra.mxu0 %v9772
    %9774 = vmatprep.subr.mxu0 0.0
    %9775 = vmatpush2.msra.mxu0 0.0
    %9776 = vmatprep.subr.mxu0 0.0
    %9777 = vmatpush2.msra.mxu0 0.0
    %9778 = vmatprep.subr.mxu0 0.0
    %9779 = vmatpush2.msra.mxu0 0.0
    %9780 = vmatprep.subr.mxu0 0.0
    %9781 = vmatpush2.msra.mxu0 0.0
    %9782 = vmatprep.subr.mxu0 0.0
    %9783 = vmatpush2.msra.mxu0 0.0
    %9784 = vmatprep.subr.mxu0 0.0
    %9785 = vmatpush2.msra.mxu0 0.0
    %9786 = vmatprep.subr.mxu0 0.0
    %9787 = vmatpush2.msra.mxu0 0.0
    %9788 = vmatprep.subr.mxu0 0.0
    %9789 = vmatpush2.msra.mxu0 0.0
    %9790 = vmatprep.subr.mxu0 0.0
    %9791 = vmatpush2.msra.mxu0 0.0
    %9792 = vmatprep.subr.mxu0 0.0
    %9793 = vmatpush2.msra.mxu0 0.0
    %9794 = vmatprep.subr.mxu0 0.0
    %9795 = vmatpush2.msra.mxu0 0.0
    %9796 = vmatprep.subr.mxu0 0.0
    %9797 = vmatpush2.msra.mxu0 0.0
    %9798 = vmatprep.subr.mxu0 0.0
    %9799 = vmatpush2.msra.mxu0 0.0
    %9800 = vmatprep.subr.mxu0 0.0
    %9801 = vmatpush2.msra.mxu0 0.0
    %9802 = vmatprep.subr.mxu0 0.0
    %9803 = vmatpush2.msra.mxu0 0.0
    %9804 = vmatprep.subr.mxu0 0.0
    %9805 = vmatpush2.msra.mxu0 0.0
    %9806 = vmatprep.mubr.f32.mxu0 0.0
    %v9807 = vand.u32 %v9727, 4294901760
    %v9808 = vsub.f32 %v9727, %v9807
    %v9809 = vand.u32 %v9808, 4294901760
    %v9810 = vsub.f32 %v9808, %v9809
    %v9811 = vand.u32 %v9810, 4294901760
    %9812 = vmatmul.mubr.f32.gmra.mxu0 %v9811
    %v9813 = vpop.f32.mrf.mxu0
    %v9814 = vadd.f32 0.0, %v9813
    %v9815 = vpop.f32.mrf.mxu0
    %9816 = vmatprep.mubr.f32.mxu0 0.0
    %v9817 = vand.u32 %v9730, 4294901760
    %v9818 = vsub.f32 %v9730, %v9817
    %v9819 = vand.u32 %v9818, 4294901760
    %v9820 = vsub.f32 %v9818, %v9819
    %v9821 = vand.u32 %v9820, 4294901760
    %9822 = vmatmul.mubr.f32.gmra.mxu0 %v9821
    %v9823 = vpop.f32.mrf.mxu0
    %v9824 = vadd.f32 0.0, %v9823
    %v9825 = vpop.f32.mrf.mxu0
    %9826 = vmatprep.mubr.f32.mxu0 0.0
    %v9827 = vand.u32 %v9733, 4294901760
    %v9828 = vsub.f32 %v9733, %v9827
    %v9829 = vand.u32 %v9828, 4294901760
    %v9830 = vsub.f32 %v9828, %v9829
    %v9831 = vand.u32 %v9830, 4294901760
    %9832 = vmatmul.mubr.f32.gmra.mxu0 %v9831
    %v9833 = vpop.f32.mrf.mxu0
    %v9834 = vadd.f32 0.0, %v9833
    %v9835 = vpop.f32.mrf.mxu0
    %9836 = vmatprep.mubr.f32.mxu0 0.0
    %v9837 = vand.u32 %v9736, 4294901760
    %v9838 = vsub.f32 %v9736, %v9837
    %v9839 = vand.u32 %v9838, 4294901760
    %v9840 = vsub.f32 %v9838, %v9839
    %v9841 = vand.u32 %v9840, 4294901760
    %9842 = vmatmul.mubr.f32.gmra.mxu0 %v9841
    %v9843 = vpop.f32.mrf.mxu0
    %v9844 = vadd.f32 0.0, %v9843
    %v9845 = vpop.f32.mrf.mxu0
    %9846 = vdwg.mxu0
    %9847 = vmatprep.subr.mxu0 0.0
    %9848 = vmatpush1.msra.mxu0 0.0
    %9849 = vmatprep.subr.mxu0 0.0
    %9850 = vmatpush1.msra.mxu0 0.0
    %9851 = vmatprep.subr.mxu0 0.0
    %9852 = vmatpush1.msra.mxu0 0.0
    %9853 = vmatprep.subr.mxu0 0.0
    %9854 = vmatpush1.msra.mxu0 0.0
    %9855 = vmatprep.subr.mxu0 0.0
    %9856 = vmatpush1.msra.mxu0 0.0
    %9857 = vmatprep.subr.mxu0 0.0
    %9858 = vmatpush1.msra.mxu0 0.0
    %9859 = vmatprep.subr.mxu0 0.0
    %9860 = vmatpush1.msra.mxu0 0.0
    %9861 = vmatprep.subr.mxu0 0.0
    %9862 = vmatpush1.msra.mxu0 0.0
    %9863 = vmatprep.subr.mxu0 0.0
    %9864 = vmatpush1.msra.mxu0 0.0
    %9865 = vmatprep.subr.mxu0 0.0
    %9866 = vmatpush1.msra.mxu0 0.0
    %9867 = vmatprep.subr.mxu0 0.0
    %9868 = vmatpush1.msra.mxu0 0.0
    %9869 = vmatprep.subr.mxu0 0.0
    %9870 = vmatpush1.msra.mxu0 0.0
    %9871 = vmatprep.subr.mxu0 0.0
    %v9872 = vand.u32 %v9725, 4294901760
    %v9873 = vsub.f32 %v9725, %v9872
    %v9874 = vand.u32 %v9873, 4294901760
    %v9875 = vsub.f32 %v9873, %v9874
    %v9876 = vand.u32 %v9875, 4294901760
    %9877 = vmatpush1.msra.mxu0 %v9876
    %9878 = vmatprep.subr.mxu0 0.0
    %v9879 = vand.u32 %v9724, 4294901760
    %v9880 = vsub.f32 %v9724, %v9879
    %v9881 = vand.u32 %v9880, 4294901760
    %v9882 = vsub.f32 %v9880, %v9881
    %v9883 = vand.u32 %v9882, 4294901760
    %9884 = vmatpush1.msra.mxu0 %v9883
    %9885 = vmatprep.subr.mxu0 0.0
    %v9886 = vand.u32 %v9723, 4294901760
    %v9887 = vsub.f32 %v9723, %v9886
    %v9888 = vand.u32 %v9887, 4294901760
    %v9889 = vsub.f32 %v9887, %v9888
    %v9890 = vand.u32 %v9889, 4294901760
    %9891 = vmatpush1.msra.mxu0 %v9890
    %9892 = vmatprep.subr.mxu0 0.0
    %v9893 = vand.u32 %v9722, 4294901760
    %v9894 = vsub.f32 %v9722, %v9893
    %v9895 = vand.u32 %v9894, 4294901760
    %v9896 = vsub.f32 %v9894, %v9895
    %v9897 = vand.u32 %v9896, 4294901760
    %9898 = vmatpush1.msra.mxu0 %v9897
    %9899 = vmatprep.subr.mxu0 0.0
    %9900 = vmatpush2.msra.mxu0 0.0
    %9901 = vmatprep.subr.mxu0 0.0
    %9902 = vmatpush2.msra.mxu0 0.0
    %9903 = vmatprep.subr.mxu0 0.0
    %9904 = vmatpush2.msra.mxu0 0.0
    %9905 = vmatprep.subr.mxu0 0.0
    %9906 = vmatpush2.msra.mxu0 0.0
    %9907 = vmatprep.subr.mxu0 0.0
    %9908 = vmatpush2.msra.mxu0 0.0
    %9909 = vmatprep.subr.mxu0 0.0
    %9910 = vmatpush2.msra.mxu0 0.0
    %9911 = vmatprep.subr.mxu0 0.0
    %9912 = vmatpush2.msra.mxu0 0.0
    %9913 = vmatprep.subr.mxu0 0.0
    %9914 = vmatpush2.msra.mxu0 0.0
    %9915 = vmatprep.subr.mxu0 0.0
    %9916 = vmatpush2.msra.mxu0 0.0
    %9917 = vmatprep.subr.mxu0 0.0
    %9918 = vmatpush2.msra.mxu0 0.0
    %9919 = vmatprep.subr.mxu0 0.0
    %9920 = vmatpush2.msra.mxu0 0.0
    %9921 = vmatprep.subr.mxu0 0.0
    %9922 = vmatpush2.msra.mxu0 0.0
    %9923 = vmatprep.subr.mxu0 0.0
    %9924 = vmatpush2.msra.mxu0 0.0
    %9925 = vmatprep.subr.mxu0 0.0
    %9926 = vmatpush2.msra.mxu0 0.0
    %9927 = vmatprep.subr.mxu0 0.0
    %9928 = vmatpush2.msra.mxu0 0.0
    %9929 = vmatprep.subr.mxu0 0.0
    %9930 = vmatpush2.msra.mxu0 0.0
    %9931 = vmatprep.mubr.f32.mxu0 0.0
    %v9932 = vand.u32 %v9727, 4294901760
    %9933 = vmatmul.mubr.f32.gmra.mxu0 %v9932
    %v9934 = vpop.f32.mrf.mxu0
    %v9935 = vadd.f32 %v9814, %v9934
    %v9936 = vpop.f32.mrf.mxu0
    %9937 = vmatprep.mubr.f32.mxu0 0.0
    %v9938 = vand.u32 %v9730, 4294901760
    %9939 = vmatmul.mubr.f32.gmra.mxu0 %v9938
    %v9940 = vpop.f32.mrf.mxu0
    %v9941 = vadd.f32 %v9824, %v9940
    %v9942 = vpop.f32.mrf.mxu0
    %9943 = vmatprep.mubr.f32.mxu0 0.0
    %v9944 = vand.u32 %v9733, 4294901760
    %9945 = vmatmul.mubr.f32.gmra.mxu0 %v9944
    %v9946 = vpop.f32.mrf.mxu0
    %v9947 = vadd.f32 %v9834, %v9946
    %v9948 = vpop.f32.mrf.mxu0
    %9949 = vmatprep.mubr.f32.mxu0 0.0
    %v9950 = vand.u32 %v9736, 4294901760
    %9951 = vmatmul.mubr.f32.gmra.mxu0 %v9950
    %v9952 = vpop.f32.mrf.mxu0
    %v9953 = vadd.f32 %v9844, %v9952
    %v9954 = vpop.f32.mrf.mxu0
    %9955 = vdwg.mxu0
    %9956 = vmatprep.subr.mxu0 0.0
    %9957 = vmatpush1.msra.mxu0 0.0
    %9958 = vmatprep.subr.mxu0 0.0
    %9959 = vmatpush1.msra.mxu0 0.0
    %9960 = vmatprep.subr.mxu0 0.0
    %9961 = vmatpush1.msra.mxu0 0.0
    %9962 = vmatprep.subr.mxu0 0.0
    %9963 = vmatpush1.msra.mxu0 0.0
    %9964 = vmatprep.subr.mxu0 0.0
    %9965 = vmatpush1.msra.mxu0 0.0
    %9966 = vmatprep.subr.mxu0 0.0
    %9967 = vmatpush1.msra.mxu0 0.0
    %9968 = vmatprep.subr.mxu0 0.0
    %9969 = vmatpush1.msra.mxu0 0.0
    %9970 = vmatprep.subr.mxu0 0.0
    %9971 = vmatpush1.msra.mxu0 0.0
    %9972 = vmatprep.subr.mxu0 0.0
    %9973 = vmatpush1.msra.mxu0 0.0
    %9974 = vmatprep.subr.mxu0 0.0
    %9975 = vmatpush1.msra.mxu0 0.0
    %9976 = vmatprep.subr.mxu0 0.0
    %9977 = vmatpush1.msra.mxu0 0.0
    %9978 = vmatprep.subr.mxu0 0.0
    %9979 = vmatpush1.msra.mxu0 0.0
    %9980 = vmatprep.subr.mxu0 0.0
    %v9981 = vand.u32 %v9725, 4294901760
    %v9982 = vsub.f32 %v9725, %v9981
    %9983 = vmatpush1.msra.mxu0 %v9982
    %9984 = vmatprep.subr.mxu0 0.0
    %v9985 = vand.u32 %v9724, 4294901760
    %v9986 = vsub.f32 %v9724, %v9985
    %9987 = vmatpush1.msra.mxu0 %v9986
    %9988 = vmatprep.subr.mxu0 0.0
    %v9989 = vand.u32 %v9723, 4294901760
    %v9990 = vsub.f32 %v9723, %v9989
    %9991 = vmatpush1.msra.mxu0 %v9990
    %9992 = vmatprep.subr.mxu0 0.0
    %v9993 = vand.u32 %v9722, 4294901760
    %v9994 = vsub.f32 %v9722, %v9993
    %9995 = vmatpush1.msra.mxu0 %v9994
    %9996 = vmatprep.subr.mxu0 0.0
    %9997 = vmatpush2.msra.mxu0 0.0
    %9998 = vmatprep.subr.mxu0 0.0
    %9999 = vmatpush2.msra.mxu0 0.0
    %10000 = vmatprep.subr.mxu0 0.0
    %10001 = vmatpush2.msra.mxu0 0.0
    %10002 = vmatprep.subr.mxu0 0.0
    %10003 = vmatpush2.msra.mxu0 0.0
    %10004 = vmatprep.subr.mxu0 0.0
    %10005 = vmatpush2.msra.mxu0 0.0
    %10006 = vmatprep.subr.mxu0 0.0
    %10007 = vmatpush2.msra.mxu0 0.0
    %10008 = vmatprep.subr.mxu0 0.0
    %10009 = vmatpush2.msra.mxu0 0.0
    %10010 = vmatprep.subr.mxu0 0.0
    %10011 = vmatpush2.msra.mxu0 0.0
    %10012 = vmatprep.subr.mxu0 0.0
    %10013 = vmatpush2.msra.mxu0 0.0
    %10014 = vmatprep.subr.mxu0 0.0
    %10015 = vmatpush2.msra.mxu0 0.0
    %10016 = vmatprep.subr.mxu0 0.0
    %10017 = vmatpush2.msra.mxu0 0.0
    %10018 = vmatprep.subr.mxu0 0.0
    %10019 = vmatpush2.msra.mxu0 0.0
    %10020 = vmatprep.subr.mxu0 0.0
    %10021 = vmatpush2.msra.mxu0 0.0
    %10022 = vmatprep.subr.mxu0 0.0
    %10023 = vmatpush2.msra.mxu0 0.0
    %10024 = vmatprep.subr.mxu0 0.0
    %10025 = vmatpush2.msra.mxu0 0.0
    %10026 = vmatprep.subr.mxu0 0.0
    %10027 = vmatpush2.msra.mxu0 0.0
    %10028 = vmatprep.mubr.f32.mxu0 0.0
    %v10029 = vand.u32 %v9727, 4294901760
    %v10030 = vsub.f32 %v9727, %v10029
    %10031 = vmatmul.mubr.f32.gmra.mxu0 %v10030
    %v10032 = vpop.f32.mrf.mxu0
    %v10033 = vadd.f32 %v9935, %v10032
    %v10034 = vpop.f32.mrf.mxu0
    %10035 = vmatprep.mubr.f32.mxu0 0.0
    %v10036 = vand.u32 %v9730, 4294901760
    %v10037 = vsub.f32 %v9730, %v10036
    %10038 = vmatmul.mubr.f32.gmra.mxu0 %v10037
    %v10039 = vpop.f32.mrf.mxu0
    %v10040 = vadd.f32 %v9941, %v10039
    %v10041 = vpop.f32.mrf.mxu0
    %10042 = vmatprep.mubr.f32.mxu0 0.0
    %v10043 = vand.u32 %v9733, 4294901760
    %v10044 = vsub.f32 %v9733, %v10043
    %10045 = vmatmul.mubr.f32.gmra.mxu0 %v10044
    %v10046 = vpop.f32.mrf.mxu0
    %v10047 = vadd.f32 %v9947, %v10046
    %v10048 = vpop.f32.mrf.mxu0
    %10049 = vmatprep.mubr.f32.mxu0 0.0
    %v10050 = vand.u32 %v9736, 4294901760
    %v10051 = vsub.f32 %v9736, %v10050
    %10052 = vmatmul.mubr.f32.gmra.mxu0 %v10051
    %v10053 = vpop.f32.mrf.mxu0
    %v10054 = vadd.f32 %v9953, %v10053
    %v10055 = vpop.f32.mrf.mxu0
    %10056 = vdwg.mxu0
    %10057 = vmatprep.subr.mxu0 0.0
    %10058 = vmatpush1.msra.mxu0 0.0
    %10059 = vmatprep.subr.mxu0 0.0
    %10060 = vmatpush1.msra.mxu0 0.0
    %10061 = vmatprep.subr.mxu0 0.0
    %10062 = vmatpush1.msra.mxu0 0.0
    %10063 = vmatprep.subr.mxu0 0.0
    %10064 = vmatpush1.msra.mxu0 0.0
    %10065 = vmatprep.subr.mxu0 0.0
    %10066 = vmatpush1.msra.mxu0 0.0
    %10067 = vmatprep.subr.mxu0 0.0
    %10068 = vmatpush1.msra.mxu0 0.0
    %10069 = vmatprep.subr.mxu0 0.0
    %10070 = vmatpush1.msra.mxu0 0.0
    %10071 = vmatprep.subr.mxu0 0.0
    %10072 = vmatpush1.msra.mxu0 0.0
    %10073 = vmatprep.subr.mxu0 0.0
    %10074 = vmatpush1.msra.mxu0 0.0
    %10075 = vmatprep.subr.mxu0 0.0
    %10076 = vmatpush1.msra.mxu0 0.0
    %10077 = vmatprep.subr.mxu0 0.0
    %10078 = vmatpush1.msra.mxu0 0.0
    %10079 = vmatprep.subr.mxu0 0.0
    %10080 = vmatpush1.msra.mxu0 0.0
    %10081 = vmatprep.subr.mxu0 0.0
    %v10082 = vand.u32 %v9725, 4294901760
    %10083 = vmatpush1.msra.mxu0 %v10082
    %10084 = vmatprep.subr.mxu0 0.0
    %v10085 = vand.u32 %v9724, 4294901760
    %10086 = vmatpush1.msra.mxu0 %v10085
    %10087 = vmatprep.subr.mxu0 0.0
    %v10088 = vand.u32 %v9723, 4294901760
    %10089 = vmatpush1.msra.mxu0 %v10088
    %10090 = vmatprep.subr.mxu0 0.0
    %v10091 = vand.u32 %v9722, 4294901760
    %10092 = vmatpush1.msra.mxu0 %v10091
    %10093 = vmatprep.subr.mxu0 0.0
    %10094 = vmatpush2.msra.mxu0 0.0
    %10095 = vmatprep.subr.mxu0 0.0
    %10096 = vmatpush2.msra.mxu0 0.0
    %10097 = vmatprep.subr.mxu0 0.0
    %10098 = vmatpush2.msra.mxu0 0.0
    %10099 = vmatprep.subr.mxu0 0.0
    %10100 = vmatpush2.msra.mxu0 0.0
    %10101 = vmatprep.subr.mxu0 0.0
    %10102 = vmatpush2.msra.mxu0 0.0
    %10103 = vmatprep.subr.mxu0 0.0
    %10104 = vmatpush2.msra.mxu0 0.0
    %10105 = vmatprep.subr.mxu0 0.0
    %10106 = vmatpush2.msra.mxu0 0.0
    %10107 = vmatprep.subr.mxu0 0.0
    %10108 = vmatpush2.msra.mxu0 0.0
    %10109 = vmatprep.subr.mxu0 0.0
    %10110 = vmatpush2.msra.mxu0 0.0
    %10111 = vmatprep.subr.mxu0 0.0
    %10112 = vmatpush2.msra.mxu0 0.0
    %10113 = vmatprep.subr.mxu0 0.0
    %10114 = vmatpush2.msra.mxu0 0.0
    %10115 = vmatprep.subr.mxu0 0.0
    %10116 = vmatpush2.msra.mxu0 0.0
    %10117 = vmatprep.subr.mxu0 0.0
    %10118 = vmatpush2.msra.mxu0 0.0
    %10119 = vmatprep.subr.mxu0 0.0
    %10120 = vmatpush2.msra.mxu0 0.0
    %10121 = vmatprep.subr.mxu0 0.0
    %10122 = vmatpush2.msra.mxu0 0.0
    %10123 = vmatprep.subr.mxu0 0.0
    %10124 = vmatpush2.msra.mxu0 0.0
    %10125 = vmatprep.mubr.f32.mxu0 0.0
    %v10126 = vand.u32 %v9727, 4294901760
    %v10127 = vsub.f32 %v9727, %v10126
    %v10128 = vand.u32 %v10127, 4294901760
    %10129 = vmatmul.mubr.f32.gmra.mxu0 %v10128
    %v10130 = vpop.f32.mrf.mxu0
    %v10131 = vadd.f32 %v10033, %v10130
    %v10132 = vpop.f32.mrf.mxu0
    %10133 = vmatprep.mubr.f32.mxu0 0.0
    %v10134 = vand.u32 %v9730, 4294901760
    %v10135 = vsub.f32 %v9730, %v10134
    %v10136 = vand.u32 %v10135, 4294901760
    %10137 = vmatmul.mubr.f32.gmra.mxu0 %v10136
    %v10138 = vpop.f32.mrf.mxu0
    %v10139 = vadd.f32 %v10040, %v10138
    %v10140 = vpop.f32.mrf.mxu0
    %10141 = vmatprep.mubr.f32.mxu0 0.0
    %v10142 = vand.u32 %v9733, 4294901760
    %v10143 = vsub.f32 %v9733, %v10142
    %v10144 = vand.u32 %v10143, 4294901760
    %10145 = vmatmul.mubr.f32.gmra.mxu0 %v10144
    %v10146 = vpop.f32.mrf.mxu0
    %v10147 = vadd.f32 %v10047, %v10146
    %v10148 = vpop.f32.mrf.mxu0
    %10149 = vmatprep.mubr.f32.mxu0 0.0
    %v10150 = vand.u32 %v9736, 4294901760
    %v10151 = vsub.f32 %v9736, %v10150
    %v10152 = vand.u32 %v10151, 4294901760
    %10153 = vmatmul.mubr.f32.gmra.mxu0 %v10152
    %v10154 = vpop.f32.mrf.mxu0
    %v10155 = vadd.f32 %v10054, %v10154
    %v10156 = vpop.f32.mrf.mxu0
    %10157 = vdwg.mxu0
    %10158 = vmatprep.subr.mxu0 0.0
    %10159 = vmatpush1.msra.mxu0 0.0
    %10160 = vmatprep.subr.mxu0 0.0
    %10161 = vmatpush1.msra.mxu0 0.0
    %10162 = vmatprep.subr.mxu0 0.0
    %10163 = vmatpush1.msra.mxu0 0.0
    %10164 = vmatprep.subr.mxu0 0.0
    %10165 = vmatpush1.msra.mxu0 0.0
    %10166 = vmatprep.subr.mxu0 0.0
    %10167 = vmatpush1.msra.mxu0 0.0
    %10168 = vmatprep.subr.mxu0 0.0
    %10169 = vmatpush1.msra.mxu0 0.0
    %10170 = vmatprep.subr.mxu0 0.0
    %10171 = vmatpush1.msra.mxu0 0.0
    %10172 = vmatprep.subr.mxu0 0.0
    %10173 = vmatpush1.msra.mxu0 0.0
    %10174 = vmatprep.subr.mxu0 0.0
    %10175 = vmatpush1.msra.mxu0 0.0
    %10176 = vmatprep.subr.mxu0 0.0
    %10177 = vmatpush1.msra.mxu0 0.0
    %10178 = vmatprep.subr.mxu0 0.0
    %10179 = vmatpush1.msra.mxu0 0.0
    %10180 = vmatprep.subr.mxu0 0.0
    %10181 = vmatpush1.msra.mxu0 0.0
    %10182 = vmatprep.subr.mxu0 0.0
    %v10183 = vand.u32 %v9725, 4294901760
    %v10184 = vsub.f32 %v9725, %v10183
    %v10185 = vand.u32 %v10184, 4294901760
    %10186 = vmatpush1.msra.mxu0 %v10185
    %10187 = vmatprep.subr.mxu0 0.0
    %v10188 = vand.u32 %v9724, 4294901760
    %v10189 = vsub.f32 %v9724, %v10188
    %v10190 = vand.u32 %v10189, 4294901760
    %10191 = vmatpush1.msra.mxu0 %v10190
    %10192 = vmatprep.subr.mxu0 0.0
    %v10193 = vand.u32 %v9723, 4294901760
    %v10194 = vsub.f32 %v9723, %v10193
    %v10195 = vand.u32 %v10194, 4294901760
    %10196 = vmatpush1.msra.mxu0 %v10195
    %10197 = vmatprep.subr.mxu0 0.0
    %v10198 = vand.u32 %v9722, 4294901760
    %v10199 = vsub.f32 %v9722, %v10198
    %v10200 = vand.u32 %v10199, 4294901760
    %10201 = vmatpush1.msra.mxu0 %v10200
    %10202 = vmatprep.subr.mxu0 0.0
    %10203 = vmatpush2.msra.mxu0 0.0
    %10204 = vmatprep.subr.mxu0 0.0
    %10205 = vmatpush2.msra.mxu0 0.0
    %10206 = vmatprep.subr.mxu0 0.0
    %10207 = vmatpush2.msra.mxu0 0.0
    %10208 = vmatprep.subr.mxu0 0.0
    %10209 = vmatpush2.msra.mxu0 0.0
    %10210 = vmatprep.subr.mxu0 0.0
    %10211 = vmatpush2.msra.mxu0 0.0
    %10212 = vmatprep.subr.mxu0 0.0
    %10213 = vmatpush2.msra.mxu0 0.0
    %10214 = vmatprep.subr.mxu0 0.0
    %10215 = vmatpush2.msra.mxu0 0.0
    %10216 = vmatprep.subr.mxu0 0.0
    %10217 = vmatpush2.msra.mxu0 0.0
    %10218 = vmatprep.subr.mxu0 0.0
    %10219 = vmatpush2.msra.mxu0 0.0
    %10220 = vmatprep.subr.mxu0 0.0
    %10221 = vmatpush2.msra.mxu0 0.0
    %10222 = vmatprep.subr.mxu0 0.0
    %10223 = vmatpush2.msra.mxu0 0.0
    %10224 = vmatprep.subr.mxu0 0.0
    %10225 = vmatpush2.msra.mxu0 0.0
    %10226 = vmatprep.subr.mxu0 0.0
    %10227 = vmatpush2.msra.mxu0 0.0
    %10228 = vmatprep.subr.mxu0 0.0
    %10229 = vmatpush2.msra.mxu0 0.0
    %10230 = vmatprep.subr.mxu0 0.0
    %10231 = vmatpush2.msra.mxu0 0.0
    %10232 = vmatprep.subr.mxu0 0.0
    %10233 = vmatpush2.msra.mxu0 0.0
    %10234 = vmatprep.mubr.f32.mxu0 0.0
    %v10235 = vand.u32 %v9727, 4294901760
    %10236 = vmatmul.mubr.f32.gmra.mxu0 %v10235
    %v10237 = vpop.f32.mrf.mxu0
    %v10238 = vadd.f32 %v10131, %v10237
    %v10239 = vpop.f32.mrf.mxu0
    %10240 = vmatprep.mubr.f32.mxu0 0.0
    %v10241 = vand.u32 %v9730, 4294901760
    %10242 = vmatmul.mubr.f32.gmra.mxu0 %v10241
    %v10243 = vpop.f32.mrf.mxu0
    %v10244 = vadd.f32 %v10139, %v10243
    %v10245 = vpop.f32.mrf.mxu0
    %10246 = vmatprep.mubr.f32.mxu0 0.0
    %v10247 = vand.u32 %v9733, 4294901760
    %10248 = vmatmul.mubr.f32.gmra.mxu0 %v10247
    %v10249 = vpop.f32.mrf.mxu0
    %v10250 = vadd.f32 %v10147, %v10249
    %v10251 = vpop.f32.mrf.mxu0
    %10252 = vmatprep.mubr.f32.mxu0 0.0
    %v10253 = vand.u32 %v9736, 4294901760
    %10254 = vmatmul.mubr.f32.gmra.mxu0 %v10253
    %v10255 = vpop.f32.mrf.mxu0
    %v10256 = vadd.f32 %v10155, %v10255
    %v10257 = vpop.f32.mrf.mxu0
    %10258 = vdwg.mxu0
    %10259 = vmatprep.subr.mxu0 0.0
    %10260 = vmatpush1.msra.mxu0 0.0
    %10261 = vmatprep.subr.mxu0 0.0
    %10262 = vmatpush1.msra.mxu0 0.0
    %10263 = vmatprep.subr.mxu0 0.0
    %10264 = vmatpush1.msra.mxu0 0.0
    %10265 = vmatprep.subr.mxu0 0.0
    %10266 = vmatpush1.msra.mxu0 0.0
    %10267 = vmatprep.subr.mxu0 0.0
    %10268 = vmatpush1.msra.mxu0 0.0
    %10269 = vmatprep.subr.mxu0 0.0
    %10270 = vmatpush1.msra.mxu0 0.0
    %10271 = vmatprep.subr.mxu0 0.0
    %10272 = vmatpush1.msra.mxu0 0.0
    %10273 = vmatprep.subr.mxu0 0.0
    %10274 = vmatpush1.msra.mxu0 0.0
    %10275 = vmatprep.subr.mxu0 0.0
    %10276 = vmatpush1.msra.mxu0 0.0
    %10277 = vmatprep.subr.mxu0 0.0
    %10278 = vmatpush1.msra.mxu0 0.0
    %10279 = vmatprep.subr.mxu0 0.0
    %10280 = vmatpush1.msra.mxu0 0.0
    %10281 = vmatprep.subr.mxu0 0.0
    %10282 = vmatpush1.msra.mxu0 0.0
    %10283 = vmatprep.subr.mxu0 0.0
    %v10284 = vand.u32 %v9725, 4294901760
    %10285 = vmatpush1.msra.mxu0 %v10284
    %10286 = vmatprep.subr.mxu0 0.0
    %v10287 = vand.u32 %v9724, 4294901760
    %10288 = vmatpush1.msra.mxu0 %v10287
    %10289 = vmatprep.subr.mxu0 0.0
    %v10290 = vand.u32 %v9723, 4294901760
    %10291 = vmatpush1.msra.mxu0 %v10290
    %10292 = vmatprep.subr.mxu0 0.0
    %v10293 = vand.u32 %v9722, 4294901760
    %10294 = vmatpush1.msra.mxu0 %v10293
    %10295 = vmatprep.subr.mxu0 0.0
    %10296 = vmatpush2.msra.mxu0 0.0
    %10297 = vmatprep.subr.mxu0 0.0
    %10298 = vmatpush2.msra.mxu0 0.0
    %10299 = vmatprep.subr.mxu0 0.0
    %10300 = vmatpush2.msra.mxu0 0.0
    %10301 = vmatprep.subr.mxu0 0.0
    %10302 = vmatpush2.msra.mxu0 0.0
    %10303 = vmatprep.subr.mxu0 0.0
    %10304 = vmatpush2.msra.mxu0 0.0
    %10305 = vmatprep.subr.mxu0 0.0
    %10306 = vmatpush2.msra.mxu0 0.0
    %10307 = vmatprep.subr.mxu0 0.0
    %10308 = vmatpush2.msra.mxu0 0.0
    %10309 = vmatprep.subr.mxu0 0.0
    %10310 = vmatpush2.msra.mxu0 0.0
    %10311 = vmatprep.subr.mxu0 0.0
    %10312 = vmatpush2.msra.mxu0 0.0
    %10313 = vmatprep.subr.mxu0 0.0
    %10314 = vmatpush2.msra.mxu0 0.0
    %10315 = vmatprep.subr.mxu0 0.0
    %10316 = vmatpush2.msra.mxu0 0.0
    %10317 = vmatprep.subr.mxu0 0.0
    %10318 = vmatpush2.msra.mxu0 0.0
    %10319 = vmatprep.subr.mxu0 0.0
    %10320 = vmatpush2.msra.mxu0 0.0
    %10321 = vmatprep.subr.mxu0 0.0
    %10322 = vmatpush2.msra.mxu0 0.0
    %10323 = vmatprep.subr.mxu0 0.0
    %10324 = vmatpush2.msra.mxu0 0.0
    %10325 = vmatprep.subr.mxu0 0.0
    %10326 = vmatpush2.msra.mxu0 0.0
    %10327 = vmatprep.mubr.f32.mxu0 0.0
    %v10328 = vand.u32 %v9727, 4294901760
    %10329 = vmatmul.mubr.f32.gmra.mxu0 %v10328
    %v10330 = vpop.f32.mrf.mxu0
    %v10331 = vadd.f32 %v10238, %v10330
    %v10332 = vpop.f32.mrf.mxu0
    %10333 = vmatprep.mubr.f32.mxu0 0.0
    %v10334 = vand.u32 %v9730, 4294901760
    %10335 = vmatmul.mubr.f32.gmra.mxu0 %v10334
    %v10336 = vpop.f32.mrf.mxu0
    %v10337 = vadd.f32 %v10244, %v10336
    %v10338 = vpop.f32.mrf.mxu0
    %10339 = vmatprep.mubr.f32.mxu0 0.0
    %v10340 = vand.u32 %v9733, 4294901760
    %10341 = vmatmul.mubr.f32.gmra.mxu0 %v10340
    %v10342 = vpop.f32.mrf.mxu0
    %v10343 = vadd.f32 %v10250, %v10342
    %v10344 = vpop.f32.mrf.mxu0
    %10345 = vmatprep.mubr.f32.mxu0 0.0
    %v10346 = vand.u32 %v9736, 4294901760
    %10347 = vmatmul.mubr.f32.gmra.mxu0 %v10346
    %v10348 = vpop.f32.mrf.mxu0
    %v10349 = vadd.f32 %v10256, %v10348
    %v10350 = vpop.f32.mrf.mxu0
    %10351 = vdwg.mxu0
    %v10352 = vadd.f32 %v9713, %v10331
    %v10353 = vadd.f32 %v9714, %v10337
    %v10354 = vadd.f32 %v9715, %v10343
    %v10355 = vadd.f32 %v9716, %v10349
    %v10356 = vld [vmem:[#allocation2 + $0xa] sm:$0xff]
    %v10357 = vld [vmem:[#allocation2 + $0x12] sm:$0xff]
    %v10358 = vld [vmem:[#allocation2 + $0x2a] sm:$0xff]
    %v10359 = vld [vmem:[#allocation2 + $0x32] sm:$0xff]
    %s10360 = scalar_lea.vmem [#allocation8], 512
    %v10361 = vld [vmem:[%s10360] sm:$0xff]
    %v10362 = vld [vmem:[%s10360 + $0x8] sm:$0xff]
    %v10363 = vld [vmem:[%s10360 + $0x10] sm:$0xff]
    %v10364 = vld [vmem:[%s10360 + $0x18] sm:$0xff]
    %v10366 = vsel %vm57, %v10356, 0
    %v10369 = vsel %vm57, %v10357, 0
    %v10372 = vsel %vm57, %v10358, 0
    %v10375 = vsel %vm57, %v10359, 0
    %10377 = vmatprep.subr.mxu0 0.0
    %10378 = vmatpush1.msra.mxu0 0.0
    %10379 = vmatprep.subr.mxu0 0.0
    %10380 = vmatpush1.msra.mxu0 0.0
    %10381 = vmatprep.subr.mxu0 0.0
    %10382 = vmatpush1.msra.mxu0 0.0
    %10383 = vmatprep.subr.mxu0 0.0
    %10384 = vmatpush1.msra.mxu0 0.0
    %10385 = vmatprep.subr.mxu0 0.0
    %10386 = vmatpush1.msra.mxu0 0.0
    %10387 = vmatprep.subr.mxu0 0.0
    %10388 = vmatpush1.msra.mxu0 0.0
    %10389 = vmatprep.subr.mxu0 0.0
    %10390 = vmatpush1.msra.mxu0 0.0
    %10391 = vmatprep.subr.mxu0 0.0
    %10392 = vmatpush1.msra.mxu0 0.0
    %10393 = vmatprep.subr.mxu0 0.0
    %10394 = vmatpush1.msra.mxu0 0.0
    %10395 = vmatprep.subr.mxu0 0.0
    %10396 = vmatpush1.msra.mxu0 0.0
    %10397 = vmatprep.subr.mxu0 0.0
    %10398 = vmatpush1.msra.mxu0 0.0
    %10399 = vmatprep.subr.mxu0 0.0
    %10400 = vmatpush1.msra.mxu0 0.0
    %10401 = vmatprep.subr.mxu0 0.0
    %v10402 = vand.u32 %v10364, 4294901760
    %10403 = vmatpush1.msra.mxu0 %v10402
    %10404 = vmatprep.subr.mxu0 0.0
    %v10405 = vand.u32 %v10363, 4294901760
    %10406 = vmatpush1.msra.mxu0 %v10405
    %10407 = vmatprep.subr.mxu0 0.0
    %v10408 = vand.u32 %v10362, 4294901760
    %10409 = vmatpush1.msra.mxu0 %v10408
    %10410 = vmatprep.subr.mxu0 0.0
    %v10411 = vand.u32 %v10361, 4294901760
    %10412 = vmatpush1.msra.mxu0 %v10411
    %10413 = vmatprep.subr.mxu0 0.0
    %10414 = vmatpush2.msra.mxu0 0.0
    %10415 = vmatprep.subr.mxu0 0.0
    %10416 = vmatpush2.msra.mxu0 0.0
    %10417 = vmatprep.subr.mxu0 0.0
    %10418 = vmatpush2.msra.mxu0 0.0
    %10419 = vmatprep.subr.mxu0 0.0
    %10420 = vmatpush2.msra.mxu0 0.0
    %10421 = vmatprep.subr.mxu0 0.0
    %10422 = vmatpush2.msra.mxu0 0.0
    %10423 = vmatprep.subr.mxu0 0.0
    %10424 = vmatpush2.msra.mxu0 0.0
    %10425 = vmatprep.subr.mxu0 0.0
    %10426 = vmatpush2.msra.mxu0 0.0
    %10427 = vmatprep.subr.mxu0 0.0
    %10428 = vmatpush2.msra.mxu0 0.0
    %10429 = vmatprep.subr.mxu0 0.0
    %10430 = vmatpush2.msra.mxu0 0.0
    %10431 = vmatprep.subr.mxu0 0.0
    %10432 = vmatpush2.msra.mxu0 0.0
    %10433 = vmatprep.subr.mxu0 0.0
    %10434 = vmatpush2.msra.mxu0 0.0
    %10435 = vmatprep.subr.mxu0 0.0
    %10436 = vmatpush2.msra.mxu0 0.0
    %10437 = vmatprep.subr.mxu0 0.0
    %10438 = vmatpush2.msra.mxu0 0.0
    %10439 = vmatprep.subr.mxu0 0.0
    %10440 = vmatpush2.msra.mxu0 0.0
    %10441 = vmatprep.subr.mxu0 0.0
    %10442 = vmatpush2.msra.mxu0 0.0
    %10443 = vmatprep.subr.mxu0 0.0
    %10444 = vmatpush2.msra.mxu0 0.0
    %10445 = vmatprep.mubr.f32.mxu0 0.0
    %v10446 = vand.u32 %v10366, 4294901760
    %v10447 = vsub.f32 %v10366, %v10446
    %v10448 = vand.u32 %v10447, 4294901760
    %v10449 = vsub.f32 %v10447, %v10448
    %v10450 = vand.u32 %v10449, 4294901760
    %10451 = vmatmul.mubr.f32.gmra.mxu0 %v10450
    %v10452 = vpop.f32.mrf.mxu0
    %v10453 = vadd.f32 0.0, %v10452
    %v10454 = vpop.f32.mrf.mxu0
    %10455 = vmatprep.mubr.f32.mxu0 0.0
    %v10456 = vand.u32 %v10369, 4294901760
    %v10457 = vsub.f32 %v10369, %v10456
    %v10458 = vand.u32 %v10457, 4294901760
    %v10459 = vsub.f32 %v10457, %v10458
    %v10460 = vand.u32 %v10459, 4294901760
    %10461 = vmatmul.mubr.f32.gmra.mxu0 %v10460
    %v10462 = vpop.f32.mrf.mxu0
    %v10463 = vadd.f32 0.0, %v10462
    %v10464 = vpop.f32.mrf.mxu0
    %10465 = vmatprep.mubr.f32.mxu0 0.0
    %v10466 = vand.u32 %v10372, 4294901760
    %v10467 = vsub.f32 %v10372, %v10466
    %v10468 = vand.u32 %v10467, 4294901760
    %v10469 = vsub.f32 %v10467, %v10468
    %v10470 = vand.u32 %v10469, 4294901760
    %10471 = vmatmul.mubr.f32.gmra.mxu0 %v10470
    %v10472 = vpop.f32.mrf.mxu0
    %v10473 = vadd.f32 0.0, %v10472
    %v10474 = vpop.f32.mrf.mxu0
    %10475 = vmatprep.mubr.f32.mxu0 0.0
    %v10476 = vand.u32 %v10375, 4294901760
    %v10477 = vsub.f32 %v10375, %v10476
    %v10478 = vand.u32 %v10477, 4294901760
    %v10479 = vsub.f32 %v10477, %v10478
    %v10480 = vand.u32 %v10479, 4294901760
    %10481 = vmatmul.mubr.f32.gmra.mxu0 %v10480
    %v10482 = vpop.f32.mrf.mxu0
    %v10483 = vadd.f32 0.0, %v10482
    %v10484 = vpop.f32.mrf.mxu0
    %10485 = vdwg.mxu0
    %10486 = vmatprep.subr.mxu0 0.0
    %10487 = vmatpush1.msra.mxu0 0.0
    %10488 = vmatprep.subr.mxu0 0.0
    %10489 = vmatpush1.msra.mxu0 0.0
    %10490 = vmatprep.subr.mxu0 0.0
    %10491 = vmatpush1.msra.mxu0 0.0
    %10492 = vmatprep.subr.mxu0 0.0
    %10493 = vmatpush1.msra.mxu0 0.0
    %10494 = vmatprep.subr.mxu0 0.0
    %10495 = vmatpush1.msra.mxu0 0.0
    %10496 = vmatprep.subr.mxu0 0.0
    %10497 = vmatpush1.msra.mxu0 0.0
    %10498 = vmatprep.subr.mxu0 0.0
    %10499 = vmatpush1.msra.mxu0 0.0
    %10500 = vmatprep.subr.mxu0 0.0
    %10501 = vmatpush1.msra.mxu0 0.0
    %10502 = vmatprep.subr.mxu0 0.0
    %10503 = vmatpush1.msra.mxu0 0.0
    %10504 = vmatprep.subr.mxu0 0.0
    %10505 = vmatpush1.msra.mxu0 0.0
    %10506 = vmatprep.subr.mxu0 0.0
    %10507 = vmatpush1.msra.mxu0 0.0
    %10508 = vmatprep.subr.mxu0 0.0
    %10509 = vmatpush1.msra.mxu0 0.0
    %10510 = vmatprep.subr.mxu0 0.0
    %v10511 = vand.u32 %v10364, 4294901760
    %v10512 = vsub.f32 %v10364, %v10511
    %v10513 = vand.u32 %v10512, 4294901760
    %v10514 = vsub.f32 %v10512, %v10513
    %v10515 = vand.u32 %v10514, 4294901760
    %10516 = vmatpush1.msra.mxu0 %v10515
    %10517 = vmatprep.subr.mxu0 0.0
    %v10518 = vand.u32 %v10363, 4294901760
    %v10519 = vsub.f32 %v10363, %v10518
    %v10520 = vand.u32 %v10519, 4294901760
    %v10521 = vsub.f32 %v10519, %v10520
    %v10522 = vand.u32 %v10521, 4294901760
    %10523 = vmatpush1.msra.mxu0 %v10522
    %10524 = vmatprep.subr.mxu0 0.0
    %v10525 = vand.u32 %v10362, 4294901760
    %v10526 = vsub.f32 %v10362, %v10525
    %v10527 = vand.u32 %v10526, 4294901760
    %v10528 = vsub.f32 %v10526, %v10527
    %v10529 = vand.u32 %v10528, 4294901760
    %10530 = vmatpush1.msra.mxu0 %v10529
    %10531 = vmatprep.subr.mxu0 0.0
    %v10532 = vand.u32 %v10361, 4294901760
    %v10533 = vsub.f32 %v10361, %v10532
    %v10534 = vand.u32 %v10533, 4294901760
    %v10535 = vsub.f32 %v10533, %v10534
    %v10536 = vand.u32 %v10535, 4294901760
    %10537 = vmatpush1.msra.mxu0 %v10536
    %10538 = vmatprep.subr.mxu0 0.0
    %10539 = vmatpush2.msra.mxu0 0.0
    %10540 = vmatprep.subr.mxu0 0.0
    %10541 = vmatpush2.msra.mxu0 0.0
    %10542 = vmatprep.subr.mxu0 0.0
    %10543 = vmatpush2.msra.mxu0 0.0
    %10544 = vmatprep.subr.mxu0 0.0
    %10545 = vmatpush2.msra.mxu0 0.0
    %10546 = vmatprep.subr.mxu0 0.0
    %10547 = vmatpush2.msra.mxu0 0.0
    %10548 = vmatprep.subr.mxu0 0.0
    %10549 = vmatpush2.msra.mxu0 0.0
    %10550 = vmatprep.subr.mxu0 0.0
    %10551 = vmatpush2.msra.mxu0 0.0
    %10552 = vmatprep.subr.mxu0 0.0
    %10553 = vmatpush2.msra.mxu0 0.0
    %10554 = vmatprep.subr.mxu0 0.0
    %10555 = vmatpush2.msra.mxu0 0.0
    %10556 = vmatprep.subr.mxu0 0.0
    %10557 = vmatpush2.msra.mxu0 0.0
    %10558 = vmatprep.subr.mxu0 0.0
    %10559 = vmatpush2.msra.mxu0 0.0
    %10560 = vmatprep.subr.mxu0 0.0
    %10561 = vmatpush2.msra.mxu0 0.0
    %10562 = vmatprep.subr.mxu0 0.0
    %10563 = vmatpush2.msra.mxu0 0.0
    %10564 = vmatprep.subr.mxu0 0.0
    %10565 = vmatpush2.msra.mxu0 0.0
    %10566 = vmatprep.subr.mxu0 0.0
    %10567 = vmatpush2.msra.mxu0 0.0
    %10568 = vmatprep.subr.mxu0 0.0
    %10569 = vmatpush2.msra.mxu0 0.0
    %10570 = vmatprep.mubr.f32.mxu0 0.0
    %v10571 = vand.u32 %v10366, 4294901760
    %10572 = vmatmul.mubr.f32.gmra.mxu0 %v10571
    %v10573 = vpop.f32.mrf.mxu0
    %v10574 = vadd.f32 %v10453, %v10573
    %v10575 = vpop.f32.mrf.mxu0
    %10576 = vmatprep.mubr.f32.mxu0 0.0
    %v10577 = vand.u32 %v10369, 4294901760
    %10578 = vmatmul.mubr.f32.gmra.mxu0 %v10577
    %v10579 = vpop.f32.mrf.mxu0
    %v10580 = vadd.f32 %v10463, %v10579
    %v10581 = vpop.f32.mrf.mxu0
    %10582 = vmatprep.mubr.f32.mxu0 0.0
    %v10583 = vand.u32 %v10372, 4294901760
    %10584 = vmatmul.mubr.f32.gmra.mxu0 %v10583
    %v10585 = vpop.f32.mrf.mxu0
    %v10586 = vadd.f32 %v10473, %v10585
    %v10587 = vpop.f32.mrf.mxu0
    %10588 = vmatprep.mubr.f32.mxu0 0.0
    %v10589 = vand.u32 %v10375, 4294901760
    %10590 = vmatmul.mubr.f32.gmra.mxu0 %v10589
    %v10591 = vpop.f32.mrf.mxu0
    %v10592 = vadd.f32 %v10483, %v10591
    %v10593 = vpop.f32.mrf.mxu0
    %10594 = vdwg.mxu0
    %10595 = vmatprep.subr.mxu0 0.0
    %10596 = vmatpush1.msra.mxu0 0.0
    %10597 = vmatprep.subr.mxu0 0.0
    %10598 = vmatpush1.msra.mxu0 0.0
    %10599 = vmatprep.subr.mxu0 0.0
    %10600 = vmatpush1.msra.mxu0 0.0
    %10601 = vmatprep.subr.mxu0 0.0
    %10602 = vmatpush1.msra.mxu0 0.0
    %10603 = vmatprep.subr.mxu0 0.0
    %10604 = vmatpush1.msra.mxu0 0.0
    %10605 = vmatprep.subr.mxu0 0.0
    %10606 = vmatpush1.msra.mxu0 0.0
    %10607 = vmatprep.subr.mxu0 0.0
    %10608 = vmatpush1.msra.mxu0 0.0
    %10609 = vmatprep.subr.mxu0 0.0
    %10610 = vmatpush1.msra.mxu0 0.0
    %10611 = vmatprep.subr.mxu0 0.0
    %10612 = vmatpush1.msra.mxu0 0.0
    %10613 = vmatprep.subr.mxu0 0.0
    %10614 = vmatpush1.msra.mxu0 0.0
    %10615 = vmatprep.subr.mxu0 0.0
    %10616 = vmatpush1.msra.mxu0 0.0
    %10617 = vmatprep.subr.mxu0 0.0
    %10618 = vmatpush1.msra.mxu0 0.0
    %10619 = vmatprep.subr.mxu0 0.0
    %v10620 = vand.u32 %v10364, 4294901760
    %v10621 = vsub.f32 %v10364, %v10620
    %10622 = vmatpush1.msra.mxu0 %v10621
    %10623 = vmatprep.subr.mxu0 0.0
    %v10624 = vand.u32 %v10363, 4294901760
    %v10625 = vsub.f32 %v10363, %v10624
    %10626 = vmatpush1.msra.mxu0 %v10625
    %10627 = vmatprep.subr.mxu0 0.0
    %v10628 = vand.u32 %v10362, 4294901760
    %v10629 = vsub.f32 %v10362, %v10628
    %10630 = vmatpush1.msra.mxu0 %v10629
    %10631 = vmatprep.subr.mxu0 0.0
    %v10632 = vand.u32 %v10361, 4294901760
    %v10633 = vsub.f32 %v10361, %v10632
    %10634 = vmatpush1.msra.mxu0 %v10633
    %10635 = vmatprep.subr.mxu0 0.0
    %10636 = vmatpush2.msra.mxu0 0.0
    %10637 = vmatprep.subr.mxu0 0.0
    %10638 = vmatpush2.msra.mxu0 0.0
    %10639 = vmatprep.subr.mxu0 0.0
    %10640 = vmatpush2.msra.mxu0 0.0
    %10641 = vmatprep.subr.mxu0 0.0
    %10642 = vmatpush2.msra.mxu0 0.0
    %10643 = vmatprep.subr.mxu0 0.0
    %10644 = vmatpush2.msra.mxu0 0.0
    %10645 = vmatprep.subr.mxu0 0.0
    %10646 = vmatpush2.msra.mxu0 0.0
    %10647 = vmatprep.subr.mxu0 0.0
    %10648 = vmatpush2.msra.mxu0 0.0
    %10649 = vmatprep.subr.mxu0 0.0
    %10650 = vmatpush2.msra.mxu0 0.0
    %10651 = vmatprep.subr.mxu0 0.0
    %10652 = vmatpush2.msra.mxu0 0.0
    %10653 = vmatprep.subr.mxu0 0.0
    %10654 = vmatpush2.msra.mxu0 0.0
    %10655 = vmatprep.subr.mxu0 0.0
    %10656 = vmatpush2.msra.mxu0 0.0
    %10657 = vmatprep.subr.mxu0 0.0
    %10658 = vmatpush2.msra.mxu0 0.0
    %10659 = vmatprep.subr.mxu0 0.0
    %10660 = vmatpush2.msra.mxu0 0.0
    %10661 = vmatprep.subr.mxu0 0.0
    %10662 = vmatpush2.msra.mxu0 0.0
    %10663 = vmatprep.subr.mxu0 0.0
    %10664 = vmatpush2.msra.mxu0 0.0
    %10665 = vmatprep.subr.mxu0 0.0
    %10666 = vmatpush2.msra.mxu0 0.0
    %10667 = vmatprep.mubr.f32.mxu0 0.0
    %v10668 = vand.u32 %v10366, 4294901760
    %v10669 = vsub.f32 %v10366, %v10668
    %10670 = vmatmul.mubr.f32.gmra.mxu0 %v10669
    %v10671 = vpop.f32.mrf.mxu0
    %v10672 = vadd.f32 %v10574, %v10671
    %v10673 = vpop.f32.mrf.mxu0
    %10674 = vmatprep.mubr.f32.mxu0 0.0
    %v10675 = vand.u32 %v10369, 4294901760
    %v10676 = vsub.f32 %v10369, %v10675
    %10677 = vmatmul.mubr.f32.gmra.mxu0 %v10676
    %v10678 = vpop.f32.mrf.mxu0
    %v10679 = vadd.f32 %v10580, %v10678
    %v10680 = vpop.f32.mrf.mxu0
    %10681 = vmatprep.mubr.f32.mxu0 0.0
    %v10682 = vand.u32 %v10372, 4294901760
    %v10683 = vsub.f32 %v10372, %v10682
    %10684 = vmatmul.mubr.f32.gmra.mxu0 %v10683
    %v10685 = vpop.f32.mrf.mxu0
    %v10686 = vadd.f32 %v10586, %v10685
    %v10687 = vpop.f32.mrf.mxu0
    %10688 = vmatprep.mubr.f32.mxu0 0.0
    %v10689 = vand.u32 %v10375, 4294901760
    %v10690 = vsub.f32 %v10375, %v10689
    %10691 = vmatmul.mubr.f32.gmra.mxu0 %v10690
    %v10692 = vpop.f32.mrf.mxu0
    %v10693 = vadd.f32 %v10592, %v10692
    %v10694 = vpop.f32.mrf.mxu0
    %10695 = vdwg.mxu0
    %10696 = vmatprep.subr.mxu0 0.0
    %10697 = vmatpush1.msra.mxu0 0.0
    %10698 = vmatprep.subr.mxu0 0.0
    %10699 = vmatpush1.msra.mxu0 0.0
    %10700 = vmatprep.subr.mxu0 0.0
    %10701 = vmatpush1.msra.mxu0 0.0
    %10702 = vmatprep.subr.mxu0 0.0
    %10703 = vmatpush1.msra.mxu0 0.0
    %10704 = vmatprep.subr.mxu0 0.0
    %10705 = vmatpush1.msra.mxu0 0.0
    %10706 = vmatprep.subr.mxu0 0.0
    %10707 = vmatpush1.msra.mxu0 0.0
    %10708 = vmatprep.subr.mxu0 0.0
    %10709 = vmatpush1.msra.mxu0 0.0
    %10710 = vmatprep.subr.mxu0 0.0
    %10711 = vmatpush1.msra.mxu0 0.0
    %10712 = vmatprep.subr.mxu0 0.0
    %10713 = vmatpush1.msra.mxu0 0.0
    %10714 = vmatprep.subr.mxu0 0.0
    %10715 = vmatpush1.msra.mxu0 0.0
    %10716 = vmatprep.subr.mxu0 0.0
    %10717 = vmatpush1.msra.mxu0 0.0
    %10718 = vmatprep.subr.mxu0 0.0
    %10719 = vmatpush1.msra.mxu0 0.0
    %10720 = vmatprep.subr.mxu0 0.0
    %v10721 = vand.u32 %v10364, 4294901760
    %10722 = vmatpush1.msra.mxu0 %v10721
    %10723 = vmatprep.subr.mxu0 0.0
    %v10724 = vand.u32 %v10363, 4294901760
    %10725 = vmatpush1.msra.mxu0 %v10724
    %10726 = vmatprep.subr.mxu0 0.0
    %v10727 = vand.u32 %v10362, 4294901760
    %10728 = vmatpush1.msra.mxu0 %v10727
    %10729 = vmatprep.subr.mxu0 0.0
    %v10730 = vand.u32 %v10361, 4294901760
    %10731 = vmatpush1.msra.mxu0 %v10730
    %10732 = vmatprep.subr.mxu0 0.0
    %10733 = vmatpush2.msra.mxu0 0.0
    %10734 = vmatprep.subr.mxu0 0.0
    %10735 = vmatpush2.msra.mxu0 0.0
    %10736 = vmatprep.subr.mxu0 0.0
    %10737 = vmatpush2.msra.mxu0 0.0
    %10738 = vmatprep.subr.mxu0 0.0
    %10739 = vmatpush2.msra.mxu0 0.0
    %10740 = vmatprep.subr.mxu0 0.0
    %10741 = vmatpush2.msra.mxu0 0.0
    %10742 = vmatprep.subr.mxu0 0.0
    %10743 = vmatpush2.msra.mxu0 0.0
    %10744 = vmatprep.subr.mxu0 0.0
    %10745 = vmatpush2.msra.mxu0 0.0
    %10746 = vmatprep.subr.mxu0 0.0
    %10747 = vmatpush2.msra.mxu0 0.0
    %10748 = vmatprep.subr.mxu0 0.0
    %10749 = vmatpush2.msra.mxu0 0.0
    %10750 = vmatprep.subr.mxu0 0.0
    %10751 = vmatpush2.msra.mxu0 0.0
    %10752 = vmatprep.subr.mxu0 0.0
    %10753 = vmatpush2.msra.mxu0 0.0
    %10754 = vmatprep.subr.mxu0 0.0
    %10755 = vmatpush2.msra.mxu0 0.0
    %10756 = vmatprep.subr.mxu0 0.0
    %10757 = vmatpush2.msra.mxu0 0.0
    %10758 = vmatprep.subr.mxu0 0.0
    %10759 = vmatpush2.msra.mxu0 0.0
    %10760 = vmatprep.subr.mxu0 0.0
    %10761 = vmatpush2.msra.mxu0 0.0
    %10762 = vmatprep.subr.mxu0 0.0
    %10763 = vmatpush2.msra.mxu0 0.0
    %10764 = vmatprep.mubr.f32.mxu0 0.0
    %v10765 = vand.u32 %v10366, 4294901760
    %v10766 = vsub.f32 %v10366, %v10765
    %v10767 = vand.u32 %v10766, 4294901760
    %10768 = vmatmul.mubr.f32.gmra.mxu0 %v10767
    %v10769 = vpop.f32.mrf.mxu0
    %v10770 = vadd.f32 %v10672, %v10769
    %v10771 = vpop.f32.mrf.mxu0
    %10772 = vmatprep.mubr.f32.mxu0 0.0
    %v10773 = vand.u32 %v10369, 4294901760
    %v10774 = vsub.f32 %v10369, %v10773
    %v10775 = vand.u32 %v10774, 4294901760
    %10776 = vmatmul.mubr.f32.gmra.mxu0 %v10775
    %v10777 = vpop.f32.mrf.mxu0
    %v10778 = vadd.f32 %v10679, %v10777
    %v10779 = vpop.f32.mrf.mxu0
    %10780 = vmatprep.mubr.f32.mxu0 0.0
    %v10781 = vand.u32 %v10372, 4294901760
    %v10782 = vsub.f32 %v10372, %v10781
    %v10783 = vand.u32 %v10782, 4294901760
    %10784 = vmatmul.mubr.f32.gmra.mxu0 %v10783
    %v10785 = vpop.f32.mrf.mxu0
    %v10786 = vadd.f32 %v10686, %v10785
    %v10787 = vpop.f32.mrf.mxu0
    %10788 = vmatprep.mubr.f32.mxu0 0.0
    %v10789 = vand.u32 %v10375, 4294901760
    %v10790 = vsub.f32 %v10375, %v10789
    %v10791 = vand.u32 %v10790, 4294901760
    %10792 = vmatmul.mubr.f32.gmra.mxu0 %v10791
    %v10793 = vpop.f32.mrf.mxu0
    %v10794 = vadd.f32 %v10693, %v10793
    %v10795 = vpop.f32.mrf.mxu0
    %10796 = vdwg.mxu0
    %10797 = vmatprep.subr.mxu0 0.0
    %10798 = vmatpush1.msra.mxu0 0.0
    %10799 = vmatprep.subr.mxu0 0.0
    %10800 = vmatpush1.msra.mxu0 0.0
    %10801 = vmatprep.subr.mxu0 0.0
    %10802 = vmatpush1.msra.mxu0 0.0
    %10803 = vmatprep.subr.mxu0 0.0
    %10804 = vmatpush1.msra.mxu0 0.0
    %10805 = vmatprep.subr.mxu0 0.0
    %10806 = vmatpush1.msra.mxu0 0.0
    %10807 = vmatprep.subr.mxu0 0.0
    %10808 = vmatpush1.msra.mxu0 0.0
    %10809 = vmatprep.subr.mxu0 0.0
    %10810 = vmatpush1.msra.mxu0 0.0
    %10811 = vmatprep.subr.mxu0 0.0
    %10812 = vmatpush1.msra.mxu0 0.0
    %10813 = vmatprep.subr.mxu0 0.0
    %10814 = vmatpush1.msra.mxu0 0.0
    %10815 = vmatprep.subr.mxu0 0.0
    %10816 = vmatpush1.msra.mxu0 0.0
    %10817 = vmatprep.subr.mxu0 0.0
    %10818 = vmatpush1.msra.mxu0 0.0
    %10819 = vmatprep.subr.mxu0 0.0
    %10820 = vmatpush1.msra.mxu0 0.0
    %10821 = vmatprep.subr.mxu0 0.0
    %v10822 = vand.u32 %v10364, 4294901760
    %v10823 = vsub.f32 %v10364, %v10822
    %v10824 = vand.u32 %v10823, 4294901760
    %10825 = vmatpush1.msra.mxu0 %v10824
    %10826 = vmatprep.subr.mxu0 0.0
    %v10827 = vand.u32 %v10363, 4294901760
    %v10828 = vsub.f32 %v10363, %v10827
    %v10829 = vand.u32 %v10828, 4294901760
    %10830 = vmatpush1.msra.mxu0 %v10829
    %10831 = vmatprep.subr.mxu0 0.0
    %v10832 = vand.u32 %v10362, 4294901760
    %v10833 = vsub.f32 %v10362, %v10832
    %v10834 = vand.u32 %v10833, 4294901760
    %10835 = vmatpush1.msra.mxu0 %v10834
    %10836 = vmatprep.subr.mxu0 0.0
    %v10837 = vand.u32 %v10361, 4294901760
    %v10838 = vsub.f32 %v10361, %v10837
    %v10839 = vand.u32 %v10838, 4294901760
    %10840 = vmatpush1.msra.mxu0 %v10839
    %10841 = vmatprep.subr.mxu0 0.0
    %10842 = vmatpush2.msra.mxu0 0.0
    %10843 = vmatprep.subr.mxu0 0.0
    %10844 = vmatpush2.msra.mxu0 0.0
    %10845 = vmatprep.subr.mxu0 0.0
    %10846 = vmatpush2.msra.mxu0 0.0
    %10847 = vmatprep.subr.mxu0 0.0
    %10848 = vmatpush2.msra.mxu0 0.0
    %10849 = vmatprep.subr.mxu0 0.0
    %10850 = vmatpush2.msra.mxu0 0.0
    %10851 = vmatprep.subr.mxu0 0.0
    %10852 = vmatpush2.msra.mxu0 0.0
    %10853 = vmatprep.subr.mxu0 0.0
    %10854 = vmatpush2.msra.mxu0 0.0
    %10855 = vmatprep.subr.mxu0 0.0
    %10856 = vmatpush2.msra.mxu0 0.0
    %10857 = vmatprep.subr.mxu0 0.0
    %10858 = vmatpush2.msra.mxu0 0.0
    %10859 = vmatprep.subr.mxu0 0.0
    %10860 = vmatpush2.msra.mxu0 0.0
    %10861 = vmatprep.subr.mxu0 0.0
    %10862 = vmatpush2.msra.mxu0 0.0
    %10863 = vmatprep.subr.mxu0 0.0
    %10864 = vmatpush2.msra.mxu0 0.0
    %10865 = vmatprep.subr.mxu0 0.0
    %10866 = vmatpush2.msra.mxu0 0.0
    %10867 = vmatprep.subr.mxu0 0.0
    %10868 = vmatpush2.msra.mxu0 0.0
    %10869 = vmatprep.subr.mxu0 0.0
    %10870 = vmatpush2.msra.mxu0 0.0
    %10871 = vmatprep.subr.mxu0 0.0
    %10872 = vmatpush2.msra.mxu0 0.0
    %10873 = vmatprep.mubr.f32.mxu0 0.0
    %v10874 = vand.u32 %v10366, 4294901760
    %10875 = vmatmul.mubr.f32.gmra.mxu0 %v10874
    %v10876 = vpop.f32.mrf.mxu0
    %v10877 = vadd.f32 %v10770, %v10876
    %v10878 = vpop.f32.mrf.mxu0
    %10879 = vmatprep.mubr.f32.mxu0 0.0
    %v10880 = vand.u32 %v10369, 4294901760
    %10881 = vmatmul.mubr.f32.gmra.mxu0 %v10880
    %v10882 = vpop.f32.mrf.mxu0
    %v10883 = vadd.f32 %v10778, %v10882
    %v10884 = vpop.f32.mrf.mxu0
    %10885 = vmatprep.mubr.f32.mxu0 0.0
    %v10886 = vand.u32 %v10372, 4294901760
    %10887 = vmatmul.mubr.f32.gmra.mxu0 %v10886
    %v10888 = vpop.f32.mrf.mxu0
    %v10889 = vadd.f32 %v10786, %v10888
    %v10890 = vpop.f32.mrf.mxu0
    %10891 = vmatprep.mubr.f32.mxu0 0.0
    %v10892 = vand.u32 %v10375, 4294901760
    %10893 = vmatmul.mubr.f32.gmra.mxu0 %v10892
    %v10894 = vpop.f32.mrf.mxu0
    %v10895 = vadd.f32 %v10794, %v10894
    %v10896 = vpop.f32.mrf.mxu0
    %10897 = vdwg.mxu0
    %10898 = vmatprep.subr.mxu0 0.0
    %10899 = vmatpush1.msra.mxu0 0.0
    %10900 = vmatprep.subr.mxu0 0.0
    %10901 = vmatpush1.msra.mxu0 0.0
    %10902 = vmatprep.subr.mxu0 0.0
    %10903 = vmatpush1.msra.mxu0 0.0
    %10904 = vmatprep.subr.mxu0 0.0
    %10905 = vmatpush1.msra.mxu0 0.0
    %10906 = vmatprep.subr.mxu0 0.0
    %10907 = vmatpush1.msra.mxu0 0.0
    %10908 = vmatprep.subr.mxu0 0.0
    %10909 = vmatpush1.msra.mxu0 0.0
    %10910 = vmatprep.subr.mxu0 0.0
    %10911 = vmatpush1.msra.mxu0 0.0
    %10912 = vmatprep.subr.mxu0 0.0
    %10913 = vmatpush1.msra.mxu0 0.0
    %10914 = vmatprep.subr.mxu0 0.0
    %10915 = vmatpush1.msra.mxu0 0.0
    %10916 = vmatprep.subr.mxu0 0.0
    %10917 = vmatpush1.msra.mxu0 0.0
    %10918 = vmatprep.subr.mxu0 0.0
    %10919 = vmatpush1.msra.mxu0 0.0
    %10920 = vmatprep.subr.mxu0 0.0
    %10921 = vmatpush1.msra.mxu0 0.0
    %10922 = vmatprep.subr.mxu0 0.0
    %v10923 = vand.u32 %v10364, 4294901760
    %10924 = vmatpush1.msra.mxu0 %v10923
    %10925 = vmatprep.subr.mxu0 0.0
    %v10926 = vand.u32 %v10363, 4294901760
    %10927 = vmatpush1.msra.mxu0 %v10926
    %10928 = vmatprep.subr.mxu0 0.0
    %v10929 = vand.u32 %v10362, 4294901760
    %10930 = vmatpush1.msra.mxu0 %v10929
    %10931 = vmatprep.subr.mxu0 0.0
    %v10932 = vand.u32 %v10361, 4294901760
    %10933 = vmatpush1.msra.mxu0 %v10932
    %10934 = vmatprep.subr.mxu0 0.0
    %10935 = vmatpush2.msra.mxu0 0.0
    %10936 = vmatprep.subr.mxu0 0.0
    %10937 = vmatpush2.msra.mxu0 0.0
    %10938 = vmatprep.subr.mxu0 0.0
    %10939 = vmatpush2.msra.mxu0 0.0
    %10940 = vmatprep.subr.mxu0 0.0
    %10941 = vmatpush2.msra.mxu0 0.0
    %10942 = vmatprep.subr.mxu0 0.0
    %10943 = vmatpush2.msra.mxu0 0.0
    %10944 = vmatprep.subr.mxu0 0.0
    %10945 = vmatpush2.msra.mxu0 0.0
    %10946 = vmatprep.subr.mxu0 0.0
    %10947 = vmatpush2.msra.mxu0 0.0
    %10948 = vmatprep.subr.mxu0 0.0
    %10949 = vmatpush2.msra.mxu0 0.0
    %10950 = vmatprep.subr.mxu0 0.0
    %10951 = vmatpush2.msra.mxu0 0.0
    %10952 = vmatprep.subr.mxu0 0.0
    %10953 = vmatpush2.msra.mxu0 0.0
    %10954 = vmatprep.subr.mxu0 0.0
    %10955 = vmatpush2.msra.mxu0 0.0
    %10956 = vmatprep.subr.mxu0 0.0
    %10957 = vmatpush2.msra.mxu0 0.0
    %10958 = vmatprep.subr.mxu0 0.0
    %10959 = vmatpush2.msra.mxu0 0.0
    %10960 = vmatprep.subr.mxu0 0.0
    %10961 = vmatpush2.msra.mxu0 0.0
    %10962 = vmatprep.subr.mxu0 0.0
    %10963 = vmatpush2.msra.mxu0 0.0
    %10964 = vmatprep.subr.mxu0 0.0
    %10965 = vmatpush2.msra.mxu0 0.0
    %10966 = vmatprep.mubr.f32.mxu0 0.0
    %v10967 = vand.u32 %v10366, 4294901760
    %10968 = vmatmul.mubr.f32.gmra.mxu0 %v10967
    %v10969 = vpop.f32.mrf.mxu0
    %v10970 = vadd.f32 %v10877, %v10969
    %v10971 = vpop.f32.mrf.mxu0
    %10972 = vmatprep.mubr.f32.mxu0 0.0
    %v10973 = vand.u32 %v10369, 4294901760
    %10974 = vmatmul.mubr.f32.gmra.mxu0 %v10973
    %v10975 = vpop.f32.mrf.mxu0
    %v10976 = vadd.f32 %v10883, %v10975
    %v10977 = vpop.f32.mrf.mxu0
    %10978 = vmatprep.mubr.f32.mxu0 0.0
    %v10979 = vand.u32 %v10372, 4294901760
    %10980 = vmatmul.mubr.f32.gmra.mxu0 %v10979
    %v10981 = vpop.f32.mrf.mxu0
    %v10982 = vadd.f32 %v10889, %v10981
    %v10983 = vpop.f32.mrf.mxu0
    %10984 = vmatprep.mubr.f32.mxu0 0.0
    %v10985 = vand.u32 %v10375, 4294901760
    %10986 = vmatmul.mubr.f32.gmra.mxu0 %v10985
    %v10987 = vpop.f32.mrf.mxu0
    %v10988 = vadd.f32 %v10895, %v10987
    %v10989 = vpop.f32.mrf.mxu0
    %10990 = vdwg.mxu0
    %v10991 = vadd.f32 %v10352, %v10970
    %v10992 = vadd.f32 %v10353, %v10976
    %v10993 = vadd.f32 %v10354, %v10982
    %v10994 = vadd.f32 %v10355, %v10988
    %v10995 = vld [vmem:[#allocation2 + $0xc] sm:$0xff]
    %v10996 = vld [vmem:[#allocation2 + $0x14] sm:$0xff]
    %v10997 = vld [vmem:[#allocation2 + $0x2c] sm:$0xff]
    %v10998 = vld [vmem:[#allocation2 + $0x34] sm:$0xff]
    %s10999 = scalar_lea.vmem [#allocation8], 544
    %v11000 = vld [vmem:[%s10999] sm:$0xff]
    %v11001 = vld [vmem:[%s10999 + $0x8] sm:$0xff]
    %v11002 = vld [vmem:[%s10999 + $0x10] sm:$0xff]
    %v11003 = vld [vmem:[%s10999 + $0x18] sm:$0xff]
    %v11005 = vsel %vm57, %v10995, 0
    %v11008 = vsel %vm57, %v10996, 0
    %v11011 = vsel %vm57, %v10997, 0
    %v11014 = vsel %vm57, %v10998, 0
    %11016 = vmatprep.subr.mxu0 0.0
    %11017 = vmatpush1.msra.mxu0 0.0
    %11018 = vmatprep.subr.mxu0 0.0
    %11019 = vmatpush1.msra.mxu0 0.0
    %11020 = vmatprep.subr.mxu0 0.0
    %11021 = vmatpush1.msra.mxu0 0.0
    %11022 = vmatprep.subr.mxu0 0.0
    %11023 = vmatpush1.msra.mxu0 0.0
    %11024 = vmatprep.subr.mxu0 0.0
    %11025 = vmatpush1.msra.mxu0 0.0
    %11026 = vmatprep.subr.mxu0 0.0
    %11027 = vmatpush1.msra.mxu0 0.0
    %11028 = vmatprep.subr.mxu0 0.0
    %11029 = vmatpush1.msra.mxu0 0.0
    %11030 = vmatprep.subr.mxu0 0.0
    %11031 = vmatpush1.msra.mxu0 0.0
    %11032 = vmatprep.subr.mxu0 0.0
    %11033 = vmatpush1.msra.mxu0 0.0
    %11034 = vmatprep.subr.mxu0 0.0
    %11035 = vmatpush1.msra.mxu0 0.0
    %11036 = vmatprep.subr.mxu0 0.0
    %11037 = vmatpush1.msra.mxu0 0.0
    %11038 = vmatprep.subr.mxu0 0.0
    %11039 = vmatpush1.msra.mxu0 0.0
    %11040 = vmatprep.subr.mxu0 0.0
    %v11041 = vand.u32 %v11003, 4294901760
    %11042 = vmatpush1.msra.mxu0 %v11041
    %11043 = vmatprep.subr.mxu0 0.0
    %v11044 = vand.u32 %v11002, 4294901760
    %11045 = vmatpush1.msra.mxu0 %v11044
    %11046 = vmatprep.subr.mxu0 0.0
    %v11047 = vand.u32 %v11001, 4294901760
    %11048 = vmatpush1.msra.mxu0 %v11047
    %11049 = vmatprep.subr.mxu0 0.0
    %v11050 = vand.u32 %v11000, 4294901760
    %11051 = vmatpush1.msra.mxu0 %v11050
    %11052 = vmatprep.subr.mxu0 0.0
    %11053 = vmatpush2.msra.mxu0 0.0
    %11054 = vmatprep.subr.mxu0 0.0
    %11055 = vmatpush2.msra.mxu0 0.0
    %11056 = vmatprep.subr.mxu0 0.0
    %11057 = vmatpush2.msra.mxu0 0.0
    %11058 = vmatprep.subr.mxu0 0.0
    %11059 = vmatpush2.msra.mxu0 0.0
    %11060 = vmatprep.subr.mxu0 0.0
    %11061 = vmatpush2.msra.mxu0 0.0
    %11062 = vmatprep.subr.mxu0 0.0
    %11063 = vmatpush2.msra.mxu0 0.0
    %11064 = vmatprep.subr.mxu0 0.0
    %11065 = vmatpush2.msra.mxu0 0.0
    %11066 = vmatprep.subr.mxu0 0.0
    %11067 = vmatpush2.msra.mxu0 0.0
    %11068 = vmatprep.subr.mxu0 0.0
    %11069 = vmatpush2.msra.mxu0 0.0
    %11070 = vmatprep.subr.mxu0 0.0
    %11071 = vmatpush2.msra.mxu0 0.0
    %11072 = vmatprep.subr.mxu0 0.0
    %11073 = vmatpush2.msra.mxu0 0.0
    %11074 = vmatprep.subr.mxu0 0.0
    %11075 = vmatpush2.msra.mxu0 0.0
    %11076 = vmatprep.subr.mxu0 0.0
    %11077 = vmatpush2.msra.mxu0 0.0
    %11078 = vmatprep.subr.mxu0 0.0
    %11079 = vmatpush2.msra.mxu0 0.0
    %11080 = vmatprep.subr.mxu0 0.0
    %11081 = vmatpush2.msra.mxu0 0.0
    %11082 = vmatprep.subr.mxu0 0.0
    %11083 = vmatpush2.msra.mxu0 0.0
    %11084 = vmatprep.mubr.f32.mxu0 0.0
    %v11085 = vand.u32 %v11005, 4294901760
    %v11086 = vsub.f32 %v11005, %v11085
    %v11087 = vand.u32 %v11086, 4294901760
    %v11088 = vsub.f32 %v11086, %v11087
    %v11089 = vand.u32 %v11088, 4294901760
    %11090 = vmatmul.mubr.f32.gmra.mxu0 %v11089
    %v11091 = vpop.f32.mrf.mxu0
    %v11092 = vadd.f32 0.0, %v11091
    %v11093 = vpop.f32.mrf.mxu0
    %11094 = vmatprep.mubr.f32.mxu0 0.0
    %v11095 = vand.u32 %v11008, 4294901760
    %v11096 = vsub.f32 %v11008, %v11095
    %v11097 = vand.u32 %v11096, 4294901760
    %v11098 = vsub.f32 %v11096, %v11097
    %v11099 = vand.u32 %v11098, 4294901760
    %11100 = vmatmul.mubr.f32.gmra.mxu0 %v11099
    %v11101 = vpop.f32.mrf.mxu0
    %v11102 = vadd.f32 0.0, %v11101
    %v11103 = vpop.f32.mrf.mxu0
    %11104 = vmatprep.mubr.f32.mxu0 0.0
    %v11105 = vand.u32 %v11011, 4294901760
    %v11106 = vsub.f32 %v11011, %v11105
    %v11107 = vand.u32 %v11106, 4294901760
    %v11108 = vsub.f32 %v11106, %v11107
    %v11109 = vand.u32 %v11108, 4294901760
    %11110 = vmatmul.mubr.f32.gmra.mxu0 %v11109
    %v11111 = vpop.f32.mrf.mxu0
    %v11112 = vadd.f32 0.0, %v11111
    %v11113 = vpop.f32.mrf.mxu0
    %11114 = vmatprep.mubr.f32.mxu0 0.0
    %v11115 = vand.u32 %v11014, 4294901760
    %v11116 = vsub.f32 %v11014, %v11115
    %v11117 = vand.u32 %v11116, 4294901760
    %v11118 = vsub.f32 %v11116, %v11117
    %v11119 = vand.u32 %v11118, 4294901760
    %11120 = vmatmul.mubr.f32.gmra.mxu0 %v11119
    %v11121 = vpop.f32.mrf.mxu0
    %v11122 = vadd.f32 0.0, %v11121
    %v11123 = vpop.f32.mrf.mxu0
    %11124 = vdwg.mxu0
    %11125 = vmatprep.subr.mxu0 0.0
    %11126 = vmatpush1.msra.mxu0 0.0
    %11127 = vmatprep.subr.mxu0 0.0
    %11128 = vmatpush1.msra.mxu0 0.0
    %11129 = vmatprep.subr.mxu0 0.0
    %11130 = vmatpush1.msra.mxu0 0.0
    %11131 = vmatprep.subr.mxu0 0.0
    %11132 = vmatpush1.msra.mxu0 0.0
    %11133 = vmatprep.subr.mxu0 0.0
    %11134 = vmatpush1.msra.mxu0 0.0
    %11135 = vmatprep.subr.mxu0 0.0
    %11136 = vmatpush1.msra.mxu0 0.0
    %11137 = vmatprep.subr.mxu0 0.0
    %11138 = vmatpush1.msra.mxu0 0.0
    %11139 = vmatprep.subr.mxu0 0.0
    %11140 = vmatpush1.msra.mxu0 0.0
    %11141 = vmatprep.subr.mxu0 0.0
    %11142 = vmatpush1.msra.mxu0 0.0
    %11143 = vmatprep.subr.mxu0 0.0
    %11144 = vmatpush1.msra.mxu0 0.0
    %11145 = vmatprep.subr.mxu0 0.0
    %11146 = vmatpush1.msra.mxu0 0.0
    %11147 = vmatprep.subr.mxu0 0.0
    %11148 = vmatpush1.msra.mxu0 0.0
    %11149 = vmatprep.subr.mxu0 0.0
    %v11150 = vand.u32 %v11003, 4294901760
    %v11151 = vsub.f32 %v11003, %v11150
    %v11152 = vand.u32 %v11151, 4294901760
    %v11153 = vsub.f32 %v11151, %v11152
    %v11154 = vand.u32 %v11153, 4294901760
    %11155 = vmatpush1.msra.mxu0 %v11154
    %11156 = vmatprep.subr.mxu0 0.0
    %v11157 = vand.u32 %v11002, 4294901760
    %v11158 = vsub.f32 %v11002, %v11157
    %v11159 = vand.u32 %v11158, 4294901760
    %v11160 = vsub.f32 %v11158, %v11159
    %v11161 = vand.u32 %v11160, 4294901760
    %11162 = vmatpush1.msra.mxu0 %v11161
    %11163 = vmatprep.subr.mxu0 0.0
    %v11164 = vand.u32 %v11001, 4294901760
    %v11165 = vsub.f32 %v11001, %v11164
    %v11166 = vand.u32 %v11165, 4294901760
    %v11167 = vsub.f32 %v11165, %v11166
    %v11168 = vand.u32 %v11167, 4294901760
    %11169 = vmatpush1.msra.mxu0 %v11168
    %11170 = vmatprep.subr.mxu0 0.0
    %v11171 = vand.u32 %v11000, 4294901760
    %v11172 = vsub.f32 %v11000, %v11171
    %v11173 = vand.u32 %v11172, 4294901760
    %v11174 = vsub.f32 %v11172, %v11173
    %v11175 = vand.u32 %v11174, 4294901760
    %11176 = vmatpush1.msra.mxu0 %v11175
    %11177 = vmatprep.subr.mxu0 0.0
    %11178 = vmatpush2.msra.mxu0 0.0
    %11179 = vmatprep.subr.mxu0 0.0
    %11180 = vmatpush2.msra.mxu0 0.0
    %11181 = vmatprep.subr.mxu0 0.0
    %11182 = vmatpush2.msra.mxu0 0.0
    %11183 = vmatprep.subr.mxu0 0.0
    %11184 = vmatpush2.msra.mxu0 0.0
    %11185 = vmatprep.subr.mxu0 0.0
    %11186 = vmatpush2.msra.mxu0 0.0
    %11187 = vmatprep.subr.mxu0 0.0
    %11188 = vmatpush2.msra.mxu0 0.0
    %11189 = vmatprep.subr.mxu0 0.0
    %11190 = vmatpush2.msra.mxu0 0.0
    %11191 = vmatprep.subr.mxu0 0.0
    %11192 = vmatpush2.msra.mxu0 0.0
    %11193 = vmatprep.subr.mxu0 0.0
    %11194 = vmatpush2.msra.mxu0 0.0
    %11195 = vmatprep.subr.mxu0 0.0
    %11196 = vmatpush2.msra.mxu0 0.0
    %11197 = vmatprep.subr.mxu0 0.0
    %11198 = vmatpush2.msra.mxu0 0.0
    %11199 = vmatprep.subr.mxu0 0.0
    %11200 = vmatpush2.msra.mxu0 0.0
    %11201 = vmatprep.subr.mxu0 0.0
    %11202 = vmatpush2.msra.mxu0 0.0
    %11203 = vmatprep.subr.mxu0 0.0
    %11204 = vmatpush2.msra.mxu0 0.0
    %11205 = vmatprep.subr.mxu0 0.0
    %11206 = vmatpush2.msra.mxu0 0.0
    %11207 = vmatprep.subr.mxu0 0.0
    %11208 = vmatpush2.msra.mxu0 0.0
    %11209 = vmatprep.mubr.f32.mxu0 0.0
    %v11210 = vand.u32 %v11005, 4294901760
    %11211 = vmatmul.mubr.f32.gmra.mxu0 %v11210
    %v11212 = vpop.f32.mrf.mxu0
    %v11213 = vadd.f32 %v11092, %v11212
    %v11214 = vpop.f32.mrf.mxu0
    %11215 = vmatprep.mubr.f32.mxu0 0.0
    %v11216 = vand.u32 %v11008, 4294901760
    %11217 = vmatmul.mubr.f32.gmra.mxu0 %v11216
    %v11218 = vpop.f32.mrf.mxu0
    %v11219 = vadd.f32 %v11102, %v11218
    %v11220 = vpop.f32.mrf.mxu0
    %11221 = vmatprep.mubr.f32.mxu0 0.0
    %v11222 = vand.u32 %v11011, 4294901760
    %11223 = vmatmul.mubr.f32.gmra.mxu0 %v11222
    %v11224 = vpop.f32.mrf.mxu0
    %v11225 = vadd.f32 %v11112, %v11224
    %v11226 = vpop.f32.mrf.mxu0
    %11227 = vmatprep.mubr.f32.mxu0 0.0
    %v11228 = vand.u32 %v11014, 4294901760
    %11229 = vmatmul.mubr.f32.gmra.mxu0 %v11228
    %v11230 = vpop.f32.mrf.mxu0
    %v11231 = vadd.f32 %v11122, %v11230
    %v11232 = vpop.f32.mrf.mxu0
    %11233 = vdwg.mxu0
    %11234 = vmatprep.subr.mxu0 0.0
    %11235 = vmatpush1.msra.mxu0 0.0
    %11236 = vmatprep.subr.mxu0 0.0
    %11237 = vmatpush1.msra.mxu0 0.0
    %11238 = vmatprep.subr.mxu0 0.0
    %11239 = vmatpush1.msra.mxu0 0.0
    %11240 = vmatprep.subr.mxu0 0.0
    %11241 = vmatpush1.msra.mxu0 0.0
    %11242 = vmatprep.subr.mxu0 0.0
    %11243 = vmatpush1.msra.mxu0 0.0
    %11244 = vmatprep.subr.mxu0 0.0
    %11245 = vmatpush1.msra.mxu0 0.0
    %11246 = vmatprep.subr.mxu0 0.0
    %11247 = vmatpush1.msra.mxu0 0.0
    %11248 = vmatprep.subr.mxu0 0.0
    %11249 = vmatpush1.msra.mxu0 0.0
    %11250 = vmatprep.subr.mxu0 0.0
    %11251 = vmatpush1.msra.mxu0 0.0
    %11252 = vmatprep.subr.mxu0 0.0
    %11253 = vmatpush1.msra.mxu0 0.0
    %11254 = vmatprep.subr.mxu0 0.0
    %11255 = vmatpush1.msra.mxu0 0.0
    %11256 = vmatprep.subr.mxu0 0.0
    %11257 = vmatpush1.msra.mxu0 0.0
    %11258 = vmatprep.subr.mxu0 0.0
    %v11259 = vand.u32 %v11003, 4294901760
    %v11260 = vsub.f32 %v11003, %v11259
    %11261 = vmatpush1.msra.mxu0 %v11260
    %11262 = vmatprep.subr.mxu0 0.0
    %v11263 = vand.u32 %v11002, 4294901760
    %v11264 = vsub.f32 %v11002, %v11263
    %11265 = vmatpush1.msra.mxu0 %v11264
    %11266 = vmatprep.subr.mxu0 0.0
    %v11267 = vand.u32 %v11001, 4294901760
    %v11268 = vsub.f32 %v11001, %v11267
    %11269 = vmatpush1.msra.mxu0 %v11268
    %11270 = vmatprep.subr.mxu0 0.0
    %v11271 = vand.u32 %v11000, 4294901760
    %v11272 = vsub.f32 %v11000, %v11271
    %11273 = vmatpush1.msra.mxu0 %v11272
    %11274 = vmatprep.subr.mxu0 0.0
    %11275 = vmatpush2.msra.mxu0 0.0
    %11276 = vmatprep.subr.mxu0 0.0
    %11277 = vmatpush2.msra.mxu0 0.0
    %11278 = vmatprep.subr.mxu0 0.0
    %11279 = vmatpush2.msra.mxu0 0.0
    %11280 = vmatprep.subr.mxu0 0.0
    %11281 = vmatpush2.msra.mxu0 0.0
    %11282 = vmatprep.subr.mxu0 0.0
    %11283 = vmatpush2.msra.mxu0 0.0
    %11284 = vmatprep.subr.mxu0 0.0
    %11285 = vmatpush2.msra.mxu0 0.0
    %11286 = vmatprep.subr.mxu0 0.0
    %11287 = vmatpush2.msra.mxu0 0.0
    %11288 = vmatprep.subr.mxu0 0.0
    %11289 = vmatpush2.msra.mxu0 0.0
    %11290 = vmatprep.subr.mxu0 0.0
    %11291 = vmatpush2.msra.mxu0 0.0
    %11292 = vmatprep.subr.mxu0 0.0
    %11293 = vmatpush2.msra.mxu0 0.0
    %11294 = vmatprep.subr.mxu0 0.0
    %11295 = vmatpush2.msra.mxu0 0.0
    %11296 = vmatprep.subr.mxu0 0.0
    %11297 = vmatpush2.msra.mxu0 0.0
    %11298 = vmatprep.subr.mxu0 0.0
    %11299 = vmatpush2.msra.mxu0 0.0
    %11300 = vmatprep.subr.mxu0 0.0
    %11301 = vmatpush2.msra.mxu0 0.0
    %11302 = vmatprep.subr.mxu0 0.0
    %11303 = vmatpush2.msra.mxu0 0.0
    %11304 = vmatprep.subr.mxu0 0.0
    %11305 = vmatpush2.msra.mxu0 0.0
    %11306 = vmatprep.mubr.f32.mxu0 0.0
    %v11307 = vand.u32 %v11005, 4294901760
    %v11308 = vsub.f32 %v11005, %v11307
    %11309 = vmatmul.mubr.f32.gmra.mxu0 %v11308
    %v11310 = vpop.f32.mrf.mxu0
    %v11311 = vadd.f32 %v11213, %v11310
    %v11312 = vpop.f32.mrf.mxu0
    %11313 = vmatprep.mubr.f32.mxu0 0.0
    %v11314 = vand.u32 %v11008, 4294901760
    %v11315 = vsub.f32 %v11008, %v11314
    %11316 = vmatmul.mubr.f32.gmra.mxu0 %v11315
    %v11317 = vpop.f32.mrf.mxu0
    %v11318 = vadd.f32 %v11219, %v11317
    %v11319 = vpop.f32.mrf.mxu0
    %11320 = vmatprep.mubr.f32.mxu0 0.0
    %v11321 = vand.u32 %v11011, 4294901760
    %v11322 = vsub.f32 %v11011, %v11321
    %11323 = vmatmul.mubr.f32.gmra.mxu0 %v11322
    %v11324 = vpop.f32.mrf.mxu0
    %v11325 = vadd.f32 %v11225, %v11324
    %v11326 = vpop.f32.mrf.mxu0
    %11327 = vmatprep.mubr.f32.mxu0 0.0
    %v11328 = vand.u32 %v11014, 4294901760
    %v11329 = vsub.f32 %v11014, %v11328
    %11330 = vmatmul.mubr.f32.gmra.mxu0 %v11329
    %v11331 = vpop.f32.mrf.mxu0
    %v11332 = vadd.f32 %v11231, %v11331
    %v11333 = vpop.f32.mrf.mxu0
    %11334 = vdwg.mxu0
    %11335 = vmatprep.subr.mxu0 0.0
    %11336 = vmatpush1.msra.mxu0 0.0
    %11337 = vmatprep.subr.mxu0 0.0
    %11338 = vmatpush1.msra.mxu0 0.0
    %11339 = vmatprep.subr.mxu0 0.0
    %11340 = vmatpush1.msra.mxu0 0.0
    %11341 = vmatprep.subr.mxu0 0.0
    %11342 = vmatpush1.msra.mxu0 0.0
    %11343 = vmatprep.subr.mxu0 0.0
    %11344 = vmatpush1.msra.mxu0 0.0
    %11345 = vmatprep.subr.mxu0 0.0
    %11346 = vmatpush1.msra.mxu0 0.0
    %11347 = vmatprep.subr.mxu0 0.0
    %11348 = vmatpush1.msra.mxu0 0.0
    %11349 = vmatprep.subr.mxu0 0.0
    %11350 = vmatpush1.msra.mxu0 0.0
    %11351 = vmatprep.subr.mxu0 0.0
    %11352 = vmatpush1.msra.mxu0 0.0
    %11353 = vmatprep.subr.mxu0 0.0
    %11354 = vmatpush1.msra.mxu0 0.0
    %11355 = vmatprep.subr.mxu0 0.0
    %11356 = vmatpush1.msra.mxu0 0.0
    %11357 = vmatprep.subr.mxu0 0.0
    %11358 = vmatpush1.msra.mxu0 0.0
    %11359 = vmatprep.subr.mxu0 0.0
    %v11360 = vand.u32 %v11003, 4294901760
    %11361 = vmatpush1.msra.mxu0 %v11360
    %11362 = vmatprep.subr.mxu0 0.0
    %v11363 = vand.u32 %v11002, 4294901760
    %11364 = vmatpush1.msra.mxu0 %v11363
    %11365 = vmatprep.subr.mxu0 0.0
    %v11366 = vand.u32 %v11001, 4294901760
    %11367 = vmatpush1.msra.mxu0 %v11366
    %11368 = vmatprep.subr.mxu0 0.0
    %v11369 = vand.u32 %v11000, 4294901760
    %11370 = vmatpush1.msra.mxu0 %v11369
    %11371 = vmatprep.subr.mxu0 0.0
    %11372 = vmatpush2.msra.mxu0 0.0
    %11373 = vmatprep.subr.mxu0 0.0
    %11374 = vmatpush2.msra.mxu0 0.0
    %11375 = vmatprep.subr.mxu0 0.0
    %11376 = vmatpush2.msra.mxu0 0.0
    %11377 = vmatprep.subr.mxu0 0.0
    %11378 = vmatpush2.msra.mxu0 0.0
    %11379 = vmatprep.subr.mxu0 0.0
    %11380 = vmatpush2.msra.mxu0 0.0
    %11381 = vmatprep.subr.mxu0 0.0
    %11382 = vmatpush2.msra.mxu0 0.0
    %11383 = vmatprep.subr.mxu0 0.0
    %11384 = vmatpush2.msra.mxu0 0.0
    %11385 = vmatprep.subr.mxu0 0.0
    %11386 = vmatpush2.msra.mxu0 0.0
    %11387 = vmatprep.subr.mxu0 0.0
    %11388 = vmatpush2.msra.mxu0 0.0
    %11389 = vmatprep.subr.mxu0 0.0
    %11390 = vmatpush2.msra.mxu0 0.0
    %11391 = vmatprep.subr.mxu0 0.0
    %11392 = vmatpush2.msra.mxu0 0.0
    %11393 = vmatprep.subr.mxu0 0.0
    %11394 = vmatpush2.msra.mxu0 0.0
    %11395 = vmatprep.subr.mxu0 0.0
    %11396 = vmatpush2.msra.mxu0 0.0
    %11397 = vmatprep.subr.mxu0 0.0
    %11398 = vmatpush2.msra.mxu0 0.0
    %11399 = vmatprep.subr.mxu0 0.0
    %11400 = vmatpush2.msra.mxu0 0.0
    %11401 = vmatprep.subr.mxu0 0.0
    %11402 = vmatpush2.msra.mxu0 0.0
    %11403 = vmatprep.mubr.f32.mxu0 0.0
    %v11404 = vand.u32 %v11005, 4294901760
    %v11405 = vsub.f32 %v11005, %v11404
    %v11406 = vand.u32 %v11405, 4294901760
    %11407 = vmatmul.mubr.f32.gmra.mxu0 %v11406
    %v11408 = vpop.f32.mrf.mxu0
    %v11409 = vadd.f32 %v11311, %v11408
    %v11410 = vpop.f32.mrf.mxu0
    %11411 = vmatprep.mubr.f32.mxu0 0.0
    %v11412 = vand.u32 %v11008, 4294901760
    %v11413 = vsub.f32 %v11008, %v11412
    %v11414 = vand.u32 %v11413, 4294901760
    %11415 = vmatmul.mubr.f32.gmra.mxu0 %v11414
    %v11416 = vpop.f32.mrf.mxu0
    %v11417 = vadd.f32 %v11318, %v11416
    %v11418 = vpop.f32.mrf.mxu0
    %11419 = vmatprep.mubr.f32.mxu0 0.0
    %v11420 = vand.u32 %v11011, 4294901760
    %v11421 = vsub.f32 %v11011, %v11420
    %v11422 = vand.u32 %v11421, 4294901760
    %11423 = vmatmul.mubr.f32.gmra.mxu0 %v11422
    %v11424 = vpop.f32.mrf.mxu0
    %v11425 = vadd.f32 %v11325, %v11424
    %v11426 = vpop.f32.mrf.mxu0
    %11427 = vmatprep.mubr.f32.mxu0 0.0
    %v11428 = vand.u32 %v11014, 4294901760
    %v11429 = vsub.f32 %v11014, %v11428
    %v11430 = vand.u32 %v11429, 4294901760
    %11431 = vmatmul.mubr.f32.gmra.mxu0 %v11430
    %v11432 = vpop.f32.mrf.mxu0
    %v11433 = vadd.f32 %v11332, %v11432
    %v11434 = vpop.f32.mrf.mxu0
    %11435 = vdwg.mxu0
    %11436 = vmatprep.subr.mxu0 0.0
    %11437 = vmatpush1.msra.mxu0 0.0
    %11438 = vmatprep.subr.mxu0 0.0
    %11439 = vmatpush1.msra.mxu0 0.0
    %11440 = vmatprep.subr.mxu0 0.0
    %11441 = vmatpush1.msra.mxu0 0.0
    %11442 = vmatprep.subr.mxu0 0.0
    %11443 = vmatpush1.msra.mxu0 0.0
    %11444 = vmatprep.subr.mxu0 0.0
    %11445 = vmatpush1.msra.mxu0 0.0
    %11446 = vmatprep.subr.mxu0 0.0
    %11447 = vmatpush1.msra.mxu0 0.0
    %11448 = vmatprep.subr.mxu0 0.0
    %11449 = vmatpush1.msra.mxu0 0.0
    %11450 = vmatprep.subr.mxu0 0.0
    %11451 = vmatpush1.msra.mxu0 0.0
    %11452 = vmatprep.subr.mxu0 0.0
    %11453 = vmatpush1.msra.mxu0 0.0
    %11454 = vmatprep.subr.mxu0 0.0
    %11455 = vmatpush1.msra.mxu0 0.0
    %11456 = vmatprep.subr.mxu0 0.0
    %11457 = vmatpush1.msra.mxu0 0.0
    %11458 = vmatprep.subr.mxu0 0.0
    %11459 = vmatpush1.msra.mxu0 0.0
    %11460 = vmatprep.subr.mxu0 0.0
    %v11461 = vand.u32 %v11003, 4294901760
    %v11462 = vsub.f32 %v11003, %v11461
    %v11463 = vand.u32 %v11462, 4294901760
    %11464 = vmatpush1.msra.mxu0 %v11463
    %11465 = vmatprep.subr.mxu0 0.0
    %v11466 = vand.u32 %v11002, 4294901760
    %v11467 = vsub.f32 %v11002, %v11466
    %v11468 = vand.u32 %v11467, 4294901760
    %11469 = vmatpush1.msra.mxu0 %v11468
    %11470 = vmatprep.subr.mxu0 0.0
    %v11471 = vand.u32 %v11001, 4294901760
    %v11472 = vsub.f32 %v11001, %v11471
    %v11473 = vand.u32 %v11472, 4294901760
    %11474 = vmatpush1.msra.mxu0 %v11473
    %11475 = vmatprep.subr.mxu0 0.0
    %v11476 = vand.u32 %v11000, 4294901760
    %v11477 = vsub.f32 %v11000, %v11476
    %v11478 = vand.u32 %v11477, 4294901760
    %11479 = vmatpush1.msra.mxu0 %v11478
    %11480 = vmatprep.subr.mxu0 0.0
    %11481 = vmatpush2.msra.mxu0 0.0
    %11482 = vmatprep.subr.mxu0 0.0
    %11483 = vmatpush2.msra.mxu0 0.0
    %11484 = vmatprep.subr.mxu0 0.0
    %11485 = vmatpush2.msra.mxu0 0.0
    %11486 = vmatprep.subr.mxu0 0.0
    %11487 = vmatpush2.msra.mxu0 0.0
    %11488 = vmatprep.subr.mxu0 0.0
    %11489 = vmatpush2.msra.mxu0 0.0
    %11490 = vmatprep.subr.mxu0 0.0
    %11491 = vmatpush2.msra.mxu0 0.0
    %11492 = vmatprep.subr.mxu0 0.0
    %11493 = vmatpush2.msra.mxu0 0.0
    %11494 = vmatprep.subr.mxu0 0.0
    %11495 = vmatpush2.msra.mxu0 0.0
    %11496 = vmatprep.subr.mxu0 0.0
    %11497 = vmatpush2.msra.mxu0 0.0
    %11498 = vmatprep.subr.mxu0 0.0
    %11499 = vmatpush2.msra.mxu0 0.0
    %11500 = vmatprep.subr.mxu0 0.0
    %11501 = vmatpush2.msra.mxu0 0.0
    %11502 = vmatprep.subr.mxu0 0.0
    %11503 = vmatpush2.msra.mxu0 0.0
    %11504 = vmatprep.subr.mxu0 0.0
    %11505 = vmatpush2.msra.mxu0 0.0
    %11506 = vmatprep.subr.mxu0 0.0
    %11507 = vmatpush2.msra.mxu0 0.0
    %11508 = vmatprep.subr.mxu0 0.0
    %11509 = vmatpush2.msra.mxu0 0.0
    %11510 = vmatprep.subr.mxu0 0.0
    %11511 = vmatpush2.msra.mxu0 0.0
    %11512 = vmatprep.mubr.f32.mxu0 0.0
    %v11513 = vand.u32 %v11005, 4294901760
    %11514 = vmatmul.mubr.f32.gmra.mxu0 %v11513
    %v11515 = vpop.f32.mrf.mxu0
    %v11516 = vadd.f32 %v11409, %v11515
    %v11517 = vpop.f32.mrf.mxu0
    %11518 = vmatprep.mubr.f32.mxu0 0.0
    %v11519 = vand.u32 %v11008, 4294901760
    %11520 = vmatmul.mubr.f32.gmra.mxu0 %v11519
    %v11521 = vpop.f32.mrf.mxu0
    %v11522 = vadd.f32 %v11417, %v11521
    %v11523 = vpop.f32.mrf.mxu0
    %11524 = vmatprep.mubr.f32.mxu0 0.0
    %v11525 = vand.u32 %v11011, 4294901760
    %11526 = vmatmul.mubr.f32.gmra.mxu0 %v11525
    %v11527 = vpop.f32.mrf.mxu0
    %v11528 = vadd.f32 %v11425, %v11527
    %v11529 = vpop.f32.mrf.mxu0
    %11530 = vmatprep.mubr.f32.mxu0 0.0
    %v11531 = vand.u32 %v11014, 4294901760
    %11532 = vmatmul.mubr.f32.gmra.mxu0 %v11531
    %v11533 = vpop.f32.mrf.mxu0
    %v11534 = vadd.f32 %v11433, %v11533
    %v11535 = vpop.f32.mrf.mxu0
    %11536 = vdwg.mxu0
    %11537 = vmatprep.subr.mxu0 0.0
    %11538 = vmatpush1.msra.mxu0 0.0
    %11539 = vmatprep.subr.mxu0 0.0
    %11540 = vmatpush1.msra.mxu0 0.0
    %11541 = vmatprep.subr.mxu0 0.0
    %11542 = vmatpush1.msra.mxu0 0.0
    %11543 = vmatprep.subr.mxu0 0.0
    %11544 = vmatpush1.msra.mxu0 0.0
    %11545 = vmatprep.subr.mxu0 0.0
    %11546 = vmatpush1.msra.mxu0 0.0
    %11547 = vmatprep.subr.mxu0 0.0
    %11548 = vmatpush1.msra.mxu0 0.0
    %11549 = vmatprep.subr.mxu0 0.0
    %11550 = vmatpush1.msra.mxu0 0.0
    %11551 = vmatprep.subr.mxu0 0.0
    %11552 = vmatpush1.msra.mxu0 0.0
    %11553 = vmatprep.subr.mxu0 0.0
    %11554 = vmatpush1.msra.mxu0 0.0
    %11555 = vmatprep.subr.mxu0 0.0
    %11556 = vmatpush1.msra.mxu0 0.0
    %11557 = vmatprep.subr.mxu0 0.0
    %11558 = vmatpush1.msra.mxu0 0.0
    %11559 = vmatprep.subr.mxu0 0.0
    %11560 = vmatpush1.msra.mxu0 0.0
    %11561 = vmatprep.subr.mxu0 0.0
    %v11562 = vand.u32 %v11003, 4294901760
    %11563 = vmatpush1.msra.mxu0 %v11562
    %11564 = vmatprep.subr.mxu0 0.0
    %v11565 = vand.u32 %v11002, 4294901760
    %11566 = vmatpush1.msra.mxu0 %v11565
    %11567 = vmatprep.subr.mxu0 0.0
    %v11568 = vand.u32 %v11001, 4294901760
    %11569 = vmatpush1.msra.mxu0 %v11568
    %11570 = vmatprep.subr.mxu0 0.0
    %v11571 = vand.u32 %v11000, 4294901760
    %11572 = vmatpush1.msra.mxu0 %v11571
    %11573 = vmatprep.subr.mxu0 0.0
    %11574 = vmatpush2.msra.mxu0 0.0
    %11575 = vmatprep.subr.mxu0 0.0
    %11576 = vmatpush2.msra.mxu0 0.0
    %11577 = vmatprep.subr.mxu0 0.0
    %11578 = vmatpush2.msra.mxu0 0.0
    %11579 = vmatprep.subr.mxu0 0.0
    %11580 = vmatpush2.msra.mxu0 0.0
    %11581 = vmatprep.subr.mxu0 0.0
    %11582 = vmatpush2.msra.mxu0 0.0
    %11583 = vmatprep.subr.mxu0 0.0
    %11584 = vmatpush2.msra.mxu0 0.0
    %11585 = vmatprep.subr.mxu0 0.0
    %11586 = vmatpush2.msra.mxu0 0.0
    %11587 = vmatprep.subr.mxu0 0.0
    %11588 = vmatpush2.msra.mxu0 0.0
    %11589 = vmatprep.subr.mxu0 0.0
    %11590 = vmatpush2.msra.mxu0 0.0
    %11591 = vmatprep.subr.mxu0 0.0
    %11592 = vmatpush2.msra.mxu0 0.0
    %11593 = vmatprep.subr.mxu0 0.0
    %11594 = vmatpush2.msra.mxu0 0.0
    %11595 = vmatprep.subr.mxu0 0.0
    %11596 = vmatpush2.msra.mxu0 0.0
    %11597 = vmatprep.subr.mxu0 0.0
    %11598 = vmatpush2.msra.mxu0 0.0
    %11599 = vmatprep.subr.mxu0 0.0
    %11600 = vmatpush2.msra.mxu0 0.0
    %11601 = vmatprep.subr.mxu0 0.0
    %11602 = vmatpush2.msra.mxu0 0.0
    %11603 = vmatprep.subr.mxu0 0.0
    %11604 = vmatpush2.msra.mxu0 0.0
    %11605 = vmatprep.mubr.f32.mxu0 0.0
    %v11606 = vand.u32 %v11005, 4294901760
    %11607 = vmatmul.mubr.f32.gmra.mxu0 %v11606
    %v11608 = vpop.f32.mrf.mxu0
    %v11609 = vadd.f32 %v11516, %v11608
    %v11610 = vpop.f32.mrf.mxu0
    %11611 = vmatprep.mubr.f32.mxu0 0.0
    %v11612 = vand.u32 %v11008, 4294901760
    %11613 = vmatmul.mubr.f32.gmra.mxu0 %v11612
    %v11614 = vpop.f32.mrf.mxu0
    %v11615 = vadd.f32 %v11522, %v11614
    %v11616 = vpop.f32.mrf.mxu0
    %11617 = vmatprep.mubr.f32.mxu0 0.0
    %v11618 = vand.u32 %v11011, 4294901760
    %11619 = vmatmul.mubr.f32.gmra.mxu0 %v11618
    %v11620 = vpop.f32.mrf.mxu0
    %v11621 = vadd.f32 %v11528, %v11620
    %v11622 = vpop.f32.mrf.mxu0
    %11623 = vmatprep.mubr.f32.mxu0 0.0
    %v11624 = vand.u32 %v11014, 4294901760
    %11625 = vmatmul.mubr.f32.gmra.mxu0 %v11624
    %v11626 = vpop.f32.mrf.mxu0
    %v11627 = vadd.f32 %v11534, %v11626
    %v11628 = vpop.f32.mrf.mxu0
    %11629 = vdwg.mxu0
    %v11630 = vadd.f32 %v10991, %v11609
    %v11631 = vadd.f32 %v10992, %v11615
    %v11632 = vadd.f32 %v10993, %v11621
    %v11633 = vadd.f32 %v10994, %v11627
    %v11634 = vadd.f32 %v5874, %v11630
    %v11635 = vadd.f32 %v5875, %v11631
    %v11636 = vadd.f32 %v5876, %v11632
    %v11637 = vadd.f32 %v5877, %v11633
    %s11638 = scalar_lea.vmem %s3, 1
    %v11639 = vld [vmem:[%s11638] sm:$0x1]
    %v11641 = vlaneseq
    %v11642 = vshrl.u32 %v11641, 7
    %v11643 = vsub.s32 0, %v11642
    %v11644 = vrot.slane %v11639, %v11643
    %v11646 = vadd.f32 %v11634, %v11644
    %v11647 = vadd.f32 %v11635, %v11644
    %v11648 = vadd.f32 %v11636, %v11644
    %v11649 = vadd.f32 %v11637, %v11644
    %s11650 = sld [smem:[#allocation3 + $0x86]]
    %s11651 = sld [smem:[#allocation3 + $0x87]]
    %s11652 = sld [smem:[#allocation3 + $0x88]]
    %v11653 = vmax.f32 %v8439, %v5883
    %v11654 = vmax.f32 %v8440, %v5884
    %v11655 = vmax.f32 %v8441, %v5885
    %v11656 = vmax.f32 %v8442, %v5886
    %v11657 = vmax.f32 %v11653, %v9717
    %v11658 = vmax.f32 %v11654, %v9718
    %v11659 = vmax.f32 %v11655, %v9719
    %v11660 = vmax.f32 %v11656, %v9720
    %v11661 = vstv %s11650
    %v11662 = vmul.f32 %v11661, %v11657
    %v11663 = vmul.f32 %v11661, %v11658
    %v11664 = vmul.f32 %v11661, %v11659
    %v11665 = vmul.f32 %v11661, %v11660
    %v11666 = vadd.f32 %v11646, %v11662
    %v11667 = vadd.f32 %v11647, %v11663
    %v11668 = vadd.f32 %v11648, %v11664
    %v11669 = vadd.f32 %v11649, %v11665
    %s11670 = smul.f32 %s11651, 0.33333334
    %v11671 = vadd.f32 %v8439, %v5883
    %v11672 = vadd.f32 %v8440, %v5884
    %v11673 = vadd.f32 %v8441, %v5885
    %v11674 = vadd.f32 %v8442, %v5886
    %v11675 = vadd.f32 %v11671, %v9717
    %v11676 = vadd.f32 %v11672, %v9718
    %v11677 = vadd.f32 %v11673, %v9719
    %v11678 = vadd.f32 %v11674, %v9720
    %v11679 = vstv %s11670
    %v11680 = vmul.f32 %v11679, %v11675
    %v11681 = vmul.f32 %v11679, %v11676
    %v11682 = vmul.f32 %v11679, %v11677
    %v11683 = vmul.f32 %v11679, %v11678
    %v11684 = vadd.f32 %v11666, %v11680
    %v11685 = vadd.f32 %v11667, %v11681
    %v11686 = vadd.f32 %v11668, %v11682
    %v11687 = vadd.f32 %v11669, %v11683
    %v11688 = vstv %s11652
    %v11689 = vmul.f32 %v11688, %v5883
    %v11690 = vmul.f32 %v11688, %v5884
    %v11691 = vmul.f32 %v11688, %v5885
    %v11692 = vmul.f32 %v11688, %v5886
    %v11693 = vadd.f32 %v11684, %v11689
    %v11694 = vadd.f32 %v11685, %v11690
    %v11695 = vadd.f32 %v11686, %v11691
    %v11696 = vadd.f32 %v11687, %v11692
    %11697 = vst.msk [vmem:[#allocation10] sm:$0xff] %vm57, %v11693
    %11698 = vst.msk [vmem:[#allocation10 + $0x8] sm:$0xff] %vm57, %v11694
    %11699 = vst.msk [vmem:[#allocation10 + $0x10] sm:$0xff] %vm57, %v11695
    %11700 = vst.msk [vmem:[#allocation10 + $0x18] sm:$0xff] %vm57, %v11696
    // Predicated region
    $region30: #{tpu_custom_call.1} parent=1 // pred_check
      _
    $region31: #{tpu_custom_call.1} parent=1 // pred_check_branch
      %11702 = sbr.rel (0) target = $region33
    $region32: #{tpu_custom_call.1} parent=1 // pred_region
      %s11704 = ssub.s32 512, 512
      %11705 = vsyncadd [#allocation5], %s11704
      %s11706 = sshll.u32 [#allocation10], 4
      %s11707 = int_to_ptr.vmem [resolvable:$true] %s11706
      %11712 = dma.vmem_to_hbm [thread:$0]  %s11707, 512, %s4, [#allocation5], 128, 128, 8
    $region33: #{tpu_custom_call.1} parent=1 // pred_fallthru
      _
    // Predicated region
    $region34: #{tpu_custom_call.1} parent=1 // pred_check
      _
    $region35: #{tpu_custom_call.1} parent=1 // pred_check_branch
      %11714 = sbr.rel (0) target = $region37
    $region36: #{tpu_custom_call.1} parent=1 // pred_region
      %11715 = dma.done [#allocation5], 512
    $region37: #{tpu_custom_call.1} parent=1 // pred_fallthru
      _
    %11716 = vsyncpa [#allocation4], 1
    %11717 = vsyncpa [#allocation9], 1
    %11718 = vsyncpa [#allocation5], 1
    %11719 = vsyncpa [#allocation6], 1

</llo_original>
